<compile_context>
chip_gen: v7x
topology: tpu7x:2x2x1
jax: 0.10.0
libtpu: 0.0.40
codegen_flags: <defaults>
</compile_context>

<pallas_src>
import functools

import jax
import jax.numpy as jnp
from jax.experimental import pallas as pl
from jax.experimental.pallas import tpu as pltpu


# ----------------------------- in-kernel helpers -----------------------------

def _pad_hw(x, p):
    """Zero-pad the spatial dims of (Bc, H, W, C) by p, in VMEM."""
    Bc, H, W, C = x.shape
    zh = jnp.zeros((Bc, p, W, C), x.dtype)
    x = jnp.concatenate([zh, x, zh], axis=1)
    zw = jnp.zeros((Bc, H + 2 * p, p, C), x.dtype)
    return jnp.concatenate([zw, x, zw], axis=2)


def _im2col(x, KH, KW):
    """Valid im2col of (Bc, Hp, Wp, C) -> (Bc*Ho*Wo, KH*KW*C), (kh,kw,c) order."""
    Bc, Hp, Wp, C = x.shape
    Ho, Wo = Hp - KH + 1, Wp - KW + 1
    cols = [x[:, kh:kh + Ho, kw:kw + Wo, :].reshape(Bc * Ho * Wo, C)
            for kh in range(KH) for kw in range(KW)]
    return jnp.concatenate(cols, axis=-1)


def _maxpool2(x):
    """2x2 max pool, stride 2, floor mode (== nn.MaxPool2d(2)) on (Bc,H,W,C)."""
    Bc, H, W, C = x.shape
    Ho, Wo = H // 2, W // 2
    x = x[:, :2 * Ho, :2 * Wo, :]
    x = x.reshape(Bc, Ho, 2, 2 * Wo, C)
    x = jnp.maximum(x[:, :, 0, :, :], x[:, :, 1, :, :])        # pool H
    x = x.reshape(Bc, Ho, Wo, 2, C)
    return jnp.maximum(x[:, :, :, 0, :], x[:, :, :, 1, :])     # pool W


# ------------------------------- fused kernel --------------------------------

def _fused_kernel(*refs, act_only, H, W):
    if act_only:
        (xp_ref, feb_ref, a1b_ref, a2b_ref,
         few_ref, a1w_ref, a2w_ref, a3w_ref,
         probs_ref) = refs
    else:
        (xp_ref, feb_ref, a1b_ref, a2b_ref, c0b_ref, c1b_ref, c2b_ref,
         few_ref, a1w_ref, a2w_ref, a3w_ref, c1w_ref, c2w_ref, c3w_ref, c3b_ref,
         probs_ref, value_ref) = refs

    Bc, P, Kfe = xp_ref.shape
    M = Bc * P

    # ------------------------ feat_enc (5x5, pad 2) --------------------------
    # im2col was hoisted to the wrapper (K padded to Kfe lanes, bf16).
    x1 = jnp.dot(xp_ref[...].reshape(M, Kfe), few_ref[...],
                 preferred_element_type=jnp.float32)
    x1 = jnp.maximum(x1 + feb_ref[...].reshape(M, -1), 0.0)
    x1 = x1.astype(jnp.bfloat16)                                 # (M, 128)

    # One padded 3x3 im2col of the shared feature map, reused by actor1 and
    # (when not act_only) critic0.
    patches3 = _im2col(_pad_hw(x1.reshape(Bc, H, W, 128), 1), 3, 3)   # (M, 1152)

    # ----------------- actor1 (+ fused critic0 'same' conv) ------------------
    fused = jnp.dot(patches3, a1w_ref[...], preferred_element_type=jnp.float32)
    if act_only:
        a = fused                                                # (M, 64)
    else:
        c0_same = fused[:, :128]                                 # critic0 @ all pixels
        a = fused[:, 128:]                                       # actor1
    a = jnp.maximum(a + a1b_ref[...].reshape(M, -1), 0.0).astype(jnp.bfloat16)

    # --------------------------- actor2 (3x3, pad 1) -------------------------
    a2p = _im2col(_pad_hw(a.reshape(Bc, H, W, 64), 1), 3, 3)     # (M, 576)
    a2 = jnp.dot(a2p, a2w_ref[...], preferred_element_type=jnp.float32)
    a2 = jnp.maximum(a2 + a2b_ref[...].reshape(M, -1), 0.0).astype(jnp.bfloat16)

    # ------------------- actor3 (1x1) + fused softmax ------------------------
    # a3w is zero-padded to 128 output lanes (column 0 holds the real logit).
    # The actor3 bias and its one-hot term are constant over pixels and cancel
    # exactly in the softmax, so they are intentionally not added.
    lmat = jnp.dot(a2, a3w_ref[...], preferred_element_type=jnp.float32)  # (M,128)
    logits_row = jnp.transpose(lmat[:, 0:1])                     # (1, M) lane-dense
    for b in range(Bc):                                          # Bc is small & static
        seg = logits_row[:, b * P:(b + 1) * P]                   # (1, P)
        mx = jnp.max(seg, axis=-1, keepdims=True)
        e = jnp.exp(seg - mx)
        denom = jnp.sum(e, axis=-1, keepdims=True)
        probs_ref[b, :, :] = e * pl.reciprocal(denom, approx=True)

    if act_only:
        return

    # -------------------------------- critic ---------------------------------
    # critic0 is a valid conv: exactly the interior of the 'same' result above
    # (all taps in range there, so the one-hot term is the constant c0 bias).
    c0 = c0_same.reshape(Bc, H, W, 128)[:, 1:H - 1, 1:W - 1, :]  # (Bc, H-2, W-2, 128)
    c0 = jnp.maximum(c0 + c0b_ref[...].reshape(Bc, 1, 1, 128), 0.0)
    c0 = _maxpool2(c0).astype(jnp.bfloat16)                      # (Bc, 7, 7, 128)

    c1p = _im2col(c0, 3, 3)                                      # (Bc*25, 1152)
    n1 = c1p.shape[0] // Bc
    c1 = jnp.dot(c1p, c1w_ref[...], preferred_element_type=jnp.float32)
    c1 = jnp.maximum(c1.reshape(Bc, n1, 256) + c1b_ref[...], 0.0)
    Hc = (H - 2) // 2 - 2
    Wc = (W - 2) // 2 - 2
    c1 = _maxpool2(c1.reshape(Bc, Hc, Wc, 256))                  # (Bc, 2, 2, 256)

    hp, wp = c1.shape[1], c1.shape[2]
    cflat = c1.reshape(Bc, hp * wp, 256)
    feat = cflat[:, 0, :]
    for t in range(1, hp * wp):
        feat = feat + cflat[:, t, :]
    feat = feat * (1.0 / float(hp * wp))                         # spatial mean (Bc,256)

    h = jnp.dot(feat.astype(jnp.bfloat16), c2w_ref[...],
                preferred_element_type=jnp.float32)
    h = jnp.maximum(h + c2b_ref[...].reshape(Bc, -1), 0.0)       # (Bc, 64)
    v = jnp.dot(h.astype(jnp.bfloat16), c3w_ref[...],
                preferred_element_type=jnp.float32) + c3b_ref[...]    # (Bc, 128)
    value_ref[...] = v.reshape(Bc, 1, -1)                        # column 0 is the value


# ------------------------------ host-side helpers ----------------------------

def init_params(key, ch, target_size):
    T = target_size
    ks = jax.random.split(key, 16)

    def w(k, shape):
        return 0.05 * jax.random.normal(k, shape, jnp.float32)

    def bvec(k, n):
        return 0.01 * jax.random.normal(k, (n,), jnp.float32)

    return {
        "feat_enc_w": w(ks[0], (5, 5, ch + T, 128)),   "feat_enc_b": bvec(ks[1], 128),
        "actor1_w":   w(ks[2], (3, 3, 128 + T, 64)),   "actor1_b":   bvec(ks[3], 64),
        "actor2_w":   w(ks[4], (3, 3, 64 + T, 32)),    "actor2_b":   bvec(ks[5], 32),
        "actor3_w":   w(ks[6], (1, 1, 32 + T, 1)),     "actor3_b":   bvec(ks[7], 1),
        "critic0_w":  w(ks[8], (3, 3, 128 + T, 128)),  "critic0_b":  bvec(ks[9], 128),
        "critic1_w":  w(ks[10], (3, 3, 128 + T, 256)), "critic1_b":  bvec(ks[11], 256),
        "critic2_w":  w(ks[12], (256 + T, 64)),        "critic2_b":  bvec(ks[13], 64),
        "critic3_w":  w(ks[14], (64, 1)),              "critic3_b":  bvec(ks[15], 1),
    }


def pack_params(params, target_size):
    """One-time packing: split every layer into its feature part (flattened for
    im2col, bf16 for the MXU) and its task-one-hot part (kept f32; folded into
    per-sample effective biases by the wrapper)."""
    T = target_size

    def split_conv(w):
        KH, KW, cin_t, cout = w.shape
        cin = cin_t - T
        wf = w[:, :, :cin, :].reshape(KH * KW * cin, cout).astype(jnp.bfloat16)
        wt = w[:, :, cin:, :].reshape(KH * KW, T, cout).astype(jnp.float32)
        return wf, wt

    few, fe_wt = split_conv(params["feat_enc_w"])
    kfe = few.shape[0]
    kfe_pad = max(128, ((kfe + 127) // 128) * 128)
    few = jnp.pad(few, ((0, kfe_pad - kfe), (0, 0)))            # K padded to 128 lanes

    a1w, a1_wt = split_conv(params["actor1_w"])
    c0w, c0_wt = split_conv(params["critic0_w"])
    a2w, a2_wt = split_conv(params["actor2_w"])
    a3w, _ = split_conv(params["actor3_w"])                     # one-hot part cancels
    a3w = jnp.pad(a3w, ((0, 0), (0, 128 - a3w.shape[1])))       # (32, 128), col 0 real
    c1w, c1_wt = split_conv(params["critic1_w"])

    c2w_full = params["critic2_w"]
    c2w = c2w_full[:-T, :].astype(jnp.bfloat16)                 # (256, 64)
    c2_wt = c2w_full[-T:, :].astype(jnp.float32)                # (T, 64)

    c3w = jnp.pad(params["critic3_w"], ((0, 0), (0, 127))).astype(jnp.bfloat16)
    c3b = jnp.pad(params["critic3_b"].reshape(1, 1), ((0, 0), (0, 127))).astype(jnp.float32)

    return dict(
        few=few,
        a1w=a1w,                                                # act_only path
        a1c0w=jnp.concatenate([c0w, a1w], axis=1),              # [critic0 | actor1]
        a2w=a2w, a3w=a3w, c1w=c1w, c2w=c2w, c3w=c3w, c3b=c3b,
        fe_wt=fe_wt, a1_wt=a1_wt, a2_wt=a2_wt,
        c0_sum_wt=c0_wt.sum(axis=0), c1_sum_wt=c1_wt.sum(axis=0), c2_wt=c2_wt,
        fe_b=params["feat_enc_b"].astype(jnp.float32),
        a1_b=params["actor1_b"].astype(jnp.float32),
        a2_b=params["actor2_b"].astype(jnp.float32),
        c0_b=params["critic0_b"].astype(jnp.float32),
        c1_b=params["critic1_b"].astype(jnp.float32),
        c2_b=params["critic2_b"].astype(jnp.float32),
    )


def _valid_mask(H, W, KH, KW, pad):
    """(H*W, KH*KW) mask: 1 where a conv tap lands inside the (unpadded) image."""
    i = jnp.arange(H)[:, None]
    kh = jnp.arange(KH)[None, :]
    vi = ((i + kh - pad) >= 0) & ((i + kh - pad) < H)            # (H, KH)
    j = jnp.arange(W)[:, None]
    kw = jnp.arange(KW)[None, :]
    vj = ((j + kw - pad) >= 0) & ((j + kw - pad) < W)            # (W, KW)
    v = vi[:, None, :, None] & vj[None, :, None, :]              # (H, W, KH, KW)
    return v.astype(jnp.float32).reshape(H * W, KH * KW)


def _onehot_bias_map(onehot, wt, b, valid):
    """Exact per-pixel effective bias of a zero-padded conv's one-hot channels."""
    hi = jax.lax.Precision.HIGHEST
    v = jnp.einsum('bt,ktc->bkc', onehot, wt, precision=hi)      # (B, K, Cout)
    return jnp.einsum('pk,bkc->bpc', valid, v, precision=hi) + b  # (B, H*W, Cout)


# --------------------------------- forward -----------------------------------

@functools.partial(jax.jit, static_argnames=("act_only", "batch_chunk"))
def lhf_policy_cond_small_forward(packed, task_eye, x_nchw, tid,
                                  act_only=False, batch_chunk=None):
    B, ch, H, W = x_nchw.shape
    T = task_eye.shape[0]
    P = H * W

    Bc = batch_chunk
    if Bc is None:
        Bc = min(B, 8)
        while B % Bc:
            Bc -= 1
    assert B % Bc == 0
    grid = (B // Bc,)

    x = jnp.transpose(x_nchw, (0, 2, 3, 1)).astype(jnp.float32)  # NCHW -> NHWC
    onehot = task_eye[tid].astype(jnp.float32)                   # (B, T)

    # First-layer im2col hoisted to XLA (tiny), padded to 128 lanes, bf16.
    kfe = 25 * ch
    kfe_pad = packed["few"].shape[0]
    xp = jnp.pad(x, ((0, 0), (2, 2), (2, 2), (0, 0)))
    cols = [xp[:, kh:kh + H, kw:kw + W, :] for kh in range(5) for kw in range(5)]
    x_patches = jnp.concatenate(cols, axis=-1).reshape(B, P, kfe)
    x_patches = jnp.pad(x_patches, ((0, 0), (0, 0), (0, kfe_pad - kfe)))
    x_patches = x_patches.astype(jnp.bfloat16)

    # Exact one-hot -> effective-bias folding (tiny per-call einsums).
    valid5 = _valid_mask(H, W, 5, 5, 2)
    valid3 = _valid_mask(H, W, 3, 3, 1)
    fe_bias = _onehot_bias_map(onehot, packed["fe_wt"], packed["fe_b"], valid5)
    a1_bias = _onehot_bias_map(onehot, packed["a1_wt"], packed["a1_b"], valid3)
    a2_bias = _onehot_bias_map(onehot, packed["a2_wt"], packed["a2_b"], valid3)

    per_sample = [x_patches, fe_bias, a1_bias, a2_bias]
    weights = [packed["few"],
               packed["a1w"] if act_only else packed["a1c0w"],
               packed["a2w"], packed["a3w"]]

    if not act_only:
        hi = jax.lax.Precision.HIGHEST
        c0_bias = (jnp.einsum('bt,tc->bc', onehot, packed["c0_sum_wt"], precision=hi)
                   + packed["c0_b"]).reshape(B, 1, -1)
        c1_bias = (jnp.einsum('bt,tc->bc', onehot, packed["c1_sum_wt"], precision=hi)
                   + packed["c1_b"]).reshape(B, 1, -1)
        c2_bias = (jnp.einsum('bt,tc->bc', onehot, packed["c2_wt"], precision=hi)
                   + packed["c2_b"]).reshape(B, 1, -1)
        per_sample += [c0_bias, c1_bias, c2_bias]
        weights += [packed["c1w"], packed["c2w"], packed["c3w"], packed["c3b"]]

    def chunk_spec(arr):
        nd = arr.ndim
        return pl.BlockSpec((Bc,) + arr.shape[1:],
                            lambda i: (i,) + (0,) * (nd - 1))

    def full_spec(arr):
        nd = arr.ndim
        return pl.BlockSpec(arr.shape, lambda i: (0,) * nd)

    in_specs = [chunk_spec(a) for a in per_sample] + [full_spec(wg) for wg in weights]

    out_shape = [jax.ShapeDtypeStruct((B, 1, P), jnp.float32)]
    out_specs = [pl.BlockSpec((Bc, 1, P), lambda i: (i, 0, 0))]
    if not act_only:
        out_shape.append(jax.ShapeDtypeStruct((B, 1, 128), jnp.float32))
        out_specs.append(pl.BlockSpec((Bc, 1, 128), lambda i: (i, 0, 0)))

    outs = pl.pallas_call(
        functools.partial(_fused_kernel, act_only=act_only, H=H, W=W),
        grid=grid,
        in_specs=in_specs,
        out_specs=out_specs,
        out_shape=out_shape,
        compiler_params=pltpu.CompilerParams(
            dimension_semantics=("parallel",),
            vmem_limit_bytes=32 * 1024 * 1024),
    )(*per_sample, *weights)

    act_probs = outs[0].reshape(B, P)
    if act_only:
        return act_probs, None
    state_values = outs[1][:, 0, 0:1]                            # (B, 1)
    return act_probs, state_values


# ----------------------------------- main -------------------------------------

if __name__ == "__main__":
    bs, ch, h, w = 2, 4, 16, 16
    target_size = 4
    action_num = h * w

    key = jax.random.PRNGKey(0)
    kp, kx = jax.random.split(key)

    params = init_params(kp, ch, target_size)
    packed = pack_params(params, target_size)
    task_eye = jnp.eye(target_size, dtype=jnp.float32)
    x = jax.random.normal(kx, (bs, ch, h, w), jnp.float32)
    tid = jnp.array([0, 2], dtype=jnp.int32)

    act_probs, state_values = lhf_policy_cond_small_forward(
        packed, task_eye, x, tid, act_only=False)
    jax.block_until_ready((act_probs, state_values))

    act_probs2, none_val = lhf_policy_cond_small_forward(
        packed, task_eye, x, tid, act_only=True)
    jax.block_until_ready(act_probs2)

    assert act_probs.shape == (bs, action_num)
    assert state_values.shape == (bs, 1)
    assert act_probs2.shape == (bs, action_num)
    assert none_val is None
    assert bool(jnp.all(jnp.isfinite(act_probs)))
    assert bool(jnp.all(jnp.isfinite(state_values)))
    # softmax normalization (approx reciprocal on the EUP -> slightly looser tol)
    assert bool(jnp.allclose(jnp.sum(act_probs, axis=-1), 1.0, atol=5e-3))
    # actor path must agree between the fused (full) and act_only variants
    assert bool(jnp.allclose(act_probs, act_probs2, atol=1e-4))

    print("KERNEL_OK")
</pallas_src>

<mosaic_0001>
module attributes {stable_mosaic.version = 11 : i64} {
  func.func @_fused_kernel(%arg0: i32, %arg1: memref<2x256x128xbf16, #tpu.memory_space<vmem>>, %arg2: memref<2x256x128xf32, #tpu.memory_space<vmem>>, %arg3: memref<2x256x64xf32, #tpu.memory_space<vmem>>, %arg4: memref<2x256x32xf32, #tpu.memory_space<vmem>>, %arg5: memref<2x1x128xf32, #tpu.memory_space<vmem>>, %arg6: memref<2x1x256xf32, #tpu.memory_space<vmem>>, %arg7: memref<2x1x64xf32, #tpu.memory_space<vmem>>, %arg8: memref<128x128xbf16, #tpu.memory_space<vmem>>, %arg9: memref<1152x192xbf16, #tpu.memory_space<vmem>>, %arg10: memref<576x32xbf16, #tpu.memory_space<vmem>>, %arg11: memref<32x128xbf16, #tpu.memory_space<vmem>>, %arg12: memref<1152x256xbf16, #tpu.memory_space<vmem>>, %arg13: memref<256x64xbf16, #tpu.memory_space<vmem>>, %arg14: memref<64x128xbf16, #tpu.memory_space<vmem>>, %arg15: memref<1x128xf32, #tpu.memory_space<vmem>>, %arg16: memref<2x1x256xf32, #tpu.memory_space<vmem>>, %arg17: memref<2x1x128xf32, #tpu.memory_space<vmem>>) attributes {dimension_semantics = [#tpu.dimension_semantics<parallel>], iteration_bounds = array<i64: 1>, scalar_prefetch = 0 : i64, scratch_operands = 0 : i64, tpu.core_type = #tpu.core_type<tc>, window_params = [{transform_indices = @transform_0, window_bounds = array<i64: 2, 256, 128>}, {transform_indices = @transform_1, window_bounds = array<i64: 2, 256, 128>}, {transform_indices = @transform_2, window_bounds = array<i64: 2, 256, 64>}, {transform_indices = @transform_3, window_bounds = array<i64: 2, 256, 32>}, {transform_indices = @transform_4, window_bounds = array<i64: 2, 1, 128>}, {transform_indices = @transform_5, window_bounds = array<i64: 2, 1, 256>}, {transform_indices = @transform_6, window_bounds = array<i64: 2, 1, 64>}, {pipeline_mode = #tpu.pipeline_mode<synchronous>, transform_indices = @transform_7, window_bounds = array<i64: 128, 128>}, {pipeline_mode = #tpu.pipeline_mode<synchronous>, transform_indices = @transform_8, window_bounds = array<i64: 1152, 192>}, {pipeline_mode = #tpu.pipeline_mode<synchronous>, transform_indices = @transform_9, window_bounds = array<i64: 576, 32>}, {pipeline_mode = #tpu.pipeline_mode<synchronous>, transform_indices = @transform_10, window_bounds = array<i64: 32, 128>}, {pipeline_mode = #tpu.pipeline_mode<synchronous>, transform_indices = @transform_11, window_bounds = array<i64: 1152, 256>}, {pipeline_mode = #tpu.pipeline_mode<synchronous>, transform_indices = @transform_12, window_bounds = array<i64: 256, 64>}, {pipeline_mode = #tpu.pipeline_mode<synchronous>, transform_indices = @transform_13, window_bounds = array<i64: 64, 128>}, {pipeline_mode = #tpu.pipeline_mode<synchronous>, transform_indices = @transform_14, window_bounds = array<i64: 1, 128>}, {transform_indices = @transform_15, window_bounds = array<i64: 2, 1, 256>}, {transform_indices = @transform_16, window_bounds = array<i64: 2, 1, 128>}]} {
    %c0 = arith.constant 0 : index
    %c0_0 = arith.constant 0 : index
    %c0_1 = arith.constant 0 : index
    %0 = vector.load %arg1[%c0, %c0_0, %c0_1] : memref<2x256x128xbf16, #tpu.memory_space<vmem>>, vector<2x256x128xbf16>
    %1 = vector.shape_cast %0 : vector<2x256x128xbf16> to vector<512x128xbf16>
    %c0_2 = arith.constant 0 : index
    %c0_3 = arith.constant 0 : index
    %2 = vector.load %arg8[%c0_2, %c0_3] : memref<128x128xbf16, #tpu.memory_space<vmem>>, vector<128x128xbf16>
    %cst = arith.constant dense<0.000000e+00> : vector<512x128xf32>
    %3 = tpu.matmul %1, %2, %cst {dimension_numbers = #tpu.dot_dimension_numbers<[1], [0], [0], [1], [0, 0, 1, 1], [], []>} : vector<512x128xbf16>, vector<128x128xbf16>, vector<512x128xf32> -> vector<512x128xf32>
    %c0_4 = arith.constant 0 : index
    %c0_5 = arith.constant 0 : index
    %c0_6 = arith.constant 0 : index
    %4 = vector.load %arg2[%c0_4, %c0_5, %c0_6] : memref<2x256x128xf32, #tpu.memory_space<vmem>>, vector<2x256x128xf32>
    %5 = vector.shape_cast %4 : vector<2x256x128xf32> to vector<512x128xf32>
    %6 = arith.addf %3, %5 : vector<512x128xf32>
    %cst_7 = arith.constant 0.000000e+00 : f32
    %7 = vector.broadcast %cst_7 : f32 to vector<512x128xf32>
    %8 = arith.maximumf %6, %7 : vector<512x128xf32>
    %9 = arith.truncf %8 : vector<512x128xf32> to vector<512x128xbf16>
    %10 = vector.shape_cast %9 : vector<512x128xbf16> to vector<2x16x16x128xbf16>
    %cst_8 = arith.constant 0.000000e+00 : bf16
    %11 = vector.broadcast %cst_8 : bf16 to vector<2x1x16x128xbf16>
    %12 = tpu.concatenate %11, %10, %11 in 1 : vector<2x1x16x128xbf16>, vector<2x16x16x128xbf16>, vector<2x1x16x128xbf16> -> vector<2x18x16x128xbf16>
    %cst_9 = arith.constant 0.000000e+00 : bf16
    %13 = vector.broadcast %cst_9 : bf16 to vector<2x18x1x128xbf16>
    %14 = tpu.concatenate %13, %12, %13 in 2 : vector<2x18x1x128xbf16>, vector<2x18x16x128xbf16>, vector<2x18x1x128xbf16> -> vector<2x18x18x128xbf16>
    %15 = vector.extract_strided_slice %14 {offsets = [0, 0, 0, 0], sizes = [2, 16, 16, 128], strides = [1, 1, 1, 1]} : vector<2x18x18x128xbf16> to vector<2x16x16x128xbf16>
    %16 = vector.shape_cast %15 : vector<2x16x16x128xbf16> to vector<512x128xbf16>
    %17 = vector.extract_strided_slice %14 {offsets = [0, 0, 1, 0], sizes = [2, 16, 16, 128], strides = [1, 1, 1, 1]} : vector<2x18x18x128xbf16> to vector<2x16x16x128xbf16>
    %18 = vector.shape_cast %17 : vector<2x16x16x128xbf16> to vector<512x128xbf16>
    %19 = vector.extract_strided_slice %14 {offsets = [0, 0, 2, 0], sizes = [2, 16, 16, 128], strides = [1, 1, 1, 1]} : vector<2x18x18x128xbf16> to vector<2x16x16x128xbf16>
    %20 = vector.shape_cast %19 : vector<2x16x16x128xbf16> to vector<512x128xbf16>
    %21 = vector.extract_strided_slice %14 {offsets = [0, 1, 0, 0], sizes = [2, 16, 16, 128], strides = [1, 1, 1, 1]} : vector<2x18x18x128xbf16> to vector<2x16x16x128xbf16>
    %22 = vector.shape_cast %21 : vector<2x16x16x128xbf16> to vector<512x128xbf16>
    %23 = vector.extract_strided_slice %14 {offsets = [0, 1, 1, 0], sizes = [2, 16, 16, 128], strides = [1, 1, 1, 1]} : vector<2x18x18x128xbf16> to vector<2x16x16x128xbf16>
    %24 = vector.shape_cast %23 : vector<2x16x16x128xbf16> to vector<512x128xbf16>
    %25 = vector.extract_strided_slice %14 {offsets = [0, 1, 2, 0], sizes = [2, 16, 16, 128], strides = [1, 1, 1, 1]} : vector<2x18x18x128xbf16> to vector<2x16x16x128xbf16>
    %26 = vector.shape_cast %25 : vector<2x16x16x128xbf16> to vector<512x128xbf16>
    %27 = vector.extract_strided_slice %14 {offsets = [0, 2, 0, 0], sizes = [2, 16, 16, 128], strides = [1, 1, 1, 1]} : vector<2x18x18x128xbf16> to vector<2x16x16x128xbf16>
    %28 = vector.shape_cast %27 : vector<2x16x16x128xbf16> to vector<512x128xbf16>
    %29 = vector.extract_strided_slice %14 {offsets = [0, 2, 1, 0], sizes = [2, 16, 16, 128], strides = [1, 1, 1, 1]} : vector<2x18x18x128xbf16> to vector<2x16x16x128xbf16>
    %30 = vector.shape_cast %29 : vector<2x16x16x128xbf16> to vector<512x128xbf16>
    %31 = vector.extract_strided_slice %14 {offsets = [0, 2, 2, 0], sizes = [2, 16, 16, 128], strides = [1, 1, 1, 1]} : vector<2x18x18x128xbf16> to vector<2x16x16x128xbf16>
    %32 = vector.shape_cast %31 : vector<2x16x16x128xbf16> to vector<512x128xbf16>
    %33 = tpu.concatenate %16, %18, %20, %22, %24, %26, %28, %30, %32 in 1 : vector<512x128xbf16>, vector<512x128xbf16>, vector<512x128xbf16>, vector<512x128xbf16>, vector<512x128xbf16>, vector<512x128xbf16>, vector<512x128xbf16>, vector<512x128xbf16>, vector<512x128xbf16> -> vector<512x1152xbf16>
    %c0_10 = arith.constant 0 : index
    %c0_11 = arith.constant 0 : index
    %34 = vector.load %arg9[%c0_10, %c0_11] : memref<1152x192xbf16, #tpu.memory_space<vmem>>, vector<1152x192xbf16>
    %cst_12 = arith.constant dense<0.000000e+00> : vector<512x192xf32>
    %35 = tpu.matmul %33, %34, %cst_12 {dimension_numbers = #tpu.dot_dimension_numbers<[1], [0], [0], [1], [0, 0, 1, 1], [], []>} : vector<512x1152xbf16>, vector<1152x192xbf16>, vector<512x192xf32> -> vector<512x192xf32>
    %36 = vector.extract_strided_slice %35 {offsets = [0, 0], sizes = [512, 128], strides = [1, 1]} : vector<512x192xf32> to vector<512x128xf32>
    %37 = vector.extract_strided_slice %35 {offsets = [0, 128], sizes = [512, 64], strides = [1, 1]} : vector<512x192xf32> to vector<512x64xf32>
    %c0_13 = arith.constant 0 : index
    %c0_14 = arith.constant 0 : index
    %c0_15 = arith.constant 0 : index
    %38 = vector.load %arg3[%c0_13, %c0_14, %c0_15] : memref<2x256x64xf32, #tpu.memory_space<vmem>>, vector<2x256x64xf32>
    %39 = vector.shape_cast %38 : vector<2x256x64xf32> to vector<512x64xf32>
    %40 = arith.addf %37, %39 : vector<512x64xf32>
    %cst_16 = arith.constant 0.000000e+00 : f32
    %41 = vector.broadcast %cst_16 : f32 to vector<512x64xf32>
    %42 = arith.maximumf %40, %41 : vector<512x64xf32>
    %43 = arith.truncf %42 : vector<512x64xf32> to vector<512x64xbf16>
    %44 = vector.shape_cast %43 : vector<512x64xbf16> to vector<2x16x16x64xbf16>
    %cst_17 = arith.constant 0.000000e+00 : bf16
    %45 = vector.broadcast %cst_17 : bf16 to vector<2x1x16x64xbf16>
    %46 = tpu.concatenate %45, %44, %45 in 1 : vector<2x1x16x64xbf16>, vector<2x16x16x64xbf16>, vector<2x1x16x64xbf16> -> vector<2x18x16x64xbf16>
    %cst_18 = arith.constant 0.000000e+00 : bf16
    %47 = vector.broadcast %cst_18 : bf16 to vector<2x18x1x64xbf16>
    %48 = tpu.concatenate %47, %46, %47 in 2 : vector<2x18x1x64xbf16>, vector<2x18x16x64xbf16>, vector<2x18x1x64xbf16> -> vector<2x18x18x64xbf16>
    %49 = vector.extract_strided_slice %48 {offsets = [0, 0, 0, 0], sizes = [2, 16, 16, 64], strides = [1, 1, 1, 1]} : vector<2x18x18x64xbf16> to vector<2x16x16x64xbf16>
    %50 = vector.shape_cast %49 : vector<2x16x16x64xbf16> to vector<512x64xbf16>
    %51 = vector.extract_strided_slice %48 {offsets = [0, 0, 1, 0], sizes = [2, 16, 16, 64], strides = [1, 1, 1, 1]} : vector<2x18x18x64xbf16> to vector<2x16x16x64xbf16>
    %52 = vector.shape_cast %51 : vector<2x16x16x64xbf16> to vector<512x64xbf16>
    %53 = vector.extract_strided_slice %48 {offsets = [0, 0, 2, 0], sizes = [2, 16, 16, 64], strides = [1, 1, 1, 1]} : vector<2x18x18x64xbf16> to vector<2x16x16x64xbf16>
    %54 = vector.shape_cast %53 : vector<2x16x16x64xbf16> to vector<512x64xbf16>
    %55 = vector.extract_strided_slice %48 {offsets = [0, 1, 0, 0], sizes = [2, 16, 16, 64], strides = [1, 1, 1, 1]} : vector<2x18x18x64xbf16> to vector<2x16x16x64xbf16>
    %56 = vector.shape_cast %55 : vector<2x16x16x64xbf16> to vector<512x64xbf16>
    %57 = vector.extract_strided_slice %48 {offsets = [0, 1, 1, 0], sizes = [2, 16, 16, 64], strides = [1, 1, 1, 1]} : vector<2x18x18x64xbf16> to vector<2x16x16x64xbf16>
    %58 = vector.shape_cast %57 : vector<2x16x16x64xbf16> to vector<512x64xbf16>
    %59 = vector.extract_strided_slice %48 {offsets = [0, 1, 2, 0], sizes = [2, 16, 16, 64], strides = [1, 1, 1, 1]} : vector<2x18x18x64xbf16> to vector<2x16x16x64xbf16>
    %60 = vector.shape_cast %59 : vector<2x16x16x64xbf16> to vector<512x64xbf16>
    %61 = vector.extract_strided_slice %48 {offsets = [0, 2, 0, 0], sizes = [2, 16, 16, 64], strides = [1, 1, 1, 1]} : vector<2x18x18x64xbf16> to vector<2x16x16x64xbf16>
    %62 = vector.shape_cast %61 : vector<2x16x16x64xbf16> to vector<512x64xbf16>
    %63 = vector.extract_strided_slice %48 {offsets = [0, 2, 1, 0], sizes = [2, 16, 16, 64], strides = [1, 1, 1, 1]} : vector<2x18x18x64xbf16> to vector<2x16x16x64xbf16>
    %64 = vector.shape_cast %63 : vector<2x16x16x64xbf16> to vector<512x64xbf16>
    %65 = vector.extract_strided_slice %48 {offsets = [0, 2, 2, 0], sizes = [2, 16, 16, 64], strides = [1, 1, 1, 1]} : vector<2x18x18x64xbf16> to vector<2x16x16x64xbf16>
    %66 = vector.shape_cast %65 : vector<2x16x16x64xbf16> to vector<512x64xbf16>
    %67 = tpu.concatenate %50, %52, %54, %56, %58, %60, %62, %64, %66 in 1 : vector<512x64xbf16>, vector<512x64xbf16>, vector<512x64xbf16>, vector<512x64xbf16>, vector<512x64xbf16>, vector<512x64xbf16>, vector<512x64xbf16>, vector<512x64xbf16>, vector<512x64xbf16> -> vector<512x576xbf16>
    %c0_19 = arith.constant 0 : index
    %c0_20 = arith.constant 0 : index
    %68 = vector.load %arg10[%c0_19, %c0_20] : memref<576x32xbf16, #tpu.memory_space<vmem>>, vector<576x32xbf16>
    %cst_21 = arith.constant dense<0.000000e+00> : vector<512x32xf32>
    %69 = tpu.matmul %67, %68, %cst_21 {dimension_numbers = #tpu.dot_dimension_numbers<[1], [0], [0], [1], [0, 0, 1, 1], [], []>} : vector<512x576xbf16>, vector<576x32xbf16>, vector<512x32xf32> -> vector<512x32xf32>
    %c0_22 = arith.constant 0 : index
    %c0_23 = arith.constant 0 : index
    %c0_24 = arith.constant 0 : index
    %70 = vector.load %arg4[%c0_22, %c0_23, %c0_24] : memref<2x256x32xf32, #tpu.memory_space<vmem>>, vector<2x256x32xf32>
    %71 = vector.shape_cast %70 : vector<2x256x32xf32> to vector<512x32xf32>
    %72 = arith.addf %69, %71 : vector<512x32xf32>
    %cst_25 = arith.constant 0.000000e+00 : f32
    %73 = vector.broadcast %cst_25 : f32 to vector<512x32xf32>
    %74 = arith.maximumf %72, %73 : vector<512x32xf32>
    %75 = arith.truncf %74 : vector<512x32xf32> to vector<512x32xbf16>
    %c0_26 = arith.constant 0 : index
    %c0_27 = arith.constant 0 : index
    %76 = vector.load %arg11[%c0_26, %c0_27] : memref<32x128xbf16, #tpu.memory_space<vmem>>, vector<32x128xbf16>
    %cst_28 = arith.constant dense<0.000000e+00> : vector<512x128xf32>
    %77 = tpu.matmul %75, %76, %cst_28 {dimension_numbers = #tpu.dot_dimension_numbers<[1], [0], [0], [1], [0, 0, 1, 1], [], []>} : vector<512x32xbf16>, vector<32x128xbf16>, vector<512x128xf32> -> vector<512x128xf32>
    %78 = vector.extract_strided_slice %77 {offsets = [0, 0], sizes = [512, 1], strides = [1, 1]} : vector<512x128xf32> to vector<512x1xf32>
    %79 = tpu.transpose %78, [1, 0] : vector<512x1xf32> -> vector<1x512xf32>
    %80 = vector.extract_strided_slice %79 {offsets = [0, 0], sizes = [1, 256], strides = [1, 1]} : vector<1x512xf32> to vector<1x256xf32>
    %cst_29 = arith.constant dense<0xFF800000> : vector<1xf32>
    %81 = vector.multi_reduction <maximumf>, %80, %cst_29 [1] : vector<1x256xf32> to vector<1xf32>
    %82 = vector.shape_cast %81 : vector<1xf32> to vector<1x1xf32>
    %83 = vector.broadcast %82 : vector<1x1xf32> to vector<1x256xf32>
    %84 = arith.subf %80, %83 : vector<1x256xf32>
    %85 = math.exp %84 : vector<1x256xf32>
    %cst_30 = arith.constant dense<0.000000e+00> : vector<1xf32>
    %86 = vector.multi_reduction <add>, %85, %cst_30 [1] : vector<1x256xf32> to vector<1xf32>
    %87 = vector.shape_cast %86 : vector<1xf32> to vector<1x1xf32>
    %88 = tpu.reciprocal %87 {approx = true} : vector<1x1xf32> -> vector<1x1xf32>
    %89 = vector.broadcast %88 : vector<1x1xf32> to vector<1x256xf32>
    %90 = arith.mulf %85, %89 : vector<1x256xf32>
    %c0_31 = arith.constant 0 : index
    %c0_32 = arith.constant 0 : index
    %c0_33 = arith.constant 0 : index
    %91 = vector.load %arg16[%c0_31, %c0_32, %c0_33] : memref<2x1x256xf32, #tpu.memory_space<vmem>>, vector<1x1x256xf32>
    %92 = vector.shape_cast %91 : vector<1x1x256xf32> to vector<1x256xf32>
    %93 = vector.shape_cast %90 : vector<1x256xf32> to vector<1x1x256xf32>
    tpu.vector_store %arg16[%c0_31, %c0_32, %c0_33], %93 {strides = array<i32>} : memref<2x1x256xf32, #tpu.memory_space<vmem>>, vector<1x1x256xf32>,
    %94 = vector.extract_strided_slice %79 {offsets = [0, 256], sizes = [1, 256], strides = [1, 1]} : vector<1x512xf32> to vector<1x256xf32>
    %cst_34 = arith.constant dense<0xFF800000> : vector<1xf32>
    %95 = vector.multi_reduction <maximumf>, %94, %cst_34 [1] : vector<1x256xf32> to vector<1xf32>
    %96 = vector.shape_cast %95 : vector<1xf32> to vector<1x1xf32>
    %97 = vector.broadcast %96 : vector<1x1xf32> to vector<1x256xf32>
    %98 = arith.subf %94, %97 : vector<1x256xf32>
    %99 = math.exp %98 : vector<1x256xf32>
    %cst_35 = arith.constant dense<0.000000e+00> : vector<1xf32>
    %100 = vector.multi_reduction <add>, %99, %cst_35 [1] : vector<1x256xf32> to vector<1xf32>
    %101 = vector.shape_cast %100 : vector<1xf32> to vector<1x1xf32>
    %102 = tpu.reciprocal %101 {approx = true} : vector<1x1xf32> -> vector<1x1xf32>
    %103 = vector.broadcast %102 : vector<1x1xf32> to vector<1x256xf32>
    %104 = arith.mulf %99, %103 : vector<1x256xf32>
    %c1 = arith.constant 1 : index
    %c0_36 = arith.constant 0 : index
    %c0_37 = arith.constant 0 : index
    %105 = vector.load %arg16[%c1, %c0_36, %c0_37] : memref<2x1x256xf32, #tpu.memory_space<vmem>>, vector<1x1x256xf32>
    %106 = vector.shape_cast %105 : vector<1x1x256xf32> to vector<1x256xf32>
    %107 = vector.shape_cast %104 : vector<1x256xf32> to vector<1x1x256xf32>
    tpu.vector_store %arg16[%c1, %c0_36, %c0_37], %107 {strides = array<i32>} : memref<2x1x256xf32, #tpu.memory_space<vmem>>, vector<1x1x256xf32>,
    %108 = vector.shape_cast %36 : vector<512x128xf32> to vector<2x16x16x128xf32>
    %109 = vector.extract_strided_slice %108 {offsets = [0, 1, 1, 0], sizes = [2, 14, 14, 128], strides = [1, 1, 1, 1]} : vector<2x16x16x128xf32> to vector<2x14x14x128xf32>
    %c0_38 = arith.constant 0 : index
    %c0_39 = arith.constant 0 : index
    %c0_40 = arith.constant 0 : index
    %110 = vector.load %arg5[%c0_38, %c0_39, %c0_40] : memref<2x1x128xf32, #tpu.memory_space<vmem>>, vector<2x1x128xf32>
    %111 = vector.shape_cast %110 : vector<2x1x128xf32> to vector<2x1x1x128xf32>
    %112 = vector.broadcast %111 : vector<2x1x1x128xf32> to vector<2x14x14x128xf32>
    %113 = arith.addf %109, %112 : vector<2x14x14x128xf32>
    %cst_41 = arith.constant 0.000000e+00 : f32
    %114 = vector.broadcast %cst_41 : f32 to vector<2x14x14x128xf32>
    %115 = arith.maximumf %113, %114 : vector<2x14x14x128xf32>
    %116 = vector.shape_cast %115 : vector<2x14x14x128xf32> to vector<2x7x2x14x128xf32>
    %117 = vector.extract_strided_slice %116 {offsets = [0, 0, 0, 0, 0], sizes = [2, 7, 1, 14, 128], strides = [1, 1, 1, 1, 1]} : vector<2x7x2x14x128xf32> to vector<2x7x1x14x128xf32>
    %118 = vector.shape_cast %117 : vector<2x7x1x14x128xf32> to vector<2x7x14x128xf32>
    %119 = vector.extract_strided_slice %116 {offsets = [0, 0, 1, 0, 0], sizes = [2, 7, 1, 14, 128], strides = [1, 1, 1, 1, 1]} : vector<2x7x2x14x128xf32> to vector<2x7x1x14x128xf32>
    %120 = vector.shape_cast %119 : vector<2x7x1x14x128xf32> to vector<2x7x14x128xf32>
    %121 = arith.maximumf %118, %120 : vector<2x7x14x128xf32>
    %122 = vector.shape_cast %121 : vector<2x7x14x128xf32> to vector<2x7x7x2x128xf32>
    %123 = vector.extract_strided_slice %122 {offsets = [0, 0, 0, 0, 0], sizes = [2, 7, 7, 1, 128], strides = [1, 1, 1, 1, 1]} : vector<2x7x7x2x128xf32> to vector<2x7x7x1x128xf32>
    %124 = vector.shape_cast %123 : vector<2x7x7x1x128xf32> to vector<2x7x7x128xf32>
    %125 = vector.extract_strided_slice %122 {offsets = [0, 0, 0, 1, 0], sizes = [2, 7, 7, 1, 128], strides = [1, 1, 1, 1, 1]} : vector<2x7x7x2x128xf32> to vector<2x7x7x1x128xf32>
    %126 = vector.shape_cast %125 : vector<2x7x7x1x128xf32> to vector<2x7x7x128xf32>
    %127 = arith.maximumf %124, %126 : vector<2x7x7x128xf32>
    %128 = arith.truncf %127 : vector<2x7x7x128xf32> to vector<2x7x7x128xbf16>
    %129 = vector.extract_strided_slice %128 {offsets = [0, 0, 0, 0], sizes = [2, 5, 5, 128], strides = [1, 1, 1, 1]} : vector<2x7x7x128xbf16> to vector<2x5x5x128xbf16>
    %130 = vector.shape_cast %129 : vector<2x5x5x128xbf16> to vector<50x128xbf16>
    %131 = vector.extract_strided_slice %128 {offsets = [0, 0, 1, 0], sizes = [2, 5, 5, 128], strides = [1, 1, 1, 1]} : vector<2x7x7x128xbf16> to vector<2x5x5x128xbf16>
    %132 = vector.shape_cast %131 : vector<2x5x5x128xbf16> to vector<50x128xbf16>
    %133 = vector.extract_strided_slice %128 {offsets = [0, 0, 2, 0], sizes = [2, 5, 5, 128], strides = [1, 1, 1, 1]} : vector<2x7x7x128xbf16> to vector<2x5x5x128xbf16>
    %134 = vector.shape_cast %133 : vector<2x5x5x128xbf16> to vector<50x128xbf16>
    %135 = vector.extract_strided_slice %128 {offsets = [0, 1, 0, 0], sizes = [2, 5, 5, 128], strides = [1, 1, 1, 1]} : vector<2x7x7x128xbf16> to vector<2x5x5x128xbf16>
    %136 = vector.shape_cast %135 : vector<2x5x5x128xbf16> to vector<50x128xbf16>
    %137 = vector.extract_strided_slice %128 {offsets = [0, 1, 1, 0], sizes = [2, 5, 5, 128], strides = [1, 1, 1, 1]} : vector<2x7x7x128xbf16> to vector<2x5x5x128xbf16>
    %138 = vector.shape_cast %137 : vector<2x5x5x128xbf16> to vector<50x128xbf16>
    %139 = vector.extract_strided_slice %128 {offsets = [0, 1, 2, 0], sizes = [2, 5, 5, 128], strides = [1, 1, 1, 1]} : vector<2x7x7x128xbf16> to vector<2x5x5x128xbf16>
    %140 = vector.shape_cast %139 : vector<2x5x5x128xbf16> to vector<50x128xbf16>
    %141 = vector.extract_strided_slice %128 {offsets = [0, 2, 0, 0], sizes = [2, 5, 5, 128], strides = [1, 1, 1, 1]} : vector<2x7x7x128xbf16> to vector<2x5x5x128xbf16>
    %142 = vector.shape_cast %141 : vector<2x5x5x128xbf16> to vector<50x128xbf16>
    %143 = vector.extract_strided_slice %128 {offsets = [0, 2, 1, 0], sizes = [2, 5, 5, 128], strides = [1, 1, 1, 1]} : vector<2x7x7x128xbf16> to vector<2x5x5x128xbf16>
    %144 = vector.shape_cast %143 : vector<2x5x5x128xbf16> to vector<50x128xbf16>
    %145 = vector.extract_strided_slice %128 {offsets = [0, 2, 2, 0], sizes = [2, 5, 5, 128], strides = [1, 1, 1, 1]} : vector<2x7x7x128xbf16> to vector<2x5x5x128xbf16>
    %146 = vector.shape_cast %145 : vector<2x5x5x128xbf16> to vector<50x128xbf16>
    %147 = tpu.concatenate %130, %132, %134, %136, %138, %140, %142, %144, %146 in 1 : vector<50x128xbf16>, vector<50x128xbf16>, vector<50x128xbf16>, vector<50x128xbf16>, vector<50x128xbf16>, vector<50x128xbf16>, vector<50x128xbf16>, vector<50x128xbf16>, vector<50x128xbf16> -> vector<50x1152xbf16>
    %c0_42 = arith.constant 0 : index
    %c0_43 = arith.constant 0 : index
    %148 = vector.load %arg12[%c0_42, %c0_43] : memref<1152x256xbf16, #tpu.memory_space<vmem>>, vector<1152x256xbf16>
    %cst_44 = arith.constant dense<0.000000e+00> : vector<50x256xf32>
    %149 = tpu.matmul %147, %148, %cst_44 {dimension_numbers = #tpu.dot_dimension_numbers<[1], [0], [0], [1], [0, 0, 1, 1], [], []>} : vector<50x1152xbf16>, vector<1152x256xbf16>, vector<50x256xf32> -> vector<50x256xf32>
    %150 = vector.shape_cast %149 : vector<50x256xf32> to vector<2x25x256xf32>
    %c0_45 = arith.constant 0 : index
    %c0_46 = arith.constant 0 : index
    %c0_47 = arith.constant 0 : index
    %151 = vector.load %arg6[%c0_45, %c0_46, %c0_47] : memref<2x1x256xf32, #tpu.memory_space<vmem>>, vector<2x1x256xf32>
    %152 = vector.broadcast %151 : vector<2x1x256xf32> to vector<2x25x256xf32>
    %153 = arith.addf %150, %152 : vector<2x25x256xf32>
    %cst_48 = arith.constant 0.000000e+00 : f32
    %154 = vector.broadcast %cst_48 : f32 to vector<2x25x256xf32>
    %155 = arith.maximumf %153, %154 : vector<2x25x256xf32>
    %156 = vector.shape_cast %155 : vector<2x25x256xf32> to vector<2x5x5x256xf32>
    %157 = vector.extract_strided_slice %156 {offsets = [0, 0, 0, 0], sizes = [2, 4, 4, 256], strides = [1, 1, 1, 1]} : vector<2x5x5x256xf32> to vector<2x4x4x256xf32>
    %158 = vector.shape_cast %157 : vector<2x4x4x256xf32> to vector<2x2x2x4x256xf32>
    %159 = vector.extract_strided_slice %158 {offsets = [0, 0, 0, 0, 0], sizes = [2, 2, 1, 4, 256], strides = [1, 1, 1, 1, 1]} : vector<2x2x2x4x256xf32> to vector<2x2x1x4x256xf32>
    %160 = vector.shape_cast %159 : vector<2x2x1x4x256xf32> to vector<2x2x4x256xf32>
    %161 = vector.extract_strided_slice %158 {offsets = [0, 0, 1, 0, 0], sizes = [2, 2, 1, 4, 256], strides = [1, 1, 1, 1, 1]} : vector<2x2x2x4x256xf32> to vector<2x2x1x4x256xf32>
    %162 = vector.shape_cast %161 : vector<2x2x1x4x256xf32> to vector<2x2x4x256xf32>
    %163 = arith.maximumf %160, %162 : vector<2x2x4x256xf32>
    %164 = vector.shape_cast %163 : vector<2x2x4x256xf32> to vector<2x2x2x2x256xf32>
    %165 = vector.extract_strided_slice %164 {offsets = [0, 0, 0, 0, 0], sizes = [2, 2, 2, 1, 256], strides = [1, 1, 1, 1, 1]} : vector<2x2x2x2x256xf32> to vector<2x2x2x1x256xf32>
    %166 = vector.shape_cast %165 : vector<2x2x2x1x256xf32> to vector<2x2x2x256xf32>
    %167 = vector.extract_strided_slice %164 {offsets = [0, 0, 0, 1, 0], sizes = [2, 2, 2, 1, 256], strides = [1, 1, 1, 1, 1]} : vector<2x2x2x2x256xf32> to vector<2x2x2x1x256xf32>
    %168 = vector.shape_cast %167 : vector<2x2x2x1x256xf32> to vector<2x2x2x256xf32>
    %169 = arith.maximumf %166, %168 : vector<2x2x2x256xf32>
    %170 = vector.shape_cast %169 : vector<2x2x2x256xf32> to vector<2x4x256xf32>
    %171 = vector.extract_strided_slice %170 {offsets = [0, 0, 0], sizes = [2, 1, 256], strides = [1, 1, 1]} : vector<2x4x256xf32> to vector<2x1x256xf32>
    %172 = vector.shape_cast %171 : vector<2x1x256xf32> to vector<2x256xf32>
    %173 = vector.extract_strided_slice %170 {offsets = [0, 1, 0], sizes = [2, 1, 256], strides = [1, 1, 1]} : vector<2x4x256xf32> to vector<2x1x256xf32>
    %174 = vector.shape_cast %173 : vector<2x1x256xf32> to vector<2x256xf32>
    %175 = arith.addf %172, %174 : vector<2x256xf32>
    %176 = vector.extract_strided_slice %170 {offsets = [0, 2, 0], sizes = [2, 1, 256], strides = [1, 1, 1]} : vector<2x4x256xf32> to vector<2x1x256xf32>
    %177 = vector.shape_cast %176 : vector<2x1x256xf32> to vector<2x256xf32>
    %178 = arith.addf %175, %177 : vector<2x256xf32>
    %179 = vector.extract_strided_slice %170 {offsets = [0, 3, 0], sizes = [2, 1, 256], strides = [1, 1, 1]} : vector<2x4x256xf32> to vector<2x1x256xf32>
    %180 = vector.shape_cast %179 : vector<2x1x256xf32> to vector<2x256xf32>
    %181 = arith.addf %178, %180 : vector<2x256xf32>
    %cst_49 = arith.constant 2.500000e-01 : f32
    %182 = vector.broadcast %cst_49 : f32 to vector<2x256xf32>
    %183 = arith.mulf %181, %182 : vector<2x256xf32>
    %184 = arith.truncf %183 : vector<2x256xf32> to vector<2x256xbf16>
    %c0_50 = arith.constant 0 : index
    %c0_51 = arith.constant 0 : index
    %185 = vector.load %arg13[%c0_50, %c0_51] : memref<256x64xbf16, #tpu.memory_space<vmem>>, vector<256x64xbf16>
    %cst_52 = arith.constant dense<0.000000e+00> : vector<2x64xf32>
    %186 = tpu.matmul %184, %185, %cst_52 {dimension_numbers = #tpu.dot_dimension_numbers<[1], [0], [0], [1], [0, 0, 1, 1], [], []>} : vector<2x256xbf16>, vector<256x64xbf16>, vector<2x64xf32> -> vector<2x64xf32>
    %c0_53 = arith.constant 0 : index
    %c0_54 = arith.constant 0 : index
    %c0_55 = arith.constant 0 : index
    %187 = vector.load %arg7[%c0_53, %c0_54, %c0_55] : memref<2x1x64xf32, #tpu.memory_space<vmem>>, vector<2x1x64xf32>
    %188 = vector.shape_cast %187 : vector<2x1x64xf32> to vector<2x64xf32>
    %189 = arith.addf %186, %188 : vector<2x64xf32>
    %cst_56 = arith.constant 0.000000e+00 : f32
    %190 = vector.broadcast %cst_56 : f32 to vector<2x64xf32>
    %191 = arith.maximumf %189, %190 : vector<2x64xf32>
    %192 = arith.truncf %191 : vector<2x64xf32> to vector<2x64xbf16>
    %c0_57 = arith.constant 0 : index
    %c0_58 = arith.constant 0 : index
    %193 = vector.load %arg14[%c0_57, %c0_58] : memref<64x128xbf16, #tpu.memory_space<vmem>>, vector<64x128xbf16>
    %cst_59 = arith.constant dense<0.000000e+00> : vector<2x128xf32>
    %194 = tpu.matmul %192, %193, %cst_59 {dimension_numbers = #tpu.dot_dimension_numbers<[1], [0], [0], [1], [0, 0, 1, 1], [], []>} : vector<2x64xbf16>, vector<64x128xbf16>, vector<2x128xf32> -> vector<2x128xf32>
    %c0_60 = arith.constant 0 : index
    %c0_61 = arith.constant 0 : index
    %195 = vector.load %arg15[%c0_60, %c0_61] : memref<1x128xf32, #tpu.memory_space<vmem>>, vector<1x128xf32>
    %196 = vector.broadcast %195 : vector<1x128xf32> to vector<2x128xf32>
    %197 = arith.addf %194, %196 : vector<2x128xf32>
    %198 = vector.shape_cast %197 : vector<2x128xf32> to vector<2x1x128xf32>
    %c0_62 = arith.constant 0 : index
    %c0_63 = arith.constant 0 : index
    %c0_64 = arith.constant 0 : index
    %199 = vector.load %arg17[%c0_62, %c0_63, %c0_64] : memref<2x1x128xf32, #tpu.memory_space<vmem>>, vector<2x1x128xf32>
    tpu.vector_store %arg17[%c0_62, %c0_63, %c0_64], %198 {strides = array<i32>} : memref<2x1x128xf32, #tpu.memory_space<vmem>>, vector<2x1x128xf32>,
    return
  }
  func.func @transform_0(%arg0: i32) -> (i32, i32, i32) {
    %c0_i32 = arith.constant 0 : i32
    %c0_i32_0 = arith.constant 0 : i32
    %c0_i32_1 = arith.constant 0 : i32
    return %arg0, %c0_i32, %c0_i32_0 : i32, i32, i32
  }
  func.func @transform_1(%arg0: i32) -> (i32, i32, i32) {
    %c0_i32 = arith.constant 0 : i32
    %c0_i32_0 = arith.constant 0 : i32
    %c0_i32_1 = arith.constant 0 : i32
    return %arg0, %c0_i32, %c0_i32_0 : i32, i32, i32
  }
  func.func @transform_2(%arg0: i32) -> (i32, i32, i32) {
    %c0_i32 = arith.constant 0 : i32
    %c0_i32_0 = arith.constant 0 : i32
    %c0_i32_1 = arith.constant 0 : i32
    return %arg0, %c0_i32, %c0_i32_0 : i32, i32, i32
  }
  func.func @transform_3(%arg0: i32) -> (i32, i32, i32) {
    %c0_i32 = arith.constant 0 : i32
    %c0_i32_0 = arith.constant 0 : i32
    %c0_i32_1 = arith.constant 0 : i32
    return %arg0, %c0_i32, %c0_i32_0 : i32, i32, i32
  }
  func.func @transform_4(%arg0: i32) -> (i32, i32, i32) {
    %c0_i32 = arith.constant 0 : i32
    %c0_i32_0 = arith.constant 0 : i32
    %c0_i32_1 = arith.constant 0 : i32
    return %arg0, %c0_i32, %c0_i32_0 : i32, i32, i32
  }
  func.func @transform_5(%arg0: i32) -> (i32, i32, i32) {
    %c0_i32 = arith.constant 0 : i32
    %c0_i32_0 = arith.constant 0 : i32
    %c0_i32_1 = arith.constant 0 : i32
    return %arg0, %c0_i32, %c0_i32_0 : i32, i32, i32
  }
  func.func @transform_6(%arg0: i32) -> (i32, i32, i32) {
    %c0_i32 = arith.constant 0 : i32
    %c0_i32_0 = arith.constant 0 : i32
    %c0_i32_1 = arith.constant 0 : i32
    return %arg0, %c0_i32, %c0_i32_0 : i32, i32, i32
  }
  func.func @transform_7(%arg0: i32) -> (i32, i32) {
    %c0_i32 = arith.constant 0 : i32
    %c0_i32_0 = arith.constant 0 : i32
    %c0_i32_1 = arith.constant 0 : i32
    return %c0_i32, %c0_i32_0 : i32, i32
  }
  func.func @transform_8(%arg0: i32) -> (i32, i32) {
    %c0_i32 = arith.constant 0 : i32
    %c0_i32_0 = arith.constant 0 : i32
    %c0_i32_1 = arith.constant 0 : i32
    return %c0_i32, %c0_i32_0 : i32, i32
  }
  func.func @transform_9(%arg0: i32) -> (i32, i32) {
    %c0_i32 = arith.constant 0 : i32
    %c0_i32_0 = arith.constant 0 : i32
    %c0_i32_1 = arith.constant 0 : i32
    return %c0_i32, %c0_i32_0 : i32, i32
  }
  func.func @transform_10(%arg0: i32) -> (i32, i32) {
    %c0_i32 = arith.constant 0 : i32
    %c0_i32_0 = arith.constant 0 : i32
    %c0_i32_1 = arith.constant 0 : i32
    return %c0_i32, %c0_i32_0 : i32, i32
  }
  func.func @transform_11(%arg0: i32) -> (i32, i32) {
    %c0_i32 = arith.constant 0 : i32
    %c0_i32_0 = arith.constant 0 : i32
    %c0_i32_1 = arith.constant 0 : i32
    return %c0_i32, %c0_i32_0 : i32, i32
  }
  func.func @transform_12(%arg0: i32) -> (i32, i32) {
    %c0_i32 = arith.constant 0 : i32
    %c0_i32_0 = arith.constant 0 : i32
    %c0_i32_1 = arith.constant 0 : i32
    return %c0_i32, %c0_i32_0 : i32, i32
  }
  func.func @transform_13(%arg0: i32) -> (i32, i32) {
    %c0_i32 = arith.constant 0 : i32
    %c0_i32_0 = arith.constant 0 : i32
    %c0_i32_1 = arith.constant 0 : i32
    return %c0_i32, %c0_i32_0 : i32, i32
  }
  func.func @transform_14(%arg0: i32) -> (i32, i32) {
    %c0_i32 = arith.constant 0 : i32
    %c0_i32_0 = arith.constant 0 : i32
    %c0_i32_1 = arith.constant 0 : i32
    return %c0_i32, %c0_i32_0 : i32, i32
  }
  func.func @transform_15(%arg0: i32) -> (i32, i32, i32) {
    %c0_i32 = arith.constant 0 : i32
    %c0_i32_0 = arith.constant 0 : i32
    %c0_i32_1 = arith.constant 0 : i32
    return %arg0, %c0_i32, %c0_i32_0 : i32, i32, i32
  }
  func.func @transform_16(%arg0: i32) -> (i32, i32, i32) {
    %c0_i32 = arith.constant 0 : i32
    %c0_i32_0 = arith.constant 0 : i32
    %c0_i32_1 = arith.constant 0 : i32
    return %arg0, %c0_i32, %c0_i32_0 : i32, i32, i32
  }
}

</mosaic_0001>

<llo_original>
// kernel: lhf_policy_cond_small_forward.1
$region0: #{lhf_policy_cond_small_forward.1}
  #allocation0 [shape = 'u32[]', space=smem, size = 0x4, offset = 0x4, fixed_abs, tag = 'smem constant byte address 0x4 - core index']
  #allocation1 [shape = 'u32[144,128]{1,0:T(1,128)}', space=vmem, size = 0x12000, scoped, tag = 'internal scratch']
  %s0 = inlined_call_operand.vmem [shape: bf16[2,256,128], index: 0, kind: input, shape index: {}]
  %s1 = inlined_call_operand.vmem [shape: f32[2,256,128], index: 1, kind: input, shape index: {}]
  %s2 = inlined_call_operand.vmem [shape: f32[2,256,64], index: 2, kind: input, shape index: {}]
  %s3 = inlined_call_operand.vmem [shape: f32[2,256,32], index: 3, kind: input, shape index: {}]
  %s4 = inlined_call_operand.vmem [shape: f32[2,1,128], index: 4, kind: input, shape index: {}]
  %s5 = inlined_call_operand.vmem [shape: f32[2,1,256], index: 5, kind: input, shape index: {}]
  %s6 = inlined_call_operand.vmem [shape: f32[2,1,64], index: 6, kind: input, shape index: {}]
  %s7 = inlined_call_operand.vmem [shape: bf16[128,128], index: 7, kind: input, shape index: {}]
  %s8 = inlined_call_operand.vmem [shape: bf16[1152,192], index: 8, kind: input, shape index: {}]
  %s9 = inlined_call_operand.vmem [shape: bf16[576,32], index: 9, kind: input, shape index: {}]
  %s10 = inlined_call_operand.vmem [shape: bf16[32,128], index: 10, kind: input, shape index: {}]
  %s11 = inlined_call_operand.vmem [shape: bf16[1152,256], index: 11, kind: input, shape index: {}]
  %s12 = inlined_call_operand.vmem [shape: bf16[256,64], index: 12, kind: input, shape index: {}]
  %s13 = inlined_call_operand.vmem [shape: bf16[64,128], index: 13, kind: input, shape index: {}]
  %s14 = inlined_call_operand.vmem [shape: f32[1,128], index: 14, kind: input, shape index: {}]
  %s15 = inlined_call_operand.vmem [shape: f32[2,1,256], index: 15, kind: output, shape index: {0}]
  %s16 = inlined_call_operand.vmem [shape: f32[2,1,128], index: 16, kind: output, shape index: {1}]
  %17 = xla_tuple %s15, %s16
  %s18 = sld [smem:[#allocation0]]
  $region78: #{lhf_policy_cond_small_forward.1} parent=0
    _
  %s20 = ssub.s32 1, %s18
  %s21 = scalar_select 0, %s20, %s18
  // Predicated region
  $region2: #{lhf_policy_cond_small_forward.1} parent=0 // pred_check
    _
  $region3: #{lhf_policy_cond_small_forward.1} parent=0 // pred_check_branch
    %23 = sbr.rel (0) target = $region5
  $region4: #{lhf_policy_cond_small_forward.1} parent=0 // pred_region
    _
  $region5: #{lhf_policy_cond_small_forward.1} parent=0 // pred_fallthru
    _
  // Predicated region
  $region6: #{lhf_policy_cond_small_forward.1} parent=0 // pred_check
    _
  $region7: #{lhf_policy_cond_small_forward.1} parent=0 // pred_check_branch
    %25 = sbr.rel (0) target = $region9
  $region8: #{lhf_policy_cond_small_forward.1} parent=0 // pred_region
    _
  $region9: #{lhf_policy_cond_small_forward.1} parent=0 // pred_fallthru
    _
  // Predicated region
  $region10: #{lhf_policy_cond_small_forward.1} parent=0 // pred_check
    _
  $region11: #{lhf_policy_cond_small_forward.1} parent=0 // pred_check_branch
    %27 = sbr.rel (0) target = $region13
  $region12: #{lhf_policy_cond_small_forward.1} parent=0 // pred_region
    _
  $region13: #{lhf_policy_cond_small_forward.1} parent=0 // pred_fallthru
    _
  // Predicated region
  $region14: #{lhf_policy_cond_small_forward.1} parent=0 // pred_check
    _
  $region15: #{lhf_policy_cond_small_forward.1} parent=0 // pred_check_branch
    %29 = sbr.rel (0) target = $region17
  $region16: #{lhf_policy_cond_small_forward.1} parent=0 // pred_region
    _
  $region17: #{lhf_policy_cond_small_forward.1} parent=0 // pred_fallthru
    _
  // Predicated region
  $region18: #{lhf_policy_cond_small_forward.1} parent=0 // pred_check
    _
  $region19: #{lhf_policy_cond_small_forward.1} parent=0 // pred_check_branch
    %31 = sbr.rel (0) target = $region21
  $region20: #{lhf_policy_cond_small_forward.1} parent=0 // pred_region
    _
  $region21: #{lhf_policy_cond_small_forward.1} parent=0 // pred_fallthru
    _
  // Predicated region
  $region22: #{lhf_policy_cond_small_forward.1} parent=0 // pred_check
    _
  $region23: #{lhf_policy_cond_small_forward.1} parent=0 // pred_check_branch
    %33 = sbr.rel (0) target = $region25
  $region24: #{lhf_policy_cond_small_forward.1} parent=0 // pred_region
    _
  $region25: #{lhf_policy_cond_small_forward.1} parent=0 // pred_fallthru
    _
  // Predicated region
  $region26: #{lhf_policy_cond_small_forward.1} parent=0 // pred_check
    _
  $region27: #{lhf_policy_cond_small_forward.1} parent=0 // pred_check_branch
    %35 = sbr.rel (0) target = $region29
  $region28: #{lhf_policy_cond_small_forward.1} parent=0 // pred_region
    _
  $region29: #{lhf_policy_cond_small_forward.1} parent=0 // pred_fallthru
    _
  // Predicated region
  $region30: #{lhf_policy_cond_small_forward.1} parent=0 // pred_check
    _
  $region31: #{lhf_policy_cond_small_forward.1} parent=0 // pred_check_branch
    %37 = sbr.rel (0) target = $region33
  $region32: #{lhf_policy_cond_small_forward.1} parent=0 // pred_region
    _
  $region33: #{lhf_policy_cond_small_forward.1} parent=0 // pred_fallthru
    _
  // Predicated region
  $region34: #{lhf_policy_cond_small_forward.1} parent=0 // pred_check
    _
  $region35: #{lhf_policy_cond_small_forward.1} parent=0 // pred_check_branch
    %39 = sbr.rel (0) target = $region37
  $region36: #{lhf_policy_cond_small_forward.1} parent=0 // pred_region
    _
  $region37: #{lhf_policy_cond_small_forward.1} parent=0 // pred_fallthru
    _
  // Predicated region
  $region38: #{lhf_policy_cond_small_forward.1} parent=0 // pred_check
    _
  $region39: #{lhf_policy_cond_small_forward.1} parent=0 // pred_check_branch
    %41 = sbr.rel (0) target = $region41
  $region40: #{lhf_policy_cond_small_forward.1} parent=0 // pred_region
    _
  $region41: #{lhf_policy_cond_small_forward.1} parent=0 // pred_fallthru
    _
  // Predicated region
  $region42: #{lhf_policy_cond_small_forward.1} parent=0 // pred_check
    _
  $region43: #{lhf_policy_cond_small_forward.1} parent=0 // pred_check_branch
    %43 = sbr.rel (0) target = $region45
  $region44: #{lhf_policy_cond_small_forward.1} parent=0 // pred_region
    _
  $region45: #{lhf_policy_cond_small_forward.1} parent=0 // pred_fallthru
    _
  // Predicated region
  $region46: #{lhf_policy_cond_small_forward.1} parent=0 // pred_check
    _
  $region47: #{lhf_policy_cond_small_forward.1} parent=0 // pred_check_branch
    %45 = sbr.rel (0) target = $region49
  $region48: #{lhf_policy_cond_small_forward.1} parent=0 // pred_region
    _
  $region49: #{lhf_policy_cond_small_forward.1} parent=0 // pred_fallthru
    _
  // Predicated region
  $region50: #{lhf_policy_cond_small_forward.1} parent=0 // pred_check
    _
  $region51: #{lhf_policy_cond_small_forward.1} parent=0 // pred_check_branch
    %47 = sbr.rel (0) target = $region53
  $region52: #{lhf_policy_cond_small_forward.1} parent=0 // pred_region
    _
  $region53: #{lhf_policy_cond_small_forward.1} parent=0 // pred_fallthru
    _
  // Predicated region
  $region54: #{lhf_policy_cond_small_forward.1} parent=0 // pred_check
    _
  $region55: #{lhf_policy_cond_small_forward.1} parent=0 // pred_check_branch
    %49 = sbr.rel (0) target = $region57
  $region56: #{lhf_policy_cond_small_forward.1} parent=0 // pred_region
    _
  $region57: #{lhf_policy_cond_small_forward.1} parent=0 // pred_fallthru
    _
  // Predicated region
  $region58: #{lhf_policy_cond_small_forward.1} parent=0 // pred_check
    _
  $region59: #{lhf_policy_cond_small_forward.1} parent=0 // pred_check_branch
    %51 = sbr.rel (0) target = $region61
  $region60: #{lhf_policy_cond_small_forward.1} parent=0 // pred_region
    _
  $region61: #{lhf_policy_cond_small_forward.1} parent=0 // pred_fallthru
    _
  %v53 = vld [vmem:[%s0] sm:$0xf]
  %v54 = vld [vmem:[%s0 + $0x4] sm:$0xf]
  %v55 = vld [vmem:[%s0 + $0x8] sm:$0xf]
  %v56 = vld [vmem:[%s0 + $0xc] sm:$0xf]
  %v57 = vld [vmem:[%s0 + $0x10] sm:$0xf]
  %v58 = vld [vmem:[%s0 + $0x14] sm:$0xf]
  %v59 = vld [vmem:[%s0 + $0x18] sm:$0xf]
  %v60 = vld [vmem:[%s0 + $0x1c] sm:$0xf]
  %v61 = vld [vmem:[%s0 + $0x20] sm:$0xf]
  %v62 = vld [vmem:[%s0 + $0x24] sm:$0xf]
  %v63 = vld [vmem:[%s0 + $0x28] sm:$0xf]
  %v64 = vld [vmem:[%s0 + $0x2c] sm:$0xf]
  %v65 = vld [vmem:[%s0 + $0x30] sm:$0xf]
  %v66 = vld [vmem:[%s0 + $0x34] sm:$0xf]
  %v67 = vld [vmem:[%s0 + $0x38] sm:$0xf]
  %v68 = vld [vmem:[%s0 + $0x3c] sm:$0xf]
  %v69 = vld [vmem:[%s0 + $0x40] sm:$0xf]
  %v70 = vld [vmem:[%s0 + $0x44] sm:$0xf]
  %v71 = vld [vmem:[%s0 + $0x48] sm:$0xf]
  %v72 = vld [vmem:[%s0 + $0x4c] sm:$0xf]
  %v73 = vld [vmem:[%s0 + $0x50] sm:$0xf]
  %v74 = vld [vmem:[%s0 + $0x54] sm:$0xf]
  %v75 = vld [vmem:[%s0 + $0x58] sm:$0xf]
  %v76 = vld [vmem:[%s0 + $0x5c] sm:$0xf]
  %v77 = vld [vmem:[%s0 + $0x60] sm:$0xf]
  %v78 = vld [vmem:[%s0 + $0x64] sm:$0xf]
  %v79 = vld [vmem:[%s0 + $0x68] sm:$0xf]
  %v80 = vld [vmem:[%s0 + $0x6c] sm:$0xf]
  %v81 = vld [vmem:[%s0 + $0x70] sm:$0xf]
  %v82 = vld [vmem:[%s0 + $0x74] sm:$0xf]
  %v83 = vld [vmem:[%s0 + $0x78] sm:$0xf]
  %v84 = vld [vmem:[%s0 + $0x7c] sm:$0xf]
  %v85 = vld [vmem:[%s0 + $0x80] sm:$0xf]
  %v86 = vld [vmem:[%s0 + $0x84] sm:$0xf]
  %v87 = vld [vmem:[%s0 + $0x88] sm:$0xf]
  %v88 = vld [vmem:[%s0 + $0x8c] sm:$0xf]
  %v89 = vld [vmem:[%s0 + $0x90] sm:$0xf]
  %v90 = vld [vmem:[%s0 + $0x94] sm:$0xf]
  %v91 = vld [vmem:[%s0 + $0x98] sm:$0xf]
  %v92 = vld [vmem:[%s0 + $0x9c] sm:$0xf]
  %v93 = vld [vmem:[%s0 + $0xa0] sm:$0xf]
  %v94 = vld [vmem:[%s0 + $0xa4] sm:$0xf]
  %v95 = vld [vmem:[%s0 + $0xa8] sm:$0xf]
  %v96 = vld [vmem:[%s0 + $0xac] sm:$0xf]
  %v97 = vld [vmem:[%s0 + $0xb0] sm:$0xf]
  %v98 = vld [vmem:[%s0 + $0xb4] sm:$0xf]
  %v99 = vld [vmem:[%s0 + $0xb8] sm:$0xf]
  %v100 = vld [vmem:[%s0 + $0xbc] sm:$0xf]
  %v101 = vld [vmem:[%s0 + $0xc0] sm:$0xf]
  %v102 = vld [vmem:[%s0 + $0xc4] sm:$0xf]
  %v103 = vld [vmem:[%s0 + $0xc8] sm:$0xf]
  %v104 = vld [vmem:[%s0 + $0xcc] sm:$0xf]
  %v105 = vld [vmem:[%s0 + $0xd0] sm:$0xf]
  %v106 = vld [vmem:[%s0 + $0xd4] sm:$0xf]
  %v107 = vld [vmem:[%s0 + $0xd8] sm:$0xf]
  %v108 = vld [vmem:[%s0 + $0xdc] sm:$0xf]
  %v109 = vld [vmem:[%s0 + $0xe0] sm:$0xf]
  %v110 = vld [vmem:[%s0 + $0xe4] sm:$0xf]
  %v111 = vld [vmem:[%s0 + $0xe8] sm:$0xf]
  %v112 = vld [vmem:[%s0 + $0xec] sm:$0xf]
  %v113 = vld [vmem:[%s0 + $0xf0] sm:$0xf]
  %v114 = vld [vmem:[%s0 + $0xf4] sm:$0xf]
  %v115 = vld [vmem:[%s0 + $0xf8] sm:$0xf]
  %v116 = vld [vmem:[%s0 + $0xfc] sm:$0xf]
  %v117 = vld [vmem:[%s7] sm:$0xf]
  %v118 = vld [vmem:[%s7 + $0x4] sm:$0xf]
  %v119 = vld [vmem:[%s7 + $0x8] sm:$0xf]
  %v120 = vld [vmem:[%s7 + $0xc] sm:$0xf]
  %v121 = vld [vmem:[%s7 + $0x10] sm:$0xf]
  %v122 = vld [vmem:[%s7 + $0x14] sm:$0xf]
  %v123 = vld [vmem:[%s7 + $0x18] sm:$0xf]
  %v124 = vld [vmem:[%s7 + $0x1c] sm:$0xf]
  %v125 = vld [vmem:[%s7 + $0x20] sm:$0xf]
  %v126 = vld [vmem:[%s7 + $0x24] sm:$0xf]
  %v127 = vld [vmem:[%s7 + $0x28] sm:$0xf]
  %v128 = vld [vmem:[%s7 + $0x2c] sm:$0xf]
  %v129 = vld [vmem:[%s7 + $0x30] sm:$0xf]
  %v130 = vld [vmem:[%s7 + $0x34] sm:$0xf]
  %v131 = vld [vmem:[%s7 + $0x38] sm:$0xf]
  %v132 = vld [vmem:[%s7 + $0x3c] sm:$0xf]
  %v133 = vld [vmem:[%s1] sm:$0xff]
  %v134 = vld [vmem:[%s1 + $0x8] sm:$0xff]
  %v135 = vld [vmem:[%s1 + $0x10] sm:$0xff]
  %v136 = vld [vmem:[%s1 + $0x18] sm:$0xff]
  %v137 = vld [vmem:[%s1 + $0x20] sm:$0xff]
  %v138 = vld [vmem:[%s1 + $0x28] sm:$0xff]
  %v139 = vld [vmem:[%s1 + $0x30] sm:$0xff]
  %v140 = vld [vmem:[%s1 + $0x38] sm:$0xff]
  %v141 = vld [vmem:[%s1 + $0x40] sm:$0xff]
  %v142 = vld [vmem:[%s1 + $0x48] sm:$0xff]
  %v143 = vld [vmem:[%s1 + $0x50] sm:$0xff]
  %v144 = vld [vmem:[%s1 + $0x58] sm:$0xff]
  %v145 = vld [vmem:[%s1 + $0x60] sm:$0xff]
  %v146 = vld [vmem:[%s1 + $0x68] sm:$0xff]
  %v147 = vld [vmem:[%s1 + $0x70] sm:$0xff]
  %v148 = vld [vmem:[%s1 + $0x78] sm:$0xff]
  %v149 = vld [vmem:[%s1 + $0x80] sm:$0xff]
  %v150 = vld [vmem:[%s1 + $0x88] sm:$0xff]
  %v151 = vld [vmem:[%s1 + $0x90] sm:$0xff]
  %v152 = vld [vmem:[%s1 + $0x98] sm:$0xff]
  %v153 = vld [vmem:[%s1 + $0xa0] sm:$0xff]
  %v154 = vld [vmem:[%s1 + $0xa8] sm:$0xff]
  %v155 = vld [vmem:[%s1 + $0xb0] sm:$0xff]
  %v156 = vld [vmem:[%s1 + $0xb8] sm:$0xff]
  %v157 = vld [vmem:[%s1 + $0xc0] sm:$0xff]
  %v158 = vld [vmem:[%s1 + $0xc8] sm:$0xff]
  %v159 = vld [vmem:[%s1 + $0xd0] sm:$0xff]
  %v160 = vld [vmem:[%s1 + $0xd8] sm:$0xff]
  %v161 = vld [vmem:[%s1 + $0xe0] sm:$0xff]
  %v162 = vld [vmem:[%s1 + $0xe8] sm:$0xff]
  %v163 = vld [vmem:[%s1 + $0xf0] sm:$0xff]
  %v164 = vld [vmem:[%s1 + $0xf8] sm:$0xff]
  %v165 = vld [vmem:[%s1 + $0x100] sm:$0xff]
  %v166 = vld [vmem:[%s1 + $0x108] sm:$0xff]
  %v167 = vld [vmem:[%s1 + $0x110] sm:$0xff]
  %v168 = vld [vmem:[%s1 + $0x118] sm:$0xff]
  %v169 = vld [vmem:[%s1 + $0x120] sm:$0xff]
  %v170 = vld [vmem:[%s1 + $0x128] sm:$0xff]
  %v171 = vld [vmem:[%s1 + $0x130] sm:$0xff]
  %v172 = vld [vmem:[%s1 + $0x138] sm:$0xff]
  %v173 = vld [vmem:[%s1 + $0x140] sm:$0xff]
  %v174 = vld [vmem:[%s1 + $0x148] sm:$0xff]
  %v175 = vld [vmem:[%s1 + $0x150] sm:$0xff]
  %v176 = vld [vmem:[%s1 + $0x158] sm:$0xff]
  %v177 = vld [vmem:[%s1 + $0x160] sm:$0xff]
  %v178 = vld [vmem:[%s1 + $0x168] sm:$0xff]
  %v179 = vld [vmem:[%s1 + $0x170] sm:$0xff]
  %v180 = vld [vmem:[%s1 + $0x178] sm:$0xff]
  %v181 = vld [vmem:[%s1 + $0x180] sm:$0xff]
  %v182 = vld [vmem:[%s1 + $0x188] sm:$0xff]
  %v183 = vld [vmem:[%s1 + $0x190] sm:$0xff]
  %v184 = vld [vmem:[%s1 + $0x198] sm:$0xff]
  %v185 = vld [vmem:[%s1 + $0x1a0] sm:$0xff]
  %v186 = vld [vmem:[%s1 + $0x1a8] sm:$0xff]
  %v187 = vld [vmem:[%s1 + $0x1b0] sm:$0xff]
  %v188 = vld [vmem:[%s1 + $0x1b8] sm:$0xff]
  %v189 = vld [vmem:[%s1 + $0x1c0] sm:$0xff]
  %v190 = vld [vmem:[%s1 + $0x1c8] sm:$0xff]
  %v191 = vld [vmem:[%s1 + $0x1d0] sm:$0xff]
  %v192 = vld [vmem:[%s1 + $0x1d8] sm:$0xff]
  %v193 = vld [vmem:[%s1 + $0x1e0] sm:$0xff]
  %v194 = vld [vmem:[%s1 + $0x1e8] sm:$0xff]
  %v195 = vld [vmem:[%s1 + $0x1f0] sm:$0xff]
  %v196 = vld [vmem:[%s1 + $0x1f8] sm:$0xff]
  %v261 = vunpack.c.l.b16 %v53
  %v262 = vunpack.c.l.b16 %v54
  %v263 = vunpack.c.l.b16 %v55
  %v264 = vunpack.c.l.b16 %v56
  %v265 = vunpack.c.l.b16 %v57
  %v266 = vunpack.c.l.b16 %v58
  %v267 = vunpack.c.l.b16 %v59
  %v268 = vunpack.c.l.b16 %v60
  %v269 = vunpack.c.l.b16 %v61
  %v270 = vunpack.c.l.b16 %v62
  %v271 = vunpack.c.l.b16 %v63
  %v272 = vunpack.c.l.b16 %v64
  %v273 = vunpack.c.l.b16 %v65
  %v274 = vunpack.c.l.b16 %v66
  %v275 = vunpack.c.l.b16 %v67
  %v276 = vunpack.c.l.b16 %v68
  %v277 = vunpack.c.l.b16 %v69
  %v278 = vunpack.c.l.b16 %v70
  %v279 = vunpack.c.l.b16 %v71
  %v280 = vunpack.c.l.b16 %v72
  %v281 = vunpack.c.l.b16 %v73
  %v282 = vunpack.c.l.b16 %v74
  %v283 = vunpack.c.l.b16 %v75
  %v284 = vunpack.c.l.b16 %v76
  %v285 = vunpack.c.l.b16 %v77
  %v286 = vunpack.c.l.b16 %v78
  %v287 = vunpack.c.l.b16 %v79
  %v288 = vunpack.c.l.b16 %v80
  %v289 = vunpack.c.l.b16 %v81
  %v290 = vunpack.c.l.b16 %v82
  %v291 = vunpack.c.l.b16 %v83
  %v292 = vunpack.c.l.b16 %v84
  %v293 = vunpack.c.l.b16 %v85
  %v294 = vunpack.c.l.b16 %v86
  %v295 = vunpack.c.l.b16 %v87
  %v296 = vunpack.c.l.b16 %v88
  %v297 = vunpack.c.l.b16 %v89
  %v298 = vunpack.c.l.b16 %v90
  %v299 = vunpack.c.l.b16 %v91
  %v300 = vunpack.c.l.b16 %v92
  %v301 = vunpack.c.l.b16 %v93
  %v302 = vunpack.c.l.b16 %v94
  %v303 = vunpack.c.l.b16 %v95
  %v304 = vunpack.c.l.b16 %v96
  %v305 = vunpack.c.l.b16 %v97
  %v306 = vunpack.c.l.b16 %v98
  %v307 = vunpack.c.l.b16 %v99
  %v308 = vunpack.c.l.b16 %v100
  %v309 = vunpack.c.l.b16 %v101
  %v310 = vunpack.c.l.b16 %v102
  %v311 = vunpack.c.l.b16 %v103
  %v312 = vunpack.c.l.b16 %v104
  %v313 = vunpack.c.l.b16 %v105
  %v314 = vunpack.c.l.b16 %v106
  %v315 = vunpack.c.l.b16 %v107
  %v316 = vunpack.c.l.b16 %v108
  %v317 = vunpack.c.l.b16 %v109
  %v318 = vunpack.c.l.b16 %v110
  %v319 = vunpack.c.l.b16 %v111
  %v320 = vunpack.c.l.b16 %v112
  %v321 = vunpack.c.l.b16 %v113
  %v322 = vunpack.c.l.b16 %v114
  %v323 = vunpack.c.l.b16 %v115
  %v324 = vunpack.c.l.b16 %v116
  %v325 = vpack.c.b16 %v262, %v261
  %v326 = vpack.c.b16 %v264, %v263
  %v327 = vpack.c.b16 %v266, %v265
  %v328 = vpack.c.b16 %v268, %v267
  %v329 = vpack.c.b16 %v270, %v269
  %v330 = vpack.c.b16 %v272, %v271
  %v331 = vpack.c.b16 %v274, %v273
  %v332 = vpack.c.b16 %v276, %v275
  %v333 = vpack.c.b16 %v278, %v277
  %v334 = vpack.c.b16 %v280, %v279
  %v335 = vpack.c.b16 %v282, %v281
  %v336 = vpack.c.b16 %v284, %v283
  %v337 = vpack.c.b16 %v286, %v285
  %v338 = vpack.c.b16 %v288, %v287
  %v339 = vpack.c.b16 %v290, %v289
  %v340 = vpack.c.b16 %v292, %v291
  %v341 = vpack.c.b16 %v294, %v293
  %v342 = vpack.c.b16 %v296, %v295
  %v343 = vpack.c.b16 %v298, %v297
  %v344 = vpack.c.b16 %v300, %v299
  %v345 = vpack.c.b16 %v302, %v301
  %v346 = vpack.c.b16 %v304, %v303
  %v347 = vpack.c.b16 %v306, %v305
  %v348 = vpack.c.b16 %v308, %v307
  %v349 = vpack.c.b16 %v310, %v309
  %v350 = vpack.c.b16 %v312, %v311
  %v351 = vpack.c.b16 %v314, %v313
  %v352 = vpack.c.b16 %v316, %v315
  %v353 = vpack.c.b16 %v318, %v317
  %v354 = vpack.c.b16 %v320, %v319
  %v355 = vpack.c.b16 %v322, %v321
  %v356 = vpack.c.b16 %v324, %v323
  %v405 = vunpack.c.l.b16 %v117
  %v406 = vunpack.c.l.b16 %v118
  %v407 = vunpack.c.l.b16 %v119
  %v408 = vunpack.c.l.b16 %v120
  %v409 = vunpack.c.l.b16 %v121
  %v410 = vunpack.c.l.b16 %v122
  %v411 = vunpack.c.l.b16 %v123
  %v412 = vunpack.c.l.b16 %v124
  %v413 = vunpack.c.l.b16 %v125
  %v414 = vunpack.c.l.b16 %v126
  %v415 = vunpack.c.l.b16 %v127
  %v416 = vunpack.c.l.b16 %v128
  %v417 = vunpack.c.l.b16 %v129
  %v418 = vunpack.c.l.b16 %v130
  %v419 = vunpack.c.l.b16 %v131
  %v420 = vunpack.c.l.b16 %v132
  %v421 = vpack.c.b16 %v406, %v405
  %v422 = vpack.c.b16 %v408, %v407
  %v423 = vpack.c.b16 %v410, %v409
  %v424 = vpack.c.b16 %v412, %v411
  %v425 = vpack.c.b16 %v414, %v413
  %v426 = vpack.c.b16 %v416, %v415
  %v427 = vpack.c.b16 %v418, %v417
  %v428 = vpack.c.b16 %v420, %v419
  %437 = vmatprep.subr.bf16.mxu0 0
  %438 = vmatpush1.bf16.msra.mxu0 %v421
  %439 = vmatprep.subr.bf16.mxu0 0
  %440 = vmatpush1.bf16.msra.mxu0 %v422
  %441 = vmatprep.subr.bf16.mxu0 0
  %442 = vmatpush1.bf16.msra.mxu0 %v423
  %443 = vmatprep.subr.bf16.mxu0 0
  %444 = vmatpush1.bf16.msra.mxu0 %v424
  %445 = vmatprep.subr.bf16.mxu0 0
  %446 = vmatpush1.bf16.msra.mxu0 %v425
  %447 = vmatprep.subr.bf16.mxu0 0
  %448 = vmatpush1.bf16.msra.mxu0 %v426
  %449 = vmatprep.subr.bf16.mxu0 0
  %450 = vmatpush1.bf16.msra.mxu0 %v427
  %451 = vmatprep.subr.bf16.mxu0 0
  %452 = vmatpush1.bf16.msra.mxu0 %v428
  %453 = vmatprep.subr.bf16.mxu0 0
  %454 = vmatpush1.bf16.msra.mxu0 0
  %455 = vmatprep.subr.bf16.mxu0 0
  %456 = vmatpush1.bf16.msra.mxu0 0
  %457 = vmatprep.subr.bf16.mxu0 0
  %458 = vmatpush1.bf16.msra.mxu0 0
  %459 = vmatprep.subr.bf16.mxu0 0
  %460 = vmatpush1.bf16.msra.mxu0 0
  %461 = vmatprep.subr.bf16.mxu0 0
  %462 = vmatpush1.bf16.msra.mxu0 0
  %463 = vmatprep.subr.bf16.mxu0 0
  %464 = vmatpush1.bf16.msra.mxu0 0
  %465 = vmatprep.subr.bf16.mxu0 0
  %466 = vmatpush1.bf16.msra.mxu0 0
  %467 = vmatprep.subr.bf16.mxu0 0
  %468 = vmatpush1.bf16.msra.mxu0 0
  %469 = vmatprep.mubr.bf16.mxu0 0
  %470 = vmatmul.mubr.bf16.gmra.mrb[0].mxu0 %v325
  %v471 = vpop.f32.mrb[0].mxu0
  %v472 = vadd.f32 %v133, %v471
  %v473 = vpop.f32.mrb[0].mxu0
  %v474 = vpop.f32.mrb[0].mxu0
  %v475 = vadd.f32 %v134, %v474
  %v476 = vpop.f32.mrb[0].mxu0
  %477 = vmatprep.mubr.bf16.mxu0 0
  %478 = vmatmul.mubr.bf16.gmra.mrb[0].mxu0 %v326
  %v479 = vpop.f32.mrb[0].mxu0
  %v480 = vadd.f32 %v135, %v479
  %v481 = vpop.f32.mrb[0].mxu0
  %v482 = vpop.f32.mrb[0].mxu0
  %v483 = vadd.f32 %v136, %v482
  %v484 = vpop.f32.mrb[0].mxu0
  %485 = vmatprep.mubr.bf16.mxu0 0
  %486 = vmatmul.mubr.bf16.gmra.mrb[0].mxu0 %v327
  %v487 = vpop.f32.mrb[0].mxu0
  %v488 = vadd.f32 %v137, %v487
  %v489 = vpop.f32.mrb[0].mxu0
  %v490 = vpop.f32.mrb[0].mxu0
  %v491 = vadd.f32 %v138, %v490
  %v492 = vpop.f32.mrb[0].mxu0
  %493 = vmatprep.mubr.bf16.mxu0 0
  %494 = vmatmul.mubr.bf16.gmra.mrb[0].mxu0 %v328
  %v495 = vpop.f32.mrb[0].mxu0
  %v496 = vadd.f32 %v139, %v495
  %v497 = vpop.f32.mrb[0].mxu0
  %v498 = vpop.f32.mrb[0].mxu0
  %v499 = vadd.f32 %v140, %v498
  %v500 = vpop.f32.mrb[0].mxu0
  %501 = vmatprep.mubr.bf16.mxu0 0
  %502 = vmatmul.mubr.bf16.gmra.mrb[0].mxu0 %v329
  %v503 = vpop.f32.mrb[0].mxu0
  %v504 = vadd.f32 %v141, %v503
  %v505 = vpop.f32.mrb[0].mxu0
  %v506 = vpop.f32.mrb[0].mxu0
  %v507 = vadd.f32 %v142, %v506
  %v508 = vpop.f32.mrb[0].mxu0
  %509 = vmatprep.mubr.bf16.mxu0 0
  %510 = vmatmul.mubr.bf16.gmra.mrb[0].mxu0 %v330
  %v511 = vpop.f32.mrb[0].mxu0
  %v512 = vadd.f32 %v143, %v511
  %v513 = vpop.f32.mrb[0].mxu0
  %v514 = vpop.f32.mrb[0].mxu0
  %v515 = vadd.f32 %v144, %v514
  %v516 = vpop.f32.mrb[0].mxu0
  %517 = vmatprep.mubr.bf16.mxu0 0
  %518 = vmatmul.mubr.bf16.gmra.mrb[0].mxu0 %v331
  %v519 = vpop.f32.mrb[0].mxu0
  %v520 = vadd.f32 %v145, %v519
  %v521 = vpop.f32.mrb[0].mxu0
  %v522 = vpop.f32.mrb[0].mxu0
  %v523 = vadd.f32 %v146, %v522
  %v524 = vpop.f32.mrb[0].mxu0
  %525 = vmatprep.mubr.bf16.mxu0 0
  %526 = vmatmul.mubr.bf16.gmra.mrb[0].mxu0 %v332
  %v527 = vpop.f32.mrb[0].mxu0
  %v528 = vadd.f32 %v147, %v527
  %v529 = vpop.f32.mrb[0].mxu0
  %v530 = vpop.f32.mrb[0].mxu0
  %v531 = vadd.f32 %v148, %v530
  %v532 = vpop.f32.mrb[0].mxu0
  %533 = vmatprep.mubr.bf16.mxu0 0
  %534 = vmatmul.mubr.bf16.gmra.mrb[0].mxu0 %v333
  %v535 = vpop.f32.mrb[0].mxu0
  %v536 = vadd.f32 %v149, %v535
  %v537 = vpop.f32.mrb[0].mxu0
  %v538 = vpop.f32.mrb[0].mxu0
  %v539 = vadd.f32 %v150, %v538
  %v540 = vpop.f32.mrb[0].mxu0
  %541 = vmatprep.mubr.bf16.mxu0 0
  %542 = vmatmul.mubr.bf16.gmra.mrb[0].mxu0 %v334
  %v543 = vpop.f32.mrb[0].mxu0
  %v544 = vadd.f32 %v151, %v543
  %v545 = vpop.f32.mrb[0].mxu0
  %v546 = vpop.f32.mrb[0].mxu0
  %v547 = vadd.f32 %v152, %v546
  %v548 = vpop.f32.mrb[0].mxu0
  %549 = vmatprep.mubr.bf16.mxu0 0
  %550 = vmatmul.mubr.bf16.gmra.mrb[0].mxu0 %v335
  %v551 = vpop.f32.mrb[0].mxu0
  %v552 = vadd.f32 %v153, %v551
  %v553 = vpop.f32.mrb[0].mxu0
  %v554 = vpop.f32.mrb[0].mxu0
  %v555 = vadd.f32 %v154, %v554
  %v556 = vpop.f32.mrb[0].mxu0
  %557 = vmatprep.mubr.bf16.mxu0 0
  %558 = vmatmul.mubr.bf16.gmra.mrb[0].mxu0 %v336
  %v559 = vpop.f32.mrb[0].mxu0
  %v560 = vadd.f32 %v155, %v559
  %v561 = vpop.f32.mrb[0].mxu0
  %v562 = vpop.f32.mrb[0].mxu0
  %v563 = vadd.f32 %v156, %v562
  %v564 = vpop.f32.mrb[0].mxu0
  %565 = vmatprep.mubr.bf16.mxu0 0
  %566 = vmatmul.mubr.bf16.gmra.mrb[0].mxu0 %v337
  %v567 = vpop.f32.mrb[0].mxu0
  %v568 = vadd.f32 %v157, %v567
  %v569 = vpop.f32.mrb[0].mxu0
  %v570 = vpop.f32.mrb[0].mxu0
  %v571 = vadd.f32 %v158, %v570
  %v572 = vpop.f32.mrb[0].mxu0
  %573 = vmatprep.mubr.bf16.mxu0 0
  %574 = vmatmul.mubr.bf16.gmra.mrb[0].mxu0 %v338
  %v575 = vpop.f32.mrb[0].mxu0
  %v576 = vadd.f32 %v159, %v575
  %v577 = vpop.f32.mrb[0].mxu0
  %v578 = vpop.f32.mrb[0].mxu0
  %v579 = vadd.f32 %v160, %v578
  %v580 = vpop.f32.mrb[0].mxu0
  %581 = vmatprep.mubr.bf16.mxu0 0
  %582 = vmatmul.mubr.bf16.gmra.mrb[0].mxu0 %v339
  %v583 = vpop.f32.mrb[0].mxu0
  %v584 = vadd.f32 %v161, %v583
  %v585 = vpop.f32.mrb[0].mxu0
  %v586 = vpop.f32.mrb[0].mxu0
  %v587 = vadd.f32 %v162, %v586
  %v588 = vpop.f32.mrb[0].mxu0
  %589 = vmatprep.mubr.bf16.mxu0 0
  %590 = vmatmul.mubr.bf16.gmra.mrb[0].mxu0 %v340
  %v591 = vpop.f32.mrb[0].mxu0
  %v592 = vadd.f32 %v163, %v591
  %v593 = vpop.f32.mrb[0].mxu0
  %v594 = vpop.f32.mrb[0].mxu0
  %v595 = vadd.f32 %v164, %v594
  %v596 = vpop.f32.mrb[0].mxu0
  %597 = vmatprep.mubr.bf16.mxu0 0
  %598 = vmatmul.mubr.bf16.gmra.mrb[0].mxu0 %v341
  %v599 = vpop.f32.mrb[0].mxu0
  %v600 = vadd.f32 %v165, %v599
  %v601 = vpop.f32.mrb[0].mxu0
  %v602 = vpop.f32.mrb[0].mxu0
  %v603 = vadd.f32 %v166, %v602
  %v604 = vpop.f32.mrb[0].mxu0
  %605 = vmatprep.mubr.bf16.mxu0 0
  %606 = vmatmul.mubr.bf16.gmra.mrb[0].mxu0 %v342
  %v607 = vpop.f32.mrb[0].mxu0
  %v608 = vadd.f32 %v167, %v607
  %v609 = vpop.f32.mrb[0].mxu0
  %v610 = vpop.f32.mrb[0].mxu0
  %v611 = vadd.f32 %v168, %v610
  %v612 = vpop.f32.mrb[0].mxu0
  %613 = vmatprep.mubr.bf16.mxu0 0
  %614 = vmatmul.mubr.bf16.gmra.mrb[0].mxu0 %v343
  %v615 = vpop.f32.mrb[0].mxu0
  %v616 = vadd.f32 %v169, %v615
  %v617 = vpop.f32.mrb[0].mxu0
  %v618 = vpop.f32.mrb[0].mxu0
  %v619 = vadd.f32 %v170, %v618
  %v620 = vpop.f32.mrb[0].mxu0
  %621 = vmatprep.mubr.bf16.mxu0 0
  %622 = vmatmul.mubr.bf16.gmra.mrb[0].mxu0 %v344
  %v623 = vpop.f32.mrb[0].mxu0
  %v624 = vadd.f32 %v171, %v623
  %v625 = vpop.f32.mrb[0].mxu0
  %v626 = vpop.f32.mrb[0].mxu0
  %v627 = vadd.f32 %v172, %v626
  %v628 = vpop.f32.mrb[0].mxu0
  %629 = vmatprep.mubr.bf16.mxu0 0
  %630 = vmatmul.mubr.bf16.gmra.mrb[0].mxu0 %v345
  %v631 = vpop.f32.mrb[0].mxu0
  %v632 = vadd.f32 %v173, %v631
  %v633 = vpop.f32.mrb[0].mxu0
  %v634 = vpop.f32.mrb[0].mxu0
  %v635 = vadd.f32 %v174, %v634
  %v636 = vpop.f32.mrb[0].mxu0
  %637 = vmatprep.mubr.bf16.mxu0 0
  %638 = vmatmul.mubr.bf16.gmra.mrb[0].mxu0 %v346
  %v639 = vpop.f32.mrb[0].mxu0
  %v640 = vadd.f32 %v175, %v639
  %v641 = vpop.f32.mrb[0].mxu0
  %v642 = vpop.f32.mrb[0].mxu0
  %v643 = vadd.f32 %v176, %v642
  %v644 = vpop.f32.mrb[0].mxu0
  %645 = vmatprep.mubr.bf16.mxu0 0
  %646 = vmatmul.mubr.bf16.gmra.mrb[0].mxu0 %v347
  %v647 = vpop.f32.mrb[0].mxu0
  %v648 = vadd.f32 %v177, %v647
  %v649 = vpop.f32.mrb[0].mxu0
  %v650 = vpop.f32.mrb[0].mxu0
  %v651 = vadd.f32 %v178, %v650
  %v652 = vpop.f32.mrb[0].mxu0
  %653 = vmatprep.mubr.bf16.mxu0 0
  %654 = vmatmul.mubr.bf16.gmra.mrb[0].mxu0 %v348
  %v655 = vpop.f32.mrb[0].mxu0
  %v656 = vadd.f32 %v179, %v655
  %v657 = vpop.f32.mrb[0].mxu0
  %v658 = vpop.f32.mrb[0].mxu0
  %v659 = vadd.f32 %v180, %v658
  %v660 = vpop.f32.mrb[0].mxu0
  %661 = vmatprep.mubr.bf16.mxu0 0
  %662 = vmatmul.mubr.bf16.gmra.mrb[0].mxu0 %v349
  %v663 = vpop.f32.mrb[0].mxu0
  %v664 = vadd.f32 %v181, %v663
  %v665 = vpop.f32.mrb[0].mxu0
  %v666 = vpop.f32.mrb[0].mxu0
  %v667 = vadd.f32 %v182, %v666
  %v668 = vpop.f32.mrb[0].mxu0
  %669 = vmatprep.mubr.bf16.mxu0 0
  %670 = vmatmul.mubr.bf16.gmra.mrb[0].mxu0 %v350
  %v671 = vpop.f32.mrb[0].mxu0
  %v672 = vadd.f32 %v183, %v671
  %v673 = vpop.f32.mrb[0].mxu0
  %v674 = vpop.f32.mrb[0].mxu0
  %v675 = vadd.f32 %v184, %v674
  %v676 = vpop.f32.mrb[0].mxu0
  %677 = vmatprep.mubr.bf16.mxu0 0
  %678 = vmatmul.mubr.bf16.gmra.mrb[0].mxu0 %v351
  %v679 = vpop.f32.mrb[0].mxu0
  %v680 = vadd.f32 %v185, %v679
  %v681 = vpop.f32.mrb[0].mxu0
  %v682 = vpop.f32.mrb[0].mxu0
  %v683 = vadd.f32 %v186, %v682
  %v684 = vpop.f32.mrb[0].mxu0
  %685 = vmatprep.mubr.bf16.mxu0 0
  %686 = vmatmul.mubr.bf16.gmra.mrb[0].mxu0 %v352
  %v687 = vpop.f32.mrb[0].mxu0
  %v688 = vadd.f32 %v187, %v687
  %v689 = vpop.f32.mrb[0].mxu0
  %v690 = vpop.f32.mrb[0].mxu0
  %v691 = vadd.f32 %v188, %v690
  %v692 = vpop.f32.mrb[0].mxu0
  %693 = vmatprep.mubr.bf16.mxu0 0
  %694 = vmatmul.mubr.bf16.gmra.mrb[0].mxu0 %v353
  %v695 = vpop.f32.mrb[0].mxu0
  %v696 = vadd.f32 %v189, %v695
  %v697 = vpop.f32.mrb[0].mxu0
  %v698 = vpop.f32.mrb[0].mxu0
  %v699 = vadd.f32 %v190, %v698
  %v700 = vpop.f32.mrb[0].mxu0
  %701 = vmatprep.mubr.bf16.mxu0 0
  %702 = vmatmul.mubr.bf16.gmra.mrb[0].mxu0 %v354
  %v703 = vpop.f32.mrb[0].mxu0
  %v704 = vadd.f32 %v191, %v703
  %v705 = vpop.f32.mrb[0].mxu0
  %v706 = vpop.f32.mrb[0].mxu0
  %v707 = vadd.f32 %v192, %v706
  %v708 = vpop.f32.mrb[0].mxu0
  %709 = vmatprep.mubr.bf16.mxu0 0
  %710 = vmatmul.mubr.bf16.gmra.mrb[0].mxu0 %v355
  %v711 = vpop.f32.mrb[0].mxu0
  %v712 = vadd.f32 %v193, %v711
  %v713 = vpop.f32.mrb[0].mxu0
  %v714 = vpop.f32.mrb[0].mxu0
  %v715 = vadd.f32 %v194, %v714
  %v716 = vpop.f32.mrb[0].mxu0
  %717 = vmatprep.mubr.bf16.mxu0 0
  %718 = vmatmul.mubr.bf16.gmra.mrb[0].mxu0 %v356
  %v719 = vpop.f32.mrb[0].mxu0
  %v720 = vadd.f32 %v195, %v719
  %v721 = vpop.f32.mrb[0].mxu0
  %v722 = vpop.f32.mrb[0].mxu0
  %v723 = vadd.f32 %v196, %v722
  %v724 = vpop.f32.mrb[0].mxu0
  %725 = vdwg.mxu0
  %v726 = vmax.f32 %v472, 0.0
  %v727 = vmax.f32 %v475, 0.0
  %v728 = vmax.f32 %v480, 0.0
  %v729 = vmax.f32 %v483, 0.0
  %v730 = vmax.f32 %v488, 0.0
  %v731 = vmax.f32 %v491, 0.0
  %v732 = vmax.f32 %v496, 0.0
  %v733 = vmax.f32 %v499, 0.0
  %v734 = vmax.f32 %v504, 0.0
  %v735 = vmax.f32 %v507, 0.0
  %v736 = vmax.f32 %v512, 0.0
  %v737 = vmax.f32 %v515, 0.0
  %v738 = vmax.f32 %v520, 0.0
  %v739 = vmax.f32 %v523, 0.0
  %v740 = vmax.f32 %v528, 0.0
  %v741 = vmax.f32 %v531, 0.0
  %v742 = vmax.f32 %v536, 0.0
  %v743 = vmax.f32 %v539, 0.0
  %v744 = vmax.f32 %v544, 0.0
  %v745 = vmax.f32 %v547, 0.0
  %v746 = vmax.f32 %v552, 0.0
  %v747 = vmax.f32 %v555, 0.0
  %v748 = vmax.f32 %v560, 0.0
  %v749 = vmax.f32 %v563, 0.0
  %v750 = vmax.f32 %v568, 0.0
  %v751 = vmax.f32 %v571, 0.0
  %v752 = vmax.f32 %v576, 0.0
  %v753 = vmax.f32 %v579, 0.0
  %v754 = vmax.f32 %v584, 0.0
  %v755 = vmax.f32 %v587, 0.0
  %v756 = vmax.f32 %v592, 0.0
  %v757 = vmax.f32 %v595, 0.0
  %v758 = vmax.f32 %v600, 0.0
  %v759 = vmax.f32 %v603, 0.0
  %v760 = vmax.f32 %v608, 0.0
  %v761 = vmax.f32 %v611, 0.0
  %v762 = vmax.f32 %v616, 0.0
  %v763 = vmax.f32 %v619, 0.0
  %v764 = vmax.f32 %v624, 0.0
  %v765 = vmax.f32 %v627, 0.0
  %v766 = vmax.f32 %v632, 0.0
  %v767 = vmax.f32 %v635, 0.0
  %v768 = vmax.f32 %v640, 0.0
  %v769 = vmax.f32 %v643, 0.0
  %v770 = vmax.f32 %v648, 0.0
  %v771 = vmax.f32 %v651, 0.0
  %v772 = vmax.f32 %v656, 0.0
  %v773 = vmax.f32 %v659, 0.0
  %v774 = vmax.f32 %v664, 0.0
  %v775 = vmax.f32 %v667, 0.0
  %v776 = vmax.f32 %v672, 0.0
  %v777 = vmax.f32 %v675, 0.0
  %v778 = vmax.f32 %v680, 0.0
  %v779 = vmax.f32 %v683, 0.0
  %v780 = vmax.f32 %v688, 0.0
  %v781 = vmax.f32 %v691, 0.0
  %v782 = vmax.f32 %v696, 0.0
  %v783 = vmax.f32 %v699, 0.0
  %v784 = vmax.f32 %v704, 0.0
  %v785 = vmax.f32 %v707, 0.0
  %v786 = vmax.f32 %v712, 0.0
  %v787 = vmax.f32 %v715, 0.0
  %v788 = vmax.f32 %v720, 0.0
  %v789 = vmax.f32 %v723, 0.0
  %v790 = vpack.c.bf16 %v727, %v726
  %v791 = vpack.c.bf16 %v729, %v728
  %v792 = vpack.c.bf16 %v731, %v730
  %v793 = vpack.c.bf16 %v733, %v732
  %v794 = vpack.c.bf16 %v735, %v734
  %v795 = vpack.c.bf16 %v737, %v736
  %v796 = vpack.c.bf16 %v739, %v738
  %v797 = vpack.c.bf16 %v741, %v740
  %v798 = vpack.c.bf16 %v743, %v742
  %v799 = vpack.c.bf16 %v745, %v744
  %v800 = vpack.c.bf16 %v747, %v746
  %v801 = vpack.c.bf16 %v749, %v748
  %v802 = vpack.c.bf16 %v751, %v750
  %v803 = vpack.c.bf16 %v753, %v752
  %v804 = vpack.c.bf16 %v755, %v754
  %v805 = vpack.c.bf16 %v757, %v756
  %v806 = vpack.c.bf16 %v759, %v758
  %v807 = vpack.c.bf16 %v761, %v760
  %v808 = vpack.c.bf16 %v763, %v762
  %v809 = vpack.c.bf16 %v765, %v764
  %v810 = vpack.c.bf16 %v767, %v766
  %v811 = vpack.c.bf16 %v769, %v768
  %v812 = vpack.c.bf16 %v771, %v770
  %v813 = vpack.c.bf16 %v773, %v772
  %v814 = vpack.c.bf16 %v775, %v774
  %v815 = vpack.c.bf16 %v777, %v776
  %v816 = vpack.c.bf16 %v779, %v778
  %v817 = vpack.c.bf16 %v781, %v780
  %v818 = vpack.c.bf16 %v783, %v782
  %v819 = vpack.c.bf16 %v785, %v784
  %v820 = vpack.c.bf16 %v787, %v786
  %v821 = vpack.c.bf16 %v789, %v788
  %v823 = vshrl.u32 0, 16
  %v825 = vrot.slane %v823, 7
  %v826 = vshll.u32 0, 16
  %v828 = vor.u32 %v825, %v826
  %v830 = vshrl.u32 %v790, 16
  %v832 = vrot.slane %v830, 7
  %v833 = vshll.u32 %v790, 16
  %v835 = vor.u32 %v832, %v833
  %v837 = vshrl.u32 %v791, 16
  %v839 = vrot.slane %v837, 7
  %v840 = vshll.u32 %v791, 16
  %v842 = vor.u32 %v839, %v840
  %v844 = vshrl.u32 %v792, 16
  %v846 = vrot.slane %v844, 7
  %v847 = vshll.u32 %v792, 16
  %v849 = vor.u32 %v846, %v847
  %v851 = vshrl.u32 %v793, 16
  %v853 = vrot.slane %v851, 7
  %v854 = vshll.u32 %v793, 16
  %v856 = vor.u32 %v853, %v854
  %v858 = vshrl.u32 %v794, 16
  %v860 = vrot.slane %v858, 7
  %v861 = vshll.u32 %v794, 16
  %v863 = vor.u32 %v860, %v861
  %v865 = vshrl.u32 %v795, 16
  %v867 = vrot.slane %v865, 7
  %v868 = vshll.u32 %v795, 16
  %v870 = vor.u32 %v867, %v868
  %v872 = vshrl.u32 %v796, 16
  %v874 = vrot.slane %v872, 7
  %v875 = vshll.u32 %v796, 16
  %v877 = vor.u32 %v874, %v875
  %v879 = vshrl.u32 %v797, 16
  %v881 = vrot.slane %v879, 7
  %v882 = vshll.u32 %v797, 16
  %v884 = vor.u32 %v881, %v882
  %v886 = vshrl.u32 %v798, 16
  %v888 = vrot.slane %v886, 7
  %v889 = vshll.u32 %v798, 16
  %v891 = vor.u32 %v888, %v889
  %v893 = vshrl.u32 %v799, 16
  %v895 = vrot.slane %v893, 7
  %v896 = vshll.u32 %v799, 16
  %v898 = vor.u32 %v895, %v896
  %v900 = vshrl.u32 %v800, 16
  %v902 = vrot.slane %v900, 7
  %v903 = vshll.u32 %v800, 16
  %v905 = vor.u32 %v902, %v903
  %v907 = vshrl.u32 %v801, 16
  %v909 = vrot.slane %v907, 7
  %v910 = vshll.u32 %v801, 16
  %v912 = vor.u32 %v909, %v910
  %v914 = vshrl.u32 %v802, 16
  %v916 = vrot.slane %v914, 7
  %v917 = vshll.u32 %v802, 16
  %v919 = vor.u32 %v916, %v917
  %v921 = vshrl.u32 %v803, 16
  %v923 = vrot.slane %v921, 7
  %v924 = vshll.u32 %v803, 16
  %v926 = vor.u32 %v923, %v924
  %v928 = vshrl.u32 %v804, 16
  %v930 = vrot.slane %v928, 7
  %v931 = vshll.u32 %v804, 16
  %v933 = vor.u32 %v930, %v931
  %v935 = vshrl.u32 %v805, 16
  %v937 = vrot.slane %v935, 7
  %v938 = vshll.u32 %v805, 16
  %v940 = vor.u32 %v937, %v938
  %v942 = vshrl.u32 %v806, 16
  %v944 = vrot.slane %v942, 7
  %v945 = vshll.u32 %v806, 16
  %v947 = vor.u32 %v944, %v945
  %v949 = vshrl.u32 %v807, 16
  %v951 = vrot.slane %v949, 7
  %v952 = vshll.u32 %v807, 16
  %v954 = vor.u32 %v951, %v952
  %v956 = vshrl.u32 %v808, 16
  %v958 = vrot.slane %v956, 7
  %v959 = vshll.u32 %v808, 16
  %v961 = vor.u32 %v958, %v959
  %v963 = vshrl.u32 %v809, 16
  %v965 = vrot.slane %v963, 7
  %v966 = vshll.u32 %v809, 16
  %v968 = vor.u32 %v965, %v966
  %v970 = vshrl.u32 %v810, 16
  %v972 = vrot.slane %v970, 7
  %v973 = vshll.u32 %v810, 16
  %v975 = vor.u32 %v972, %v973
  %v977 = vshrl.u32 %v811, 16
  %v979 = vrot.slane %v977, 7
  %v980 = vshll.u32 %v811, 16
  %v982 = vor.u32 %v979, %v980
  %v984 = vshrl.u32 %v812, 16
  %v986 = vrot.slane %v984, 7
  %v987 = vshll.u32 %v812, 16
  %v989 = vor.u32 %v986, %v987
  %v991 = vshrl.u32 %v813, 16
  %v993 = vrot.slane %v991, 7
  %v994 = vshll.u32 %v813, 16
  %v996 = vor.u32 %v993, %v994
  %v998 = vshrl.u32 %v814, 16
  %v1000 = vrot.slane %v998, 7
  %v1001 = vshll.u32 %v814, 16
  %v1003 = vor.u32 %v1000, %v1001
  %v1005 = vshrl.u32 %v815, 16
  %v1007 = vrot.slane %v1005, 7
  %v1008 = vshll.u32 %v815, 16
  %v1010 = vor.u32 %v1007, %v1008
  %v1012 = vshrl.u32 %v816, 16
  %v1014 = vrot.slane %v1012, 7
  %v1015 = vshll.u32 %v816, 16
  %v1017 = vor.u32 %v1014, %v1015
  %v1019 = vshrl.u32 %v817, 16
  %v1021 = vrot.slane %v1019, 7
  %v1022 = vshll.u32 %v817, 16
  %v1024 = vor.u32 %v1021, %v1022
  %v1026 = vshrl.u32 %v818, 16
  %v1028 = vrot.slane %v1026, 7
  %v1029 = vshll.u32 %v818, 16
  %v1031 = vor.u32 %v1028, %v1029
  %v1033 = vshrl.u32 %v819, 16
  %v1035 = vrot.slane %v1033, 7
  %v1036 = vshll.u32 %v819, 16
  %v1038 = vor.u32 %v1035, %v1036
  %v1040 = vshrl.u32 %v820, 16
  %v1042 = vrot.slane %v1040, 7
  %v1043 = vshll.u32 %v820, 16
  %v1045 = vor.u32 %v1042, %v1043
  %v1047 = vshrl.u32 %v821, 16
  %v1049 = vrot.slane %v1047, 7
  %v1050 = vshll.u32 %v821, 16
  %v1052 = vor.u32 %v1049, %v1050
  %vm1119 = vcmask 1040384
  %vm1120 = vsmask.f32 256
  %vm1121 = vmand %vm1119, %vm1120
  %v1122 = vsel %vm1121, 0, %v828
  %v1123 = vsel %vm1121, 0, %v835
  %v1124 = vsel %vm1121, 0, %v842
  %v1125 = vsel %vm1121, 0, %v849
  %v1126 = vsel %vm1121, 0, %v856
  %v1127 = vsel %vm1121, 0, %v863
  %v1128 = vsel %vm1121, 0, %v870
  %v1129 = vsel %vm1121, 0, %v877
  %v1130 = vsel %vm1121, 0, %v884
  %v1131 = vsel %vm1121, 0, %v891
  %v1132 = vsel %vm1121, 0, %v898
  %v1133 = vsel %vm1121, 0, %v905
  %v1134 = vsel %vm1121, 0, %v912
  %v1135 = vsel %vm1121, 0, %v919
  %v1136 = vsel %vm1121, 0, %v926
  %v1137 = vsel %vm1121, 0, %v933
  %v1138 = vsel %vm1121, 0, %v940
  %v1139 = vsel %vm1121, 0, %v947
  %v1140 = vsel %vm1121, 0, %v954
  %v1141 = vsel %vm1121, 0, %v961
  %v1142 = vsel %vm1121, 0, %v968
  %v1143 = vsel %vm1121, 0, %v975
  %v1144 = vsel %vm1121, 0, %v982
  %v1145 = vsel %vm1121, 0, %v989
  %v1146 = vsel %vm1121, 0, %v996
  %v1147 = vsel %vm1121, 0, %v1003
  %v1148 = vsel %vm1121, 0, %v1010
  %v1149 = vsel %vm1121, 0, %v1017
  %v1150 = vsel %vm1121, 0, %v1024
  %v1151 = vsel %vm1121, 0, %v1031
  %v1152 = vsel %vm1121, 0, %v1038
  %v1153 = vsel %vm1121, 0, %v1045
  %v1154 = vsel %vm1121, 0, %v1052
  %v1155 = vsel %vm1121, %v825, 0
  %v1156 = vsel %vm1121, %v832, 0
  %v1157 = vsel %vm1121, %v839, 0
  %v1158 = vsel %vm1121, %v846, 0
  %v1159 = vsel %vm1121, %v853, 0
  %v1160 = vsel %vm1121, %v860, 0
  %v1161 = vsel %vm1121, %v867, 0
  %v1162 = vsel %vm1121, %v874, 0
  %v1163 = vsel %vm1121, %v881, 0
  %v1164 = vsel %vm1121, %v888, 0
  %v1165 = vsel %vm1121, %v895, 0
  %v1166 = vsel %vm1121, %v902, 0
  %v1167 = vsel %vm1121, %v909, 0
  %v1168 = vsel %vm1121, %v916, 0
  %v1169 = vsel %vm1121, %v923, 0
  %v1170 = vsel %vm1121, %v930, 0
  %v1171 = vsel %vm1121, %v937, 0
  %v1172 = vsel %vm1121, %v944, 0
  %v1173 = vsel %vm1121, %v951, 0
  %v1174 = vsel %vm1121, %v958, 0
  %v1175 = vsel %vm1121, %v965, 0
  %v1176 = vsel %vm1121, %v972, 0
  %v1177 = vsel %vm1121, %v979, 0
  %v1178 = vsel %vm1121, %v986, 0
  %v1179 = vsel %vm1121, %v993, 0
  %v1180 = vsel %vm1121, %v1000, 0
  %v1181 = vsel %vm1121, %v1007, 0
  %v1182 = vsel %vm1121, %v1014, 0
  %v1183 = vsel %vm1121, %v1021, 0
  %v1184 = vsel %vm1121, %v1028, 0
  %v1185 = vsel %vm1121, %v1035, 0
  %v1186 = vsel %vm1121, %v1042, 0
  %v1187 = vsel %vm1121, %v1049, 0
  %vm1188 = vsmask.f32 7424
  %v1190 = vshrl.u32 %v1122, 16
  %v1192 = vshll.u32 %v1122, 16
  %v1194 = vrot.slane %v1192, 1
  %v1195 = vor.u32 %v1190, %v1194
  %v1197 = vshll.u32 %v1155, 16
  %v1199 = vrot.slane %v1197, 1
  %v1200 = vsel %vm1188, %v1195, %v1199
  %v1202 = vshrl.u32 %v1123, 16
  %v1204 = vshll.u32 %v1123, 16
  %v1206 = vrot.slane %v1204, 1
  %v1207 = vor.u32 %v1202, %v1206
  %v1209 = vshll.u32 %v1156, 16
  %v1211 = vrot.slane %v1209, 1
  %v1212 = vsel %vm1188, %v1207, %v1211
  %v1214 = vshrl.u32 %v1124, 16
  %v1216 = vshll.u32 %v1124, 16
  %v1218 = vrot.slane %v1216, 1
  %v1219 = vor.u32 %v1214, %v1218
  %v1221 = vshll.u32 %v1157, 16
  %v1223 = vrot.slane %v1221, 1
  %v1224 = vsel %vm1188, %v1219, %v1223
  %v1226 = vshrl.u32 %v1125, 16
  %v1228 = vshll.u32 %v1125, 16
  %v1230 = vrot.slane %v1228, 1
  %v1231 = vor.u32 %v1226, %v1230
  %v1233 = vshll.u32 %v1158, 16
  %v1235 = vrot.slane %v1233, 1
  %v1236 = vsel %vm1188, %v1231, %v1235
  %v1238 = vshrl.u32 %v1126, 16
  %v1240 = vshll.u32 %v1126, 16
  %v1242 = vrot.slane %v1240, 1
  %v1243 = vor.u32 %v1238, %v1242
  %v1245 = vshll.u32 %v1159, 16
  %v1247 = vrot.slane %v1245, 1
  %v1248 = vsel %vm1188, %v1243, %v1247
  %v1250 = vshrl.u32 %v1127, 16
  %v1252 = vshll.u32 %v1127, 16
  %v1254 = vrot.slane %v1252, 1
  %v1255 = vor.u32 %v1250, %v1254
  %v1257 = vshll.u32 %v1160, 16
  %v1259 = vrot.slane %v1257, 1
  %v1260 = vsel %vm1188, %v1255, %v1259
  %v1262 = vshrl.u32 %v1128, 16
  %v1264 = vshll.u32 %v1128, 16
  %v1266 = vrot.slane %v1264, 1
  %v1267 = vor.u32 %v1262, %v1266
  %v1269 = vshll.u32 %v1161, 16
  %v1271 = vrot.slane %v1269, 1
  %v1272 = vsel %vm1188, %v1267, %v1271
  %v1274 = vshrl.u32 %v1129, 16
  %v1276 = vshll.u32 %v1129, 16
  %v1278 = vrot.slane %v1276, 1
  %v1279 = vor.u32 %v1274, %v1278
  %v1281 = vshll.u32 %v1162, 16
  %v1283 = vrot.slane %v1281, 1
  %v1284 = vsel %vm1188, %v1279, %v1283
  %v1286 = vshrl.u32 %v1130, 16
  %v1288 = vshll.u32 %v1130, 16
  %v1290 = vrot.slane %v1288, 1
  %v1291 = vor.u32 %v1286, %v1290
  %v1293 = vshll.u32 %v1163, 16
  %v1295 = vrot.slane %v1293, 1
  %v1296 = vsel %vm1188, %v1291, %v1295
  %v1298 = vshrl.u32 %v1131, 16
  %v1300 = vshll.u32 %v1131, 16
  %v1302 = vrot.slane %v1300, 1
  %v1303 = vor.u32 %v1298, %v1302
  %v1305 = vshll.u32 %v1164, 16
  %v1307 = vrot.slane %v1305, 1
  %v1308 = vsel %vm1188, %v1303, %v1307
  %v1310 = vshrl.u32 %v1132, 16
  %v1312 = vshll.u32 %v1132, 16
  %v1314 = vrot.slane %v1312, 1
  %v1315 = vor.u32 %v1310, %v1314
  %v1317 = vshll.u32 %v1165, 16
  %v1319 = vrot.slane %v1317, 1
  %v1320 = vsel %vm1188, %v1315, %v1319
  %v1322 = vshrl.u32 %v1133, 16
  %v1324 = vshll.u32 %v1133, 16
  %v1326 = vrot.slane %v1324, 1
  %v1327 = vor.u32 %v1322, %v1326
  %v1329 = vshll.u32 %v1166, 16
  %v1331 = vrot.slane %v1329, 1
  %v1332 = vsel %vm1188, %v1327, %v1331
  %v1334 = vshrl.u32 %v1134, 16
  %v1336 = vshll.u32 %v1134, 16
  %v1338 = vrot.slane %v1336, 1
  %v1339 = vor.u32 %v1334, %v1338
  %v1341 = vshll.u32 %v1167, 16
  %v1343 = vrot.slane %v1341, 1
  %v1344 = vsel %vm1188, %v1339, %v1343
  %v1346 = vshrl.u32 %v1135, 16
  %v1348 = vshll.u32 %v1135, 16
  %v1350 = vrot.slane %v1348, 1
  %v1351 = vor.u32 %v1346, %v1350
  %v1353 = vshll.u32 %v1168, 16
  %v1355 = vrot.slane %v1353, 1
  %v1356 = vsel %vm1188, %v1351, %v1355
  %v1358 = vshrl.u32 %v1136, 16
  %v1360 = vshll.u32 %v1136, 16
  %v1362 = vrot.slane %v1360, 1
  %v1363 = vor.u32 %v1358, %v1362
  %v1365 = vshll.u32 %v1169, 16
  %v1367 = vrot.slane %v1365, 1
  %v1368 = vsel %vm1188, %v1363, %v1367
  %v1370 = vshrl.u32 %v1137, 16
  %v1372 = vshll.u32 %v1137, 16
  %v1374 = vrot.slane %v1372, 1
  %v1375 = vor.u32 %v1370, %v1374
  %v1377 = vshll.u32 %v1170, 16
  %v1379 = vrot.slane %v1377, 1
  %v1380 = vsel %vm1188, %v1375, %v1379
  %v1382 = vshrl.u32 %v1139, 16
  %v1384 = vshll.u32 %v1139, 16
  %v1386 = vrot.slane %v1384, 1
  %v1387 = vor.u32 %v1382, %v1386
  %v1389 = vshll.u32 %v1172, 16
  %v1391 = vrot.slane %v1389, 1
  %v1392 = vsel %vm1188, %v1387, %v1391
  %v1394 = vshrl.u32 %v1140, 16
  %v1396 = vshll.u32 %v1140, 16
  %v1398 = vrot.slane %v1396, 1
  %v1399 = vor.u32 %v1394, %v1398
  %v1401 = vshll.u32 %v1173, 16
  %v1403 = vrot.slane %v1401, 1
  %v1404 = vsel %vm1188, %v1399, %v1403
  %v1406 = vshrl.u32 %v1141, 16
  %v1408 = vshll.u32 %v1141, 16
  %v1410 = vrot.slane %v1408, 1
  %v1411 = vor.u32 %v1406, %v1410
  %v1413 = vshll.u32 %v1174, 16
  %v1415 = vrot.slane %v1413, 1
  %v1416 = vsel %vm1188, %v1411, %v1415
  %v1418 = vshrl.u32 %v1142, 16
  %v1420 = vshll.u32 %v1142, 16
  %v1422 = vrot.slane %v1420, 1
  %v1423 = vor.u32 %v1418, %v1422
  %v1425 = vshll.u32 %v1175, 16
  %v1427 = vrot.slane %v1425, 1
  %v1428 = vsel %vm1188, %v1423, %v1427
  %v1430 = vshrl.u32 %v1143, 16
  %v1432 = vshll.u32 %v1143, 16
  %v1434 = vrot.slane %v1432, 1
  %v1435 = vor.u32 %v1430, %v1434
  %v1437 = vshll.u32 %v1176, 16
  %v1439 = vrot.slane %v1437, 1
  %v1440 = vsel %vm1188, %v1435, %v1439
  %v1442 = vshrl.u32 %v1144, 16
  %v1444 = vshll.u32 %v1144, 16
  %v1446 = vrot.slane %v1444, 1
  %v1447 = vor.u32 %v1442, %v1446
  %v1449 = vshll.u32 %v1177, 16
  %v1451 = vrot.slane %v1449, 1
  %v1452 = vsel %vm1188, %v1447, %v1451
  %v1454 = vshrl.u32 %v1145, 16
  %v1456 = vshll.u32 %v1145, 16
  %v1458 = vrot.slane %v1456, 1
  %v1459 = vor.u32 %v1454, %v1458
  %v1461 = vshll.u32 %v1178, 16
  %v1463 = vrot.slane %v1461, 1
  %v1464 = vsel %vm1188, %v1459, %v1463
  %v1466 = vshrl.u32 %v1146, 16
  %v1468 = vshll.u32 %v1146, 16
  %v1470 = vrot.slane %v1468, 1
  %v1471 = vor.u32 %v1466, %v1470
  %v1473 = vshll.u32 %v1179, 16
  %v1475 = vrot.slane %v1473, 1
  %v1476 = vsel %vm1188, %v1471, %v1475
  %v1478 = vshrl.u32 %v1147, 16
  %v1480 = vshll.u32 %v1147, 16
  %v1482 = vrot.slane %v1480, 1
  %v1483 = vor.u32 %v1478, %v1482
  %v1485 = vshll.u32 %v1180, 16
  %v1487 = vrot.slane %v1485, 1
  %v1488 = vsel %vm1188, %v1483, %v1487
  %v1490 = vshrl.u32 %v1148, 16
  %v1492 = vshll.u32 %v1148, 16
  %v1494 = vrot.slane %v1492, 1
  %v1495 = vor.u32 %v1490, %v1494
  %v1497 = vshll.u32 %v1181, 16
  %v1499 = vrot.slane %v1497, 1
  %v1500 = vsel %vm1188, %v1495, %v1499
  %v1502 = vshrl.u32 %v1149, 16
  %v1504 = vshll.u32 %v1149, 16
  %v1506 = vrot.slane %v1504, 1
  %v1507 = vor.u32 %v1502, %v1506
  %v1509 = vshll.u32 %v1182, 16
  %v1511 = vrot.slane %v1509, 1
  %v1512 = vsel %vm1188, %v1507, %v1511
  %v1514 = vshrl.u32 %v1150, 16
  %v1516 = vshll.u32 %v1150, 16
  %v1518 = vrot.slane %v1516, 1
  %v1519 = vor.u32 %v1514, %v1518
  %v1521 = vshll.u32 %v1183, 16
  %v1523 = vrot.slane %v1521, 1
  %v1524 = vsel %vm1188, %v1519, %v1523
  %v1526 = vshrl.u32 %v1151, 16
  %v1528 = vshll.u32 %v1151, 16
  %v1530 = vrot.slane %v1528, 1
  %v1531 = vor.u32 %v1526, %v1530
  %v1533 = vshll.u32 %v1184, 16
  %v1535 = vrot.slane %v1533, 1
  %v1536 = vsel %vm1188, %v1531, %v1535
  %v1538 = vshrl.u32 %v1152, 16
  %v1540 = vshll.u32 %v1152, 16
  %v1542 = vrot.slane %v1540, 1
  %v1543 = vor.u32 %v1538, %v1542
  %v1545 = vshll.u32 %v1185, 16
  %v1547 = vrot.slane %v1545, 1
  %v1548 = vsel %vm1188, %v1543, %v1547
  %v1550 = vshrl.u32 %v1153, 16
  %v1552 = vshll.u32 %v1153, 16
  %v1554 = vrot.slane %v1552, 1
  %v1555 = vor.u32 %v1550, %v1554
  %v1557 = vshll.u32 %v1186, 16
  %v1559 = vrot.slane %v1557, 1
  %v1560 = vsel %vm1188, %v1555, %v1559
  %vm1654 = vcmask 1046528
  %v1655 = vrot.slane %v1122, 1
  %v1656 = vrot.slane %v1155, 1
  %v1657 = vsel %vm1654, %v1655, %v1656
  %v1658 = vrot.slane %v1123, 1
  %v1659 = vrot.slane %v1156, 1
  %v1660 = vsel %vm1654, %v1658, %v1659
  %v1661 = vrot.slane %v1124, 1
  %v1662 = vrot.slane %v1157, 1
  %v1663 = vsel %vm1654, %v1661, %v1662
  %v1664 = vrot.slane %v1125, 1
  %v1665 = vrot.slane %v1158, 1
  %v1666 = vsel %vm1654, %v1664, %v1665
  %v1667 = vrot.slane %v1126, 1
  %v1668 = vrot.slane %v1159, 1
  %v1669 = vsel %vm1654, %v1667, %v1668
  %v1670 = vrot.slane %v1127, 1
  %v1671 = vrot.slane %v1160, 1
  %v1672 = vsel %vm1654, %v1670, %v1671
  %v1673 = vrot.slane %v1128, 1
  %v1674 = vrot.slane %v1161, 1
  %v1675 = vsel %vm1654, %v1673, %v1674
  %v1676 = vrot.slane %v1129, 1
  %v1677 = vrot.slane %v1162, 1
  %v1678 = vsel %vm1654, %v1676, %v1677
  %v1679 = vrot.slane %v1130, 1
  %v1680 = vrot.slane %v1163, 1
  %v1681 = vsel %vm1654, %v1679, %v1680
  %v1682 = vrot.slane %v1131, 1
  %v1683 = vrot.slane %v1164, 1
  %v1684 = vsel %vm1654, %v1682, %v1683
  %v1685 = vrot.slane %v1132, 1
  %v1686 = vrot.slane %v1165, 1
  %v1687 = vsel %vm1654, %v1685, %v1686
  %v1688 = vrot.slane %v1133, 1
  %v1689 = vrot.slane %v1166, 1
  %v1690 = vsel %vm1654, %v1688, %v1689
  %v1691 = vrot.slane %v1134, 1
  %v1692 = vrot.slane %v1167, 1
  %v1693 = vsel %vm1654, %v1691, %v1692
  %v1694 = vrot.slane %v1135, 1
  %v1695 = vrot.slane %v1168, 1
  %v1696 = vsel %vm1654, %v1694, %v1695
  %v1697 = vrot.slane %v1136, 1
  %v1698 = vrot.slane %v1169, 1
  %v1699 = vsel %vm1654, %v1697, %v1698
  %v1700 = vrot.slane %v1137, 1
  %v1701 = vrot.slane %v1170, 1
  %v1702 = vsel %vm1654, %v1700, %v1701
  %v1703 = vrot.slane %v1139, 1
  %v1704 = vrot.slane %v1172, 1
  %v1705 = vsel %vm1654, %v1703, %v1704
  %v1706 = vrot.slane %v1140, 1
  %v1707 = vrot.slane %v1173, 1
  %v1708 = vsel %vm1654, %v1706, %v1707
  %v1709 = vrot.slane %v1141, 1
  %v1710 = vrot.slane %v1174, 1
  %v1711 = vsel %vm1654, %v1709, %v1710
  %v1712 = vrot.slane %v1142, 1
  %v1713 = vrot.slane %v1175, 1
  %v1714 = vsel %vm1654, %v1712, %v1713
  %v1715 = vrot.slane %v1143, 1
  %v1716 = vrot.slane %v1176, 1
  %v1717 = vsel %vm1654, %v1715, %v1716
  %v1718 = vrot.slane %v1144, 1
  %v1719 = vrot.slane %v1177, 1
  %v1720 = vsel %vm1654, %v1718, %v1719
  %v1721 = vrot.slane %v1145, 1
  %v1722 = vrot.slane %v1178, 1
  %v1723 = vsel %vm1654, %v1721, %v1722
  %v1724 = vrot.slane %v1146, 1
  %v1725 = vrot.slane %v1179, 1
  %v1726 = vsel %vm1654, %v1724, %v1725
  %v1727 = vrot.slane %v1147, 1
  %v1728 = vrot.slane %v1180, 1
  %v1729 = vsel %vm1654, %v1727, %v1728
  %v1730 = vrot.slane %v1148, 1
  %v1731 = vrot.slane %v1181, 1
  %v1732 = vsel %vm1654, %v1730, %v1731
  %v1733 = vrot.slane %v1149, 1
  %v1734 = vrot.slane %v1182, 1
  %v1735 = vsel %vm1654, %v1733, %v1734
  %v1736 = vrot.slane %v1150, 1
  %v1737 = vrot.slane %v1183, 1
  %v1738 = vsel %vm1654, %v1736, %v1737
  %v1739 = vrot.slane %v1151, 1
  %v1740 = vrot.slane %v1184, 1
  %v1741 = vsel %vm1654, %v1739, %v1740
  %v1742 = vrot.slane %v1152, 1
  %v1743 = vrot.slane %v1185, 1
  %v1744 = vsel %vm1654, %v1742, %v1743
  %v1745 = vrot.slane %v1153, 1
  %v1746 = vrot.slane %v1186, 1
  %v1747 = vsel %vm1654, %v1745, %v1746
  %v1780 = vshrl.u32 %v1138, 16
  %v1782 = vshll.u32 %v1138, 16
  %v1784 = vrot.slane %v1782, 1
  %v1785 = vor.u32 %v1780, %v1784
  %v1787 = vshll.u32 %v1171, 16
  %v1789 = vrot.slane %v1787, 1
  %v1790 = vsel %vm1188, %v1785, %v1789
  %v1792 = vshrl.u32 %v1154, 16
  %v1794 = vshll.u32 %v1154, 16
  %v1796 = vrot.slane %v1794, 1
  %v1797 = vor.u32 %v1792, %v1796
  %v1799 = vshll.u32 %v1187, 16
  %v1801 = vrot.slane %v1799, 1
  %v1802 = vsel %vm1188, %v1797, %v1801
  %v1809 = vrot.slane %v1138, 1
  %v1810 = vrot.slane %v1171, 1
  %v1811 = vsel %vm1654, %v1809, %v1810
  %v1812 = vrot.slane %v1154, 1
  %v1813 = vrot.slane %v1187, 1
  %v1814 = vsel %vm1654, %v1812, %v1813
  %v1817 = vld [vmem:[%s8] sm:$0xff]
  %v1818 = vld [vmem:[%s8 + $0x8] sm:$0xff]
  %v1819 = vld [vmem:[%s8 + $0x10] sm:$0xff]
  %v1820 = vld [vmem:[%s8 + $0x18] sm:$0xff]
  %v1821 = vld [vmem:[%s8 + $0x20] sm:$0xff]
  %v1822 = vld [vmem:[%s8 + $0x28] sm:$0xff]
  %v1823 = vld [vmem:[%s8 + $0x30] sm:$0xff]
  %v1824 = vld [vmem:[%s8 + $0x38] sm:$0xff]
  %v1825 = vld [vmem:[%s8 + $0x40] sm:$0xff]
  %v1826 = vld [vmem:[%s8 + $0x48] sm:$0xff]
  %v1827 = vld [vmem:[%s8 + $0x50] sm:$0xff]
  %v1828 = vld [vmem:[%s8 + $0x58] sm:$0xff]
  %v1829 = vld [vmem:[%s8 + $0x60] sm:$0xff]
  %v1830 = vld [vmem:[%s8 + $0x68] sm:$0xff]
  %v1831 = vld [vmem:[%s8 + $0x70] sm:$0xff]
  %v1832 = vld [vmem:[%s8 + $0x78] sm:$0xff]
  %v1833 = vld [vmem:[%s8 + $0x80] sm:$0xff]
  %v1834 = vld [vmem:[%s8 + $0x88] sm:$0xff]
  %v1835 = vld [vmem:[%s8 + $0x90] sm:$0xff]
  %v1836 = vld [vmem:[%s8 + $0x98] sm:$0xff]
  %v1837 = vld [vmem:[%s8 + $0xa0] sm:$0xff]
  %v1838 = vld [vmem:[%s8 + $0xa8] sm:$0xff]
  %v1839 = vld [vmem:[%s8 + $0xb0] sm:$0xff]
  %v1840 = vld [vmem:[%s8 + $0xb8] sm:$0xff]
  %v1841 = vld [vmem:[%s8 + $0xc0] sm:$0xff]
  %v1842 = vld [vmem:[%s8 + $0xc8] sm:$0xff]
  %v1843 = vld [vmem:[%s8 + $0xd0] sm:$0xff]
  %v1844 = vld [vmem:[%s8 + $0xd8] sm:$0xff]
  %v1845 = vld [vmem:[%s8 + $0xe0] sm:$0xff]
  %v1846 = vld [vmem:[%s8 + $0xe8] sm:$0xff]
  %v1847 = vld [vmem:[%s8 + $0xf0] sm:$0xff]
  %v1848 = vld [vmem:[%s8 + $0xf8] sm:$0xff]
  %v1849 = vld [vmem:[%s8 + $0x100] sm:$0xff]
  %v1850 = vld [vmem:[%s8 + $0x108] sm:$0xff]
  %v1851 = vld [vmem:[%s8 + $0x110] sm:$0xff]
  %v1852 = vld [vmem:[%s8 + $0x118] sm:$0xff]
  %v1853 = vld [vmem:[%s8 + $0x120] sm:$0xff]
  %v1854 = vld [vmem:[%s8 + $0x128] sm:$0xff]
  %v1855 = vld [vmem:[%s8 + $0x130] sm:$0xff]
  %v1856 = vld [vmem:[%s8 + $0x138] sm:$0xff]
  %v1857 = vld [vmem:[%s8 + $0x140] sm:$0xff]
  %v1858 = vld [vmem:[%s8 + $0x148] sm:$0xff]
  %v1859 = vld [vmem:[%s8 + $0x150] sm:$0xff]
  %v1860 = vld [vmem:[%s8 + $0x158] sm:$0xff]
  %v1861 = vld [vmem:[%s8 + $0x160] sm:$0xff]
  %v1862 = vld [vmem:[%s8 + $0x168] sm:$0xff]
  %v1863 = vld [vmem:[%s8 + $0x170] sm:$0xff]
  %v1864 = vld [vmem:[%s8 + $0x178] sm:$0xff]
  %v1865 = vld [vmem:[%s8 + $0x180] sm:$0xff]
  %v1866 = vld [vmem:[%s8 + $0x188] sm:$0xff]
  %v1867 = vld [vmem:[%s8 + $0x190] sm:$0xff]
  %v1868 = vld [vmem:[%s8 + $0x198] sm:$0xff]
  %v1869 = vld [vmem:[%s8 + $0x1a0] sm:$0xff]
  %v1870 = vld [vmem:[%s8 + $0x1a8] sm:$0xff]
  %v1871 = vld [vmem:[%s8 + $0x1b0] sm:$0xff]
  %v1872 = vld [vmem:[%s8 + $0x1b8] sm:$0xff]
  %v1873 = vld [vmem:[%s8 + $0x1c0] sm:$0xff]
  %v1874 = vld [vmem:[%s8 + $0x1c8] sm:$0xff]
  %v1875 = vld [vmem:[%s8 + $0x1d0] sm:$0xff]
  %v1876 = vld [vmem:[%s8 + $0x1d8] sm:$0xff]
  %v1877 = vld [vmem:[%s8 + $0x1e0] sm:$0xff]
  %v1878 = vld [vmem:[%s8 + $0x1e8] sm:$0xff]
  %v1879 = vld [vmem:[%s8 + $0x1f0] sm:$0xff]
  %v1880 = vld [vmem:[%s8 + $0x1f8] sm:$0xff]
  %v1881 = vld [vmem:[%s8 + $0x200] sm:$0xff]
  %v1882 = vld [vmem:[%s8 + $0x208] sm:$0xff]
  %v1883 = vld [vmem:[%s8 + $0x210] sm:$0xff]
  %v1884 = vld [vmem:[%s8 + $0x218] sm:$0xff]
  %v1885 = vld [vmem:[%s8 + $0x220] sm:$0xff]
  %v1886 = vld [vmem:[%s8 + $0x228] sm:$0xff]
  %v1887 = vld [vmem:[%s8 + $0x230] sm:$0xff]
  %v1888 = vld [vmem:[%s8 + $0x238] sm:$0xff]
  %v1889 = vld [vmem:[%s8 + $0x240] sm:$0xff]
  %v1890 = vld [vmem:[%s8 + $0x248] sm:$0xff]
  %v1891 = vld [vmem:[%s8 + $0x250] sm:$0xff]
  %v1892 = vld [vmem:[%s8 + $0x258] sm:$0xff]
  %v1893 = vld [vmem:[%s8 + $0x260] sm:$0xff]
  %v1894 = vld [vmem:[%s8 + $0x268] sm:$0xff]
  %v1895 = vld [vmem:[%s8 + $0x270] sm:$0xff]
  %v1896 = vld [vmem:[%s8 + $0x278] sm:$0xff]
  %v1897 = vld [vmem:[%s8 + $0x280] sm:$0xff]
  %v1898 = vld [vmem:[%s8 + $0x288] sm:$0xff]
  %v1899 = vld [vmem:[%s8 + $0x290] sm:$0xff]
  %v1900 = vld [vmem:[%s8 + $0x298] sm:$0xff]
  %v1901 = vld [vmem:[%s8 + $0x2a0] sm:$0xff]
  %v1902 = vld [vmem:[%s8 + $0x2a8] sm:$0xff]
  %v1903 = vld [vmem:[%s8 + $0x2b0] sm:$0xff]
  %v1904 = vld [vmem:[%s8 + $0x2b8] sm:$0xff]
  %v1905 = vld [vmem:[%s8 + $0x2c0] sm:$0xff]
  %v1906 = vld [vmem:[%s8 + $0x2c8] sm:$0xff]
  %v1907 = vld [vmem:[%s8 + $0x2d0] sm:$0xff]
  %v1908 = vld [vmem:[%s8 + $0x2d8] sm:$0xff]
  %v1909 = vld [vmem:[%s8 + $0x2e0] sm:$0xff]
  %v1910 = vld [vmem:[%s8 + $0x2e8] sm:$0xff]
  %v1911 = vld [vmem:[%s8 + $0x2f0] sm:$0xff]
  %v1912 = vld [vmem:[%s8 + $0x2f8] sm:$0xff]
  %v1913 = vld [vmem:[%s8 + $0x300] sm:$0xff]
  %v1914 = vld [vmem:[%s8 + $0x308] sm:$0xff]
  %v1915 = vld [vmem:[%s8 + $0x310] sm:$0xff]
  %v1916 = vld [vmem:[%s8 + $0x318] sm:$0xff]
  %v1917 = vld [vmem:[%s8 + $0x320] sm:$0xff]
  %v1918 = vld [vmem:[%s8 + $0x328] sm:$0xff]
  %v1919 = vld [vmem:[%s8 + $0x330] sm:$0xff]
  %v1920 = vld [vmem:[%s8 + $0x338] sm:$0xff]
  %v1921 = vld [vmem:[%s8 + $0x340] sm:$0xff]
  %v1922 = vld [vmem:[%s8 + $0x348] sm:$0xff]
  %v1923 = vld [vmem:[%s8 + $0x350] sm:$0xff]
  %v1924 = vld [vmem:[%s8 + $0x358] sm:$0xff]
  %v1925 = vld [vmem:[%s8 + $0x360] sm:$0xff]
  %v1926 = vld [vmem:[%s8 + $0x368] sm:$0xff]
  %v1927 = vld [vmem:[%s8 + $0x370] sm:$0xff]
  %v1928 = vld [vmem:[%s8 + $0x378] sm:$0xff]
  %v1929 = vld [vmem:[%s8 + $0x380] sm:$0xff]
  %v1930 = vld [vmem:[%s8 + $0x388] sm:$0xff]
  %v1931 = vld [vmem:[%s8 + $0x390] sm:$0xff]
  %v1932 = vld [vmem:[%s8 + $0x398] sm:$0xff]
  %v1933 = vld [vmem:[%s8 + $0x3a0] sm:$0xff]
  %v1934 = vld [vmem:[%s8 + $0x3a8] sm:$0xff]
  %v1935 = vld [vmem:[%s8 + $0x3b0] sm:$0xff]
  %v1936 = vld [vmem:[%s8 + $0x3b8] sm:$0xff]
  %v1937 = vld [vmem:[%s8 + $0x3c0] sm:$0xff]
  %v1938 = vld [vmem:[%s8 + $0x3c8] sm:$0xff]
  %v1939 = vld [vmem:[%s8 + $0x3d0] sm:$0xff]
  %v1940 = vld [vmem:[%s8 + $0x3d8] sm:$0xff]
  %v1941 = vld [vmem:[%s8 + $0x3e0] sm:$0xff]
  %v1942 = vld [vmem:[%s8 + $0x3e8] sm:$0xff]
  %v1943 = vld [vmem:[%s8 + $0x3f0] sm:$0xff]
  %v1944 = vld [vmem:[%s8 + $0x3f8] sm:$0xff]
  %v1945 = vld [vmem:[%s8 + $0x400] sm:$0xff]
  %v1946 = vld [vmem:[%s8 + $0x408] sm:$0xff]
  %v1947 = vld [vmem:[%s8 + $0x410] sm:$0xff]
  %v1948 = vld [vmem:[%s8 + $0x418] sm:$0xff]
  %v1949 = vld [vmem:[%s8 + $0x420] sm:$0xff]
  %v1950 = vld [vmem:[%s8 + $0x428] sm:$0xff]
  %v1951 = vld [vmem:[%s8 + $0x430] sm:$0xff]
  %v1952 = vld [vmem:[%s8 + $0x438] sm:$0xff]
  %v1953 = vld [vmem:[%s8 + $0x440] sm:$0xff]
  %v1954 = vld [vmem:[%s8 + $0x448] sm:$0xff]
  %v1955 = vld [vmem:[%s8 + $0x450] sm:$0xff]
  %v1956 = vld [vmem:[%s8 + $0x458] sm:$0xff]
  %v1957 = vld [vmem:[%s8 + $0x460] sm:$0xff]
  %v1958 = vld [vmem:[%s8 + $0x468] sm:$0xff]
  %v1959 = vld [vmem:[%s8 + $0x470] sm:$0xff]
  %v1960 = vld [vmem:[%s8 + $0x478] sm:$0xff]
  %v2105 = vunpack.c.l.b16 %v1817
  %v2106 = vunpack.c.h.b16 %v1817
  %v2107 = vunpack.c.l.b16 %v1818
  %v2108 = vunpack.c.h.b16 %v1818
  %v2109 = vunpack.c.l.b16 %v1819
  %v2110 = vunpack.c.h.b16 %v1819
  %v2111 = vunpack.c.l.b16 %v1820
  %v2112 = vunpack.c.h.b16 %v1820
  %v2113 = vunpack.c.l.b16 %v1821
  %v2114 = vunpack.c.h.b16 %v1821
  %v2115 = vunpack.c.l.b16 %v1822
  %v2116 = vunpack.c.h.b16 %v1822
  %v2117 = vunpack.c.l.b16 %v1823
  %v2118 = vunpack.c.h.b16 %v1823
  %v2119 = vunpack.c.l.b16 %v1824
  %v2120 = vunpack.c.h.b16 %v1824
  %v2121 = vunpack.c.l.b16 %v1825
  %v2122 = vunpack.c.h.b16 %v1825
  %v2123 = vunpack.c.l.b16 %v1826
  %v2124 = vunpack.c.h.b16 %v1826
  %v2125 = vunpack.c.l.b16 %v1827
  %v2126 = vunpack.c.h.b16 %v1827
  %v2127 = vunpack.c.l.b16 %v1828
  %v2128 = vunpack.c.h.b16 %v1828
  %v2129 = vunpack.c.l.b16 %v1829
  %v2130 = vunpack.c.h.b16 %v1829
  %v2131 = vunpack.c.l.b16 %v1830
  %v2132 = vunpack.c.h.b16 %v1830
  %v2133 = vunpack.c.l.b16 %v1831
  %v2134 = vunpack.c.h.b16 %v1831
  %v2135 = vunpack.c.l.b16 %v1832
  %v2136 = vunpack.c.h.b16 %v1832
  %v2137 = vunpack.c.l.b16 %v1833
  %v2138 = vunpack.c.h.b16 %v1833
  %v2139 = vunpack.c.l.b16 %v1834
  %v2140 = vunpack.c.h.b16 %v1834
  %v2141 = vunpack.c.l.b16 %v1835
  %v2142 = vunpack.c.h.b16 %v1835
  %v2143 = vunpack.c.l.b16 %v1836
  %v2144 = vunpack.c.h.b16 %v1836
  %v2145 = vunpack.c.l.b16 %v1837
  %v2146 = vunpack.c.h.b16 %v1837
  %v2147 = vunpack.c.l.b16 %v1838
  %v2148 = vunpack.c.h.b16 %v1838
  %v2149 = vunpack.c.l.b16 %v1839
  %v2150 = vunpack.c.h.b16 %v1839
  %v2151 = vunpack.c.l.b16 %v1840
  %v2152 = vunpack.c.h.b16 %v1840
  %v2153 = vunpack.c.l.b16 %v1841
  %v2154 = vunpack.c.h.b16 %v1841
  %v2155 = vunpack.c.l.b16 %v1842
  %v2156 = vunpack.c.h.b16 %v1842
  %v2157 = vunpack.c.l.b16 %v1843
  %v2158 = vunpack.c.h.b16 %v1843
  %v2159 = vunpack.c.l.b16 %v1844
  %v2160 = vunpack.c.h.b16 %v1844
  %v2161 = vunpack.c.l.b16 %v1845
  %v2162 = vunpack.c.h.b16 %v1845
  %v2163 = vunpack.c.l.b16 %v1846
  %v2164 = vunpack.c.h.b16 %v1846
  %v2165 = vunpack.c.l.b16 %v1847
  %v2166 = vunpack.c.h.b16 %v1847
  %v2167 = vunpack.c.l.b16 %v1848
  %v2168 = vunpack.c.h.b16 %v1848
  %v2169 = vunpack.c.l.b16 %v1849
  %v2170 = vunpack.c.h.b16 %v1849
  %v2171 = vunpack.c.l.b16 %v1850
  %v2172 = vunpack.c.h.b16 %v1850
  %v2173 = vunpack.c.l.b16 %v1851
  %v2174 = vunpack.c.h.b16 %v1851
  %v2175 = vunpack.c.l.b16 %v1852
  %v2176 = vunpack.c.h.b16 %v1852
  %v2177 = vunpack.c.l.b16 %v1853
  %v2178 = vunpack.c.h.b16 %v1853
  %v2179 = vunpack.c.l.b16 %v1854
  %v2180 = vunpack.c.h.b16 %v1854
  %v2181 = vunpack.c.l.b16 %v1855
  %v2182 = vunpack.c.h.b16 %v1855
  %v2183 = vunpack.c.l.b16 %v1856
  %v2184 = vunpack.c.h.b16 %v1856
  %v2185 = vunpack.c.l.b16 %v1857
  %v2186 = vunpack.c.h.b16 %v1857
  %v2187 = vunpack.c.l.b16 %v1858
  %v2188 = vunpack.c.h.b16 %v1858
  %v2189 = vunpack.c.l.b16 %v1859
  %v2190 = vunpack.c.h.b16 %v1859
  %v2191 = vunpack.c.l.b16 %v1860
  %v2192 = vunpack.c.h.b16 %v1860
  %v2193 = vunpack.c.l.b16 %v1861
  %v2194 = vunpack.c.h.b16 %v1861
  %v2195 = vunpack.c.l.b16 %v1862
  %v2196 = vunpack.c.h.b16 %v1862
  %v2197 = vunpack.c.l.b16 %v1863
  %v2198 = vunpack.c.h.b16 %v1863
  %v2199 = vunpack.c.l.b16 %v1864
  %v2200 = vunpack.c.h.b16 %v1864
  %v2201 = vunpack.c.l.b16 %v1865
  %v2202 = vunpack.c.h.b16 %v1865
  %v2203 = vunpack.c.l.b16 %v1866
  %v2204 = vunpack.c.h.b16 %v1866
  %v2205 = vunpack.c.l.b16 %v1867
  %v2206 = vunpack.c.h.b16 %v1867
  %v2207 = vunpack.c.l.b16 %v1868
  %v2208 = vunpack.c.h.b16 %v1868
  %v2209 = vunpack.c.l.b16 %v1869
  %v2210 = vunpack.c.h.b16 %v1869
  %v2211 = vunpack.c.l.b16 %v1870
  %v2212 = vunpack.c.h.b16 %v1870
  %v2213 = vunpack.c.l.b16 %v1871
  %v2214 = vunpack.c.h.b16 %v1871
  %v2215 = vunpack.c.l.b16 %v1872
  %v2216 = vunpack.c.h.b16 %v1872
  %v2217 = vunpack.c.l.b16 %v1873
  %v2218 = vunpack.c.h.b16 %v1873
  %v2219 = vunpack.c.l.b16 %v1874
  %v2220 = vunpack.c.h.b16 %v1874
  %v2221 = vunpack.c.l.b16 %v1875
  %v2222 = vunpack.c.h.b16 %v1875
  %v2223 = vunpack.c.l.b16 %v1876
  %v2224 = vunpack.c.h.b16 %v1876
  %v2225 = vunpack.c.l.b16 %v1877
  %v2226 = vunpack.c.h.b16 %v1877
  %v2227 = vunpack.c.l.b16 %v1878
  %v2228 = vunpack.c.h.b16 %v1878
  %v2229 = vunpack.c.l.b16 %v1879
  %v2230 = vunpack.c.h.b16 %v1879
  %v2231 = vunpack.c.l.b16 %v1880
  %v2232 = vunpack.c.h.b16 %v1880
  %v2233 = vunpack.c.l.b16 %v1881
  %v2234 = vunpack.c.h.b16 %v1881
  %v2235 = vunpack.c.l.b16 %v1882
  %v2236 = vunpack.c.h.b16 %v1882
  %v2237 = vunpack.c.l.b16 %v1883
  %v2238 = vunpack.c.h.b16 %v1883
  %v2239 = vunpack.c.l.b16 %v1884
  %v2240 = vunpack.c.h.b16 %v1884
  %v2241 = vunpack.c.l.b16 %v1885
  %v2242 = vunpack.c.h.b16 %v1885
  %v2243 = vunpack.c.l.b16 %v1886
  %v2244 = vunpack.c.h.b16 %v1886
  %v2245 = vunpack.c.l.b16 %v1887
  %v2246 = vunpack.c.h.b16 %v1887
  %v2247 = vunpack.c.l.b16 %v1888
  %v2248 = vunpack.c.h.b16 %v1888
  %v2249 = vunpack.c.l.b16 %v1889
  %v2250 = vunpack.c.h.b16 %v1889
  %v2251 = vunpack.c.l.b16 %v1890
  %v2252 = vunpack.c.h.b16 %v1890
  %v2253 = vunpack.c.l.b16 %v1891
  %v2254 = vunpack.c.h.b16 %v1891
  %v2255 = vunpack.c.l.b16 %v1892
  %v2256 = vunpack.c.h.b16 %v1892
  %v2257 = vunpack.c.l.b16 %v1893
  %v2258 = vunpack.c.h.b16 %v1893
  %v2259 = vunpack.c.l.b16 %v1894
  %v2260 = vunpack.c.h.b16 %v1894
  %v2261 = vunpack.c.l.b16 %v1895
  %v2262 = vunpack.c.h.b16 %v1895
  %v2263 = vunpack.c.l.b16 %v1896
  %v2264 = vunpack.c.h.b16 %v1896
  %v2265 = vunpack.c.l.b16 %v1897
  %v2266 = vunpack.c.h.b16 %v1897
  %v2267 = vunpack.c.l.b16 %v1898
  %v2268 = vunpack.c.h.b16 %v1898
  %v2269 = vunpack.c.l.b16 %v1899
  %v2270 = vunpack.c.h.b16 %v1899
  %v2271 = vunpack.c.l.b16 %v1900
  %v2272 = vunpack.c.h.b16 %v1900
  %v2273 = vunpack.c.l.b16 %v1901
  %v2274 = vunpack.c.h.b16 %v1901
  %v2275 = vunpack.c.l.b16 %v1902
  %v2276 = vunpack.c.h.b16 %v1902
  %v2277 = vunpack.c.l.b16 %v1903
  %v2278 = vunpack.c.h.b16 %v1903
  %v2279 = vunpack.c.l.b16 %v1904
  %v2280 = vunpack.c.h.b16 %v1904
  %v2281 = vunpack.c.l.b16 %v1905
  %v2282 = vunpack.c.h.b16 %v1905
  %v2283 = vunpack.c.l.b16 %v1906
  %v2284 = vunpack.c.h.b16 %v1906
  %v2285 = vunpack.c.l.b16 %v1907
  %v2286 = vunpack.c.h.b16 %v1907
  %v2287 = vunpack.c.l.b16 %v1908
  %v2288 = vunpack.c.h.b16 %v1908
  %v2289 = vunpack.c.l.b16 %v1909
  %v2290 = vunpack.c.h.b16 %v1909
  %v2291 = vunpack.c.l.b16 %v1910
  %v2292 = vunpack.c.h.b16 %v1910
  %v2293 = vunpack.c.l.b16 %v1911
  %v2294 = vunpack.c.h.b16 %v1911
  %v2295 = vunpack.c.l.b16 %v1912
  %v2296 = vunpack.c.h.b16 %v1912
  %v2297 = vunpack.c.l.b16 %v1913
  %v2298 = vunpack.c.h.b16 %v1913
  %v2299 = vunpack.c.l.b16 %v1914
  %v2300 = vunpack.c.h.b16 %v1914
  %v2301 = vunpack.c.l.b16 %v1915
  %v2302 = vunpack.c.h.b16 %v1915
  %v2303 = vunpack.c.l.b16 %v1916
  %v2304 = vunpack.c.h.b16 %v1916
  %v2305 = vunpack.c.l.b16 %v1917
  %v2306 = vunpack.c.h.b16 %v1917
  %v2307 = vunpack.c.l.b16 %v1918
  %v2308 = vunpack.c.h.b16 %v1918
  %v2309 = vunpack.c.l.b16 %v1919
  %v2310 = vunpack.c.h.b16 %v1919
  %v2311 = vunpack.c.l.b16 %v1920
  %v2312 = vunpack.c.h.b16 %v1920
  %v2313 = vunpack.c.l.b16 %v1921
  %v2314 = vunpack.c.h.b16 %v1921
  %v2315 = vunpack.c.l.b16 %v1922
  %v2316 = vunpack.c.h.b16 %v1922
  %v2317 = vunpack.c.l.b16 %v1923
  %v2318 = vunpack.c.h.b16 %v1923
  %v2319 = vunpack.c.l.b16 %v1924
  %v2320 = vunpack.c.h.b16 %v1924
  %v2321 = vunpack.c.l.b16 %v1925
  %v2322 = vunpack.c.h.b16 %v1925
  %v2323 = vunpack.c.l.b16 %v1926
  %v2324 = vunpack.c.h.b16 %v1926
  %v2325 = vunpack.c.l.b16 %v1927
  %v2326 = vunpack.c.h.b16 %v1927
  %v2327 = vunpack.c.l.b16 %v1928
  %v2328 = vunpack.c.h.b16 %v1928
  %v2329 = vunpack.c.l.b16 %v1929
  %v2330 = vunpack.c.h.b16 %v1929
  %v2331 = vunpack.c.l.b16 %v1930
  %v2332 = vunpack.c.h.b16 %v1930
  %v2333 = vunpack.c.l.b16 %v1931
  %v2334 = vunpack.c.h.b16 %v1931
  %v2335 = vunpack.c.l.b16 %v1932
  %v2336 = vunpack.c.h.b16 %v1932
  %v2337 = vunpack.c.l.b16 %v1933
  %v2338 = vunpack.c.h.b16 %v1933
  %v2339 = vunpack.c.l.b16 %v1934
  %v2340 = vunpack.c.h.b16 %v1934
  %v2341 = vunpack.c.l.b16 %v1935
  %v2342 = vunpack.c.h.b16 %v1935
  %v2343 = vunpack.c.l.b16 %v1936
  %v2344 = vunpack.c.h.b16 %v1936
  %v2345 = vunpack.c.l.b16 %v1937
  %v2346 = vunpack.c.h.b16 %v1937
  %v2347 = vunpack.c.l.b16 %v1938
  %v2348 = vunpack.c.h.b16 %v1938
  %v2349 = vunpack.c.l.b16 %v1939
  %v2350 = vunpack.c.h.b16 %v1939
  %v2351 = vunpack.c.l.b16 %v1940
  %v2352 = vunpack.c.h.b16 %v1940
  %v2353 = vunpack.c.l.b16 %v1941
  %v2354 = vunpack.c.h.b16 %v1941
  %v2355 = vunpack.c.l.b16 %v1942
  %v2356 = vunpack.c.h.b16 %v1942
  %v2357 = vunpack.c.l.b16 %v1943
  %v2358 = vunpack.c.h.b16 %v1943
  %v2359 = vunpack.c.l.b16 %v1944
  %v2360 = vunpack.c.h.b16 %v1944
  %v2361 = vunpack.c.l.b16 %v1945
  %v2362 = vunpack.c.h.b16 %v1945
  %v2363 = vunpack.c.l.b16 %v1946
  %v2364 = vunpack.c.h.b16 %v1946
  %v2365 = vunpack.c.l.b16 %v1947
  %v2366 = vunpack.c.h.b16 %v1947
  %v2367 = vunpack.c.l.b16 %v1948
  %v2368 = vunpack.c.h.b16 %v1948
  %v2369 = vunpack.c.l.b16 %v1949
  %v2370 = vunpack.c.h.b16 %v1949
  %v2371 = vunpack.c.l.b16 %v1950
  %v2372 = vunpack.c.h.b16 %v1950
  %v2373 = vunpack.c.l.b16 %v1951
  %v2374 = vunpack.c.h.b16 %v1951
  %v2375 = vunpack.c.l.b16 %v1952
  %v2376 = vunpack.c.h.b16 %v1952
  %v2377 = vunpack.c.l.b16 %v1953
  %v2378 = vunpack.c.h.b16 %v1953
  %v2379 = vunpack.c.l.b16 %v1954
  %v2380 = vunpack.c.h.b16 %v1954
  %v2381 = vunpack.c.l.b16 %v1955
  %v2382 = vunpack.c.h.b16 %v1955
  %v2383 = vunpack.c.l.b16 %v1956
  %v2384 = vunpack.c.h.b16 %v1956
  %v2385 = vunpack.c.l.b16 %v1957
  %v2386 = vunpack.c.h.b16 %v1957
  %v2387 = vunpack.c.l.b16 %v1958
  %v2388 = vunpack.c.h.b16 %v1958
  %v2389 = vunpack.c.l.b16 %v1959
  %v2390 = vunpack.c.h.b16 %v1959
  %v2391 = vunpack.c.l.b16 %v1960
  %v2392 = vunpack.c.h.b16 %v1960
  %v2393 = vpack.c.b16 %v2107, %v2105
  %v2394 = vpack.c.b16 %v2108, %v2106
  %v2395 = vpack.c.b16 %v2111, %v2109
  %v2396 = vpack.c.b16 %v2112, %v2110
  %v2397 = vpack.c.b16 %v2115, %v2113
  %v2398 = vpack.c.b16 %v2116, %v2114
  %v2399 = vpack.c.b16 %v2119, %v2117
  %v2400 = vpack.c.b16 %v2120, %v2118
  %v2401 = vpack.c.b16 %v2123, %v2121
  %v2402 = vpack.c.b16 %v2124, %v2122
  %v2403 = vpack.c.b16 %v2127, %v2125
  %v2404 = vpack.c.b16 %v2128, %v2126
  %v2405 = vpack.c.b16 %v2131, %v2129
  %v2406 = vpack.c.b16 %v2132, %v2130
  %v2407 = vpack.c.b16 %v2135, %v2133
  %v2408 = vpack.c.b16 %v2136, %v2134
  %v2409 = vpack.c.b16 %v2139, %v2137
  %v2410 = vpack.c.b16 %v2140, %v2138
  %v2411 = vpack.c.b16 %v2143, %v2141
  %v2412 = vpack.c.b16 %v2144, %v2142
  %v2413 = vpack.c.b16 %v2147, %v2145
  %v2414 = vpack.c.b16 %v2148, %v2146
  %v2415 = vpack.c.b16 %v2151, %v2149
  %v2416 = vpack.c.b16 %v2152, %v2150
  %v2417 = vpack.c.b16 %v2155, %v2153
  %v2418 = vpack.c.b16 %v2156, %v2154
  %v2419 = vpack.c.b16 %v2159, %v2157
  %v2420 = vpack.c.b16 %v2160, %v2158
  %v2421 = vpack.c.b16 %v2163, %v2161
  %v2422 = vpack.c.b16 %v2164, %v2162
  %v2423 = vpack.c.b16 %v2167, %v2165
  %v2424 = vpack.c.b16 %v2168, %v2166
  %v2425 = vpack.c.b16 %v2171, %v2169
  %v2426 = vpack.c.b16 %v2172, %v2170
  %v2427 = vpack.c.b16 %v2175, %v2173
  %v2428 = vpack.c.b16 %v2176, %v2174
  %v2429 = vpack.c.b16 %v2179, %v2177
  %v2430 = vpack.c.b16 %v2180, %v2178
  %v2431 = vpack.c.b16 %v2183, %v2181
  %v2432 = vpack.c.b16 %v2184, %v2182
  %v2433 = vpack.c.b16 %v2187, %v2185
  %v2434 = vpack.c.b16 %v2188, %v2186
  %v2435 = vpack.c.b16 %v2191, %v2189
  %v2436 = vpack.c.b16 %v2192, %v2190
  %v2437 = vpack.c.b16 %v2195, %v2193
  %v2438 = vpack.c.b16 %v2196, %v2194
  %v2439 = vpack.c.b16 %v2199, %v2197
  %v2440 = vpack.c.b16 %v2200, %v2198
  %v2441 = vpack.c.b16 %v2203, %v2201
  %v2442 = vpack.c.b16 %v2204, %v2202
  %v2443 = vpack.c.b16 %v2207, %v2205
  %v2444 = vpack.c.b16 %v2208, %v2206
  %v2445 = vpack.c.b16 %v2211, %v2209
  %v2446 = vpack.c.b16 %v2212, %v2210
  %v2447 = vpack.c.b16 %v2215, %v2213
  %v2448 = vpack.c.b16 %v2216, %v2214
  %v2449 = vpack.c.b16 %v2219, %v2217
  %v2450 = vpack.c.b16 %v2220, %v2218
  %v2451 = vpack.c.b16 %v2223, %v2221
  %v2452 = vpack.c.b16 %v2224, %v2222
  %v2453 = vpack.c.b16 %v2227, %v2225
  %v2454 = vpack.c.b16 %v2228, %v2226
  %v2455 = vpack.c.b16 %v2231, %v2229
  %v2456 = vpack.c.b16 %v2232, %v2230
  %v2457 = vpack.c.b16 %v2235, %v2233
  %v2458 = vpack.c.b16 %v2236, %v2234
  %v2459 = vpack.c.b16 %v2239, %v2237
  %v2460 = vpack.c.b16 %v2240, %v2238
  %v2461 = vpack.c.b16 %v2243, %v2241
  %v2462 = vpack.c.b16 %v2244, %v2242
  %v2463 = vpack.c.b16 %v2247, %v2245
  %v2464 = vpack.c.b16 %v2248, %v2246
  %v2465 = vpack.c.b16 %v2251, %v2249
  %v2466 = vpack.c.b16 %v2252, %v2250
  %v2467 = vpack.c.b16 %v2255, %v2253
  %v2468 = vpack.c.b16 %v2256, %v2254
  %v2469 = vpack.c.b16 %v2259, %v2257
  %v2470 = vpack.c.b16 %v2260, %v2258
  %v2471 = vpack.c.b16 %v2263, %v2261
  %v2472 = vpack.c.b16 %v2264, %v2262
  %v2473 = vpack.c.b16 %v2267, %v2265
  %v2474 = vpack.c.b16 %v2268, %v2266
  %v2475 = vpack.c.b16 %v2271, %v2269
  %v2476 = vpack.c.b16 %v2272, %v2270
  %v2477 = vpack.c.b16 %v2275, %v2273
  %v2478 = vpack.c.b16 %v2276, %v2274
  %v2479 = vpack.c.b16 %v2279, %v2277
  %v2480 = vpack.c.b16 %v2280, %v2278
  %v2481 = vpack.c.b16 %v2283, %v2281
  %v2482 = vpack.c.b16 %v2284, %v2282
  %v2483 = vpack.c.b16 %v2287, %v2285
  %v2484 = vpack.c.b16 %v2288, %v2286
  %v2485 = vpack.c.b16 %v2291, %v2289
  %v2486 = vpack.c.b16 %v2292, %v2290
  %v2487 = vpack.c.b16 %v2295, %v2293
  %v2488 = vpack.c.b16 %v2296, %v2294
  %v2489 = vpack.c.b16 %v2299, %v2297
  %v2490 = vpack.c.b16 %v2300, %v2298
  %v2491 = vpack.c.b16 %v2303, %v2301
  %v2492 = vpack.c.b16 %v2304, %v2302
  %v2493 = vpack.c.b16 %v2307, %v2305
  %v2494 = vpack.c.b16 %v2308, %v2306
  %v2495 = vpack.c.b16 %v2311, %v2309
  %v2496 = vpack.c.b16 %v2312, %v2310
  %v2497 = vpack.c.b16 %v2315, %v2313
  %v2498 = vpack.c.b16 %v2316, %v2314
  %v2499 = vpack.c.b16 %v2319, %v2317
  %v2500 = vpack.c.b16 %v2320, %v2318
  %v2501 = vpack.c.b16 %v2323, %v2321
  %v2502 = vpack.c.b16 %v2324, %v2322
  %v2503 = vpack.c.b16 %v2327, %v2325
  %v2504 = vpack.c.b16 %v2328, %v2326
  %v2505 = vpack.c.b16 %v2331, %v2329
  %v2506 = vpack.c.b16 %v2332, %v2330
  %v2507 = vpack.c.b16 %v2335, %v2333
  %v2508 = vpack.c.b16 %v2336, %v2334
  %v2509 = vpack.c.b16 %v2339, %v2337
  %v2510 = vpack.c.b16 %v2340, %v2338
  %v2511 = vpack.c.b16 %v2343, %v2341
  %v2512 = vpack.c.b16 %v2344, %v2342
  %v2513 = vpack.c.b16 %v2347, %v2345
  %v2514 = vpack.c.b16 %v2348, %v2346
  %v2515 = vpack.c.b16 %v2351, %v2349
  %v2516 = vpack.c.b16 %v2352, %v2350
  %v2517 = vpack.c.b16 %v2355, %v2353
  %v2518 = vpack.c.b16 %v2356, %v2354
  %v2519 = vpack.c.b16 %v2359, %v2357
  %v2520 = vpack.c.b16 %v2360, %v2358
  %v2521 = vpack.c.b16 %v2363, %v2361
  %v2522 = vpack.c.b16 %v2364, %v2362
  %v2523 = vpack.c.b16 %v2367, %v2365
  %v2524 = vpack.c.b16 %v2368, %v2366
  %v2525 = vpack.c.b16 %v2371, %v2369
  %v2526 = vpack.c.b16 %v2372, %v2370
  %v2527 = vpack.c.b16 %v2375, %v2373
  %v2528 = vpack.c.b16 %v2376, %v2374
  %v2529 = vpack.c.b16 %v2379, %v2377
  %v2530 = vpack.c.b16 %v2380, %v2378
  %v2531 = vpack.c.b16 %v2383, %v2381
  %v2532 = vpack.c.b16 %v2384, %v2382
  %v2533 = vpack.c.b16 %v2387, %v2385
  %v2534 = vpack.c.b16 %v2388, %v2386
  %v2535 = vpack.c.b16 %v2391, %v2389
  %v2536 = vpack.c.b16 %v2392, %v2390
  %2681 = vmatprep.subr.bf16.mxu0 %v2394
  %2682 = vmatpush1.bf16.msra.mxu0 %v2393
  %2683 = vmatprep.subr.bf16.mxu0 %v2396
  %2684 = vmatpush1.bf16.msra.mxu0 %v2395
  %2685 = vmatprep.subr.bf16.mxu0 %v2398
  %2686 = vmatpush1.bf16.msra.mxu0 %v2397
  %2687 = vmatprep.subr.bf16.mxu0 %v2400
  %2688 = vmatpush1.bf16.msra.mxu0 %v2399
  %2689 = vmatprep.subr.bf16.mxu0 %v2402
  %2690 = vmatpush1.bf16.msra.mxu0 %v2401
  %2691 = vmatprep.subr.bf16.mxu0 %v2404
  %2692 = vmatpush1.bf16.msra.mxu0 %v2403
  %2693 = vmatprep.subr.bf16.mxu0 %v2406
  %2694 = vmatpush1.bf16.msra.mxu0 %v2405
  %2695 = vmatprep.subr.bf16.mxu0 %v2408
  %2696 = vmatpush1.bf16.msra.mxu0 %v2407
  %2697 = vmatprep.subr.bf16.mxu0 %v2410
  %2698 = vmatpush1.bf16.msra.mxu0 %v2409
  %2699 = vmatprep.subr.bf16.mxu0 %v2412
  %2700 = vmatpush1.bf16.msra.mxu0 %v2411
  %2701 = vmatprep.subr.bf16.mxu0 %v2414
  %2702 = vmatpush1.bf16.msra.mxu0 %v2413
  %2703 = vmatprep.subr.bf16.mxu0 %v2416
  %2704 = vmatpush1.bf16.msra.mxu0 %v2415
  %2705 = vmatprep.subr.bf16.mxu0 %v2418
  %2706 = vmatpush1.bf16.msra.mxu0 %v2417
  %2707 = vmatprep.subr.bf16.mxu0 %v2420
  %2708 = vmatpush1.bf16.msra.mxu0 %v2419
  %2709 = vmatprep.subr.bf16.mxu0 %v2422
  %2710 = vmatpush1.bf16.msra.mxu0 %v2421
  %2711 = vmatprep.subr.bf16.mxu0 %v2424
  %2712 = vmatpush1.bf16.msra.mxu0 %v2423
  %2713 = vmatprep.mubr.bf16.mxu0 %v1200
  %2714 = vmatmul.mubr.bf16.gmra.mrb[0].mxu0 %v1122
  %v2715 = vpop.f32.mrb[0].mxu0
  %v2716 = vpop.f32.mrb[0].mxu0
  %v2717 = vadd.f32 0.0, %v2716
  %v2718 = vpop.f32.mrb[0].mxu0
  %v2719 = vpop.f32.mrb[0].mxu0
  %v2720 = vadd.f32 0.0, %v2719
  %2721 = vmatprep.mubr.bf16.mxu0 %v1212
  %2722 = vmatmul.mubr.bf16.gmra.mrb[0].mxu0 %v1123
  %v2723 = vpop.f32.mrb[0].mxu0
  %v2724 = vadd.f32 0.0, %v2723
  %v2725 = vpop.f32.mrb[0].mxu0
  %v2726 = vadd.f32 0.0, %v2725
  %v2727 = vpop.f32.mrb[0].mxu0
  %v2728 = vadd.f32 0.0, %v2727
  %v2729 = vpop.f32.mrb[0].mxu0
  %v2730 = vadd.f32 0.0, %v2729
  %2731 = vmatprep.mubr.bf16.mxu0 %v1224
  %2732 = vmatmul.mubr.bf16.gmra.mrb[0].mxu0 %v1124
  %v2733 = vpop.f32.mrb[0].mxu0
  %v2734 = vadd.f32 0.0, %v2733
  %v2735 = vpop.f32.mrb[0].mxu0
  %v2736 = vadd.f32 0.0, %v2735
  %v2737 = vpop.f32.mrb[0].mxu0
  %v2738 = vadd.f32 0.0, %v2737
  %v2739 = vpop.f32.mrb[0].mxu0
  %v2740 = vadd.f32 0.0, %v2739
  %2741 = vmatprep.mubr.bf16.mxu0 %v1236
  %2742 = vmatmul.mubr.bf16.gmra.mrb[0].mxu0 %v1125
  %v2743 = vpop.f32.mrb[0].mxu0
  %v2744 = vadd.f32 0.0, %v2743
  %v2745 = vpop.f32.mrb[0].mxu0
  %v2746 = vadd.f32 0.0, %v2745
  %v2747 = vpop.f32.mrb[0].mxu0
  %v2748 = vadd.f32 0.0, %v2747
  %v2749 = vpop.f32.mrb[0].mxu0
  %v2750 = vadd.f32 0.0, %v2749
  %2751 = vmatprep.mubr.bf16.mxu0 %v1248
  %2752 = vmatmul.mubr.bf16.gmra.mrb[0].mxu0 %v1126
  %v2753 = vpop.f32.mrb[0].mxu0
  %v2754 = vadd.f32 0.0, %v2753
  %v2755 = vpop.f32.mrb[0].mxu0
  %v2756 = vadd.f32 0.0, %v2755
  %v2757 = vpop.f32.mrb[0].mxu0
  %v2758 = vadd.f32 0.0, %v2757
  %v2759 = vpop.f32.mrb[0].mxu0
  %v2760 = vadd.f32 0.0, %v2759
  %2761 = vmatprep.mubr.bf16.mxu0 %v1260
  %2762 = vmatmul.mubr.bf16.gmra.mrb[0].mxu0 %v1127
  %v2763 = vpop.f32.mrb[0].mxu0
  %v2764 = vadd.f32 0.0, %v2763
  %v2765 = vpop.f32.mrb[0].mxu0
  %v2766 = vadd.f32 0.0, %v2765
  %v2767 = vpop.f32.mrb[0].mxu0
  %v2768 = vadd.f32 0.0, %v2767
  %v2769 = vpop.f32.mrb[0].mxu0
  %v2770 = vadd.f32 0.0, %v2769
  %2771 = vmatprep.mubr.bf16.mxu0 %v1272
  %2772 = vmatmul.mubr.bf16.gmra.mrb[0].mxu0 %v1128
  %v2773 = vpop.f32.mrb[0].mxu0
  %v2774 = vadd.f32 0.0, %v2773
  %v2775 = vpop.f32.mrb[0].mxu0
  %v2776 = vadd.f32 0.0, %v2775
  %v2777 = vpop.f32.mrb[0].mxu0
  %v2778 = vadd.f32 0.0, %v2777
  %v2779 = vpop.f32.mrb[0].mxu0
  %v2780 = vadd.f32 0.0, %v2779
  %2781 = vmatprep.mubr.bf16.mxu0 %v1284
  %2782 = vmatmul.mubr.bf16.gmra.mrb[0].mxu0 %v1129
  %v2783 = vpop.f32.mrb[0].mxu0
  %v2784 = vadd.f32 0.0, %v2783
  %v2785 = vpop.f32.mrb[0].mxu0
  %v2786 = vadd.f32 0.0, %v2785
  %v2787 = vpop.f32.mrb[0].mxu0
  %v2788 = vadd.f32 0.0, %v2787
  %v2789 = vpop.f32.mrb[0].mxu0
  %v2790 = vadd.f32 0.0, %v2789
  %2791 = vmatprep.mubr.bf16.mxu0 %v1296
  %2792 = vmatmul.mubr.bf16.gmra.mrb[0].mxu0 %v1130
  %v2793 = vpop.f32.mrb[0].mxu0
  %v2794 = vadd.f32 0.0, %v2793
  %v2795 = vpop.f32.mrb[0].mxu0
  %v2796 = vadd.f32 0.0, %v2795
  %v2797 = vpop.f32.mrb[0].mxu0
  %v2798 = vadd.f32 0.0, %v2797
  %v2799 = vpop.f32.mrb[0].mxu0
  %v2800 = vadd.f32 0.0, %v2799
  %2801 = vmatprep.mubr.bf16.mxu0 %v1308
  %2802 = vmatmul.mubr.bf16.gmra.mrb[0].mxu0 %v1131
  %v2803 = vpop.f32.mrb[0].mxu0
  %v2804 = vadd.f32 0.0, %v2803
  %v2805 = vpop.f32.mrb[0].mxu0
  %v2806 = vadd.f32 0.0, %v2805
  %v2807 = vpop.f32.mrb[0].mxu0
  %v2808 = vadd.f32 0.0, %v2807
  %v2809 = vpop.f32.mrb[0].mxu0
  %v2810 = vadd.f32 0.0, %v2809
  %2811 = vmatprep.mubr.bf16.mxu0 %v1320
  %2812 = vmatmul.mubr.bf16.gmra.mrb[0].mxu0 %v1132
  %v2813 = vpop.f32.mrb[0].mxu0
  %v2814 = vadd.f32 0.0, %v2813
  %v2815 = vpop.f32.mrb[0].mxu0
  %v2816 = vadd.f32 0.0, %v2815
  %v2817 = vpop.f32.mrb[0].mxu0
  %v2818 = vadd.f32 0.0, %v2817
  %v2819 = vpop.f32.mrb[0].mxu0
  %v2820 = vadd.f32 0.0, %v2819
  %2821 = vmatprep.mubr.bf16.mxu0 %v1332
  %2822 = vmatmul.mubr.bf16.gmra.mrb[0].mxu0 %v1133
  %v2823 = vpop.f32.mrb[0].mxu0
  %v2824 = vadd.f32 0.0, %v2823
  %v2825 = vpop.f32.mrb[0].mxu0
  %v2826 = vadd.f32 0.0, %v2825
  %v2827 = vpop.f32.mrb[0].mxu0
  %v2828 = vadd.f32 0.0, %v2827
  %v2829 = vpop.f32.mrb[0].mxu0
  %v2830 = vadd.f32 0.0, %v2829
  %2831 = vmatprep.mubr.bf16.mxu0 %v1344
  %2832 = vmatmul.mubr.bf16.gmra.mrb[0].mxu0 %v1134
  %v2833 = vpop.f32.mrb[0].mxu0
  %v2834 = vadd.f32 0.0, %v2833
  %v2835 = vpop.f32.mrb[0].mxu0
  %v2836 = vadd.f32 0.0, %v2835
  %v2837 = vpop.f32.mrb[0].mxu0
  %v2838 = vadd.f32 0.0, %v2837
  %v2839 = vpop.f32.mrb[0].mxu0
  %v2840 = vadd.f32 0.0, %v2839
  %2841 = vmatprep.mubr.bf16.mxu0 %v1356
  %2842 = vmatmul.mubr.bf16.gmra.mrb[0].mxu0 %v1135
  %v2843 = vpop.f32.mrb[0].mxu0
  %v2844 = vadd.f32 0.0, %v2843
  %v2845 = vpop.f32.mrb[0].mxu0
  %v2846 = vadd.f32 0.0, %v2845
  %v2847 = vpop.f32.mrb[0].mxu0
  %v2848 = vadd.f32 0.0, %v2847
  %v2849 = vpop.f32.mrb[0].mxu0
  %v2850 = vadd.f32 0.0, %v2849
  %2851 = vmatprep.mubr.bf16.mxu0 %v1368
  %2852 = vmatmul.mubr.bf16.gmra.mrb[0].mxu0 %v1136
  %v2853 = vpop.f32.mrb[0].mxu0
  %v2854 = vadd.f32 0.0, %v2853
  %v2855 = vpop.f32.mrb[0].mxu0
  %v2856 = vadd.f32 0.0, %v2855
  %v2857 = vpop.f32.mrb[0].mxu0
  %v2858 = vadd.f32 0.0, %v2857
  %v2859 = vpop.f32.mrb[0].mxu0
  %v2860 = vadd.f32 0.0, %v2859
  %2861 = vmatprep.mubr.bf16.mxu0 %v1380
  %2862 = vmatmul.mubr.bf16.gmra.mrb[0].mxu0 %v1137
  %v2863 = vpop.f32.mrb[0].mxu0
  %v2864 = vpop.f32.mrb[0].mxu0
  %v2865 = vadd.f32 0.0, %v2864
  %v2866 = vpop.f32.mrb[0].mxu0
  %v2867 = vpop.f32.mrb[0].mxu0
  %v2868 = vadd.f32 0.0, %v2867
  %2869 = vmatprep.mubr.bf16.mxu0 %v1200
  %2870 = vmatmul.mubr.bf16.gmra.mrb[0].mxu0 %v1122
  %v2871 = vpop.f32.mrb[0].mxu0
  %v2872 = vpop.f32.mrb[0].mxu0
  %v2873 = vadd.f32 0.0, %v2872
  %v2874 = vpop.f32.mrb[0].mxu0
  %v2875 = vpop.f32.mrb[0].mxu0
  %v2876 = vadd.f32 0.0, %v2875
  %2877 = vmatprep.mubr.bf16.mxu0 %v1392
  %2878 = vmatmul.mubr.bf16.gmra.mrb[0].mxu0 %v1139
  %v2879 = vpop.f32.mrb[0].mxu0
  %v2880 = vadd.f32 0.0, %v2879
  %v2881 = vpop.f32.mrb[0].mxu0
  %v2882 = vadd.f32 0.0, %v2881
  %v2883 = vpop.f32.mrb[0].mxu0
  %v2884 = vadd.f32 0.0, %v2883
  %v2885 = vpop.f32.mrb[0].mxu0
  %v2886 = vadd.f32 0.0, %v2885
  %2887 = vmatprep.mubr.bf16.mxu0 %v1404
  %2888 = vmatmul.mubr.bf16.gmra.mrb[0].mxu0 %v1140
  %v2889 = vpop.f32.mrb[0].mxu0
  %v2890 = vadd.f32 0.0, %v2889
  %v2891 = vpop.f32.mrb[0].mxu0
  %v2892 = vadd.f32 0.0, %v2891
  %v2893 = vpop.f32.mrb[0].mxu0
  %v2894 = vadd.f32 0.0, %v2893
  %v2895 = vpop.f32.mrb[0].mxu0
  %v2896 = vadd.f32 0.0, %v2895
  %2897 = vmatprep.mubr.bf16.mxu0 %v1416
  %2898 = vmatmul.mubr.bf16.gmra.mrb[0].mxu0 %v1141
  %v2899 = vpop.f32.mrb[0].mxu0
  %v2900 = vadd.f32 0.0, %v2899
  %v2901 = vpop.f32.mrb[0].mxu0
  %v2902 = vadd.f32 0.0, %v2901
  %v2903 = vpop.f32.mrb[0].mxu0
  %v2904 = vadd.f32 0.0, %v2903
  %v2905 = vpop.f32.mrb[0].mxu0
  %v2906 = vadd.f32 0.0, %v2905
  %2907 = vmatprep.mubr.bf16.mxu0 %v1428
  %2908 = vmatmul.mubr.bf16.gmra.mrb[0].mxu0 %v1142
  %v2909 = vpop.f32.mrb[0].mxu0
  %v2910 = vadd.f32 0.0, %v2909
  %v2911 = vpop.f32.mrb[0].mxu0
  %v2912 = vadd.f32 0.0, %v2911
  %v2913 = vpop.f32.mrb[0].mxu0
  %v2914 = vadd.f32 0.0, %v2913
  %v2915 = vpop.f32.mrb[0].mxu0
  %v2916 = vadd.f32 0.0, %v2915
  %2917 = vmatprep.mubr.bf16.mxu0 %v1440
  %2918 = vmatmul.mubr.bf16.gmra.mrb[0].mxu0 %v1143
  %v2919 = vpop.f32.mrb[0].mxu0
  %v2920 = vadd.f32 0.0, %v2919
  %v2921 = vpop.f32.mrb[0].mxu0
  %v2922 = vadd.f32 0.0, %v2921
  %v2923 = vpop.f32.mrb[0].mxu0
  %v2924 = vadd.f32 0.0, %v2923
  %v2925 = vpop.f32.mrb[0].mxu0
  %v2926 = vadd.f32 0.0, %v2925
  %2927 = vmatprep.mubr.bf16.mxu0 %v1452
  %2928 = vmatmul.mubr.bf16.gmra.mrb[0].mxu0 %v1144
  %v2929 = vpop.f32.mrb[0].mxu0
  %v2930 = vadd.f32 0.0, %v2929
  %v2931 = vpop.f32.mrb[0].mxu0
  %v2932 = vadd.f32 0.0, %v2931
  %v2933 = vpop.f32.mrb[0].mxu0
  %v2934 = vadd.f32 0.0, %v2933
  %v2935 = vpop.f32.mrb[0].mxu0
  %v2936 = vadd.f32 0.0, %v2935
  %2937 = vmatprep.mubr.bf16.mxu0 %v1464
  %2938 = vmatmul.mubr.bf16.gmra.mrb[0].mxu0 %v1145
  %v2939 = vpop.f32.mrb[0].mxu0
  %v2940 = vadd.f32 0.0, %v2939
  %v2941 = vpop.f32.mrb[0].mxu0
  %v2942 = vadd.f32 0.0, %v2941
  %v2943 = vpop.f32.mrb[0].mxu0
  %v2944 = vadd.f32 0.0, %v2943
  %v2945 = vpop.f32.mrb[0].mxu0
  %v2946 = vadd.f32 0.0, %v2945
  %2947 = vmatprep.mubr.bf16.mxu0 %v1476
  %2948 = vmatmul.mubr.bf16.gmra.mrb[0].mxu0 %v1146
  %v2949 = vpop.f32.mrb[0].mxu0
  %v2950 = vadd.f32 0.0, %v2949
  %v2951 = vpop.f32.mrb[0].mxu0
  %v2952 = vadd.f32 0.0, %v2951
  %v2953 = vpop.f32.mrb[0].mxu0
  %v2954 = vadd.f32 0.0, %v2953
  %v2955 = vpop.f32.mrb[0].mxu0
  %v2956 = vadd.f32 0.0, %v2955
  %2957 = vmatprep.mubr.bf16.mxu0 %v1488
  %2958 = vmatmul.mubr.bf16.gmra.mrb[0].mxu0 %v1147
  %v2959 = vpop.f32.mrb[0].mxu0
  %v2960 = vadd.f32 0.0, %v2959
  %v2961 = vpop.f32.mrb[0].mxu0
  %v2962 = vadd.f32 0.0, %v2961
  %v2963 = vpop.f32.mrb[0].mxu0
  %v2964 = vadd.f32 0.0, %v2963
  %v2965 = vpop.f32.mrb[0].mxu0
  %v2966 = vadd.f32 0.0, %v2965
  %2967 = vmatprep.mubr.bf16.mxu0 %v1500
  %2968 = vmatmul.mubr.bf16.gmra.mrb[0].mxu0 %v1148
  %v2969 = vpop.f32.mrb[0].mxu0
  %v2970 = vadd.f32 0.0, %v2969
  %v2971 = vpop.f32.mrb[0].mxu0
  %v2972 = vadd.f32 0.0, %v2971
  %v2973 = vpop.f32.mrb[0].mxu0
  %v2974 = vadd.f32 0.0, %v2973
  %v2975 = vpop.f32.mrb[0].mxu0
  %v2976 = vadd.f32 0.0, %v2975
  %2977 = vmatprep.mubr.bf16.mxu0 %v1512
  %2978 = vmatmul.mubr.bf16.gmra.mrb[0].mxu0 %v1149
  %v2979 = vpop.f32.mrb[0].mxu0
  %v2980 = vadd.f32 0.0, %v2979
  %v2981 = vpop.f32.mrb[0].mxu0
  %v2982 = vadd.f32 0.0, %v2981
  %v2983 = vpop.f32.mrb[0].mxu0
  %v2984 = vadd.f32 0.0, %v2983
  %v2985 = vpop.f32.mrb[0].mxu0
  %v2986 = vadd.f32 0.0, %v2985
  %2987 = vmatprep.mubr.bf16.mxu0 %v1524
  %2988 = vmatmul.mubr.bf16.gmra.mrb[0].mxu0 %v1150
  %v2989 = vpop.f32.mrb[0].mxu0
  %v2990 = vadd.f32 0.0, %v2989
  %v2991 = vpop.f32.mrb[0].mxu0
  %v2992 = vadd.f32 0.0, %v2991
  %v2993 = vpop.f32.mrb[0].mxu0
  %v2994 = vadd.f32 0.0, %v2993
  %v2995 = vpop.f32.mrb[0].mxu0
  %v2996 = vadd.f32 0.0, %v2995
  %2997 = vmatprep.mubr.bf16.mxu0 %v1536
  %2998 = vmatmul.mubr.bf16.gmra.mrb[0].mxu0 %v1151
  %v2999 = vpop.f32.mrb[0].mxu0
  %v3000 = vadd.f32 0.0, %v2999
  %v3001 = vpop.f32.mrb[0].mxu0
  %v3002 = vadd.f32 0.0, %v3001
  %v3003 = vpop.f32.mrb[0].mxu0
  %v3004 = vadd.f32 0.0, %v3003
  %v3005 = vpop.f32.mrb[0].mxu0
  %v3006 = vadd.f32 0.0, %v3005
  %3007 = vmatprep.mubr.bf16.mxu0 %v1548
  %3008 = vmatmul.mubr.bf16.gmra.mrb[0].mxu0 %v1152
  %v3009 = vpop.f32.mrb[0].mxu0
  %v3010 = vadd.f32 0.0, %v3009
  %v3011 = vpop.f32.mrb[0].mxu0
  %v3012 = vadd.f32 0.0, %v3011
  %v3013 = vpop.f32.mrb[0].mxu0
  %v3014 = vadd.f32 0.0, %v3013
  %v3015 = vpop.f32.mrb[0].mxu0
  %v3016 = vadd.f32 0.0, %v3015
  %3017 = vmatprep.mubr.bf16.mxu0 %v1560
  %3018 = vmatmul.mubr.bf16.gmra.mrb[0].mxu0 %v1153
  %v3019 = vpop.f32.mrb[0].mxu0
  %v3020 = vpop.f32.mrb[0].mxu0
  %v3021 = vadd.f32 0.0, %v3020
  %v3022 = vpop.f32.mrb[0].mxu0
  %v3023 = vpop.f32.mrb[0].mxu0
  %v3024 = vadd.f32 0.0, %v3023
  %3025 = vdwg.mxu0
  %3026 = vmatprep.subr.bf16.mxu0 %v2426
  %3027 = vmatpush1.bf16.msra.mxu0 %v2425
  %3028 = vmatprep.subr.bf16.mxu0 %v2428
  %3029 = vmatpush1.bf16.msra.mxu0 %v2427
  %3030 = vmatprep.subr.bf16.mxu0 %v2430
  %3031 = vmatpush1.bf16.msra.mxu0 %v2429
  %3032 = vmatprep.subr.bf16.mxu0 %v2432
  %3033 = vmatpush1.bf16.msra.mxu0 %v2431
  %3034 = vmatprep.subr.bf16.mxu0 %v2434
  %3035 = vmatpush1.bf16.msra.mxu0 %v2433
  %3036 = vmatprep.subr.bf16.mxu0 %v2436
  %3037 = vmatpush1.bf16.msra.mxu0 %v2435
  %3038 = vmatprep.subr.bf16.mxu0 %v2438
  %3039 = vmatpush1.bf16.msra.mxu0 %v2437
  %3040 = vmatprep.subr.bf16.mxu0 %v2440
  %3041 = vmatpush1.bf16.msra.mxu0 %v2439
  %3042 = vmatprep.subr.bf16.mxu0 %v2442
  %3043 = vmatpush1.bf16.msra.mxu0 %v2441
  %3044 = vmatprep.subr.bf16.mxu0 %v2444
  %3045 = vmatpush1.bf16.msra.mxu0 %v2443
  %3046 = vmatprep.subr.bf16.mxu0 %v2446
  %3047 = vmatpush1.bf16.msra.mxu0 %v2445
  %3048 = vmatprep.subr.bf16.mxu0 %v2448
  %3049 = vmatpush1.bf16.msra.mxu0 %v2447
  %3050 = vmatprep.subr.bf16.mxu0 %v2450
  %3051 = vmatpush1.bf16.msra.mxu0 %v2449
  %3052 = vmatprep.subr.bf16.mxu0 %v2452
  %3053 = vmatpush1.bf16.msra.mxu0 %v2451
  %3054 = vmatprep.subr.bf16.mxu0 %v2454
  %3055 = vmatpush1.bf16.msra.mxu0 %v2453
  %3056 = vmatprep.subr.bf16.mxu0 %v2456
  %3057 = vmatpush1.bf16.msra.mxu0 %v2455
  %3058 = vmatprep.mubr.bf16.mxu0 %v1123
  %3059 = vmatmul.mubr.bf16.gmra.mrb[0].mxu0 %v1657
  %v3060 = vpop.f32.mrb[0].mxu0
  %v3061 = vpop.f32.mrb[0].mxu0
  %v3062 = vadd.f32 %v2717, %v3061
  %v3063 = vpop.f32.mrb[0].mxu0
  %v3064 = vpop.f32.mrb[0].mxu0
  %v3065 = vadd.f32 %v2720, %v3064
  %3066 = vmatprep.mubr.bf16.mxu0 %v1124
  %3067 = vmatmul.mubr.bf16.gmra.mrb[0].mxu0 %v1660
  %v3068 = vpop.f32.mrb[0].mxu0
  %v3069 = vadd.f32 %v2724, %v3068
  %v3070 = vpop.f32.mrb[0].mxu0
  %v3071 = vadd.f32 %v2726, %v3070
  %v3072 = vpop.f32.mrb[0].mxu0
  %v3073 = vadd.f32 %v2728, %v3072
  %v3074 = vpop.f32.mrb[0].mxu0
  %v3075 = vadd.f32 %v2730, %v3074
  %3076 = vmatprep.mubr.bf16.mxu0 %v1125
  %3077 = vmatmul.mubr.bf16.gmra.mrb[0].mxu0 %v1663
  %v3078 = vpop.f32.mrb[0].mxu0
  %v3079 = vadd.f32 %v2734, %v3078
  %v3080 = vpop.f32.mrb[0].mxu0
  %v3081 = vadd.f32 %v2736, %v3080
  %v3082 = vpop.f32.mrb[0].mxu0
  %v3083 = vadd.f32 %v2738, %v3082
  %v3084 = vpop.f32.mrb[0].mxu0
  %v3085 = vadd.f32 %v2740, %v3084
  %3086 = vmatprep.mubr.bf16.mxu0 %v1126
  %3087 = vmatmul.mubr.bf16.gmra.mrb[0].mxu0 %v1666
  %v3088 = vpop.f32.mrb[0].mxu0
  %v3089 = vadd.f32 %v2744, %v3088
  %v3090 = vpop.f32.mrb[0].mxu0
  %v3091 = vadd.f32 %v2746, %v3090
  %v3092 = vpop.f32.mrb[0].mxu0
  %v3093 = vadd.f32 %v2748, %v3092
  %v3094 = vpop.f32.mrb[0].mxu0
  %v3095 = vadd.f32 %v2750, %v3094
  %3096 = vmatprep.mubr.bf16.mxu0 %v1127
  %3097 = vmatmul.mubr.bf16.gmra.mrb[0].mxu0 %v1669
  %v3098 = vpop.f32.mrb[0].mxu0
  %v3099 = vadd.f32 %v2754, %v3098
  %v3100 = vpop.f32.mrb[0].mxu0
  %v3101 = vadd.f32 %v2756, %v3100
  %v3102 = vpop.f32.mrb[0].mxu0
  %v3103 = vadd.f32 %v2758, %v3102
  %v3104 = vpop.f32.mrb[0].mxu0
  %v3105 = vadd.f32 %v2760, %v3104
  %3106 = vmatprep.mubr.bf16.mxu0 %v1128
  %3107 = vmatmul.mubr.bf16.gmra.mrb[0].mxu0 %v1672
  %v3108 = vpop.f32.mrb[0].mxu0
  %v3109 = vadd.f32 %v2764, %v3108
  %v3110 = vpop.f32.mrb[0].mxu0
  %v3111 = vadd.f32 %v2766, %v3110
  %v3112 = vpop.f32.mrb[0].mxu0
  %v3113 = vadd.f32 %v2768, %v3112
  %v3114 = vpop.f32.mrb[0].mxu0
  %v3115 = vadd.f32 %v2770, %v3114
  %3116 = vmatprep.mubr.bf16.mxu0 %v1129
  %3117 = vmatmul.mubr.bf16.gmra.mrb[0].mxu0 %v1675
  %v3118 = vpop.f32.mrb[0].mxu0
  %v3119 = vadd.f32 %v2774, %v3118
  %v3120 = vpop.f32.mrb[0].mxu0
  %v3121 = vadd.f32 %v2776, %v3120
  %v3122 = vpop.f32.mrb[0].mxu0
  %v3123 = vadd.f32 %v2778, %v3122
  %v3124 = vpop.f32.mrb[0].mxu0
  %v3125 = vadd.f32 %v2780, %v3124
  %3126 = vmatprep.mubr.bf16.mxu0 %v1130
  %3127 = vmatmul.mubr.bf16.gmra.mrb[0].mxu0 %v1678
  %v3128 = vpop.f32.mrb[0].mxu0
  %v3129 = vadd.f32 %v2784, %v3128
  %v3130 = vpop.f32.mrb[0].mxu0
  %v3131 = vadd.f32 %v2786, %v3130
  %v3132 = vpop.f32.mrb[0].mxu0
  %v3133 = vadd.f32 %v2788, %v3132
  %v3134 = vpop.f32.mrb[0].mxu0
  %v3135 = vadd.f32 %v2790, %v3134
  %3136 = vmatprep.mubr.bf16.mxu0 %v1131
  %3137 = vmatmul.mubr.bf16.gmra.mrb[0].mxu0 %v1681
  %v3138 = vpop.f32.mrb[0].mxu0
  %v3139 = vadd.f32 %v2794, %v3138
  %v3140 = vpop.f32.mrb[0].mxu0
  %v3141 = vadd.f32 %v2796, %v3140
  %v3142 = vpop.f32.mrb[0].mxu0
  %v3143 = vadd.f32 %v2798, %v3142
  %v3144 = vpop.f32.mrb[0].mxu0
  %v3145 = vadd.f32 %v2800, %v3144
  %3146 = vmatprep.mubr.bf16.mxu0 %v1132
  %3147 = vmatmul.mubr.bf16.gmra.mrb[0].mxu0 %v1684
  %v3148 = vpop.f32.mrb[0].mxu0
  %v3149 = vadd.f32 %v2804, %v3148
  %v3150 = vpop.f32.mrb[0].mxu0
  %v3151 = vadd.f32 %v2806, %v3150
  %v3152 = vpop.f32.mrb[0].mxu0
  %v3153 = vadd.f32 %v2808, %v3152
  %v3154 = vpop.f32.mrb[0].mxu0
  %v3155 = vadd.f32 %v2810, %v3154
  %3156 = vmatprep.mubr.bf16.mxu0 %v1133
  %3157 = vmatmul.mubr.bf16.gmra.mrb[0].mxu0 %v1687
  %v3158 = vpop.f32.mrb[0].mxu0
  %v3159 = vadd.f32 %v2814, %v3158
  %v3160 = vpop.f32.mrb[0].mxu0
  %v3161 = vadd.f32 %v2816, %v3160
  %v3162 = vpop.f32.mrb[0].mxu0
  %v3163 = vadd.f32 %v2818, %v3162
  %v3164 = vpop.f32.mrb[0].mxu0
  %v3165 = vadd.f32 %v2820, %v3164
  %3166 = vmatprep.mubr.bf16.mxu0 %v1134
  %3167 = vmatmul.mubr.bf16.gmra.mrb[0].mxu0 %v1690
  %v3168 = vpop.f32.mrb[0].mxu0
  %v3169 = vadd.f32 %v2824, %v3168
  %v3170 = vpop.f32.mrb[0].mxu0
  %v3171 = vadd.f32 %v2826, %v3170
  %v3172 = vpop.f32.mrb[0].mxu0
  %v3173 = vadd.f32 %v2828, %v3172
  %v3174 = vpop.f32.mrb[0].mxu0
  %v3175 = vadd.f32 %v2830, %v3174
  %3176 = vmatprep.mubr.bf16.mxu0 %v1135
  %3177 = vmatmul.mubr.bf16.gmra.mrb[0].mxu0 %v1693
  %v3178 = vpop.f32.mrb[0].mxu0
  %v3179 = vadd.f32 %v2834, %v3178
  %v3180 = vpop.f32.mrb[0].mxu0
  %v3181 = vadd.f32 %v2836, %v3180
  %v3182 = vpop.f32.mrb[0].mxu0
  %v3183 = vadd.f32 %v2838, %v3182
  %v3184 = vpop.f32.mrb[0].mxu0
  %v3185 = vadd.f32 %v2840, %v3184
  %3186 = vmatprep.mubr.bf16.mxu0 %v1136
  %3187 = vmatmul.mubr.bf16.gmra.mrb[0].mxu0 %v1696
  %v3188 = vpop.f32.mrb[0].mxu0
  %v3189 = vadd.f32 %v2844, %v3188
  %v3190 = vpop.f32.mrb[0].mxu0
  %v3191 = vadd.f32 %v2846, %v3190
  %v3192 = vpop.f32.mrb[0].mxu0
  %v3193 = vadd.f32 %v2848, %v3192
  %v3194 = vpop.f32.mrb[0].mxu0
  %v3195 = vadd.f32 %v2850, %v3194
  %3196 = vmatprep.mubr.bf16.mxu0 %v1137
  %3197 = vmatmul.mubr.bf16.gmra.mrb[0].mxu0 %v1699
  %v3198 = vpop.f32.mrb[0].mxu0
  %v3199 = vadd.f32 %v2854, %v3198
  %v3200 = vpop.f32.mrb[0].mxu0
  %v3201 = vadd.f32 %v2856, %v3200
  %v3202 = vpop.f32.mrb[0].mxu0
  %v3203 = vadd.f32 %v2858, %v3202
  %v3204 = vpop.f32.mrb[0].mxu0
  %v3205 = vadd.f32 %v2860, %v3204
  %3206 = vmatprep.mubr.bf16.mxu0 %v1138
  %3207 = vmatmul.mubr.bf16.gmra.mrb[0].mxu0 %v1702
  %v3208 = vpop.f32.mrb[0].mxu0
  %v3209 = vpop.f32.mrb[0].mxu0
  %v3210 = vadd.f32 %v2865, %v3209
  %v3211 = vpop.f32.mrb[0].mxu0
  %v3212 = vpop.f32.mrb[0].mxu0
  %v3213 = vadd.f32 %v2868, %v3212
  %3214 = vmatprep.mubr.bf16.mxu0 %v1139
  %3215 = vmatmul.mubr.bf16.gmra.mrb[0].mxu0 %v1657
  %v3216 = vpop.f32.mrb[0].mxu0
  %v3217 = vpop.f32.mrb[0].mxu0
  %v3218 = vadd.f32 %v2873, %v3217
  %v3219 = vpop.f32.mrb[0].mxu0
  %v3220 = vpop.f32.mrb[0].mxu0
  %v3221 = vadd.f32 %v2876, %v3220
  %3222 = vmatprep.mubr.bf16.mxu0 %v1140
  %3223 = vmatmul.mubr.bf16.gmra.mrb[0].mxu0 %v1705
  %v3224 = vpop.f32.mrb[0].mxu0
  %v3225 = vadd.f32 %v2880, %v3224
  %v3226 = vpop.f32.mrb[0].mxu0
  %v3227 = vadd.f32 %v2882, %v3226
  %v3228 = vpop.f32.mrb[0].mxu0
  %v3229 = vadd.f32 %v2884, %v3228
  %v3230 = vpop.f32.mrb[0].mxu0
  %v3231 = vadd.f32 %v2886, %v3230
  %3232 = vmatprep.mubr.bf16.mxu0 %v1141
  %3233 = vmatmul.mubr.bf16.gmra.mrb[0].mxu0 %v1708
  %v3234 = vpop.f32.mrb[0].mxu0
  %v3235 = vadd.f32 %v2890, %v3234
  %v3236 = vpop.f32.mrb[0].mxu0
  %v3237 = vadd.f32 %v2892, %v3236
  %v3238 = vpop.f32.mrb[0].mxu0
  %v3239 = vadd.f32 %v2894, %v3238
  %v3240 = vpop.f32.mrb[0].mxu0
  %v3241 = vadd.f32 %v2896, %v3240
  %3242 = vmatprep.mubr.bf16.mxu0 %v1142
  %3243 = vmatmul.mubr.bf16.gmra.mrb[0].mxu0 %v1711
  %v3244 = vpop.f32.mrb[0].mxu0
  %v3245 = vadd.f32 %v2900, %v3244
  %v3246 = vpop.f32.mrb[0].mxu0
  %v3247 = vadd.f32 %v2902, %v3246
  %v3248 = vpop.f32.mrb[0].mxu0
  %v3249 = vadd.f32 %v2904, %v3248
  %v3250 = vpop.f32.mrb[0].mxu0
  %v3251 = vadd.f32 %v2906, %v3250
  %3252 = vmatprep.mubr.bf16.mxu0 %v1143
  %3253 = vmatmul.mubr.bf16.gmra.mrb[0].mxu0 %v1714
  %v3254 = vpop.f32.mrb[0].mxu0
  %v3255 = vadd.f32 %v2910, %v3254
  %v3256 = vpop.f32.mrb[0].mxu0
  %v3257 = vadd.f32 %v2912, %v3256
  %v3258 = vpop.f32.mrb[0].mxu0
  %v3259 = vadd.f32 %v2914, %v3258
  %v3260 = vpop.f32.mrb[0].mxu0
  %v3261 = vadd.f32 %v2916, %v3260
  %3262 = vmatprep.mubr.bf16.mxu0 %v1144
  %3263 = vmatmul.mubr.bf16.gmra.mrb[0].mxu0 %v1717
  %v3264 = vpop.f32.mrb[0].mxu0
  %v3265 = vadd.f32 %v2920, %v3264
  %v3266 = vpop.f32.mrb[0].mxu0
  %v3267 = vadd.f32 %v2922, %v3266
  %v3268 = vpop.f32.mrb[0].mxu0
  %v3269 = vadd.f32 %v2924, %v3268
  %v3270 = vpop.f32.mrb[0].mxu0
  %v3271 = vadd.f32 %v2926, %v3270
  %3272 = vmatprep.mubr.bf16.mxu0 %v1145
  %3273 = vmatmul.mubr.bf16.gmra.mrb[0].mxu0 %v1720
  %v3274 = vpop.f32.mrb[0].mxu0
  %v3275 = vadd.f32 %v2930, %v3274
  %v3276 = vpop.f32.mrb[0].mxu0
  %v3277 = vadd.f32 %v2932, %v3276
  %v3278 = vpop.f32.mrb[0].mxu0
  %v3279 = vadd.f32 %v2934, %v3278
  %v3280 = vpop.f32.mrb[0].mxu0
  %v3281 = vadd.f32 %v2936, %v3280
  %3282 = vmatprep.mubr.bf16.mxu0 %v1146
  %3283 = vmatmul.mubr.bf16.gmra.mrb[0].mxu0 %v1723
  %v3284 = vpop.f32.mrb[0].mxu0
  %v3285 = vadd.f32 %v2940, %v3284
  %v3286 = vpop.f32.mrb[0].mxu0
  %v3287 = vadd.f32 %v2942, %v3286
  %v3288 = vpop.f32.mrb[0].mxu0
  %v3289 = vadd.f32 %v2944, %v3288
  %v3290 = vpop.f32.mrb[0].mxu0
  %v3291 = vadd.f32 %v2946, %v3290
  %3292 = vmatprep.mubr.bf16.mxu0 %v1147
  %3293 = vmatmul.mubr.bf16.gmra.mrb[0].mxu0 %v1726
  %v3294 = vpop.f32.mrb[0].mxu0
  %v3295 = vadd.f32 %v2950, %v3294
  %v3296 = vpop.f32.mrb[0].mxu0
  %v3297 = vadd.f32 %v2952, %v3296
  %v3298 = vpop.f32.mrb[0].mxu0
  %v3299 = vadd.f32 %v2954, %v3298
  %v3300 = vpop.f32.mrb[0].mxu0
  %v3301 = vadd.f32 %v2956, %v3300
  %3302 = vmatprep.mubr.bf16.mxu0 %v1148
  %3303 = vmatmul.mubr.bf16.gmra.mrb[0].mxu0 %v1729
  %v3304 = vpop.f32.mrb[0].mxu0
  %v3305 = vadd.f32 %v2960, %v3304
  %v3306 = vpop.f32.mrb[0].mxu0
  %v3307 = vadd.f32 %v2962, %v3306
  %v3308 = vpop.f32.mrb[0].mxu0
  %v3309 = vadd.f32 %v2964, %v3308
  %v3310 = vpop.f32.mrb[0].mxu0
  %v3311 = vadd.f32 %v2966, %v3310
  %3312 = vmatprep.mubr.bf16.mxu0 %v1149
  %3313 = vmatmul.mubr.bf16.gmra.mrb[0].mxu0 %v1732
  %v3314 = vpop.f32.mrb[0].mxu0
  %v3315 = vadd.f32 %v2970, %v3314
  %v3316 = vpop.f32.mrb[0].mxu0
  %v3317 = vadd.f32 %v2972, %v3316
  %v3318 = vpop.f32.mrb[0].mxu0
  %v3319 = vadd.f32 %v2974, %v3318
  %v3320 = vpop.f32.mrb[0].mxu0
  %v3321 = vadd.f32 %v2976, %v3320
  %3322 = vmatprep.mubr.bf16.mxu0 %v1150
  %3323 = vmatmul.mubr.bf16.gmra.mrb[0].mxu0 %v1735
  %v3324 = vpop.f32.mrb[0].mxu0
  %v3325 = vadd.f32 %v2980, %v3324
  %v3326 = vpop.f32.mrb[0].mxu0
  %v3327 = vadd.f32 %v2982, %v3326
  %v3328 = vpop.f32.mrb[0].mxu0
  %v3329 = vadd.f32 %v2984, %v3328
  %v3330 = vpop.f32.mrb[0].mxu0
  %v3331 = vadd.f32 %v2986, %v3330
  %3332 = vmatprep.mubr.bf16.mxu0 %v1151
  %3333 = vmatmul.mubr.bf16.gmra.mrb[0].mxu0 %v1738
  %v3334 = vpop.f32.mrb[0].mxu0
  %v3335 = vadd.f32 %v2990, %v3334
  %v3336 = vpop.f32.mrb[0].mxu0
  %v3337 = vadd.f32 %v2992, %v3336
  %v3338 = vpop.f32.mrb[0].mxu0
  %v3339 = vadd.f32 %v2994, %v3338
  %v3340 = vpop.f32.mrb[0].mxu0
  %v3341 = vadd.f32 %v2996, %v3340
  %3342 = vmatprep.mubr.bf16.mxu0 %v1152
  %3343 = vmatmul.mubr.bf16.gmra.mrb[0].mxu0 %v1741
  %v3344 = vpop.f32.mrb[0].mxu0
  %v3345 = vadd.f32 %v3000, %v3344
  %v3346 = vpop.f32.mrb[0].mxu0
  %v3347 = vadd.f32 %v3002, %v3346
  %v3348 = vpop.f32.mrb[0].mxu0
  %v3349 = vadd.f32 %v3004, %v3348
  %v3350 = vpop.f32.mrb[0].mxu0
  %v3351 = vadd.f32 %v3006, %v3350
  %3352 = vmatprep.mubr.bf16.mxu0 %v1153
  %3353 = vmatmul.mubr.bf16.gmra.mrb[0].mxu0 %v1744
  %v3354 = vpop.f32.mrb[0].mxu0
  %v3355 = vadd.f32 %v3010, %v3354
  %v3356 = vpop.f32.mrb[0].mxu0
  %v3357 = vadd.f32 %v3012, %v3356
  %v3358 = vpop.f32.mrb[0].mxu0
  %v3359 = vadd.f32 %v3014, %v3358
  %v3360 = vpop.f32.mrb[0].mxu0
  %v3361 = vadd.f32 %v3016, %v3360
  %3362 = vmatprep.mubr.bf16.mxu0 %v1154
  %3363 = vmatmul.mubr.bf16.gmra.mrb[0].mxu0 %v1747
  %v3364 = vpop.f32.mrb[0].mxu0
  %v3365 = vpop.f32.mrb[0].mxu0
  %v3366 = vadd.f32 %v3021, %v3365
  %v3367 = vpop.f32.mrb[0].mxu0
  %v3368 = vpop.f32.mrb[0].mxu0
  %v3369 = vadd.f32 %v3024, %v3368
  %3370 = vdwg.mxu0
  %3371 = vmatprep.subr.bf16.mxu0 %v2458
  %3372 = vmatpush1.bf16.msra.mxu0 %v2457
  %3373 = vmatprep.subr.bf16.mxu0 %v2460
  %3374 = vmatpush1.bf16.msra.mxu0 %v2459
  %3375 = vmatprep.subr.bf16.mxu0 %v2462
  %3376 = vmatpush1.bf16.msra.mxu0 %v2461
  %3377 = vmatprep.subr.bf16.mxu0 %v2464
  %3378 = vmatpush1.bf16.msra.mxu0 %v2463
  %3379 = vmatprep.subr.bf16.mxu0 %v2466
  %3380 = vmatpush1.bf16.msra.mxu0 %v2465
  %3381 = vmatprep.subr.bf16.mxu0 %v2468
  %3382 = vmatpush1.bf16.msra.mxu0 %v2467
  %3383 = vmatprep.subr.bf16.mxu0 %v2470
  %3384 = vmatpush1.bf16.msra.mxu0 %v2469
  %3385 = vmatprep.subr.bf16.mxu0 %v2472
  %3386 = vmatpush1.bf16.msra.mxu0 %v2471
  %3387 = vmatprep.subr.bf16.mxu0 %v2474
  %3388 = vmatpush1.bf16.msra.mxu0 %v2473
  %3389 = vmatprep.subr.bf16.mxu0 %v2476
  %3390 = vmatpush1.bf16.msra.mxu0 %v2475
  %3391 = vmatprep.subr.bf16.mxu0 %v2478
  %3392 = vmatpush1.bf16.msra.mxu0 %v2477
  %3393 = vmatprep.subr.bf16.mxu0 %v2480
  %3394 = vmatpush1.bf16.msra.mxu0 %v2479
  %3395 = vmatprep.subr.bf16.mxu0 %v2482
  %3396 = vmatpush1.bf16.msra.mxu0 %v2481
  %3397 = vmatprep.subr.bf16.mxu0 %v2484
  %3398 = vmatpush1.bf16.msra.mxu0 %v2483
  %3399 = vmatprep.subr.bf16.mxu0 %v2486
  %3400 = vmatpush1.bf16.msra.mxu0 %v2485
  %3401 = vmatprep.subr.bf16.mxu0 %v2488
  %3402 = vmatpush1.bf16.msra.mxu0 %v2487
  %3403 = vmatprep.mubr.bf16.mxu0 %v1660
  %3404 = vmatmul.mubr.bf16.gmra.mrb[0].mxu0 %v1212
  %v3405 = vpop.f32.mrb[0].mxu0
  %v3406 = vpop.f32.mrb[0].mxu0
  %v3407 = vadd.f32 %v3062, %v3406
  %v3408 = vpop.f32.mrb[0].mxu0
  %v3409 = vpop.f32.mrb[0].mxu0
  %v3410 = vadd.f32 %v3065, %v3409
  %3411 = vmatprep.mubr.bf16.mxu0 %v1663
  %3412 = vmatmul.mubr.bf16.gmra.mrb[0].mxu0 %v1224
  %v3413 = vpop.f32.mrb[0].mxu0
  %v3414 = vadd.f32 %v3069, %v3413
  %v3415 = vpop.f32.mrb[0].mxu0
  %v3416 = vadd.f32 %v3071, %v3415
  %v3417 = vpop.f32.mrb[0].mxu0
  %v3418 = vadd.f32 %v3073, %v3417
  %v3419 = vpop.f32.mrb[0].mxu0
  %v3420 = vadd.f32 %v3075, %v3419
  %3421 = vmatprep.mubr.bf16.mxu0 %v1666
  %3422 = vmatmul.mubr.bf16.gmra.mrb[0].mxu0 %v1236
  %v3423 = vpop.f32.mrb[0].mxu0
  %v3424 = vadd.f32 %v3079, %v3423
  %v3425 = vpop.f32.mrb[0].mxu0
  %v3426 = vadd.f32 %v3081, %v3425
  %v3427 = vpop.f32.mrb[0].mxu0
  %v3428 = vadd.f32 %v3083, %v3427
  %v3429 = vpop.f32.mrb[0].mxu0
  %v3430 = vadd.f32 %v3085, %v3429
  %3431 = vmatprep.mubr.bf16.mxu0 %v1669
  %3432 = vmatmul.mubr.bf16.gmra.mrb[0].mxu0 %v1248
  %v3433 = vpop.f32.mrb[0].mxu0
  %v3434 = vadd.f32 %v3089, %v3433
  %v3435 = vpop.f32.mrb[0].mxu0
  %v3436 = vadd.f32 %v3091, %v3435
  %v3437 = vpop.f32.mrb[0].mxu0
  %v3438 = vadd.f32 %v3093, %v3437
  %v3439 = vpop.f32.mrb[0].mxu0
  %v3440 = vadd.f32 %v3095, %v3439
  %3441 = vmatprep.mubr.bf16.mxu0 %v1672
  %3442 = vmatmul.mubr.bf16.gmra.mrb[0].mxu0 %v1260
  %v3443 = vpop.f32.mrb[0].mxu0
  %v3444 = vadd.f32 %v3099, %v3443
  %v3445 = vpop.f32.mrb[0].mxu0
  %v3446 = vadd.f32 %v3101, %v3445
  %v3447 = vpop.f32.mrb[0].mxu0
  %v3448 = vadd.f32 %v3103, %v3447
  %v3449 = vpop.f32.mrb[0].mxu0
  %v3450 = vadd.f32 %v3105, %v3449
  %3451 = vmatprep.mubr.bf16.mxu0 %v1675
  %3452 = vmatmul.mubr.bf16.gmra.mrb[0].mxu0 %v1272
  %v3453 = vpop.f32.mrb[0].mxu0
  %v3454 = vadd.f32 %v3109, %v3453
  %v3455 = vpop.f32.mrb[0].mxu0
  %v3456 = vadd.f32 %v3111, %v3455
  %v3457 = vpop.f32.mrb[0].mxu0
  %v3458 = vadd.f32 %v3113, %v3457
  %v3459 = vpop.f32.mrb[0].mxu0
  %v3460 = vadd.f32 %v3115, %v3459
  %3461 = vmatprep.mubr.bf16.mxu0 %v1678
  %3462 = vmatmul.mubr.bf16.gmra.mrb[0].mxu0 %v1284
  %v3463 = vpop.f32.mrb[0].mxu0
  %v3464 = vadd.f32 %v3119, %v3463
  %v3465 = vpop.f32.mrb[0].mxu0
  %v3466 = vadd.f32 %v3121, %v3465
  %v3467 = vpop.f32.mrb[0].mxu0
  %v3468 = vadd.f32 %v3123, %v3467
  %v3469 = vpop.f32.mrb[0].mxu0
  %v3470 = vadd.f32 %v3125, %v3469
  %3471 = vmatprep.mubr.bf16.mxu0 %v1681
  %3472 = vmatmul.mubr.bf16.gmra.mrb[0].mxu0 %v1296
  %v3473 = vpop.f32.mrb[0].mxu0
  %v3474 = vadd.f32 %v3129, %v3473
  %v3475 = vpop.f32.mrb[0].mxu0
  %v3476 = vadd.f32 %v3131, %v3475
  %v3477 = vpop.f32.mrb[0].mxu0
  %v3478 = vadd.f32 %v3133, %v3477
  %v3479 = vpop.f32.mrb[0].mxu0
  %v3480 = vadd.f32 %v3135, %v3479
  %3481 = vmatprep.mubr.bf16.mxu0 %v1684
  %3482 = vmatmul.mubr.bf16.gmra.mrb[0].mxu0 %v1308
  %v3483 = vpop.f32.mrb[0].mxu0
  %v3484 = vadd.f32 %v3139, %v3483
  %v3485 = vpop.f32.mrb[0].mxu0
  %v3486 = vadd.f32 %v3141, %v3485
  %v3487 = vpop.f32.mrb[0].mxu0
  %v3488 = vadd.f32 %v3143, %v3487
  %v3489 = vpop.f32.mrb[0].mxu0
  %v3490 = vadd.f32 %v3145, %v3489
  %3491 = vmatprep.mubr.bf16.mxu0 %v1687
  %3492 = vmatmul.mubr.bf16.gmra.mrb[0].mxu0 %v1320
  %v3493 = vpop.f32.mrb[0].mxu0
  %v3494 = vadd.f32 %v3149, %v3493
  %v3495 = vpop.f32.mrb[0].mxu0
  %v3496 = vadd.f32 %v3151, %v3495
  %v3497 = vpop.f32.mrb[0].mxu0
  %v3498 = vadd.f32 %v3153, %v3497
  %v3499 = vpop.f32.mrb[0].mxu0
  %v3500 = vadd.f32 %v3155, %v3499
  %3501 = vmatprep.mubr.bf16.mxu0 %v1690
  %3502 = vmatmul.mubr.bf16.gmra.mrb[0].mxu0 %v1332
  %v3503 = vpop.f32.mrb[0].mxu0
  %v3504 = vadd.f32 %v3159, %v3503
  %v3505 = vpop.f32.mrb[0].mxu0
  %v3506 = vadd.f32 %v3161, %v3505
  %v3507 = vpop.f32.mrb[0].mxu0
  %v3508 = vadd.f32 %v3163, %v3507
  %v3509 = vpop.f32.mrb[0].mxu0
  %v3510 = vadd.f32 %v3165, %v3509
  %3511 = vmatprep.mubr.bf16.mxu0 %v1693
  %3512 = vmatmul.mubr.bf16.gmra.mrb[0].mxu0 %v1344
  %v3513 = vpop.f32.mrb[0].mxu0
  %v3514 = vadd.f32 %v3169, %v3513
  %v3515 = vpop.f32.mrb[0].mxu0
  %v3516 = vadd.f32 %v3171, %v3515
  %v3517 = vpop.f32.mrb[0].mxu0
  %v3518 = vadd.f32 %v3173, %v3517
  %v3519 = vpop.f32.mrb[0].mxu0
  %v3520 = vadd.f32 %v3175, %v3519
  %3521 = vmatprep.mubr.bf16.mxu0 %v1696
  %3522 = vmatmul.mubr.bf16.gmra.mrb[0].mxu0 %v1356
  %v3523 = vpop.f32.mrb[0].mxu0
  %v3524 = vadd.f32 %v3179, %v3523
  %v3525 = vpop.f32.mrb[0].mxu0
  %v3526 = vadd.f32 %v3181, %v3525
  %v3527 = vpop.f32.mrb[0].mxu0
  %v3528 = vadd.f32 %v3183, %v3527
  %v3529 = vpop.f32.mrb[0].mxu0
  %v3530 = vadd.f32 %v3185, %v3529
  %3531 = vmatprep.mubr.bf16.mxu0 %v1699
  %3532 = vmatmul.mubr.bf16.gmra.mrb[0].mxu0 %v1368
  %v3533 = vpop.f32.mrb[0].mxu0
  %v3534 = vadd.f32 %v3189, %v3533
  %v3535 = vpop.f32.mrb[0].mxu0
  %v3536 = vadd.f32 %v3191, %v3535
  %v3537 = vpop.f32.mrb[0].mxu0
  %v3538 = vadd.f32 %v3193, %v3537
  %v3539 = vpop.f32.mrb[0].mxu0
  %v3540 = vadd.f32 %v3195, %v3539
  %3541 = vmatprep.mubr.bf16.mxu0 %v1702
  %3542 = vmatmul.mubr.bf16.gmra.mrb[0].mxu0 %v1380
  %v3543 = vpop.f32.mrb[0].mxu0
  %v3544 = vadd.f32 %v3199, %v3543
  %v3545 = vpop.f32.mrb[0].mxu0
  %v3546 = vadd.f32 %v3201, %v3545
  %v3547 = vpop.f32.mrb[0].mxu0
  %v3548 = vadd.f32 %v3203, %v3547
  %v3549 = vpop.f32.mrb[0].mxu0
  %v3550 = vadd.f32 %v3205, %v3549
  %3551 = vmatprep.mubr.bf16.mxu0 %v1811
  %3552 = vmatmul.mubr.bf16.gmra.mrb[0].mxu0 %v1790
  %v3553 = vpop.f32.mrb[0].mxu0
  %v3554 = vpop.f32.mrb[0].mxu0
  %v3555 = vadd.f32 %v3210, %v3554
  %v3556 = vpop.f32.mrb[0].mxu0
  %v3557 = vpop.f32.mrb[0].mxu0
  %v3558 = vadd.f32 %v3213, %v3557
  %3559 = vmatprep.mubr.bf16.mxu0 %v1705
  %3560 = vmatmul.mubr.bf16.gmra.mrb[0].mxu0 %v1392
  %v3561 = vpop.f32.mrb[0].mxu0
  %v3562 = vpop.f32.mrb[0].mxu0
  %v3563 = vadd.f32 %v3218, %v3562
  %v3564 = vpop.f32.mrb[0].mxu0
  %v3565 = vpop.f32.mrb[0].mxu0
  %v3566 = vadd.f32 %v3221, %v3565
  %3567 = vmatprep.mubr.bf16.mxu0 %v1708
  %3568 = vmatmul.mubr.bf16.gmra.mrb[0].mxu0 %v1404
  %v3569 = vpop.f32.mrb[0].mxu0
  %v3570 = vadd.f32 %v3225, %v3569
  %v3571 = vpop.f32.mrb[0].mxu0
  %v3572 = vadd.f32 %v3227, %v3571
  %v3573 = vpop.f32.mrb[0].mxu0
  %v3574 = vadd.f32 %v3229, %v3573
  %v3575 = vpop.f32.mrb[0].mxu0
  %v3576 = vadd.f32 %v3231, %v3575
  %3577 = vmatprep.mubr.bf16.mxu0 %v1711
  %3578 = vmatmul.mubr.bf16.gmra.mrb[0].mxu0 %v1416
  %v3579 = vpop.f32.mrb[0].mxu0
  %v3580 = vadd.f32 %v3235, %v3579
  %v3581 = vpop.f32.mrb[0].mxu0
  %v3582 = vadd.f32 %v3237, %v3581
  %v3583 = vpop.f32.mrb[0].mxu0
  %v3584 = vadd.f32 %v3239, %v3583
  %v3585 = vpop.f32.mrb[0].mxu0
  %v3586 = vadd.f32 %v3241, %v3585
  %3587 = vmatprep.mubr.bf16.mxu0 %v1714
  %3588 = vmatmul.mubr.bf16.gmra.mrb[0].mxu0 %v1428
  %v3589 = vpop.f32.mrb[0].mxu0
  %v3590 = vadd.f32 %v3245, %v3589
  %v3591 = vpop.f32.mrb[0].mxu0
  %v3592 = vadd.f32 %v3247, %v3591
  %v3593 = vpop.f32.mrb[0].mxu0
  %v3594 = vadd.f32 %v3249, %v3593
  %v3595 = vpop.f32.mrb[0].mxu0
  %v3596 = vadd.f32 %v3251, %v3595
  %3597 = vmatprep.mubr.bf16.mxu0 %v1717
  %3598 = vmatmul.mubr.bf16.gmra.mrb[0].mxu0 %v1440
  %v3599 = vpop.f32.mrb[0].mxu0
  %v3600 = vadd.f32 %v3255, %v3599
  %v3601 = vpop.f32.mrb[0].mxu0
  %v3602 = vadd.f32 %v3257, %v3601
  %v3603 = vpop.f32.mrb[0].mxu0
  %v3604 = vadd.f32 %v3259, %v3603
  %v3605 = vpop.f32.mrb[0].mxu0
  %v3606 = vadd.f32 %v3261, %v3605
  %3607 = vmatprep.mubr.bf16.mxu0 %v1720
  %3608 = vmatmul.mubr.bf16.gmra.mrb[0].mxu0 %v1452
  %v3609 = vpop.f32.mrb[0].mxu0
  %v3610 = vadd.f32 %v3265, %v3609
  %v3611 = vpop.f32.mrb[0].mxu0
  %v3612 = vadd.f32 %v3267, %v3611
  %v3613 = vpop.f32.mrb[0].mxu0
  %v3614 = vadd.f32 %v3269, %v3613
  %v3615 = vpop.f32.mrb[0].mxu0
  %v3616 = vadd.f32 %v3271, %v3615
  %3617 = vmatprep.mubr.bf16.mxu0 %v1723
  %3618 = vmatmul.mubr.bf16.gmra.mrb[0].mxu0 %v1464
  %v3619 = vpop.f32.mrb[0].mxu0
  %v3620 = vadd.f32 %v3275, %v3619
  %v3621 = vpop.f32.mrb[0].mxu0
  %v3622 = vadd.f32 %v3277, %v3621
  %v3623 = vpop.f32.mrb[0].mxu0
  %v3624 = vadd.f32 %v3279, %v3623
  %v3625 = vpop.f32.mrb[0].mxu0
  %v3626 = vadd.f32 %v3281, %v3625
  %3627 = vmatprep.mubr.bf16.mxu0 %v1726
  %3628 = vmatmul.mubr.bf16.gmra.mrb[0].mxu0 %v1476
  %v3629 = vpop.f32.mrb[0].mxu0
  %v3630 = vadd.f32 %v3285, %v3629
  %v3631 = vpop.f32.mrb[0].mxu0
  %v3632 = vadd.f32 %v3287, %v3631
  %v3633 = vpop.f32.mrb[0].mxu0
  %v3634 = vadd.f32 %v3289, %v3633
  %v3635 = vpop.f32.mrb[0].mxu0
  %v3636 = vadd.f32 %v3291, %v3635
  %3637 = vmatprep.mubr.bf16.mxu0 %v1729
  %3638 = vmatmul.mubr.bf16.gmra.mrb[0].mxu0 %v1488
  %v3639 = vpop.f32.mrb[0].mxu0
  %v3640 = vadd.f32 %v3295, %v3639
  %v3641 = vpop.f32.mrb[0].mxu0
  %v3642 = vadd.f32 %v3297, %v3641
  %v3643 = vpop.f32.mrb[0].mxu0
  %v3644 = vadd.f32 %v3299, %v3643
  %v3645 = vpop.f32.mrb[0].mxu0
  %v3646 = vadd.f32 %v3301, %v3645
  %3647 = vmatprep.mubr.bf16.mxu0 %v1732
  %3648 = vmatmul.mubr.bf16.gmra.mrb[0].mxu0 %v1500
  %v3649 = vpop.f32.mrb[0].mxu0
  %v3650 = vadd.f32 %v3305, %v3649
  %v3651 = vpop.f32.mrb[0].mxu0
  %v3652 = vadd.f32 %v3307, %v3651
  %v3653 = vpop.f32.mrb[0].mxu0
  %v3654 = vadd.f32 %v3309, %v3653
  %v3655 = vpop.f32.mrb[0].mxu0
  %v3656 = vadd.f32 %v3311, %v3655
  %3657 = vmatprep.mubr.bf16.mxu0 %v1735
  %3658 = vmatmul.mubr.bf16.gmra.mrb[0].mxu0 %v1512
  %v3659 = vpop.f32.mrb[0].mxu0
  %v3660 = vadd.f32 %v3315, %v3659
  %v3661 = vpop.f32.mrb[0].mxu0
  %v3662 = vadd.f32 %v3317, %v3661
  %v3663 = vpop.f32.mrb[0].mxu0
  %v3664 = vadd.f32 %v3319, %v3663
  %v3665 = vpop.f32.mrb[0].mxu0
  %v3666 = vadd.f32 %v3321, %v3665
  %3667 = vmatprep.mubr.bf16.mxu0 %v1738
  %3668 = vmatmul.mubr.bf16.gmra.mrb[0].mxu0 %v1524
  %v3669 = vpop.f32.mrb[0].mxu0
  %v3670 = vadd.f32 %v3325, %v3669
  %v3671 = vpop.f32.mrb[0].mxu0
  %v3672 = vadd.f32 %v3327, %v3671
  %v3673 = vpop.f32.mrb[0].mxu0
  %v3674 = vadd.f32 %v3329, %v3673
  %v3675 = vpop.f32.mrb[0].mxu0
  %v3676 = vadd.f32 %v3331, %v3675
  %3677 = vmatprep.mubr.bf16.mxu0 %v1741
  %3678 = vmatmul.mubr.bf16.gmra.mrb[0].mxu0 %v1536
  %v3679 = vpop.f32.mrb[0].mxu0
  %v3680 = vadd.f32 %v3335, %v3679
  %v3681 = vpop.f32.mrb[0].mxu0
  %v3682 = vadd.f32 %v3337, %v3681
  %v3683 = vpop.f32.mrb[0].mxu0
  %v3684 = vadd.f32 %v3339, %v3683
  %v3685 = vpop.f32.mrb[0].mxu0
  %v3686 = vadd.f32 %v3341, %v3685
  %3687 = vmatprep.mubr.bf16.mxu0 %v1744
  %3688 = vmatmul.mubr.bf16.gmra.mrb[0].mxu0 %v1548
  %v3689 = vpop.f32.mrb[0].mxu0
  %v3690 = vadd.f32 %v3345, %v3689
  %v3691 = vpop.f32.mrb[0].mxu0
  %v3692 = vadd.f32 %v3347, %v3691
  %v3693 = vpop.f32.mrb[0].mxu0
  %v3694 = vadd.f32 %v3349, %v3693
  %v3695 = vpop.f32.mrb[0].mxu0
  %v3696 = vadd.f32 %v3351, %v3695
  %3697 = vmatprep.mubr.bf16.mxu0 %v1747
  %3698 = vmatmul.mubr.bf16.gmra.mrb[0].mxu0 %v1560
  %v3699 = vpop.f32.mrb[0].mxu0
  %v3700 = vadd.f32 %v3355, %v3699
  %v3701 = vpop.f32.mrb[0].mxu0
  %v3702 = vadd.f32 %v3357, %v3701
  %v3703 = vpop.f32.mrb[0].mxu0
  %v3704 = vadd.f32 %v3359, %v3703
  %v3705 = vpop.f32.mrb[0].mxu0
  %v3706 = vadd.f32 %v3361, %v3705
  %3707 = vmatprep.mubr.bf16.mxu0 %v1814
  %3708 = vmatmul.mubr.bf16.gmra.mrb[0].mxu0 %v1802
  %v3709 = vpop.f32.mrb[0].mxu0
  %v3710 = vpop.f32.mrb[0].mxu0
  %v3711 = vadd.f32 %v3366, %v3710
  %v3712 = vpop.f32.mrb[0].mxu0
  %v3713 = vpop.f32.mrb[0].mxu0
  %v3714 = vadd.f32 %v3369, %v3713
  %3715 = vdwg.mxu0
  %3716 = vmatprep.subr.bf16.mxu0 %v2490
  %3717 = vmatpush1.bf16.msra.mxu0 %v2489
  %3718 = vmatprep.subr.bf16.mxu0 %v2492
  %3719 = vmatpush1.bf16.msra.mxu0 %v2491
  %3720 = vmatprep.subr.bf16.mxu0 %v2494
  %3721 = vmatpush1.bf16.msra.mxu0 %v2493
  %3722 = vmatprep.subr.bf16.mxu0 %v2496
  %3723 = vmatpush1.bf16.msra.mxu0 %v2495
  %3724 = vmatprep.subr.bf16.mxu0 %v2498
  %3725 = vmatpush1.bf16.msra.mxu0 %v2497
  %3726 = vmatprep.subr.bf16.mxu0 %v2500
  %3727 = vmatpush1.bf16.msra.mxu0 %v2499
  %3728 = vmatprep.subr.bf16.mxu0 %v2502
  %3729 = vmatpush1.bf16.msra.mxu0 %v2501
  %3730 = vmatprep.subr.bf16.mxu0 %v2504
  %3731 = vmatpush1.bf16.msra.mxu0 %v2503
  %3732 = vmatprep.subr.bf16.mxu0 %v2506
  %3733 = vmatpush1.bf16.msra.mxu0 %v2505
  %3734 = vmatprep.subr.bf16.mxu0 %v2508
  %3735 = vmatpush1.bf16.msra.mxu0 %v2507
  %3736 = vmatprep.subr.bf16.mxu0 %v2510
  %3737 = vmatpush1.bf16.msra.mxu0 %v2509
  %3738 = vmatprep.subr.bf16.mxu0 %v2512
  %3739 = vmatpush1.bf16.msra.mxu0 %v2511
  %3740 = vmatprep.subr.bf16.mxu0 %v2514
  %3741 = vmatpush1.bf16.msra.mxu0 %v2513
  %3742 = vmatprep.subr.bf16.mxu0 %v2516
  %3743 = vmatpush1.bf16.msra.mxu0 %v2515
  %3744 = vmatprep.subr.bf16.mxu0 %v2518
  %3745 = vmatpush1.bf16.msra.mxu0 %v2517
  %3746 = vmatprep.subr.bf16.mxu0 %v2520
  %3747 = vmatpush1.bf16.msra.mxu0 %v2519
  %3748 = vmatprep.mubr.bf16.mxu0 %v1224
  %3749 = vmatmul.mubr.bf16.gmra.mrb[0].mxu0 %v1124
  %v3750 = vpop.f32.mrb[0].mxu0
  %v3751 = vpop.f32.mrb[0].mxu0
  %v3752 = vadd.f32 %v3407, %v3751
  %v3753 = vpop.f32.mrb[0].mxu0
  %v3754 = vpop.f32.mrb[0].mxu0
  %v3755 = vadd.f32 %v3410, %v3754
  %3756 = vmatprep.mubr.bf16.mxu0 %v1236
  %3757 = vmatmul.mubr.bf16.gmra.mrb[0].mxu0 %v1125
  %v3758 = vpop.f32.mrb[0].mxu0
  %v3759 = vadd.f32 %v3414, %v3758
  %v3760 = vpop.f32.mrb[0].mxu0
  %v3761 = vadd.f32 %v3416, %v3760
  %v3762 = vpop.f32.mrb[0].mxu0
  %v3763 = vadd.f32 %v3418, %v3762
  %v3764 = vpop.f32.mrb[0].mxu0
  %v3765 = vadd.f32 %v3420, %v3764
  %3766 = vmatprep.mubr.bf16.mxu0 %v1248
  %3767 = vmatmul.mubr.bf16.gmra.mrb[0].mxu0 %v1126
  %v3768 = vpop.f32.mrb[0].mxu0
  %v3769 = vadd.f32 %v3424, %v3768
  %v3770 = vpop.f32.mrb[0].mxu0
  %v3771 = vadd.f32 %v3426, %v3770
  %v3772 = vpop.f32.mrb[0].mxu0
  %v3773 = vadd.f32 %v3428, %v3772
  %v3774 = vpop.f32.mrb[0].mxu0
  %v3775 = vadd.f32 %v3430, %v3774
  %3776 = vmatprep.mubr.bf16.mxu0 %v1260
  %3777 = vmatmul.mubr.bf16.gmra.mrb[0].mxu0 %v1127
  %v3778 = vpop.f32.mrb[0].mxu0
  %v3779 = vadd.f32 %v3434, %v3778
  %v3780 = vpop.f32.mrb[0].mxu0
  %v3781 = vadd.f32 %v3436, %v3780
  %v3782 = vpop.f32.mrb[0].mxu0
  %v3783 = vadd.f32 %v3438, %v3782
  %v3784 = vpop.f32.mrb[0].mxu0
  %v3785 = vadd.f32 %v3440, %v3784
  %3786 = vmatprep.mubr.bf16.mxu0 %v1272
  %3787 = vmatmul.mubr.bf16.gmra.mrb[0].mxu0 %v1128
  %v3788 = vpop.f32.mrb[0].mxu0
  %v3789 = vadd.f32 %v3444, %v3788
  %v3790 = vpop.f32.mrb[0].mxu0
  %v3791 = vadd.f32 %v3446, %v3790
  %v3792 = vpop.f32.mrb[0].mxu0
  %v3793 = vadd.f32 %v3448, %v3792
  %v3794 = vpop.f32.mrb[0].mxu0
  %v3795 = vadd.f32 %v3450, %v3794
  %3796 = vmatprep.mubr.bf16.mxu0 %v1284
  %3797 = vmatmul.mubr.bf16.gmra.mrb[0].mxu0 %v1129
  %v3798 = vpop.f32.mrb[0].mxu0
  %v3799 = vadd.f32 %v3454, %v3798
  %v3800 = vpop.f32.mrb[0].mxu0
  %v3801 = vadd.f32 %v3456, %v3800
  %v3802 = vpop.f32.mrb[0].mxu0
  %v3803 = vadd.f32 %v3458, %v3802
  %v3804 = vpop.f32.mrb[0].mxu0
  %v3805 = vadd.f32 %v3460, %v3804
  %3806 = vmatprep.mubr.bf16.mxu0 %v1296
  %3807 = vmatmul.mubr.bf16.gmra.mrb[0].mxu0 %v1130
  %v3808 = vpop.f32.mrb[0].mxu0
  %v3809 = vadd.f32 %v3464, %v3808
  %v3810 = vpop.f32.mrb[0].mxu0
  %v3811 = vadd.f32 %v3466, %v3810
  %v3812 = vpop.f32.mrb[0].mxu0
  %v3813 = vadd.f32 %v3468, %v3812
  %v3814 = vpop.f32.mrb[0].mxu0
  %v3815 = vadd.f32 %v3470, %v3814
  %3816 = vmatprep.mubr.bf16.mxu0 %v1308
  %3817 = vmatmul.mubr.bf16.gmra.mrb[0].mxu0 %v1131
  %v3818 = vpop.f32.mrb[0].mxu0
  %v3819 = vadd.f32 %v3474, %v3818
  %v3820 = vpop.f32.mrb[0].mxu0
  %v3821 = vadd.f32 %v3476, %v3820
  %v3822 = vpop.f32.mrb[0].mxu0
  %v3823 = vadd.f32 %v3478, %v3822
  %v3824 = vpop.f32.mrb[0].mxu0
  %v3825 = vadd.f32 %v3480, %v3824
  %3826 = vmatprep.mubr.bf16.mxu0 %v1320
  %3827 = vmatmul.mubr.bf16.gmra.mrb[0].mxu0 %v1132
  %v3828 = vpop.f32.mrb[0].mxu0
  %v3829 = vadd.f32 %v3484, %v3828
  %v3830 = vpop.f32.mrb[0].mxu0
  %v3831 = vadd.f32 %v3486, %v3830
  %v3832 = vpop.f32.mrb[0].mxu0
  %v3833 = vadd.f32 %v3488, %v3832
  %v3834 = vpop.f32.mrb[0].mxu0
  %v3835 = vadd.f32 %v3490, %v3834
  %3836 = vmatprep.mubr.bf16.mxu0 %v1332
  %3837 = vmatmul.mubr.bf16.gmra.mrb[0].mxu0 %v1133
  %v3838 = vpop.f32.mrb[0].mxu0
  %v3839 = vadd.f32 %v3494, %v3838
  %v3840 = vpop.f32.mrb[0].mxu0
  %v3841 = vadd.f32 %v3496, %v3840
  %v3842 = vpop.f32.mrb[0].mxu0
  %v3843 = vadd.f32 %v3498, %v3842
  %v3844 = vpop.f32.mrb[0].mxu0
  %v3845 = vadd.f32 %v3500, %v3844
  %3846 = vmatprep.mubr.bf16.mxu0 %v1344
  %3847 = vmatmul.mubr.bf16.gmra.mrb[0].mxu0 %v1134
  %v3848 = vpop.f32.mrb[0].mxu0
  %v3849 = vadd.f32 %v3504, %v3848
  %v3850 = vpop.f32.mrb[0].mxu0
  %v3851 = vadd.f32 %v3506, %v3850
  %v3852 = vpop.f32.mrb[0].mxu0
  %v3853 = vadd.f32 %v3508, %v3852
  %v3854 = vpop.f32.mrb[0].mxu0
  %v3855 = vadd.f32 %v3510, %v3854
  %3856 = vmatprep.mubr.bf16.mxu0 %v1356
  %3857 = vmatmul.mubr.bf16.gmra.mrb[0].mxu0 %v1135
  %v3858 = vpop.f32.mrb[0].mxu0
  %v3859 = vadd.f32 %v3514, %v3858
  %v3860 = vpop.f32.mrb[0].mxu0
  %v3861 = vadd.f32 %v3516, %v3860
  %v3862 = vpop.f32.mrb[0].mxu0
  %v3863 = vadd.f32 %v3518, %v3862
  %v3864 = vpop.f32.mrb[0].mxu0
  %v3865 = vadd.f32 %v3520, %v3864
  %3866 = vmatprep.mubr.bf16.mxu0 %v1368
  %3867 = vmatmul.mubr.bf16.gmra.mrb[0].mxu0 %v1136
  %v3868 = vpop.f32.mrb[0].mxu0
  %v3869 = vadd.f32 %v3524, %v3868
  %v3870 = vpop.f32.mrb[0].mxu0
  %v3871 = vadd.f32 %v3526, %v3870
  %v3872 = vpop.f32.mrb[0].mxu0
  %v3873 = vadd.f32 %v3528, %v3872
  %v3874 = vpop.f32.mrb[0].mxu0
  %v3875 = vadd.f32 %v3530, %v3874
  %3876 = vmatprep.mubr.bf16.mxu0 %v1380
  %3877 = vmatmul.mubr.bf16.gmra.mrb[0].mxu0 %v1137
  %v3878 = vpop.f32.mrb[0].mxu0
  %v3879 = vadd.f32 %v3534, %v3878
  %v3880 = vpop.f32.mrb[0].mxu0
  %v3881 = vadd.f32 %v3536, %v3880
  %v3882 = vpop.f32.mrb[0].mxu0
  %v3883 = vadd.f32 %v3538, %v3882
  %v3884 = vpop.f32.mrb[0].mxu0
  %v3885 = vadd.f32 %v3540, %v3884
  %3886 = vmatprep.mubr.bf16.mxu0 %v1790
  %3887 = vmatmul.mubr.bf16.gmra.mrb[0].mxu0 %v1138
  %v3888 = vpop.f32.mrb[0].mxu0
  %v3889 = vadd.f32 %v3544, %v3888
  %v3890 = vpop.f32.mrb[0].mxu0
  %v3891 = vadd.f32 %v3546, %v3890
  %v3892 = vpop.f32.mrb[0].mxu0
  %v3893 = vadd.f32 %v3548, %v3892
  %v3894 = vpop.f32.mrb[0].mxu0
  %v3895 = vadd.f32 %v3550, %v3894
  %3896 = vmatprep.mubr.bf16.mxu0 %v1200
  %3897 = vmatmul.mubr.bf16.gmra.mrb[0].mxu0 %v1122
  %v3898 = vpop.f32.mrb[0].mxu0
  %v3899 = vpop.f32.mrb[0].mxu0
  %v3900 = vadd.f32 %v3555, %v3899
  %v3901 = vpop.f32.mrb[0].mxu0
  %v3902 = vpop.f32.mrb[0].mxu0
  %v3903 = vadd.f32 %v3558, %v3902
  %3904 = vmatprep.mubr.bf16.mxu0 %v1404
  %3905 = vmatmul.mubr.bf16.gmra.mrb[0].mxu0 %v1140
  %v3906 = vpop.f32.mrb[0].mxu0
  %v3907 = vpop.f32.mrb[0].mxu0
  %v3908 = vadd.f32 %v3563, %v3907
  %v3909 = vpop.f32.mrb[0].mxu0
  %v3910 = vpop.f32.mrb[0].mxu0
  %v3911 = vadd.f32 %v3566, %v3910
  %3912 = vmatprep.mubr.bf16.mxu0 %v1416
  %3913 = vmatmul.mubr.bf16.gmra.mrb[0].mxu0 %v1141
  %v3914 = vpop.f32.mrb[0].mxu0
  %v3915 = vadd.f32 %v3570, %v3914
  %v3916 = vpop.f32.mrb[0].mxu0
  %v3917 = vadd.f32 %v3572, %v3916
  %v3918 = vpop.f32.mrb[0].mxu0
  %v3919 = vadd.f32 %v3574, %v3918
  %v3920 = vpop.f32.mrb[0].mxu0
  %v3921 = vadd.f32 %v3576, %v3920
  %3922 = vmatprep.mubr.bf16.mxu0 %v1428
  %3923 = vmatmul.mubr.bf16.gmra.mrb[0].mxu0 %v1142
  %v3924 = vpop.f32.mrb[0].mxu0
  %v3925 = vadd.f32 %v3580, %v3924
  %v3926 = vpop.f32.mrb[0].mxu0
  %v3927 = vadd.f32 %v3582, %v3926
  %v3928 = vpop.f32.mrb[0].mxu0
  %v3929 = vadd.f32 %v3584, %v3928
  %v3930 = vpop.f32.mrb[0].mxu0
  %v3931 = vadd.f32 %v3586, %v3930
  %3932 = vmatprep.mubr.bf16.mxu0 %v1440
  %3933 = vmatmul.mubr.bf16.gmra.mrb[0].mxu0 %v1143
  %v3934 = vpop.f32.mrb[0].mxu0
  %v3935 = vadd.f32 %v3590, %v3934
  %v3936 = vpop.f32.mrb[0].mxu0
  %v3937 = vadd.f32 %v3592, %v3936
  %v3938 = vpop.f32.mrb[0].mxu0
  %v3939 = vadd.f32 %v3594, %v3938
  %v3940 = vpop.f32.mrb[0].mxu0
  %v3941 = vadd.f32 %v3596, %v3940
  %3942 = vmatprep.mubr.bf16.mxu0 %v1452
  %3943 = vmatmul.mubr.bf16.gmra.mrb[0].mxu0 %v1144
  %v3944 = vpop.f32.mrb[0].mxu0
  %v3945 = vadd.f32 %v3600, %v3944
  %v3946 = vpop.f32.mrb[0].mxu0
  %v3947 = vadd.f32 %v3602, %v3946
  %v3948 = vpop.f32.mrb[0].mxu0
  %v3949 = vadd.f32 %v3604, %v3948
  %v3950 = vpop.f32.mrb[0].mxu0
  %v3951 = vadd.f32 %v3606, %v3950
  %3952 = vmatprep.mubr.bf16.mxu0 %v1464
  %3953 = vmatmul.mubr.bf16.gmra.mrb[0].mxu0 %v1145
  %v3954 = vpop.f32.mrb[0].mxu0
  %v3955 = vadd.f32 %v3610, %v3954
  %v3956 = vpop.f32.mrb[0].mxu0
  %v3957 = vadd.f32 %v3612, %v3956
  %v3958 = vpop.f32.mrb[0].mxu0
  %v3959 = vadd.f32 %v3614, %v3958
  %v3960 = vpop.f32.mrb[0].mxu0
  %v3961 = vadd.f32 %v3616, %v3960
  %3962 = vmatprep.mubr.bf16.mxu0 %v1476
  %3963 = vmatmul.mubr.bf16.gmra.mrb[0].mxu0 %v1146
  %v3964 = vpop.f32.mrb[0].mxu0
  %v3965 = vadd.f32 %v3620, %v3964
  %v3966 = vpop.f32.mrb[0].mxu0
  %v3967 = vadd.f32 %v3622, %v3966
  %v3968 = vpop.f32.mrb[0].mxu0
  %v3969 = vadd.f32 %v3624, %v3968
  %v3970 = vpop.f32.mrb[0].mxu0
  %v3971 = vadd.f32 %v3626, %v3970
  %3972 = vmatprep.mubr.bf16.mxu0 %v1488
  %3973 = vmatmul.mubr.bf16.gmra.mrb[0].mxu0 %v1147
  %v3974 = vpop.f32.mrb[0].mxu0
  %v3975 = vadd.f32 %v3630, %v3974
  %v3976 = vpop.f32.mrb[0].mxu0
  %v3977 = vadd.f32 %v3632, %v3976
  %v3978 = vpop.f32.mrb[0].mxu0
  %v3979 = vadd.f32 %v3634, %v3978
  %v3980 = vpop.f32.mrb[0].mxu0
  %v3981 = vadd.f32 %v3636, %v3980
  %3982 = vmatprep.mubr.bf16.mxu0 %v1500
  %3983 = vmatmul.mubr.bf16.gmra.mrb[0].mxu0 %v1148
  %v3984 = vpop.f32.mrb[0].mxu0
  %v3985 = vadd.f32 %v3640, %v3984
  %v3986 = vpop.f32.mrb[0].mxu0
  %v3987 = vadd.f32 %v3642, %v3986
  %v3988 = vpop.f32.mrb[0].mxu0
  %v3989 = vadd.f32 %v3644, %v3988
  %v3990 = vpop.f32.mrb[0].mxu0
  %v3991 = vadd.f32 %v3646, %v3990
  %3992 = vmatprep.mubr.bf16.mxu0 %v1512
  %3993 = vmatmul.mubr.bf16.gmra.mrb[0].mxu0 %v1149
  %v3994 = vpop.f32.mrb[0].mxu0
  %v3995 = vadd.f32 %v3650, %v3994
  %v3996 = vpop.f32.mrb[0].mxu0
  %v3997 = vadd.f32 %v3652, %v3996
  %v3998 = vpop.f32.mrb[0].mxu0
  %v3999 = vadd.f32 %v3654, %v3998
  %v4000 = vpop.f32.mrb[0].mxu0
  %v4001 = vadd.f32 %v3656, %v4000
  %4002 = vmatprep.mubr.bf16.mxu0 %v1524
  %4003 = vmatmul.mubr.bf16.gmra.mrb[0].mxu0 %v1150
  %v4004 = vpop.f32.mrb[0].mxu0
  %v4005 = vadd.f32 %v3660, %v4004
  %v4006 = vpop.f32.mrb[0].mxu0
  %v4007 = vadd.f32 %v3662, %v4006
  %v4008 = vpop.f32.mrb[0].mxu0
  %v4009 = vadd.f32 %v3664, %v4008
  %v4010 = vpop.f32.mrb[0].mxu0
  %v4011 = vadd.f32 %v3666, %v4010
  %4012 = vmatprep.mubr.bf16.mxu0 %v1536
  %4013 = vmatmul.mubr.bf16.gmra.mrb[0].mxu0 %v1151
  %v4014 = vpop.f32.mrb[0].mxu0
  %v4015 = vadd.f32 %v3670, %v4014
  %v4016 = vpop.f32.mrb[0].mxu0
  %v4017 = vadd.f32 %v3672, %v4016
  %v4018 = vpop.f32.mrb[0].mxu0
  %v4019 = vadd.f32 %v3674, %v4018
  %v4020 = vpop.f32.mrb[0].mxu0
  %v4021 = vadd.f32 %v3676, %v4020
  %4022 = vmatprep.mubr.bf16.mxu0 %v1548
  %4023 = vmatmul.mubr.bf16.gmra.mrb[0].mxu0 %v1152
  %v4024 = vpop.f32.mrb[0].mxu0
  %v4025 = vadd.f32 %v3680, %v4024
  %v4026 = vpop.f32.mrb[0].mxu0
  %v4027 = vadd.f32 %v3682, %v4026
  %v4028 = vpop.f32.mrb[0].mxu0
  %v4029 = vadd.f32 %v3684, %v4028
  %v4030 = vpop.f32.mrb[0].mxu0
  %v4031 = vadd.f32 %v3686, %v4030
  %4032 = vmatprep.mubr.bf16.mxu0 %v1560
  %4033 = vmatmul.mubr.bf16.gmra.mrb[0].mxu0 %v1153
  %v4034 = vpop.f32.mrb[0].mxu0
  %v4035 = vadd.f32 %v3690, %v4034
  %v4036 = vpop.f32.mrb[0].mxu0
  %v4037 = vadd.f32 %v3692, %v4036
  %v4038 = vpop.f32.mrb[0].mxu0
  %v4039 = vadd.f32 %v3694, %v4038
  %v4040 = vpop.f32.mrb[0].mxu0
  %v4041 = vadd.f32 %v3696, %v4040
  %4042 = vmatprep.mubr.bf16.mxu0 %v1802
  %4043 = vmatmul.mubr.bf16.gmra.mrb[0].mxu0 %v1154
  %v4044 = vpop.f32.mrb[0].mxu0
  %v4045 = vadd.f32 %v3700, %v4044
  %v4046 = vpop.f32.mrb[0].mxu0
  %v4047 = vadd.f32 %v3702, %v4046
  %v4048 = vpop.f32.mrb[0].mxu0
  %v4049 = vadd.f32 %v3704, %v4048
  %v4050 = vpop.f32.mrb[0].mxu0
  %v4051 = vadd.f32 %v3706, %v4050
  %4052 = vmatprep.mubr.bf16.mxu0 %v1200
  %4053 = vmatmul.mubr.bf16.gmra.mrb[0].mxu0 %v1122
  %v4054 = vpop.f32.mrb[0].mxu0
  %v4055 = vpop.f32.mrb[0].mxu0
  %v4056 = vadd.f32 %v3711, %v4055
  %v4057 = vpop.f32.mrb[0].mxu0
  %v4058 = vpop.f32.mrb[0].mxu0
  %v4059 = vadd.f32 %v3714, %v4058
  %4060 = vdwg.mxu0
  %4061 = vmatprep.subr.bf16.mxu0 %v2522
  %4062 = vmatpush1.bf16.msra.mxu0 %v2521
  %4063 = vmatprep.subr.bf16.mxu0 %v2524
  %4064 = vmatpush1.bf16.msra.mxu0 %v2523
  %4065 = vmatprep.subr.bf16.mxu0 %v2526
  %4066 = vmatpush1.bf16.msra.mxu0 %v2525
  %4067 = vmatprep.subr.bf16.mxu0 %v2528
  %4068 = vmatpush1.bf16.msra.mxu0 %v2527
  %4069 = vmatprep.subr.bf16.mxu0 %v2530
  %4070 = vmatpush1.bf16.msra.mxu0 %v2529
  %4071 = vmatprep.subr.bf16.mxu0 %v2532
  %4072 = vmatpush1.bf16.msra.mxu0 %v2531
  %4073 = vmatprep.subr.bf16.mxu0 %v2534
  %4074 = vmatpush1.bf16.msra.mxu0 %v2533
  %4075 = vmatprep.subr.bf16.mxu0 %v2536
  %4076 = vmatpush1.bf16.msra.mxu0 %v2535
  %4077 = vmatprep.subr.bf16.mxu0 0
  %4078 = vmatpush1.bf16.msra.mxu0 0
  %4079 = vmatprep.subr.bf16.mxu0 0
  %4080 = vmatpush1.bf16.msra.mxu0 0
  %4081 = vmatprep.subr.bf16.mxu0 0
  %4082 = vmatpush1.bf16.msra.mxu0 0
  %4083 = vmatprep.subr.bf16.mxu0 0
  %4084 = vmatpush1.bf16.msra.mxu0 0
  %4085 = vmatprep.subr.bf16.mxu0 0
  %4086 = vmatpush1.bf16.msra.mxu0 0
  %4087 = vmatprep.subr.bf16.mxu0 0
  %4088 = vmatpush1.bf16.msra.mxu0 0
  %4089 = vmatprep.subr.bf16.mxu0 0
  %4090 = vmatpush1.bf16.msra.mxu0 0
  %4091 = vmatprep.subr.bf16.mxu0 0
  %4092 = vmatpush1.bf16.msra.mxu0 0
  %4093 = vmatprep.mubr.bf16.mxu0 0
  %4094 = vmatmul.mubr.bf16.gmra.mrb[0].mxu0 %v1663
  %v4095 = vpop.f32.mrb[0].mxu0
  %v4096 = vpop.f32.mrb[0].mxu0
  %v4097 = vadd.f32 %v3752, %v4096
  %v4098 = vpop.f32.mrb[0].mxu0
  %v4099 = vpop.f32.mrb[0].mxu0
  %v4100 = vadd.f32 %v3755, %v4099
  %4101 = vmatprep.mubr.bf16.mxu0 0
  %4102 = vmatmul.mubr.bf16.gmra.mrb[0].mxu0 %v1666
  %v4103 = vpop.f32.mrb[0].mxu0
  %v4104 = vadd.f32 %v3759, %v4103
  %v4105 = vpop.f32.mrb[0].mxu0
  %v4106 = vadd.f32 %v3761, %v4105
  %v4107 = vpop.f32.mrb[0].mxu0
  %v4108 = vadd.f32 %v3763, %v4107
  %v4109 = vpop.f32.mrb[0].mxu0
  %v4110 = vadd.f32 %v3765, %v4109
  %4111 = vmatprep.mubr.bf16.mxu0 0
  %4112 = vmatmul.mubr.bf16.gmra.mrb[0].mxu0 %v1669
  %v4113 = vpop.f32.mrb[0].mxu0
  %v4114 = vadd.f32 %v3769, %v4113
  %v4115 = vpop.f32.mrb[0].mxu0
  %v4116 = vadd.f32 %v3771, %v4115
  %v4117 = vpop.f32.mrb[0].mxu0
  %v4118 = vadd.f32 %v3773, %v4117
  %v4119 = vpop.f32.mrb[0].mxu0
  %v4120 = vadd.f32 %v3775, %v4119
  %4121 = vmatprep.mubr.bf16.mxu0 0
  %4122 = vmatmul.mubr.bf16.gmra.mrb[0].mxu0 %v1672
  %v4123 = vpop.f32.mrb[0].mxu0
  %v4124 = vadd.f32 %v3779, %v4123
  %v4125 = vpop.f32.mrb[0].mxu0
  %v4126 = vadd.f32 %v3781, %v4125
  %v4127 = vpop.f32.mrb[0].mxu0
  %v4128 = vadd.f32 %v3783, %v4127
  %v4129 = vpop.f32.mrb[0].mxu0
  %v4130 = vadd.f32 %v3785, %v4129
  %4131 = vmatprep.mubr.bf16.mxu0 0
  %4132 = vmatmul.mubr.bf16.gmra.mrb[0].mxu0 %v1675
  %v4133 = vpop.f32.mrb[0].mxu0
  %v4134 = vadd.f32 %v3789, %v4133
  %v4135 = vpop.f32.mrb[0].mxu0
  %v4136 = vadd.f32 %v3791, %v4135
  %v4137 = vpop.f32.mrb[0].mxu0
  %v4138 = vadd.f32 %v3793, %v4137
  %v4139 = vpop.f32.mrb[0].mxu0
  %v4140 = vadd.f32 %v3795, %v4139
  %4141 = vmatprep.mubr.bf16.mxu0 0
  %4142 = vmatmul.mubr.bf16.gmra.mrb[0].mxu0 %v1678
  %v4143 = vpop.f32.mrb[0].mxu0
  %v4144 = vadd.f32 %v3799, %v4143
  %v4145 = vpop.f32.mrb[0].mxu0
  %v4146 = vadd.f32 %v3801, %v4145
  %v4147 = vpop.f32.mrb[0].mxu0
  %v4148 = vadd.f32 %v3803, %v4147
  %v4149 = vpop.f32.mrb[0].mxu0
  %v4150 = vadd.f32 %v3805, %v4149
  %4151 = vmatprep.mubr.bf16.mxu0 0
  %4152 = vmatmul.mubr.bf16.gmra.mrb[0].mxu0 %v1681
  %v4153 = vpop.f32.mrb[0].mxu0
  %v4154 = vadd.f32 %v3809, %v4153
  %v4155 = vpop.f32.mrb[0].mxu0
  %v4156 = vadd.f32 %v3811, %v4155
  %v4157 = vpop.f32.mrb[0].mxu0
  %v4158 = vadd.f32 %v3813, %v4157
  %v4159 = vpop.f32.mrb[0].mxu0
  %v4160 = vadd.f32 %v3815, %v4159
  %4161 = vmatprep.mubr.bf16.mxu0 0
  %4162 = vmatmul.mubr.bf16.gmra.mrb[0].mxu0 %v1684
  %v4163 = vpop.f32.mrb[0].mxu0
  %v4164 = vadd.f32 %v3819, %v4163
  %v4165 = vpop.f32.mrb[0].mxu0
  %v4166 = vadd.f32 %v3821, %v4165
  %v4167 = vpop.f32.mrb[0].mxu0
  %v4168 = vadd.f32 %v3823, %v4167
  %v4169 = vpop.f32.mrb[0].mxu0
  %v4170 = vadd.f32 %v3825, %v4169
  %4171 = vmatprep.mubr.bf16.mxu0 0
  %4172 = vmatmul.mubr.bf16.gmra.mrb[0].mxu0 %v1687
  %v4173 = vpop.f32.mrb[0].mxu0
  %v4174 = vadd.f32 %v3829, %v4173
  %v4175 = vpop.f32.mrb[0].mxu0
  %v4176 = vadd.f32 %v3831, %v4175
  %v4177 = vpop.f32.mrb[0].mxu0
  %v4178 = vadd.f32 %v3833, %v4177
  %v4179 = vpop.f32.mrb[0].mxu0
  %v4180 = vadd.f32 %v3835, %v4179
  %4181 = vmatprep.mubr.bf16.mxu0 0
  %4182 = vmatmul.mubr.bf16.gmra.mrb[0].mxu0 %v1690
  %v4183 = vpop.f32.mrb[0].mxu0
  %v4184 = vadd.f32 %v3839, %v4183
  %v4185 = vpop.f32.mrb[0].mxu0
  %v4186 = vadd.f32 %v3841, %v4185
  %v4187 = vpop.f32.mrb[0].mxu0
  %v4188 = vadd.f32 %v3843, %v4187
  %v4189 = vpop.f32.mrb[0].mxu0
  %v4190 = vadd.f32 %v3845, %v4189
  %4191 = vmatprep.mubr.bf16.mxu0 0
  %4192 = vmatmul.mubr.bf16.gmra.mrb[0].mxu0 %v1693
  %v4193 = vpop.f32.mrb[0].mxu0
  %v4194 = vadd.f32 %v3849, %v4193
  %v4195 = vpop.f32.mrb[0].mxu0
  %v4196 = vadd.f32 %v3851, %v4195
  %v4197 = vpop.f32.mrb[0].mxu0
  %v4198 = vadd.f32 %v3853, %v4197
  %v4199 = vpop.f32.mrb[0].mxu0
  %v4200 = vadd.f32 %v3855, %v4199
  %4201 = vmatprep.mubr.bf16.mxu0 0
  %4202 = vmatmul.mubr.bf16.gmra.mrb[0].mxu0 %v1696
  %v4203 = vpop.f32.mrb[0].mxu0
  %v4204 = vadd.f32 %v3859, %v4203
  %v4205 = vpop.f32.mrb[0].mxu0
  %v4206 = vadd.f32 %v3861, %v4205
  %v4207 = vpop.f32.mrb[0].mxu0
  %v4208 = vadd.f32 %v3863, %v4207
  %v4209 = vpop.f32.mrb[0].mxu0
  %v4210 = vadd.f32 %v3865, %v4209
  %4211 = vmatprep.mubr.bf16.mxu0 0
  %4212 = vmatmul.mubr.bf16.gmra.mrb[0].mxu0 %v1699
  %v4213 = vpop.f32.mrb[0].mxu0
  %v4214 = vadd.f32 %v3869, %v4213
  %v4215 = vpop.f32.mrb[0].mxu0
  %v4216 = vadd.f32 %v3871, %v4215
  %v4217 = vpop.f32.mrb[0].mxu0
  %v4218 = vadd.f32 %v3873, %v4217
  %v4219 = vpop.f32.mrb[0].mxu0
  %v4220 = vadd.f32 %v3875, %v4219
  %4221 = vmatprep.mubr.bf16.mxu0 0
  %4222 = vmatmul.mubr.bf16.gmra.mrb[0].mxu0 %v1702
  %v4223 = vpop.f32.mrb[0].mxu0
  %v4224 = vadd.f32 %v3879, %v4223
  %v4225 = vpop.f32.mrb[0].mxu0
  %v4226 = vadd.f32 %v3881, %v4225
  %v4227 = vpop.f32.mrb[0].mxu0
  %v4228 = vadd.f32 %v3883, %v4227
  %v4229 = vpop.f32.mrb[0].mxu0
  %v4230 = vadd.f32 %v3885, %v4229
  %4231 = vmatprep.mubr.bf16.mxu0 0
  %4232 = vmatmul.mubr.bf16.gmra.mrb[0].mxu0 %v1811
  %v4233 = vpop.f32.mrb[0].mxu0
  %v4234 = vadd.f32 %v3889, %v4233
  %v4235 = vpop.f32.mrb[0].mxu0
  %v4236 = vadd.f32 %v3891, %v4235
  %v4237 = vpop.f32.mrb[0].mxu0
  %v4238 = vadd.f32 %v3893, %v4237
  %v4239 = vpop.f32.mrb[0].mxu0
  %v4240 = vadd.f32 %v3895, %v4239
  %4241 = vmatprep.mubr.bf16.mxu0 0
  %4242 = vmatmul.mubr.bf16.gmra.mrb[0].mxu0 %v1657
  %v4243 = vpop.f32.mrb[0].mxu0
  %v4244 = vpop.f32.mrb[0].mxu0
  %v4245 = vadd.f32 %v3900, %v4244
  %v4246 = vpop.f32.mrb[0].mxu0
  %v4247 = vpop.f32.mrb[0].mxu0
  %v4248 = vadd.f32 %v3903, %v4247
  %4249 = vmatprep.mubr.bf16.mxu0 0
  %4250 = vmatmul.mubr.bf16.gmra.mrb[0].mxu0 %v1708
  %v4251 = vpop.f32.mrb[0].mxu0
  %v4252 = vpop.f32.mrb[0].mxu0
  %v4253 = vadd.f32 %v3908, %v4252
  %v4254 = vpop.f32.mrb[0].mxu0
  %v4255 = vpop.f32.mrb[0].mxu0
  %v4256 = vadd.f32 %v3911, %v4255
  %4257 = vmatprep.mubr.bf16.mxu0 0
  %4258 = vmatmul.mubr.bf16.gmra.mrb[0].mxu0 %v1711
  %v4259 = vpop.f32.mrb[0].mxu0
  %v4260 = vadd.f32 %v3915, %v4259
  %v4261 = vpop.f32.mrb[0].mxu0
  %v4262 = vadd.f32 %v3917, %v4261
  %v4263 = vpop.f32.mrb[0].mxu0
  %v4264 = vadd.f32 %v3919, %v4263
  %v4265 = vpop.f32.mrb[0].mxu0
  %v4266 = vadd.f32 %v3921, %v4265
  %4267 = vmatprep.mubr.bf16.mxu0 0
  %4268 = vmatmul.mubr.bf16.gmra.mrb[0].mxu0 %v1714
  %v4269 = vpop.f32.mrb[0].mxu0
  %v4270 = vadd.f32 %v3925, %v4269
  %v4271 = vpop.f32.mrb[0].mxu0
  %v4272 = vadd.f32 %v3927, %v4271
  %v4273 = vpop.f32.mrb[0].mxu0
  %v4274 = vadd.f32 %v3929, %v4273
  %v4275 = vpop.f32.mrb[0].mxu0
  %v4276 = vadd.f32 %v3931, %v4275
  %4277 = vmatprep.mubr.bf16.mxu0 0
  %4278 = vmatmul.mubr.bf16.gmra.mrb[0].mxu0 %v1717
  %v4279 = vpop.f32.mrb[0].mxu0
  %v4280 = vadd.f32 %v3935, %v4279
  %v4281 = vpop.f32.mrb[0].mxu0
  %v4282 = vadd.f32 %v3937, %v4281
  %v4283 = vpop.f32.mrb[0].mxu0
  %v4284 = vadd.f32 %v3939, %v4283
  %v4285 = vpop.f32.mrb[0].mxu0
  %v4286 = vadd.f32 %v3941, %v4285
  %4287 = vmatprep.mubr.bf16.mxu0 0
  %4288 = vmatmul.mubr.bf16.gmra.mrb[0].mxu0 %v1720
  %v4289 = vpop.f32.mrb[0].mxu0
  %v4290 = vadd.f32 %v3945, %v4289
  %v4291 = vpop.f32.mrb[0].mxu0
  %v4292 = vadd.f32 %v3947, %v4291
  %v4293 = vpop.f32.mrb[0].mxu0
  %v4294 = vadd.f32 %v3949, %v4293
  %v4295 = vpop.f32.mrb[0].mxu0
  %v4296 = vadd.f32 %v3951, %v4295
  %4297 = vmatprep.mubr.bf16.mxu0 0
  %4298 = vmatmul.mubr.bf16.gmra.mrb[0].mxu0 %v1723
  %v4299 = vpop.f32.mrb[0].mxu0
  %v4300 = vadd.f32 %v3955, %v4299
  %v4301 = vpop.f32.mrb[0].mxu0
  %v4302 = vadd.f32 %v3957, %v4301
  %v4303 = vpop.f32.mrb[0].mxu0
  %v4304 = vadd.f32 %v3959, %v4303
  %v4305 = vpop.f32.mrb[0].mxu0
  %v4306 = vadd.f32 %v3961, %v4305
  %4307 = vmatprep.mubr.bf16.mxu0 0
  %4308 = vmatmul.mubr.bf16.gmra.mrb[0].mxu0 %v1726
  %v4309 = vpop.f32.mrb[0].mxu0
  %v4310 = vadd.f32 %v3965, %v4309
  %v4311 = vpop.f32.mrb[0].mxu0
  %v4312 = vadd.f32 %v3967, %v4311
  %v4313 = vpop.f32.mrb[0].mxu0
  %v4314 = vadd.f32 %v3969, %v4313
  %v4315 = vpop.f32.mrb[0].mxu0
  %v4316 = vadd.f32 %v3971, %v4315
  %4317 = vmatprep.mubr.bf16.mxu0 0
  %4318 = vmatmul.mubr.bf16.gmra.mrb[0].mxu0 %v1729
  %v4319 = vpop.f32.mrb[0].mxu0
  %v4320 = vadd.f32 %v3975, %v4319
  %v4321 = vpop.f32.mrb[0].mxu0
  %v4322 = vadd.f32 %v3977, %v4321
  %v4323 = vpop.f32.mrb[0].mxu0
  %v4324 = vadd.f32 %v3979, %v4323
  %v4325 = vpop.f32.mrb[0].mxu0
  %v4326 = vadd.f32 %v3981, %v4325
  %4327 = vmatprep.mubr.bf16.mxu0 0
  %4328 = vmatmul.mubr.bf16.gmra.mrb[0].mxu0 %v1732
  %v4329 = vpop.f32.mrb[0].mxu0
  %v4330 = vadd.f32 %v3985, %v4329
  %v4331 = vpop.f32.mrb[0].mxu0
  %v4332 = vadd.f32 %v3987, %v4331
  %v4333 = vpop.f32.mrb[0].mxu0
  %v4334 = vadd.f32 %v3989, %v4333
  %v4335 = vpop.f32.mrb[0].mxu0
  %v4336 = vadd.f32 %v3991, %v4335
  %4337 = vmatprep.mubr.bf16.mxu0 0
  %4338 = vmatmul.mubr.bf16.gmra.mrb[0].mxu0 %v1735
  %v4339 = vpop.f32.mrb[0].mxu0
  %v4340 = vadd.f32 %v3995, %v4339
  %v4341 = vpop.f32.mrb[0].mxu0
  %v4342 = vadd.f32 %v3997, %v4341
  %v4343 = vpop.f32.mrb[0].mxu0
  %v4344 = vadd.f32 %v3999, %v4343
  %v4345 = vpop.f32.mrb[0].mxu0
  %v4346 = vadd.f32 %v4001, %v4345
  %4347 = vmatprep.mubr.bf16.mxu0 0
  %4348 = vmatmul.mubr.bf16.gmra.mrb[0].mxu0 %v1738
  %v4349 = vpop.f32.mrb[0].mxu0
  %v4350 = vadd.f32 %v4005, %v4349
  %v4351 = vpop.f32.mrb[0].mxu0
  %v4352 = vadd.f32 %v4007, %v4351
  %v4353 = vpop.f32.mrb[0].mxu0
  %v4354 = vadd.f32 %v4009, %v4353
  %v4355 = vpop.f32.mrb[0].mxu0
  %v4356 = vadd.f32 %v4011, %v4355
  %4357 = vmatprep.mubr.bf16.mxu0 0
  %4358 = vmatmul.mubr.bf16.gmra.mrb[0].mxu0 %v1741
  %v4359 = vpop.f32.mrb[0].mxu0
  %v4360 = vadd.f32 %v4015, %v4359
  %v4361 = vpop.f32.mrb[0].mxu0
  %v4362 = vadd.f32 %v4017, %v4361
  %v4363 = vpop.f32.mrb[0].mxu0
  %v4364 = vadd.f32 %v4019, %v4363
  %v4365 = vpop.f32.mrb[0].mxu0
  %v4366 = vadd.f32 %v4021, %v4365
  %4367 = vmatprep.mubr.bf16.mxu0 0
  %4368 = vmatmul.mubr.bf16.gmra.mrb[0].mxu0 %v1744
  %v4369 = vpop.f32.mrb[0].mxu0
  %v4370 = vadd.f32 %v4025, %v4369
  %v4371 = vpop.f32.mrb[0].mxu0
  %v4372 = vadd.f32 %v4027, %v4371
  %v4373 = vpop.f32.mrb[0].mxu0
  %v4374 = vadd.f32 %v4029, %v4373
  %v4375 = vpop.f32.mrb[0].mxu0
  %v4376 = vadd.f32 %v4031, %v4375
  %4377 = vmatprep.mubr.bf16.mxu0 0
  %4378 = vmatmul.mubr.bf16.gmra.mrb[0].mxu0 %v1747
  %v4379 = vpop.f32.mrb[0].mxu0
  %v4380 = vadd.f32 %v4035, %v4379
  %v4381 = vpop.f32.mrb[0].mxu0
  %v4382 = vadd.f32 %v4037, %v4381
  %v4383 = vpop.f32.mrb[0].mxu0
  %v4384 = vadd.f32 %v4039, %v4383
  %v4385 = vpop.f32.mrb[0].mxu0
  %v4386 = vadd.f32 %v4041, %v4385
  %4387 = vmatprep.mubr.bf16.mxu0 0
  %4388 = vmatmul.mubr.bf16.gmra.mrb[0].mxu0 %v1814
  %v4389 = vpop.f32.mrb[0].mxu0
  %v4390 = vadd.f32 %v4045, %v4389
  %v4391 = vpop.f32.mrb[0].mxu0
  %v4392 = vadd.f32 %v4047, %v4391
  %v4393 = vpop.f32.mrb[0].mxu0
  %v4394 = vadd.f32 %v4049, %v4393
  %v4395 = vpop.f32.mrb[0].mxu0
  %v4396 = vadd.f32 %v4051, %v4395
  %4397 = vmatprep.mubr.bf16.mxu0 0
  %4398 = vmatmul.mubr.bf16.gmra.mrb[0].mxu0 %v1657
  %v4399 = vpop.f32.mrb[0].mxu0
  %v4400 = vpop.f32.mrb[0].mxu0
  %v4401 = vadd.f32 %v4056, %v4400
  %v4402 = vpop.f32.mrb[0].mxu0
  %v4403 = vpop.f32.mrb[0].mxu0
  %v4404 = vadd.f32 %v4059, %v4403
  %4405 = vdwg.mxu0
  %v4406 = vld [vmem:[%s2] sm:$0xff]
  %v4407 = vld [vmem:[%s2 + $0x8] sm:$0xff]
  %v4408 = vld [vmem:[%s2 + $0x10] sm:$0xff]
  %v4409 = vld [vmem:[%s2 + $0x18] sm:$0xff]
  %v4410 = vld [vmem:[%s2 + $0x20] sm:$0xff]
  %v4411 = vld [vmem:[%s2 + $0x28] sm:$0xff]
  %v4412 = vld [vmem:[%s2 + $0x30] sm:$0xff]
  %v4413 = vld [vmem:[%s2 + $0x38] sm:$0xff]
  %v4414 = vld [vmem:[%s2 + $0x40] sm:$0xff]
  %v4415 = vld [vmem:[%s2 + $0x48] sm:$0xff]
  %v4416 = vld [vmem:[%s2 + $0x50] sm:$0xff]
  %v4417 = vld [vmem:[%s2 + $0x58] sm:$0xff]
  %v4418 = vld [vmem:[%s2 + $0x60] sm:$0xff]
  %v4419 = vld [vmem:[%s2 + $0x68] sm:$0xff]
  %v4420 = vld [vmem:[%s2 + $0x70] sm:$0xff]
  %v4421 = vld [vmem:[%s2 + $0x78] sm:$0xff]
  %v4422 = vld [vmem:[%s2 + $0x80] sm:$0xff]
  %v4423 = vld [vmem:[%s2 + $0x88] sm:$0xff]
  %v4424 = vld [vmem:[%s2 + $0x90] sm:$0xff]
  %v4425 = vld [vmem:[%s2 + $0x98] sm:$0xff]
  %v4426 = vld [vmem:[%s2 + $0xa0] sm:$0xff]
  %v4427 = vld [vmem:[%s2 + $0xa8] sm:$0xff]
  %v4428 = vld [vmem:[%s2 + $0xb0] sm:$0xff]
  %v4429 = vld [vmem:[%s2 + $0xb8] sm:$0xff]
  %v4430 = vld [vmem:[%s2 + $0xc0] sm:$0xff]
  %v4431 = vld [vmem:[%s2 + $0xc8] sm:$0xff]
  %v4432 = vld [vmem:[%s2 + $0xd0] sm:$0xff]
  %v4433 = vld [vmem:[%s2 + $0xd8] sm:$0xff]
  %v4434 = vld [vmem:[%s2 + $0xe0] sm:$0xff]
  %v4435 = vld [vmem:[%s2 + $0xe8] sm:$0xff]
  %v4436 = vld [vmem:[%s2 + $0xf0] sm:$0xff]
  %v4437 = vld [vmem:[%s2 + $0xf8] sm:$0xff]
  %v4438 = vld [vmem:[%s2 + $0x100] sm:$0xff]
  %v4439 = vld [vmem:[%s2 + $0x108] sm:$0xff]
  %v4440 = vld [vmem:[%s2 + $0x110] sm:$0xff]
  %v4441 = vld [vmem:[%s2 + $0x118] sm:$0xff]
  %v4442 = vld [vmem:[%s2 + $0x120] sm:$0xff]
  %v4443 = vld [vmem:[%s2 + $0x128] sm:$0xff]
  %v4444 = vld [vmem:[%s2 + $0x130] sm:$0xff]
  %v4445 = vld [vmem:[%s2 + $0x138] sm:$0xff]
  %v4446 = vld [vmem:[%s2 + $0x140] sm:$0xff]
  %v4447 = vld [vmem:[%s2 + $0x148] sm:$0xff]
  %v4448 = vld [vmem:[%s2 + $0x150] sm:$0xff]
  %v4449 = vld [vmem:[%s2 + $0x158] sm:$0xff]
  %v4450 = vld [vmem:[%s2 + $0x160] sm:$0xff]
  %v4451 = vld [vmem:[%s2 + $0x168] sm:$0xff]
  %v4452 = vld [vmem:[%s2 + $0x170] sm:$0xff]
  %v4453 = vld [vmem:[%s2 + $0x178] sm:$0xff]
  %v4454 = vld [vmem:[%s2 + $0x180] sm:$0xff]
  %v4455 = vld [vmem:[%s2 + $0x188] sm:$0xff]
  %v4456 = vld [vmem:[%s2 + $0x190] sm:$0xff]
  %v4457 = vld [vmem:[%s2 + $0x198] sm:$0xff]
  %v4458 = vld [vmem:[%s2 + $0x1a0] sm:$0xff]
  %v4459 = vld [vmem:[%s2 + $0x1a8] sm:$0xff]
  %v4460 = vld [vmem:[%s2 + $0x1b0] sm:$0xff]
  %v4461 = vld [vmem:[%s2 + $0x1b8] sm:$0xff]
  %v4462 = vld [vmem:[%s2 + $0x1c0] sm:$0xff]
  %v4463 = vld [vmem:[%s2 + $0x1c8] sm:$0xff]
  %v4464 = vld [vmem:[%s2 + $0x1d0] sm:$0xff]
  %v4465 = vld [vmem:[%s2 + $0x1d8] sm:$0xff]
  %v4466 = vld [vmem:[%s2 + $0x1e0] sm:$0xff]
  %v4467 = vld [vmem:[%s2 + $0x1e8] sm:$0xff]
  %v4468 = vld [vmem:[%s2 + $0x1f0] sm:$0xff]
  %v4469 = vld [vmem:[%s2 + $0x1f8] sm:$0xff]
  %v4470 = vadd.f32 %v4097, %v4406
  %v4471 = vadd.f32 %v4100, %v4407
  %v4472 = vadd.f32 %v4106, %v4408
  %v4473 = vadd.f32 %v4110, %v4409
  %v4474 = vadd.f32 %v4116, %v4410
  %v4475 = vadd.f32 %v4120, %v4411
  %v4476 = vadd.f32 %v4126, %v4412
  %v4477 = vadd.f32 %v4130, %v4413
  %v4478 = vadd.f32 %v4136, %v4414
  %v4479 = vadd.f32 %v4140, %v4415
  %v4480 = vadd.f32 %v4146, %v4416
  %v4481 = vadd.f32 %v4150, %v4417
  %v4482 = vadd.f32 %v4156, %v4418
  %v4483 = vadd.f32 %v4160, %v4419
  %v4484 = vadd.f32 %v4166, %v4420
  %v4485 = vadd.f32 %v4170, %v4421
  %v4486 = vadd.f32 %v4176, %v4422
  %v4487 = vadd.f32 %v4180, %v4423
  %v4488 = vadd.f32 %v4186, %v4424
  %v4489 = vadd.f32 %v4190, %v4425
  %v4490 = vadd.f32 %v4196, %v4426
  %v4491 = vadd.f32 %v4200, %v4427
  %v4492 = vadd.f32 %v4206, %v4428
  %v4493 = vadd.f32 %v4210, %v4429
  %v4494 = vadd.f32 %v4216, %v4430
  %v4495 = vadd.f32 %v4220, %v4431
  %v4496 = vadd.f32 %v4226, %v4432
  %v4497 = vadd.f32 %v4230, %v4433
  %v4498 = vadd.f32 %v4236, %v4434
  %v4499 = vadd.f32 %v4240, %v4435
  %v4500 = vadd.f32 %v4245, %v4436
  %v4501 = vadd.f32 %v4248, %v4437
  %v4502 = vadd.f32 %v4253, %v4438
  %v4503 = vadd.f32 %v4256, %v4439
  %v4504 = vadd.f32 %v4262, %v4440
  %v4505 = vadd.f32 %v4266, %v4441
  %v4506 = vadd.f32 %v4272, %v4442
  %v4507 = vadd.f32 %v4276, %v4443
  %v4508 = vadd.f32 %v4282, %v4444
  %v4509 = vadd.f32 %v4286, %v4445
  %v4510 = vadd.f32 %v4292, %v4446
  %v4511 = vadd.f32 %v4296, %v4447
  %v4512 = vadd.f32 %v4302, %v4448
  %v4513 = vadd.f32 %v4306, %v4449
  %v4514 = vadd.f32 %v4312, %v4450
  %v4515 = vadd.f32 %v4316, %v4451
  %v4516 = vadd.f32 %v4322, %v4452
  %v4517 = vadd.f32 %v4326, %v4453
  %v4518 = vadd.f32 %v4332, %v4454
  %v4519 = vadd.f32 %v4336, %v4455
  %v4520 = vadd.f32 %v4342, %v4456
  %v4521 = vadd.f32 %v4346, %v4457
  %v4522 = vadd.f32 %v4352, %v4458
  %v4523 = vadd.f32 %v4356, %v4459
  %v4524 = vadd.f32 %v4362, %v4460
  %v4525 = vadd.f32 %v4366, %v4461
  %v4526 = vadd.f32 %v4372, %v4462
  %v4527 = vadd.f32 %v4376, %v4463
  %v4528 = vadd.f32 %v4382, %v4464
  %v4529 = vadd.f32 %v4386, %v4465
  %v4530 = vadd.f32 %v4392, %v4466
  %v4531 = vadd.f32 %v4396, %v4467
  %v4532 = vadd.f32 %v4401, %v4468
  %v4533 = vadd.f32 %v4404, %v4469
  %v4534 = vmax.f32 %v4470, 0.0
  %v4535 = vmax.f32 %v4471, 0.0
  %v4536 = vmax.f32 %v4472, 0.0
  %v4537 = vmax.f32 %v4473, 0.0
  %v4538 = vmax.f32 %v4474, 0.0
  %v4539 = vmax.f32 %v4475, 0.0
  %v4540 = vmax.f32 %v4476, 0.0
  %v4541 = vmax.f32 %v4477, 0.0
  %v4542 = vmax.f32 %v4478, 0.0
  %v4543 = vmax.f32 %v4479, 0.0
  %v4544 = vmax.f32 %v4480, 0.0
  %v4545 = vmax.f32 %v4481, 0.0
  %v4546 = vmax.f32 %v4482, 0.0
  %v4547 = vmax.f32 %v4483, 0.0
  %v4548 = vmax.f32 %v4484, 0.0
  %v4549 = vmax.f32 %v4485, 0.0
  %v4550 = vmax.f32 %v4486, 0.0
  %v4551 = vmax.f32 %v4487, 0.0
  %v4552 = vmax.f32 %v4488, 0.0
  %v4553 = vmax.f32 %v4489, 0.0
  %v4554 = vmax.f32 %v4490, 0.0
  %v4555 = vmax.f32 %v4491, 0.0
  %v4556 = vmax.f32 %v4492, 0.0
  %v4557 = vmax.f32 %v4493, 0.0
  %v4558 = vmax.f32 %v4494, 0.0
  %v4559 = vmax.f32 %v4495, 0.0
  %v4560 = vmax.f32 %v4496, 0.0
  %v4561 = vmax.f32 %v4497, 0.0
  %v4562 = vmax.f32 %v4498, 0.0
  %v4563 = vmax.f32 %v4499, 0.0
  %v4564 = vmax.f32 %v4500, 0.0
  %v4565 = vmax.f32 %v4501, 0.0
  %v4566 = vmax.f32 %v4502, 0.0
  %v4567 = vmax.f32 %v4503, 0.0
  %v4568 = vmax.f32 %v4504, 0.0
  %v4569 = vmax.f32 %v4505, 0.0
  %v4570 = vmax.f32 %v4506, 0.0
  %v4571 = vmax.f32 %v4507, 0.0
  %v4572 = vmax.f32 %v4508, 0.0
  %v4573 = vmax.f32 %v4509, 0.0
  %v4574 = vmax.f32 %v4510, 0.0
  %v4575 = vmax.f32 %v4511, 0.0
  %v4576 = vmax.f32 %v4512, 0.0
  %v4577 = vmax.f32 %v4513, 0.0
  %v4578 = vmax.f32 %v4514, 0.0
  %v4579 = vmax.f32 %v4515, 0.0
  %v4580 = vmax.f32 %v4516, 0.0
  %v4581 = vmax.f32 %v4517, 0.0
  %v4582 = vmax.f32 %v4518, 0.0
  %v4583 = vmax.f32 %v4519, 0.0
  %v4584 = vmax.f32 %v4520, 0.0
  %v4585 = vmax.f32 %v4521, 0.0
  %v4586 = vmax.f32 %v4522, 0.0
  %v4587 = vmax.f32 %v4523, 0.0
  %v4588 = vmax.f32 %v4524, 0.0
  %v4589 = vmax.f32 %v4525, 0.0
  %v4590 = vmax.f32 %v4526, 0.0
  %v4591 = vmax.f32 %v4527, 0.0
  %v4592 = vmax.f32 %v4528, 0.0
  %v4593 = vmax.f32 %v4529, 0.0
  %v4594 = vmax.f32 %v4530, 0.0
  %v4595 = vmax.f32 %v4531, 0.0
  %v4596 = vmax.f32 %v4532, 0.0
  %v4597 = vmax.f32 %v4533, 0.0
  %v4598 = vpack.c.bf16 %v4535, %v4534
  %v4599 = vpack.c.bf16 %v4537, %v4536
  %v4600 = vpack.c.bf16 %v4539, %v4538
  %v4601 = vpack.c.bf16 %v4541, %v4540
  %v4602 = vpack.c.bf16 %v4543, %v4542
  %v4603 = vpack.c.bf16 %v4545, %v4544
  %v4604 = vpack.c.bf16 %v4547, %v4546
  %v4605 = vpack.c.bf16 %v4549, %v4548
  %v4606 = vpack.c.bf16 %v4551, %v4550
  %v4607 = vpack.c.bf16 %v4553, %v4552
  %v4608 = vpack.c.bf16 %v4555, %v4554
  %v4609 = vpack.c.bf16 %v4557, %v4556
  %v4610 = vpack.c.bf16 %v4559, %v4558
  %v4611 = vpack.c.bf16 %v4561, %v4560
  %v4612 = vpack.c.bf16 %v4563, %v4562
  %v4613 = vpack.c.bf16 %v4565, %v4564
  %v4614 = vpack.c.bf16 %v4567, %v4566
  %v4615 = vpack.c.bf16 %v4569, %v4568
  %v4616 = vpack.c.bf16 %v4571, %v4570
  %v4617 = vpack.c.bf16 %v4573, %v4572
  %v4618 = vpack.c.bf16 %v4575, %v4574
  %v4619 = vpack.c.bf16 %v4577, %v4576
  %v4620 = vpack.c.bf16 %v4579, %v4578
  %v4621 = vpack.c.bf16 %v4581, %v4580
  %v4622 = vpack.c.bf16 %v4583, %v4582
  %v4623 = vpack.c.bf16 %v4585, %v4584
  %v4624 = vpack.c.bf16 %v4587, %v4586
  %v4625 = vpack.c.bf16 %v4589, %v4588
  %v4626 = vpack.c.bf16 %v4591, %v4590
  %v4627 = vpack.c.bf16 %v4593, %v4592
  %v4628 = vpack.c.bf16 %v4595, %v4594
  %v4629 = vpack.c.bf16 %v4597, %v4596
  %v4631 = vshrl.u32 %v4598, 16
  %v4633 = vrot.slane %v4631, 7
  %v4634 = vshll.u32 %v4598, 16
  %v4636 = vor.u32 %v4633, %v4634
  %v4638 = vshrl.u32 %v4599, 16
  %v4640 = vrot.slane %v4638, 7
  %v4641 = vshll.u32 %v4599, 16
  %v4643 = vor.u32 %v4640, %v4641
  %v4645 = vshrl.u32 %v4600, 16
  %v4647 = vrot.slane %v4645, 7
  %v4648 = vshll.u32 %v4600, 16
  %v4650 = vor.u32 %v4647, %v4648
  %v4652 = vshrl.u32 %v4601, 16
  %v4654 = vrot.slane %v4652, 7
  %v4655 = vshll.u32 %v4601, 16
  %v4657 = vor.u32 %v4654, %v4655
  %v4659 = vshrl.u32 %v4602, 16
  %v4661 = vrot.slane %v4659, 7
  %v4662 = vshll.u32 %v4602, 16
  %v4664 = vor.u32 %v4661, %v4662
  %v4666 = vshrl.u32 %v4603, 16
  %v4668 = vrot.slane %v4666, 7
  %v4669 = vshll.u32 %v4603, 16
  %v4671 = vor.u32 %v4668, %v4669
  %v4673 = vshrl.u32 %v4604, 16
  %v4675 = vrot.slane %v4673, 7
  %v4676 = vshll.u32 %v4604, 16
  %v4678 = vor.u32 %v4675, %v4676
  %v4680 = vshrl.u32 %v4605, 16
  %v4682 = vrot.slane %v4680, 7
  %v4683 = vshll.u32 %v4605, 16
  %v4685 = vor.u32 %v4682, %v4683
  %v4687 = vshrl.u32 %v4606, 16
  %v4689 = vrot.slane %v4687, 7
  %v4690 = vshll.u32 %v4606, 16
  %v4692 = vor.u32 %v4689, %v4690
  %v4694 = vshrl.u32 %v4607, 16
  %v4696 = vrot.slane %v4694, 7
  %v4697 = vshll.u32 %v4607, 16
  %v4699 = vor.u32 %v4696, %v4697
  %v4701 = vshrl.u32 %v4608, 16
  %v4703 = vrot.slane %v4701, 7
  %v4704 = vshll.u32 %v4608, 16
  %v4706 = vor.u32 %v4703, %v4704
  %v4708 = vshrl.u32 %v4609, 16
  %v4710 = vrot.slane %v4708, 7
  %v4711 = vshll.u32 %v4609, 16
  %v4713 = vor.u32 %v4710, %v4711
  %v4715 = vshrl.u32 %v4610, 16
  %v4717 = vrot.slane %v4715, 7
  %v4718 = vshll.u32 %v4610, 16
  %v4720 = vor.u32 %v4717, %v4718
  %v4722 = vshrl.u32 %v4611, 16
  %v4724 = vrot.slane %v4722, 7
  %v4725 = vshll.u32 %v4611, 16
  %v4727 = vor.u32 %v4724, %v4725
  %v4729 = vshrl.u32 %v4612, 16
  %v4731 = vrot.slane %v4729, 7
  %v4732 = vshll.u32 %v4612, 16
  %v4734 = vor.u32 %v4731, %v4732
  %v4736 = vshrl.u32 %v4613, 16
  %v4738 = vrot.slane %v4736, 7
  %v4739 = vshll.u32 %v4613, 16
  %v4741 = vor.u32 %v4738, %v4739
  %v4743 = vshrl.u32 %v4614, 16
  %v4745 = vrot.slane %v4743, 7
  %v4746 = vshll.u32 %v4614, 16
  %v4748 = vor.u32 %v4745, %v4746
  %v4750 = vshrl.u32 %v4615, 16
  %v4752 = vrot.slane %v4750, 7
  %v4753 = vshll.u32 %v4615, 16
  %v4755 = vor.u32 %v4752, %v4753
  %v4757 = vshrl.u32 %v4616, 16
  %v4759 = vrot.slane %v4757, 7
  %v4760 = vshll.u32 %v4616, 16
  %v4762 = vor.u32 %v4759, %v4760
  %v4764 = vshrl.u32 %v4617, 16
  %v4766 = vrot.slane %v4764, 7
  %v4767 = vshll.u32 %v4617, 16
  %v4769 = vor.u32 %v4766, %v4767
  %v4771 = vshrl.u32 %v4618, 16
  %v4773 = vrot.slane %v4771, 7
  %v4774 = vshll.u32 %v4618, 16
  %v4776 = vor.u32 %v4773, %v4774
  %v4778 = vshrl.u32 %v4619, 16
  %v4780 = vrot.slane %v4778, 7
  %v4781 = vshll.u32 %v4619, 16
  %v4783 = vor.u32 %v4780, %v4781
  %v4785 = vshrl.u32 %v4620, 16
  %v4787 = vrot.slane %v4785, 7
  %v4788 = vshll.u32 %v4620, 16
  %v4790 = vor.u32 %v4787, %v4788
  %v4792 = vshrl.u32 %v4621, 16
  %v4794 = vrot.slane %v4792, 7
  %v4795 = vshll.u32 %v4621, 16
  %v4797 = vor.u32 %v4794, %v4795
  %v4799 = vshrl.u32 %v4622, 16
  %v4801 = vrot.slane %v4799, 7
  %v4802 = vshll.u32 %v4622, 16
  %v4804 = vor.u32 %v4801, %v4802
  %v4806 = vshrl.u32 %v4623, 16
  %v4808 = vrot.slane %v4806, 7
  %v4809 = vshll.u32 %v4623, 16
  %v4811 = vor.u32 %v4808, %v4809
  %v4813 = vshrl.u32 %v4624, 16
  %v4815 = vrot.slane %v4813, 7
  %v4816 = vshll.u32 %v4624, 16
  %v4818 = vor.u32 %v4815, %v4816
  %v4820 = vshrl.u32 %v4625, 16
  %v4822 = vrot.slane %v4820, 7
  %v4823 = vshll.u32 %v4625, 16
  %v4825 = vor.u32 %v4822, %v4823
  %v4827 = vshrl.u32 %v4626, 16
  %v4829 = vrot.slane %v4827, 7
  %v4830 = vshll.u32 %v4626, 16
  %v4832 = vor.u32 %v4829, %v4830
  %v4834 = vshrl.u32 %v4627, 16
  %v4836 = vrot.slane %v4834, 7
  %v4837 = vshll.u32 %v4627, 16
  %v4839 = vor.u32 %v4836, %v4837
  %v4841 = vshrl.u32 %v4628, 16
  %v4843 = vrot.slane %v4841, 7
  %v4844 = vshll.u32 %v4628, 16
  %v4846 = vor.u32 %v4843, %v4844
  %v4848 = vshrl.u32 %v4629, 16
  %v4850 = vrot.slane %v4848, 7
  %v4851 = vshll.u32 %v4629, 16
  %v4853 = vor.u32 %v4850, %v4851
  %v4918 = vsel %vm1121, 0, %v4636
  %v4919 = vsel %vm1121, 0, %v4643
  %v4920 = vsel %vm1121, 0, %v4650
  %v4921 = vsel %vm1121, 0, %v4657
  %v4922 = vsel %vm1121, 0, %v4664
  %v4923 = vsel %vm1121, 0, %v4671
  %v4924 = vsel %vm1121, 0, %v4678
  %v4925 = vsel %vm1121, 0, %v4685
  %v4926 = vsel %vm1121, 0, %v4692
  %v4927 = vsel %vm1121, 0, %v4699
  %v4928 = vsel %vm1121, 0, %v4706
  %v4929 = vsel %vm1121, 0, %v4713
  %v4930 = vsel %vm1121, 0, %v4720
  %v4931 = vsel %vm1121, 0, %v4727
  %v4932 = vsel %vm1121, 0, %v4734
  %v4933 = vsel %vm1121, 0, %v4741
  %v4934 = vsel %vm1121, 0, %v4748
  %v4935 = vsel %vm1121, 0, %v4755
  %v4936 = vsel %vm1121, 0, %v4762
  %v4937 = vsel %vm1121, 0, %v4769
  %v4938 = vsel %vm1121, 0, %v4776
  %v4939 = vsel %vm1121, 0, %v4783
  %v4940 = vsel %vm1121, 0, %v4790
  %v4941 = vsel %vm1121, 0, %v4797
  %v4942 = vsel %vm1121, 0, %v4804
  %v4943 = vsel %vm1121, 0, %v4811
  %v4944 = vsel %vm1121, 0, %v4818
  %v4945 = vsel %vm1121, 0, %v4825
  %v4946 = vsel %vm1121, 0, %v4832
  %v4947 = vsel %vm1121, 0, %v4839
  %v4948 = vsel %vm1121, 0, %v4846
  %v4949 = vsel %vm1121, 0, %v4853
  %v4950 = vsel %vm1121, %v4633, 0
  %v4951 = vsel %vm1121, %v4640, 0
  %v4952 = vsel %vm1121, %v4647, 0
  %v4953 = vsel %vm1121, %v4654, 0
  %v4954 = vsel %vm1121, %v4661, 0
  %v4955 = vsel %vm1121, %v4668, 0
  %v4956 = vsel %vm1121, %v4675, 0
  %v4957 = vsel %vm1121, %v4682, 0
  %v4958 = vsel %vm1121, %v4689, 0
  %v4959 = vsel %vm1121, %v4696, 0
  %v4960 = vsel %vm1121, %v4703, 0
  %v4961 = vsel %vm1121, %v4710, 0
  %v4962 = vsel %vm1121, %v4717, 0
  %v4963 = vsel %vm1121, %v4724, 0
  %v4964 = vsel %vm1121, %v4731, 0
  %v4965 = vsel %vm1121, %v4738, 0
  %v4966 = vsel %vm1121, %v4745, 0
  %v4967 = vsel %vm1121, %v4752, 0
  %v4968 = vsel %vm1121, %v4759, 0
  %v4969 = vsel %vm1121, %v4766, 0
  %v4970 = vsel %vm1121, %v4773, 0
  %v4971 = vsel %vm1121, %v4780, 0
  %v4972 = vsel %vm1121, %v4787, 0
  %v4973 = vsel %vm1121, %v4794, 0
  %v4974 = vsel %vm1121, %v4801, 0
  %v4975 = vsel %vm1121, %v4808, 0
  %v4976 = vsel %vm1121, %v4815, 0
  %v4977 = vsel %vm1121, %v4822, 0
  %v4978 = vsel %vm1121, %v4829, 0
  %v4979 = vsel %vm1121, %v4836, 0
  %v4980 = vsel %vm1121, %v4843, 0
  %v4981 = vsel %vm1121, %v4850, 0
  %v4983 = vshrl.u32 %v4918, 16
  %v4985 = vshll.u32 %v4918, 16
  %v4987 = vrot.slane %v4985, 1
  %v4988 = vor.u32 %v4983, %v4987
  %v4990 = vshll.u32 %v4950, 16
  %v4992 = vrot.slane %v4990, 1
  %v4993 = vsel %vm1188, %v4988, %v4992
  %v4995 = vshrl.u32 %v4919, 16
  %v4997 = vshll.u32 %v4919, 16
  %v4999 = vrot.slane %v4997, 1
  %v5000 = vor.u32 %v4995, %v4999
  %v5002 = vshll.u32 %v4951, 16
  %v5004 = vrot.slane %v5002, 1
  %v5005 = vsel %vm1188, %v5000, %v5004
  %v5007 = vshrl.u32 %v4920, 16
  %v5009 = vshll.u32 %v4920, 16
  %v5011 = vrot.slane %v5009, 1
  %v5012 = vor.u32 %v5007, %v5011
  %v5014 = vshll.u32 %v4952, 16
  %v5016 = vrot.slane %v5014, 1
  %v5017 = vsel %vm1188, %v5012, %v5016
  %v5019 = vshrl.u32 %v4921, 16
  %v5021 = vshll.u32 %v4921, 16
  %v5023 = vrot.slane %v5021, 1
  %v5024 = vor.u32 %v5019, %v5023
  %v5026 = vshll.u32 %v4953, 16
  %v5028 = vrot.slane %v5026, 1
  %v5029 = vsel %vm1188, %v5024, %v5028
  %v5031 = vshrl.u32 %v4922, 16
  %v5033 = vshll.u32 %v4922, 16
  %v5035 = vrot.slane %v5033, 1
  %v5036 = vor.u32 %v5031, %v5035
  %v5038 = vshll.u32 %v4954, 16
  %v5040 = vrot.slane %v5038, 1
  %v5041 = vsel %vm1188, %v5036, %v5040
  %v5043 = vshrl.u32 %v4923, 16
  %v5045 = vshll.u32 %v4923, 16
  %v5047 = vrot.slane %v5045, 1
  %v5048 = vor.u32 %v5043, %v5047
  %v5050 = vshll.u32 %v4955, 16
  %v5052 = vrot.slane %v5050, 1
  %v5053 = vsel %vm1188, %v5048, %v5052
  %v5055 = vshrl.u32 %v4924, 16
  %v5057 = vshll.u32 %v4924, 16
  %v5059 = vrot.slane %v5057, 1
  %v5060 = vor.u32 %v5055, %v5059
  %v5062 = vshll.u32 %v4956, 16
  %v5064 = vrot.slane %v5062, 1
  %v5065 = vsel %vm1188, %v5060, %v5064
  %v5067 = vshrl.u32 %v4925, 16
  %v5069 = vshll.u32 %v4925, 16
  %v5071 = vrot.slane %v5069, 1
  %v5072 = vor.u32 %v5067, %v5071
  %v5074 = vshll.u32 %v4957, 16
  %v5076 = vrot.slane %v5074, 1
  %v5077 = vsel %vm1188, %v5072, %v5076
  %v5079 = vshrl.u32 %v4926, 16
  %v5081 = vshll.u32 %v4926, 16
  %v5083 = vrot.slane %v5081, 1
  %v5084 = vor.u32 %v5079, %v5083
  %v5086 = vshll.u32 %v4958, 16
  %v5088 = vrot.slane %v5086, 1
  %v5089 = vsel %vm1188, %v5084, %v5088
  %v5091 = vshrl.u32 %v4927, 16
  %v5093 = vshll.u32 %v4927, 16
  %v5095 = vrot.slane %v5093, 1
  %v5096 = vor.u32 %v5091, %v5095
  %v5098 = vshll.u32 %v4959, 16
  %v5100 = vrot.slane %v5098, 1
  %v5101 = vsel %vm1188, %v5096, %v5100
  %v5103 = vshrl.u32 %v4928, 16
  %v5105 = vshll.u32 %v4928, 16
  %v5107 = vrot.slane %v5105, 1
  %v5108 = vor.u32 %v5103, %v5107
  %v5110 = vshll.u32 %v4960, 16
  %v5112 = vrot.slane %v5110, 1
  %v5113 = vsel %vm1188, %v5108, %v5112
  %v5115 = vshrl.u32 %v4929, 16
  %v5117 = vshll.u32 %v4929, 16
  %v5119 = vrot.slane %v5117, 1
  %v5120 = vor.u32 %v5115, %v5119
  %v5122 = vshll.u32 %v4961, 16
  %v5124 = vrot.slane %v5122, 1
  %v5125 = vsel %vm1188, %v5120, %v5124
  %v5127 = vshrl.u32 %v4930, 16
  %v5129 = vshll.u32 %v4930, 16
  %v5131 = vrot.slane %v5129, 1
  %v5132 = vor.u32 %v5127, %v5131
  %v5134 = vshll.u32 %v4962, 16
  %v5136 = vrot.slane %v5134, 1
  %v5137 = vsel %vm1188, %v5132, %v5136
  %v5139 = vshrl.u32 %v4931, 16
  %v5141 = vshll.u32 %v4931, 16
  %v5143 = vrot.slane %v5141, 1
  %v5144 = vor.u32 %v5139, %v5143
  %v5146 = vshll.u32 %v4963, 16
  %v5148 = vrot.slane %v5146, 1
  %v5149 = vsel %vm1188, %v5144, %v5148
  %v5151 = vshrl.u32 %v4932, 16
  %v5153 = vshll.u32 %v4932, 16
  %v5155 = vrot.slane %v5153, 1
  %v5156 = vor.u32 %v5151, %v5155
  %v5158 = vshll.u32 %v4964, 16
  %v5160 = vrot.slane %v5158, 1
  %v5161 = vsel %vm1188, %v5156, %v5160
  %v5163 = vshrl.u32 %v4934, 16
  %v5165 = vshll.u32 %v4934, 16
  %v5167 = vrot.slane %v5165, 1
  %v5168 = vor.u32 %v5163, %v5167
  %v5170 = vshll.u32 %v4966, 16
  %v5172 = vrot.slane %v5170, 1
  %v5173 = vsel %vm1188, %v5168, %v5172
  %v5175 = vshrl.u32 %v4935, 16
  %v5177 = vshll.u32 %v4935, 16
  %v5179 = vrot.slane %v5177, 1
  %v5180 = vor.u32 %v5175, %v5179
  %v5182 = vshll.u32 %v4967, 16
  %v5184 = vrot.slane %v5182, 1
  %v5185 = vsel %vm1188, %v5180, %v5184
  %v5187 = vshrl.u32 %v4936, 16
  %v5189 = vshll.u32 %v4936, 16
  %v5191 = vrot.slane %v5189, 1
  %v5192 = vor.u32 %v5187, %v5191
  %v5194 = vshll.u32 %v4968, 16
  %v5196 = vrot.slane %v5194, 1
  %v5197 = vsel %vm1188, %v5192, %v5196
  %v5199 = vshrl.u32 %v4937, 16
  %v5201 = vshll.u32 %v4937, 16
  %v5203 = vrot.slane %v5201, 1
  %v5204 = vor.u32 %v5199, %v5203
  %v5206 = vshll.u32 %v4969, 16
  %v5208 = vrot.slane %v5206, 1
  %v5209 = vsel %vm1188, %v5204, %v5208
  %v5211 = vshrl.u32 %v4938, 16
  %v5213 = vshll.u32 %v4938, 16
  %v5215 = vrot.slane %v5213, 1
  %v5216 = vor.u32 %v5211, %v5215
  %v5218 = vshll.u32 %v4970, 16
  %v5220 = vrot.slane %v5218, 1
  %v5221 = vsel %vm1188, %v5216, %v5220
  %v5223 = vshrl.u32 %v4939, 16
  %v5225 = vshll.u32 %v4939, 16
  %v5227 = vrot.slane %v5225, 1
  %v5228 = vor.u32 %v5223, %v5227
  %v5230 = vshll.u32 %v4971, 16
  %v5232 = vrot.slane %v5230, 1
  %v5233 = vsel %vm1188, %v5228, %v5232
  %v5235 = vshrl.u32 %v4940, 16
  %v5237 = vshll.u32 %v4940, 16
  %v5239 = vrot.slane %v5237, 1
  %v5240 = vor.u32 %v5235, %v5239
  %v5242 = vshll.u32 %v4972, 16
  %v5244 = vrot.slane %v5242, 1
  %v5245 = vsel %vm1188, %v5240, %v5244
  %v5247 = vshrl.u32 %v4941, 16
  %v5249 = vshll.u32 %v4941, 16
  %v5251 = vrot.slane %v5249, 1
  %v5252 = vor.u32 %v5247, %v5251
  %v5254 = vshll.u32 %v4973, 16
  %v5256 = vrot.slane %v5254, 1
  %v5257 = vsel %vm1188, %v5252, %v5256
  %v5259 = vshrl.u32 %v4942, 16
  %v5261 = vshll.u32 %v4942, 16
  %v5263 = vrot.slane %v5261, 1
  %v5264 = vor.u32 %v5259, %v5263
  %v5266 = vshll.u32 %v4974, 16
  %v5268 = vrot.slane %v5266, 1
  %v5269 = vsel %vm1188, %v5264, %v5268
  %v5271 = vshrl.u32 %v4943, 16
  %v5273 = vshll.u32 %v4943, 16
  %v5275 = vrot.slane %v5273, 1
  %v5276 = vor.u32 %v5271, %v5275
  %v5278 = vshll.u32 %v4975, 16
  %v5280 = vrot.slane %v5278, 1
  %v5281 = vsel %vm1188, %v5276, %v5280
  %v5283 = vshrl.u32 %v4944, 16
  %v5285 = vshll.u32 %v4944, 16
  %v5287 = vrot.slane %v5285, 1
  %v5288 = vor.u32 %v5283, %v5287
  %v5290 = vshll.u32 %v4976, 16
  %v5292 = vrot.slane %v5290, 1
  %v5293 = vsel %vm1188, %v5288, %v5292
  %v5295 = vshrl.u32 %v4945, 16
  %v5297 = vshll.u32 %v4945, 16
  %v5299 = vrot.slane %v5297, 1
  %v5300 = vor.u32 %v5295, %v5299
  %v5302 = vshll.u32 %v4977, 16
  %v5304 = vrot.slane %v5302, 1
  %v5305 = vsel %vm1188, %v5300, %v5304
  %v5307 = vshrl.u32 %v4946, 16
  %v5309 = vshll.u32 %v4946, 16
  %v5311 = vrot.slane %v5309, 1
  %v5312 = vor.u32 %v5307, %v5311
  %v5314 = vshll.u32 %v4978, 16
  %v5316 = vrot.slane %v5314, 1
  %v5317 = vsel %vm1188, %v5312, %v5316
  %v5319 = vshrl.u32 %v4947, 16
  %v5321 = vshll.u32 %v4947, 16
  %v5323 = vrot.slane %v5321, 1
  %v5324 = vor.u32 %v5319, %v5323
  %v5326 = vshll.u32 %v4979, 16
  %v5328 = vrot.slane %v5326, 1
  %v5329 = vsel %vm1188, %v5324, %v5328
  %v5331 = vshrl.u32 %v4948, 16
  %v5333 = vshll.u32 %v4948, 16
  %v5335 = vrot.slane %v5333, 1
  %v5336 = vor.u32 %v5331, %v5335
  %v5338 = vshll.u32 %v4980, 16
  %v5340 = vrot.slane %v5338, 1
  %v5341 = vsel %vm1188, %v5336, %v5340
  %v5402 = vrot.slane %v4918, 1
  %v5403 = vrot.slane %v4950, 1
  %v5404 = vsel %vm1654, %v5402, %v5403
  %v5405 = vrot.slane %v4919, 1
  %v5406 = vrot.slane %v4951, 1
  %v5407 = vsel %vm1654, %v5405, %v5406
  %v5408 = vrot.slane %v4920, 1
  %v5409 = vrot.slane %v4952, 1
  %v5410 = vsel %vm1654, %v5408, %v5409
  %v5411 = vrot.slane %v4921, 1
  %v5412 = vrot.slane %v4953, 1
  %v5413 = vsel %vm1654, %v5411, %v5412
  %v5414 = vrot.slane %v4922, 1
  %v5415 = vrot.slane %v4954, 1
  %v5416 = vsel %vm1654, %v5414, %v5415
  %v5417 = vrot.slane %v4923, 1
  %v5418 = vrot.slane %v4955, 1
  %v5419 = vsel %vm1654, %v5417, %v5418
  %v5420 = vrot.slane %v4924, 1
  %v5421 = vrot.slane %v4956, 1
  %v5422 = vsel %vm1654, %v5420, %v5421
  %v5423 = vrot.slane %v4925, 1
  %v5424 = vrot.slane %v4957, 1
  %v5425 = vsel %vm1654, %v5423, %v5424
  %v5426 = vrot.slane %v4926, 1
  %v5427 = vrot.slane %v4958, 1
  %v5428 = vsel %vm1654, %v5426, %v5427
  %v5429 = vrot.slane %v4927, 1
  %v5430 = vrot.slane %v4959, 1
  %v5431 = vsel %vm1654, %v5429, %v5430
  %v5432 = vrot.slane %v4928, 1
  %v5433 = vrot.slane %v4960, 1
  %v5434 = vsel %vm1654, %v5432, %v5433
  %v5435 = vrot.slane %v4929, 1
  %v5436 = vrot.slane %v4961, 1
  %v5437 = vsel %vm1654, %v5435, %v5436
  %v5438 = vrot.slane %v4930, 1
  %v5439 = vrot.slane %v4962, 1
  %v5440 = vsel %vm1654, %v5438, %v5439
  %v5441 = vrot.slane %v4931, 1
  %v5442 = vrot.slane %v4963, 1
  %v5443 = vsel %vm1654, %v5441, %v5442
  %v5444 = vrot.slane %v4932, 1
  %v5445 = vrot.slane %v4964, 1
  %v5446 = vsel %vm1654, %v5444, %v5445
  %v5447 = vrot.slane %v4934, 1
  %v5448 = vrot.slane %v4966, 1
  %v5449 = vsel %vm1654, %v5447, %v5448
  %v5450 = vrot.slane %v4935, 1
  %v5451 = vrot.slane %v4967, 1
  %v5452 = vsel %vm1654, %v5450, %v5451
  %v5453 = vrot.slane %v4936, 1
  %v5454 = vrot.slane %v4968, 1
  %v5455 = vsel %vm1654, %v5453, %v5454
  %v5456 = vrot.slane %v4937, 1
  %v5457 = vrot.slane %v4969, 1
  %v5458 = vsel %vm1654, %v5456, %v5457
  %v5459 = vrot.slane %v4938, 1
  %v5460 = vrot.slane %v4970, 1
  %v5461 = vsel %vm1654, %v5459, %v5460
  %v5462 = vrot.slane %v4939, 1
  %v5463 = vrot.slane %v4971, 1
  %v5464 = vsel %vm1654, %v5462, %v5463
  %v5465 = vrot.slane %v4940, 1
  %v5466 = vrot.slane %v4972, 1
  %v5467 = vsel %vm1654, %v5465, %v5466
  %v5468 = vrot.slane %v4941, 1
  %v5469 = vrot.slane %v4973, 1
  %v5470 = vsel %vm1654, %v5468, %v5469
  %v5471 = vrot.slane %v4942, 1
  %v5472 = vrot.slane %v4974, 1
  %v5473 = vsel %vm1654, %v5471, %v5472
  %v5474 = vrot.slane %v4943, 1
  %v5475 = vrot.slane %v4975, 1
  %v5476 = vsel %vm1654, %v5474, %v5475
  %v5477 = vrot.slane %v4944, 1
  %v5478 = vrot.slane %v4976, 1
  %v5479 = vsel %vm1654, %v5477, %v5478
  %v5480 = vrot.slane %v4945, 1
  %v5481 = vrot.slane %v4977, 1
  %v5482 = vsel %vm1654, %v5480, %v5481
  %v5483 = vrot.slane %v4946, 1
  %v5484 = vrot.slane %v4978, 1
  %v5485 = vsel %vm1654, %v5483, %v5484
  %v5486 = vrot.slane %v4947, 1
  %v5487 = vrot.slane %v4979, 1
  %v5488 = vsel %vm1654, %v5486, %v5487
  %v5489 = vrot.slane %v4948, 1
  %v5490 = vrot.slane %v4980, 1
  %v5491 = vsel %vm1654, %v5489, %v5490
  %v5493 = vshrl.u32 %v4933, 16
  %v5495 = vshll.u32 %v4933, 16
  %v5497 = vrot.slane %v5495, 1
  %v5498 = vor.u32 %v5493, %v5497
  %v5500 = vshll.u32 %v4965, 16
  %v5502 = vrot.slane %v5500, 1
  %v5503 = vsel %vm1188, %v5498, %v5502
  %v5505 = vshrl.u32 %v4949, 16
  %v5507 = vshll.u32 %v4949, 16
  %v5509 = vrot.slane %v5507, 1
  %v5510 = vor.u32 %v5505, %v5509
  %v5512 = vshll.u32 %v4981, 16
  %v5514 = vrot.slane %v5512, 1
  %v5515 = vsel %vm1188, %v5510, %v5514
  %v5520 = vrot.slane %v4933, 1
  %v5521 = vrot.slane %v4965, 1
  %v5522 = vsel %vm1654, %v5520, %v5521
  %v5523 = vrot.slane %v4949, 1
  %v5524 = vrot.slane %v4981, 1
  %v5525 = vsel %vm1654, %v5523, %v5524
  %5526 = vrot.lane.b32.xlu0 %v1200, 64
  %v5527 = vpop.permute.xlu0 %5526
  %5528 = vrot.lane.b32.xlu0 %v4993, 64
  %v5529 = vpop.permute.xlu0 %5528
  %5530 = vrot.lane.b32.xlu0 %v5005, 64
  %v5531 = vpop.permute.xlu0 %5530
  %5532 = vrot.lane.b32.xlu0 %v5017, 64
  %v5533 = vpop.permute.xlu0 %5532
  %5534 = vrot.lane.b32.xlu0 %v5029, 64
  %v5535 = vpop.permute.xlu0 %5534
  %5536 = vrot.lane.b32.xlu0 %v5041, 64
  %v5537 = vpop.permute.xlu0 %5536
  %5538 = vrot.lane.b32.xlu0 %v5053, 64
  %v5539 = vpop.permute.xlu0 %5538
  %5540 = vrot.lane.b32.xlu0 %v5065, 64
  %v5541 = vpop.permute.xlu0 %5540
  %5542 = vrot.lane.b32.xlu0 %v5077, 64
  %v5543 = vpop.permute.xlu0 %5542
  %5544 = vrot.lane.b32.xlu0 %v5089, 64
  %v5545 = vpop.permute.xlu0 %5544
  %5546 = vrot.lane.b32.xlu0 %v5101, 64
  %v5547 = vpop.permute.xlu0 %5546
  %5548 = vrot.lane.b32.xlu0 %v5113, 64
  %v5549 = vpop.permute.xlu0 %5548
  %5550 = vrot.lane.b32.xlu0 %v5125, 64
  %v5551 = vpop.permute.xlu0 %5550
  %5552 = vrot.lane.b32.xlu0 %v5137, 64
  %v5553 = vpop.permute.xlu0 %5552
  %5554 = vrot.lane.b32.xlu0 %v5149, 64
  %v5555 = vpop.permute.xlu0 %5554
  %5556 = vrot.lane.b32.xlu0 %v5161, 64
  %v5557 = vpop.permute.xlu0 %5556
  %5558 = vrot.lane.b32.xlu0 %v5173, 64
  %v5559 = vpop.permute.xlu0 %5558
  %5560 = vrot.lane.b32.xlu0 %v5185, 64
  %v5561 = vpop.permute.xlu0 %5560
  %5562 = vrot.lane.b32.xlu0 %v5197, 64
  %v5563 = vpop.permute.xlu0 %5562
  %5564 = vrot.lane.b32.xlu0 %v5209, 64
  %v5565 = vpop.permute.xlu0 %5564
  %5566 = vrot.lane.b32.xlu0 %v5221, 64
  %v5567 = vpop.permute.xlu0 %5566
  %5568 = vrot.lane.b32.xlu0 %v5233, 64
  %v5569 = vpop.permute.xlu0 %5568
  %5570 = vrot.lane.b32.xlu0 %v5245, 64
  %v5571 = vpop.permute.xlu0 %5570
  %5572 = vrot.lane.b32.xlu0 %v5257, 64
  %v5573 = vpop.permute.xlu0 %5572
  %5574 = vrot.lane.b32.xlu0 %v5269, 64
  %v5575 = vpop.permute.xlu0 %5574
  %5576 = vrot.lane.b32.xlu0 %v5281, 64
  %v5577 = vpop.permute.xlu0 %5576
  %5578 = vrot.lane.b32.xlu0 %v5293, 64
  %v5579 = vpop.permute.xlu0 %5578
  %5580 = vrot.lane.b32.xlu0 %v5305, 64
  %v5581 = vpop.permute.xlu0 %5580
  %5582 = vrot.lane.b32.xlu0 %v5317, 64
  %v5583 = vpop.permute.xlu0 %5582
  %5584 = vrot.lane.b32.xlu0 %v5329, 64
  %v5585 = vpop.permute.xlu0 %5584
  %5586 = vrot.lane.b32.xlu0 %v5341, 64
  %v5587 = vpop.permute.xlu0 %5586
  %5588 = vrot.lane.b32.xlu0 %v4918, 64
  %v5589 = vpop.permute.xlu0 %5588
  %5590 = vrot.lane.b32.xlu0 %v4919, 64
  %v5591 = vpop.permute.xlu0 %5590
  %5592 = vrot.lane.b32.xlu0 %v4920, 64
  %v5593 = vpop.permute.xlu0 %5592
  %5594 = vrot.lane.b32.xlu0 %v4921, 64
  %v5595 = vpop.permute.xlu0 %5594
  %5596 = vrot.lane.b32.xlu0 %v4922, 64
  %v5597 = vpop.permute.xlu0 %5596
  %5598 = vrot.lane.b32.xlu0 %v4923, 64
  %v5599 = vpop.permute.xlu0 %5598
  %5600 = vrot.lane.b32.xlu0 %v4924, 64
  %v5601 = vpop.permute.xlu0 %5600
  %5602 = vrot.lane.b32.xlu0 %v4925, 64
  %v5603 = vpop.permute.xlu0 %5602
  %5604 = vrot.lane.b32.xlu0 %v4926, 64
  %v5605 = vpop.permute.xlu0 %5604
  %5606 = vrot.lane.b32.xlu0 %v4927, 64
  %v5607 = vpop.permute.xlu0 %5606
  %5608 = vrot.lane.b32.xlu0 %v4928, 64
  %v5609 = vpop.permute.xlu0 %5608
  %5610 = vrot.lane.b32.xlu0 %v4929, 64
  %v5611 = vpop.permute.xlu0 %5610
  %5612 = vrot.lane.b32.xlu0 %v4930, 64
  %v5613 = vpop.permute.xlu0 %5612
  %5614 = vrot.lane.b32.xlu0 %v4931, 64
  %v5615 = vpop.permute.xlu0 %5614
  %5616 = vrot.lane.b32.xlu0 %v4932, 64
  %v5617 = vpop.permute.xlu0 %5616
  %5618 = vrot.lane.b32.xlu0 %v4933, 64
  %v5619 = vpop.permute.xlu0 %5618
  %5620 = vrot.lane.b32.xlu0 %v4934, 64
  %v5621 = vpop.permute.xlu0 %5620
  %5622 = vrot.lane.b32.xlu0 %v4935, 64
  %v5623 = vpop.permute.xlu0 %5622
  %5624 = vrot.lane.b32.xlu0 %v4936, 64
  %v5625 = vpop.permute.xlu0 %5624
  %5626 = vrot.lane.b32.xlu0 %v4937, 64
  %v5627 = vpop.permute.xlu0 %5626
  %5628 = vrot.lane.b32.xlu0 %v4938, 64
  %v5629 = vpop.permute.xlu0 %5628
  %5630 = vrot.lane.b32.xlu0 %v4939, 64
  %v5631 = vpop.permute.xlu0 %5630
  %5632 = vrot.lane.b32.xlu0 %v4940, 64
  %v5633 = vpop.permute.xlu0 %5632
  %5634 = vrot.lane.b32.xlu0 %v4941, 64
  %v5635 = vpop.permute.xlu0 %5634
  %5636 = vrot.lane.b32.xlu0 %v4942, 64
  %v5637 = vpop.permute.xlu0 %5636
  %5638 = vrot.lane.b32.xlu0 %v4943, 64
  %v5639 = vpop.permute.xlu0 %5638
  %5640 = vrot.lane.b32.xlu0 %v4944, 64
  %v5641 = vpop.permute.xlu0 %5640
  %5642 = vrot.lane.b32.xlu0 %v4945, 64
  %v5643 = vpop.permute.xlu0 %5642
  %5644 = vrot.lane.b32.xlu0 %v4946, 64
  %v5645 = vpop.permute.xlu0 %5644
  %5646 = vrot.lane.b32.xlu0 %v4947, 64
  %v5647 = vpop.permute.xlu0 %5646
  %5648 = vrot.lane.b32.xlu0 %v4948, 64
  %v5649 = vpop.permute.xlu0 %5648
  %5650 = vrot.lane.b32.xlu0 %v4949, 64
  %v5651 = vpop.permute.xlu0 %5650
  %5652 = vrot.lane.b32.xlu0 %v5404, 64
  %v5653 = vpop.permute.xlu0 %5652
  %5654 = vrot.lane.b32.xlu0 %v5407, 64
  %v5655 = vpop.permute.xlu0 %5654
  %5656 = vrot.lane.b32.xlu0 %v5410, 64
  %v5657 = vpop.permute.xlu0 %5656
  %5658 = vrot.lane.b32.xlu0 %v5413, 64
  %v5659 = vpop.permute.xlu0 %5658
  %5660 = vrot.lane.b32.xlu0 %v5416, 64
  %v5661 = vpop.permute.xlu0 %5660
  %5662 = vrot.lane.b32.xlu0 %v5419, 64
  %v5663 = vpop.permute.xlu0 %5662
  %5664 = vrot.lane.b32.xlu0 %v5422, 64
  %v5665 = vpop.permute.xlu0 %5664
  %5666 = vrot.lane.b32.xlu0 %v5425, 64
  %v5667 = vpop.permute.xlu0 %5666
  %5668 = vrot.lane.b32.xlu0 %v5428, 64
  %v5669 = vpop.permute.xlu0 %5668
  %5670 = vrot.lane.b32.xlu0 %v5431, 64
  %v5671 = vpop.permute.xlu0 %5670
  %5672 = vrot.lane.b32.xlu0 %v5434, 64
  %v5673 = vpop.permute.xlu0 %5672
  %5674 = vrot.lane.b32.xlu0 %v5437, 64
  %v5675 = vpop.permute.xlu0 %5674
  %5676 = vrot.lane.b32.xlu0 %v5440, 64
  %v5677 = vpop.permute.xlu0 %5676
  %5678 = vrot.lane.b32.xlu0 %v5443, 64
  %v5679 = vpop.permute.xlu0 %5678
  %5680 = vrot.lane.b32.xlu0 %v5446, 64
  %v5681 = vpop.permute.xlu0 %5680
  %5682 = vrot.lane.b32.xlu0 %v5522, 64
  %v5683 = vpop.permute.xlu0 %5682
  %5684 = vrot.lane.b32.xlu0 %v5449, 64
  %v5685 = vpop.permute.xlu0 %5684
  %5686 = vrot.lane.b32.xlu0 %v5452, 64
  %v5687 = vpop.permute.xlu0 %5686
  %5688 = vrot.lane.b32.xlu0 %v5455, 64
  %v5689 = vpop.permute.xlu0 %5688
  %5690 = vrot.lane.b32.xlu0 %v5458, 64
  %v5691 = vpop.permute.xlu0 %5690
  %5692 = vrot.lane.b32.xlu0 %v5461, 64
  %v5693 = vpop.permute.xlu0 %5692
  %5694 = vrot.lane.b32.xlu0 %v5464, 64
  %v5695 = vpop.permute.xlu0 %5694
  %5696 = vrot.lane.b32.xlu0 %v5467, 64
  %v5697 = vpop.permute.xlu0 %5696
  %5698 = vrot.lane.b32.xlu0 %v5470, 64
  %v5699 = vpop.permute.xlu0 %5698
  %5700 = vrot.lane.b32.xlu0 %v5473, 64
  %v5701 = vpop.permute.xlu0 %5700
  %5702 = vrot.lane.b32.xlu0 %v5476, 64
  %v5703 = vpop.permute.xlu0 %5702
  %5704 = vrot.lane.b32.xlu0 %v5479, 64
  %v5705 = vpop.permute.xlu0 %5704
  %5706 = vrot.lane.b32.xlu0 %v5482, 64
  %v5707 = vpop.permute.xlu0 %5706
  %5708 = vrot.lane.b32.xlu0 %v5485, 64
  %v5709 = vpop.permute.xlu0 %5708
  %5710 = vrot.lane.b32.xlu0 %v5488, 64
  %v5711 = vpop.permute.xlu0 %5710
  %5712 = vrot.lane.b32.xlu0 %v5491, 64
  %v5713 = vpop.permute.xlu0 %5712
  %5714 = vrot.lane.b32.xlu0 %v5525, 64
  %v5715 = vpop.permute.xlu0 %5714
  %5716 = vrot.lane.b32.xlu0 %v5503, 64
  %v5717 = vpop.permute.xlu0 %5716
  %5718 = vrot.lane.b32.xlu0 %v5515, 64
  %v5719 = vpop.permute.xlu0 %5718
  %vm5720 = vcmask 523264
  %v5722 = vsel %vm5720, %v1122, %v5527
  %v5725 = vsel %vm5720, %v4918, %v5529
  %v5728 = vsel %vm5720, %v4919, %v5531
  %v5731 = vsel %vm5720, %v4920, %v5533
  %v5734 = vsel %vm5720, %v4921, %v5535
  %v5737 = vsel %vm5720, %v4922, %v5537
  %v5740 = vsel %vm5720, %v4923, %v5539
  %v5743 = vsel %vm5720, %v4924, %v5541
  %v5746 = vsel %vm5720, %v4925, %v5543
  %v5749 = vsel %vm5720, %v4926, %v5545
  %v5752 = vsel %vm5720, %v4927, %v5547
  %v5755 = vsel %vm5720, %v4928, %v5549
  %v5758 = vsel %vm5720, %v4929, %v5551
  %v5761 = vsel %vm5720, %v4930, %v5553
  %v5764 = vsel %vm5720, %v4931, %v5555
  %v5767 = vsel %vm5720, %v4932, %v5557
  %v5770 = vsel %vm5720, %v4934, %v5559
  %v5773 = vsel %vm5720, %v4935, %v5561
  %v5776 = vsel %vm5720, %v4936, %v5563
  %v5779 = vsel %vm5720, %v4937, %v5565
  %v5782 = vsel %vm5720, %v4938, %v5567
  %v5785 = vsel %vm5720, %v4939, %v5569
  %v5788 = vsel %vm5720, %v4940, %v5571
  %v5791 = vsel %vm5720, %v4941, %v5573
  %v5794 = vsel %vm5720, %v4942, %v5575
  %v5797 = vsel %vm5720, %v4943, %v5577
  %v5800 = vsel %vm5720, %v4944, %v5579
  %v5803 = vsel %vm5720, %v4945, %v5581
  %v5806 = vsel %vm5720, %v4946, %v5583
  %v5809 = vsel %vm5720, %v4947, %v5585
  %v5812 = vsel %vm5720, %v4948, %v5587
  %v5816 = vsel %vm5720, %v1657, %v5589
  %v5820 = vsel %vm5720, %v5404, %v5591
  %v5824 = vsel %vm5720, %v5407, %v5593
  %v5828 = vsel %vm5720, %v5410, %v5595
  %v5832 = vsel %vm5720, %v5413, %v5597
  %v5836 = vsel %vm5720, %v5416, %v5599
  %v5840 = vsel %vm5720, %v5419, %v5601
  %v5844 = vsel %vm5720, %v5422, %v5603
  %v5848 = vsel %vm5720, %v5425, %v5605
  %v5852 = vsel %vm5720, %v5428, %v5607
  %v5856 = vsel %vm5720, %v5431, %v5609
  %v5860 = vsel %vm5720, %v5434, %v5611
  %v5864 = vsel %vm5720, %v5437, %v5613
  %v5868 = vsel %vm5720, %v5440, %v5615
  %v5872 = vsel %vm5720, %v5443, %v5617
  %v5876 = vsel %vm5720, %v5446, %v5619
  %v5879 = vsel %vm5720, %v1657, %v5621
  %v5883 = vsel %vm5720, %v5449, %v5623
  %v5887 = vsel %vm5720, %v5452, %v5625
  %v5891 = vsel %vm5720, %v5455, %v5627
  %v5895 = vsel %vm5720, %v5458, %v5629
  %v5899 = vsel %vm5720, %v5461, %v5631
  %v5903 = vsel %vm5720, %v5464, %v5633
  %v5907 = vsel %vm5720, %v5467, %v5635
  %v5911 = vsel %vm5720, %v5470, %v5637
  %v5915 = vsel %vm5720, %v5473, %v5639
  %v5919 = vsel %vm5720, %v5476, %v5641
  %v5923 = vsel %vm5720, %v5479, %v5643
  %v5927 = vsel %vm5720, %v5482, %v5645
  %v5931 = vsel %vm5720, %v5485, %v5647
  %v5935 = vsel %vm5720, %v5488, %v5649
  %v5939 = vsel %vm5720, %v5491, %v5651
  %v5943 = vsel %vm5720, %v4993, %v5653
  %v5947 = vsel %vm5720, %v5005, %v5655
  %v5951 = vsel %vm5720, %v5017, %v5657
  %v5955 = vsel %vm5720, %v5029, %v5659
  %v5959 = vsel %vm5720, %v5041, %v5661
  %v5963 = vsel %vm5720, %v5053, %v5663
  %v5967 = vsel %vm5720, %v5065, %v5665
  %v5971 = vsel %vm5720, %v5077, %v5667
  %v5975 = vsel %vm5720, %v5089, %v5669
  %v5979 = vsel %vm5720, %v5101, %v5671
  %v5983 = vsel %vm5720, %v5113, %v5673
  %v5987 = vsel %vm5720, %v5125, %v5675
  %v5991 = vsel %vm5720, %v5137, %v5677
  %v5995 = vsel %vm5720, %v5149, %v5679
  %v5999 = vsel %vm5720, %v5161, %v5681
  %v6003 = vsel %vm5720, %v5503, %v5683
  %v6007 = vsel %vm5720, %v5173, %v5685
  %v6011 = vsel %vm5720, %v5185, %v5687
  %v6015 = vsel %vm5720, %v5197, %v5689
  %v6019 = vsel %vm5720, %v5209, %v5691
  %v6023 = vsel %vm5720, %v5221, %v5693
  %v6027 = vsel %vm5720, %v5233, %v5695
  %v6031 = vsel %vm5720, %v5245, %v5697
  %v6035 = vsel %vm5720, %v5257, %v5699
  %v6039 = vsel %vm5720, %v5269, %v5701
  %v6043 = vsel %vm5720, %v5281, %v5703
  %v6047 = vsel %vm5720, %v5293, %v5705
  %v6051 = vsel %vm5720, %v5305, %v5707
  %v6055 = vsel %vm5720, %v5317, %v5709
  %v6059 = vsel %vm5720, %v5329, %v5711
  %v6063 = vsel %vm5720, %v5341, %v5713
  %v6067 = vsel %vm5720, %v5515, %v5715
  %v6070 = vsel %vm5720, %v4933, %v5717
  %v6073 = vsel %vm5720, %v4949, %v5719
  %v6075 = vld [vmem:[%s9] sm:$0xf]
  %v6076 = vld [vmem:[%s9 + $0x4] sm:$0xf]
  %v6077 = vld [vmem:[%s9 + $0x8] sm:$0xf]
  %v6078 = vld [vmem:[%s9 + $0xc] sm:$0xf]
  %v6079 = vld [vmem:[%s9 + $0x10] sm:$0xf]
  %v6080 = vld [vmem:[%s9 + $0x14] sm:$0xf]
  %v6081 = vld [vmem:[%s9 + $0x18] sm:$0xf]
  %v6082 = vld [vmem:[%s9 + $0x1c] sm:$0xf]
  %v6083 = vld [vmem:[%s9 + $0x20] sm:$0xf]
  %v6084 = vld [vmem:[%s9 + $0x24] sm:$0xf]
  %v6085 = vld [vmem:[%s9 + $0x28] sm:$0xf]
  %v6086 = vld [vmem:[%s9 + $0x2c] sm:$0xf]
  %v6087 = vld [vmem:[%s9 + $0x30] sm:$0xf]
  %v6088 = vld [vmem:[%s9 + $0x34] sm:$0xf]
  %v6089 = vld [vmem:[%s9 + $0x38] sm:$0xf]
  %v6090 = vld [vmem:[%s9 + $0x3c] sm:$0xf]
  %v6091 = vld [vmem:[%s9 + $0x40] sm:$0xf]
  %v6092 = vld [vmem:[%s9 + $0x44] sm:$0xf]
  %v6093 = vld [vmem:[%s9 + $0x48] sm:$0xf]
  %v6094 = vld [vmem:[%s9 + $0x4c] sm:$0xf]
  %v6095 = vld [vmem:[%s9 + $0x50] sm:$0xf]
  %v6096 = vld [vmem:[%s9 + $0x54] sm:$0xf]
  %v6097 = vld [vmem:[%s9 + $0x58] sm:$0xf]
  %v6098 = vld [vmem:[%s9 + $0x5c] sm:$0xf]
  %v6099 = vld [vmem:[%s9 + $0x60] sm:$0xf]
  %v6100 = vld [vmem:[%s9 + $0x64] sm:$0xf]
  %v6101 = vld [vmem:[%s9 + $0x68] sm:$0xf]
  %v6102 = vld [vmem:[%s9 + $0x6c] sm:$0xf]
  %v6103 = vld [vmem:[%s9 + $0x70] sm:$0xf]
  %v6104 = vld [vmem:[%s9 + $0x74] sm:$0xf]
  %v6105 = vld [vmem:[%s9 + $0x78] sm:$0xf]
  %v6106 = vld [vmem:[%s9 + $0x7c] sm:$0xf]
  %v6107 = vld [vmem:[%s9 + $0x80] sm:$0xf]
  %v6108 = vld [vmem:[%s9 + $0x84] sm:$0xf]
  %v6109 = vld [vmem:[%s9 + $0x88] sm:$0xf]
  %v6110 = vld [vmem:[%s9 + $0x8c] sm:$0xf]
  %v6111 = vld [vmem:[%s9 + $0x90] sm:$0xf]
  %v6112 = vld [vmem:[%s9 + $0x94] sm:$0xf]
  %v6113 = vld [vmem:[%s9 + $0x98] sm:$0xf]
  %v6114 = vld [vmem:[%s9 + $0x9c] sm:$0xf]
  %v6115 = vld [vmem:[%s9 + $0xa0] sm:$0xf]
  %v6116 = vld [vmem:[%s9 + $0xa4] sm:$0xf]
  %v6117 = vld [vmem:[%s9 + $0xa8] sm:$0xf]
  %v6118 = vld [vmem:[%s9 + $0xac] sm:$0xf]
  %v6119 = vld [vmem:[%s9 + $0xb0] sm:$0xf]
  %v6120 = vld [vmem:[%s9 + $0xb4] sm:$0xf]
  %v6121 = vld [vmem:[%s9 + $0xb8] sm:$0xf]
  %v6122 = vld [vmem:[%s9 + $0xbc] sm:$0xf]
  %v6123 = vld [vmem:[%s9 + $0xc0] sm:$0xf]
  %v6124 = vld [vmem:[%s9 + $0xc4] sm:$0xf]
  %v6125 = vld [vmem:[%s9 + $0xc8] sm:$0xf]
  %v6126 = vld [vmem:[%s9 + $0xcc] sm:$0xf]
  %v6127 = vld [vmem:[%s9 + $0xd0] sm:$0xf]
  %v6128 = vld [vmem:[%s9 + $0xd4] sm:$0xf]
  %v6129 = vld [vmem:[%s9 + $0xd8] sm:$0xf]
  %v6130 = vld [vmem:[%s9 + $0xdc] sm:$0xf]
  %v6131 = vld [vmem:[%s9 + $0xe0] sm:$0xf]
  %v6132 = vld [vmem:[%s9 + $0xe4] sm:$0xf]
  %v6133 = vld [vmem:[%s9 + $0xe8] sm:$0xf]
  %v6134 = vld [vmem:[%s9 + $0xec] sm:$0xf]
  %v6135 = vld [vmem:[%s9 + $0xf0] sm:$0xf]
  %v6136 = vld [vmem:[%s9 + $0xf4] sm:$0xf]
  %v6137 = vld [vmem:[%s9 + $0xf8] sm:$0xf]
  %v6138 = vld [vmem:[%s9 + $0xfc] sm:$0xf]
  %v6139 = vld [vmem:[%s9 + $0x100] sm:$0xf]
  %v6140 = vld [vmem:[%s9 + $0x104] sm:$0xf]
  %v6141 = vld [vmem:[%s9 + $0x108] sm:$0xf]
  %v6142 = vld [vmem:[%s9 + $0x10c] sm:$0xf]
  %v6143 = vld [vmem:[%s9 + $0x110] sm:$0xf]
  %v6144 = vld [vmem:[%s9 + $0x114] sm:$0xf]
  %v6145 = vld [vmem:[%s9 + $0x118] sm:$0xf]
  %v6146 = vld [vmem:[%s9 + $0x11c] sm:$0xf]
  %v6147 = vld [vmem:[%s3] sm:$0xff]
  %v6148 = vld [vmem:[%s3 + $0x8] sm:$0xff]
  %v6149 = vld [vmem:[%s3 + $0x10] sm:$0xff]
  %v6150 = vld [vmem:[%s3 + $0x18] sm:$0xff]
  %v6151 = vld [vmem:[%s3 + $0x20] sm:$0xff]
  %v6152 = vld [vmem:[%s3 + $0x28] sm:$0xff]
  %v6153 = vld [vmem:[%s3 + $0x30] sm:$0xff]
  %v6154 = vld [vmem:[%s3 + $0x38] sm:$0xff]
  %v6155 = vld [vmem:[%s3 + $0x40] sm:$0xff]
  %v6156 = vld [vmem:[%s3 + $0x48] sm:$0xff]
  %v6157 = vld [vmem:[%s3 + $0x50] sm:$0xff]
  %v6158 = vld [vmem:[%s3 + $0x58] sm:$0xff]
  %v6159 = vld [vmem:[%s3 + $0x60] sm:$0xff]
  %v6160 = vld [vmem:[%s3 + $0x68] sm:$0xff]
  %v6161 = vld [vmem:[%s3 + $0x70] sm:$0xff]
  %v6162 = vld [vmem:[%s3 + $0x78] sm:$0xff]
  %v6163 = vld [vmem:[%s3 + $0x80] sm:$0xff]
  %v6164 = vld [vmem:[%s3 + $0x88] sm:$0xff]
  %v6165 = vld [vmem:[%s3 + $0x90] sm:$0xff]
  %v6166 = vld [vmem:[%s3 + $0x98] sm:$0xff]
  %v6167 = vld [vmem:[%s3 + $0xa0] sm:$0xff]
  %v6168 = vld [vmem:[%s3 + $0xa8] sm:$0xff]
  %v6169 = vld [vmem:[%s3 + $0xb0] sm:$0xff]
  %v6170 = vld [vmem:[%s3 + $0xb8] sm:$0xff]
  %v6171 = vld [vmem:[%s3 + $0xc0] sm:$0xff]
  %v6172 = vld [vmem:[%s3 + $0xc8] sm:$0xff]
  %v6173 = vld [vmem:[%s3 + $0xd0] sm:$0xff]
  %v6174 = vld [vmem:[%s3 + $0xd8] sm:$0xff]
  %v6175 = vld [vmem:[%s3 + $0xe0] sm:$0xff]
  %v6176 = vld [vmem:[%s3 + $0xe8] sm:$0xff]
  %v6177 = vld [vmem:[%s3 + $0xf0] sm:$0xff]
  %v6178 = vld [vmem:[%s3 + $0xf8] sm:$0xff]
  %v6179 = vld [vmem:[%s3 + $0x100] sm:$0xff]
  %v6180 = vld [vmem:[%s3 + $0x108] sm:$0xff]
  %v6181 = vld [vmem:[%s3 + $0x110] sm:$0xff]
  %v6182 = vld [vmem:[%s3 + $0x118] sm:$0xff]
  %v6183 = vld [vmem:[%s3 + $0x120] sm:$0xff]
  %v6184 = vld [vmem:[%s3 + $0x128] sm:$0xff]
  %v6185 = vld [vmem:[%s3 + $0x130] sm:$0xff]
  %v6186 = vld [vmem:[%s3 + $0x138] sm:$0xff]
  %v6187 = vld [vmem:[%s3 + $0x140] sm:$0xff]
  %v6188 = vld [vmem:[%s3 + $0x148] sm:$0xff]
  %v6189 = vld [vmem:[%s3 + $0x150] sm:$0xff]
  %v6190 = vld [vmem:[%s3 + $0x158] sm:$0xff]
  %v6191 = vld [vmem:[%s3 + $0x160] sm:$0xff]
  %v6192 = vld [vmem:[%s3 + $0x168] sm:$0xff]
  %v6193 = vld [vmem:[%s3 + $0x170] sm:$0xff]
  %v6194 = vld [vmem:[%s3 + $0x178] sm:$0xff]
  %v6195 = vld [vmem:[%s3 + $0x180] sm:$0xff]
  %v6196 = vld [vmem:[%s3 + $0x188] sm:$0xff]
  %v6197 = vld [vmem:[%s3 + $0x190] sm:$0xff]
  %v6198 = vld [vmem:[%s3 + $0x198] sm:$0xff]
  %v6199 = vld [vmem:[%s3 + $0x1a0] sm:$0xff]
  %v6200 = vld [vmem:[%s3 + $0x1a8] sm:$0xff]
  %v6201 = vld [vmem:[%s3 + $0x1b0] sm:$0xff]
  %v6202 = vld [vmem:[%s3 + $0x1b8] sm:$0xff]
  %v6203 = vld [vmem:[%s3 + $0x1c0] sm:$0xff]
  %v6204 = vld [vmem:[%s3 + $0x1c8] sm:$0xff]
  %v6205 = vld [vmem:[%s3 + $0x1d0] sm:$0xff]
  %v6206 = vld [vmem:[%s3 + $0x1d8] sm:$0xff]
  %v6207 = vld [vmem:[%s3 + $0x1e0] sm:$0xff]
  %v6208 = vld [vmem:[%s3 + $0x1e8] sm:$0xff]
  %v6209 = vld [vmem:[%s3 + $0x1f0] sm:$0xff]
  %v6210 = vld [vmem:[%s3 + $0x1f8] sm:$0xff]
  %v6283 = vunpack.c.l.b16 %v6075
  %v6284 = vunpack.c.l.b16 %v6076
  %v6285 = vunpack.c.l.b16 %v6077
  %v6286 = vunpack.c.l.b16 %v6078
  %v6287 = vunpack.c.l.b16 %v6079
  %v6288 = vunpack.c.l.b16 %v6080
  %v6289 = vunpack.c.l.b16 %v6081
  %v6290 = vunpack.c.l.b16 %v6082
  %v6291 = vunpack.c.l.b16 %v6083
  %v6292 = vunpack.c.l.b16 %v6084
  %v6293 = vunpack.c.l.b16 %v6085
  %v6294 = vunpack.c.l.b16 %v6086
  %v6295 = vunpack.c.l.b16 %v6087
  %v6296 = vunpack.c.l.b16 %v6088
  %v6297 = vunpack.c.l.b16 %v6089
  %v6298 = vunpack.c.l.b16 %v6090
  %v6299 = vunpack.c.l.b16 %v6091
  %v6300 = vunpack.c.l.b16 %v6092
  %v6301 = vunpack.c.l.b16 %v6093
  %v6302 = vunpack.c.l.b16 %v6094
  %v6303 = vunpack.c.l.b16 %v6095
  %v6304 = vunpack.c.l.b16 %v6096
  %v6305 = vunpack.c.l.b16 %v6097
  %v6306 = vunpack.c.l.b16 %v6098
  %v6307 = vunpack.c.l.b16 %v6099
  %v6308 = vunpack.c.l.b16 %v6100
  %v6309 = vunpack.c.l.b16 %v6101
  %v6310 = vunpack.c.l.b16 %v6102
  %v6311 = vunpack.c.l.b16 %v6103
  %v6312 = vunpack.c.l.b16 %v6104
  %v6313 = vunpack.c.l.b16 %v6105
  %v6314 = vunpack.c.l.b16 %v6106
  %v6315 = vunpack.c.l.b16 %v6107
  %v6316 = vunpack.c.l.b16 %v6108
  %v6317 = vunpack.c.l.b16 %v6109
  %v6318 = vunpack.c.l.b16 %v6110
  %v6319 = vunpack.c.l.b16 %v6111
  %v6320 = vunpack.c.l.b16 %v6112
  %v6321 = vunpack.c.l.b16 %v6113
  %v6322 = vunpack.c.l.b16 %v6114
  %v6323 = vunpack.c.l.b16 %v6115
  %v6324 = vunpack.c.l.b16 %v6116
  %v6325 = vunpack.c.l.b16 %v6117
  %v6326 = vunpack.c.l.b16 %v6118
  %v6327 = vunpack.c.l.b16 %v6119
  %v6328 = vunpack.c.l.b16 %v6120
  %v6329 = vunpack.c.l.b16 %v6121
  %v6330 = vunpack.c.l.b16 %v6122
  %v6331 = vunpack.c.l.b16 %v6123
  %v6332 = vunpack.c.l.b16 %v6124
  %v6333 = vunpack.c.l.b16 %v6125
  %v6334 = vunpack.c.l.b16 %v6126
  %v6335 = vunpack.c.l.b16 %v6127
  %v6336 = vunpack.c.l.b16 %v6128
  %v6337 = vunpack.c.l.b16 %v6129
  %v6338 = vunpack.c.l.b16 %v6130
  %v6339 = vunpack.c.l.b16 %v6131
  %v6340 = vunpack.c.l.b16 %v6132
  %v6341 = vunpack.c.l.b16 %v6133
  %v6342 = vunpack.c.l.b16 %v6134
  %v6343 = vunpack.c.l.b16 %v6135
  %v6344 = vunpack.c.l.b16 %v6136
  %v6345 = vunpack.c.l.b16 %v6137
  %v6346 = vunpack.c.l.b16 %v6138
  %v6347 = vunpack.c.l.b16 %v6139
  %v6348 = vunpack.c.l.b16 %v6140
  %v6349 = vunpack.c.l.b16 %v6141
  %v6350 = vunpack.c.l.b16 %v6142
  %v6351 = vunpack.c.l.b16 %v6143
  %v6352 = vunpack.c.l.b16 %v6144
  %v6353 = vunpack.c.l.b16 %v6145
  %v6354 = vunpack.c.l.b16 %v6146
  %v6355 = vpack.c.b16 %v6284, %v6283
  %v6356 = vpack.c.b16 %v6286, %v6285
  %v6357 = vpack.c.b16 %v6288, %v6287
  %v6358 = vpack.c.b16 %v6290, %v6289
  %v6359 = vpack.c.b16 %v6292, %v6291
  %v6360 = vpack.c.b16 %v6294, %v6293
  %v6361 = vpack.c.b16 %v6296, %v6295
  %v6362 = vpack.c.b16 %v6298, %v6297
  %v6363 = vpack.c.b16 %v6300, %v6299
  %v6364 = vpack.c.b16 %v6302, %v6301
  %v6365 = vpack.c.b16 %v6304, %v6303
  %v6366 = vpack.c.b16 %v6306, %v6305
  %v6367 = vpack.c.b16 %v6308, %v6307
  %v6368 = vpack.c.b16 %v6310, %v6309
  %v6369 = vpack.c.b16 %v6312, %v6311
  %v6370 = vpack.c.b16 %v6314, %v6313
  %v6371 = vpack.c.b16 %v6316, %v6315
  %v6372 = vpack.c.b16 %v6318, %v6317
  %v6373 = vpack.c.b16 %v6320, %v6319
  %v6374 = vpack.c.b16 %v6322, %v6321
  %v6375 = vpack.c.b16 %v6324, %v6323
  %v6376 = vpack.c.b16 %v6326, %v6325
  %v6377 = vpack.c.b16 %v6328, %v6327
  %v6378 = vpack.c.b16 %v6330, %v6329
  %v6379 = vpack.c.b16 %v6332, %v6331
  %v6380 = vpack.c.b16 %v6334, %v6333
  %v6381 = vpack.c.b16 %v6336, %v6335
  %v6382 = vpack.c.b16 %v6338, %v6337
  %v6383 = vpack.c.b16 %v6340, %v6339
  %v6384 = vpack.c.b16 %v6342, %v6341
  %v6385 = vpack.c.b16 %v6344, %v6343
  %v6386 = vpack.c.b16 %v6346, %v6345
  %v6387 = vpack.c.b16 %v6348, %v6347
  %v6388 = vpack.c.b16 %v6350, %v6349
  %v6389 = vpack.c.b16 %v6352, %v6351
  %v6390 = vpack.c.b16 %v6354, %v6353
  %v6427 = vsel %vm5720, %v5407, 0
  %v6429 = vsel %vm5720, %v5410, 0
  %v6431 = vsel %vm5720, %v5413, 0
  %v6433 = vsel %vm5720, %v5416, 0
  %v6435 = vsel %vm5720, %v5419, 0
  %v6437 = vsel %vm5720, %v5422, 0
  %v6439 = vsel %vm5720, %v5425, 0
  %v6441 = vsel %vm5720, %v5428, 0
  %v6443 = vsel %vm5720, %v5431, 0
  %v6445 = vsel %vm5720, %v5434, 0
  %v6447 = vsel %vm5720, %v5437, 0
  %v6449 = vsel %vm5720, %v5440, 0
  %v6451 = vsel %vm5720, %v5443, 0
  %v6453 = vsel %vm5720, %v5446, 0
  %v6456 = vsel %vm5720, %v5522, 0
  %v6458 = vsel %vm5720, %v1657, 0
  %v6460 = vsel %vm5720, %v5452, 0
  %v6462 = vsel %vm5720, %v5455, 0
  %v6464 = vsel %vm5720, %v5458, 0
  %v6466 = vsel %vm5720, %v5461, 0
  %v6468 = vsel %vm5720, %v5464, 0
  %v6470 = vsel %vm5720, %v5467, 0
  %v6472 = vsel %vm5720, %v5470, 0
  %v6474 = vsel %vm5720, %v5473, 0
  %v6476 = vsel %vm5720, %v5476, 0
  %v6478 = vsel %vm5720, %v5479, 0
  %v6480 = vsel %vm5720, %v5482, 0
  %v6482 = vsel %vm5720, %v5485, 0
  %v6484 = vsel %vm5720, %v5488, 0
  %v6486 = vsel %vm5720, %v5491, 0
  %v6489 = vsel %vm5720, %v5525, 0
  %6491 = vmatprep.subr.bf16.mxu0 0
  %6492 = vmatpush1.bf16.msra.mxu0 %v6355
  %6493 = vmatprep.subr.bf16.mxu0 0
  %6494 = vmatpush1.bf16.msra.mxu0 %v6356
  %6495 = vmatprep.subr.bf16.mxu0 0
  %6496 = vmatpush1.bf16.msra.mxu0 %v6357
  %6497 = vmatprep.subr.bf16.mxu0 0
  %6498 = vmatpush1.bf16.msra.mxu0 %v6358
  %6499 = vmatprep.subr.bf16.mxu0 0
  %6500 = vmatpush1.bf16.msra.mxu0 %v6359
  %6501 = vmatprep.subr.bf16.mxu0 0
  %6502 = vmatpush1.bf16.msra.mxu0 %v6360
  %6503 = vmatprep.subr.bf16.mxu0 0
  %6504 = vmatpush1.bf16.msra.mxu0 %v6361
  %6505 = vmatprep.subr.bf16.mxu0 0
  %6506 = vmatpush1.bf16.msra.mxu0 %v6362
  %6507 = vmatprep.subr.bf16.mxu0 0
  %6508 = vmatpush1.bf16.msra.mxu0 %v6363
  %6509 = vmatprep.subr.bf16.mxu0 0
  %6510 = vmatpush1.bf16.msra.mxu0 %v6364
  %6511 = vmatprep.subr.bf16.mxu0 0
  %6512 = vmatpush1.bf16.msra.mxu0 %v6365
  %6513 = vmatprep.subr.bf16.mxu0 0
  %6514 = vmatpush1.bf16.msra.mxu0 %v6366
  %6515 = vmatprep.subr.bf16.mxu0 0
  %6516 = vmatpush1.bf16.msra.mxu0 %v6367
  %6517 = vmatprep.subr.bf16.mxu0 0
  %6518 = vmatpush1.bf16.msra.mxu0 %v6368
  %6519 = vmatprep.subr.bf16.mxu0 0
  %6520 = vmatpush1.bf16.msra.mxu0 %v6369
  %6521 = vmatprep.subr.bf16.mxu0 0
  %6522 = vmatpush1.bf16.msra.mxu0 %v6370
  %6523 = vmatprep.mubr.bf16.mxu0 %v5816
  %6524 = vmatmul.mubr.bf16.gmra.mrb[0].mxu0 %v5722
  %v6525 = vpop.f32.mrb[0].mxu0
  %v6526 = vadd.f32 %v6147, %v6525
  %v6527 = vpop.f32.mrb[0].mxu0
  %v6528 = vpop.f32.mrb[0].mxu0
  %v6529 = vadd.f32 %v6148, %v6528
  %v6530 = vpop.f32.mrb[0].mxu0
  %6531 = vmatprep.mubr.bf16.mxu0 %v5820
  %6532 = vmatmul.mubr.bf16.gmra.mrb[0].mxu0 %v5725
  %v6533 = vpop.f32.mrb[0].mxu0
  %v6534 = vadd.f32 %v6149, %v6533
  %v6535 = vpop.f32.mrb[0].mxu0
  %v6536 = vpop.f32.mrb[0].mxu0
  %v6537 = vadd.f32 %v6150, %v6536
  %v6538 = vpop.f32.mrb[0].mxu0
  %6539 = vmatprep.mubr.bf16.mxu0 %v5824
  %6540 = vmatmul.mubr.bf16.gmra.mrb[0].mxu0 %v5728
  %v6541 = vpop.f32.mrb[0].mxu0
  %v6542 = vadd.f32 %v6151, %v6541
  %v6543 = vpop.f32.mrb[0].mxu0
  %v6544 = vpop.f32.mrb[0].mxu0
  %v6545 = vadd.f32 %v6152, %v6544
  %v6546 = vpop.f32.mrb[0].mxu0
  %6547 = vmatprep.mubr.bf16.mxu0 %v5828
  %6548 = vmatmul.mubr.bf16.gmra.mrb[0].mxu0 %v5731
  %v6549 = vpop.f32.mrb[0].mxu0
  %v6550 = vadd.f32 %v6153, %v6549
  %v6551 = vpop.f32.mrb[0].mxu0
  %v6552 = vpop.f32.mrb[0].mxu0
  %v6553 = vadd.f32 %v6154, %v6552
  %v6554 = vpop.f32.mrb[0].mxu0
  %6555 = vmatprep.mubr.bf16.mxu0 %v5832
  %6556 = vmatmul.mubr.bf16.gmra.mrb[0].mxu0 %v5734
  %v6557 = vpop.f32.mrb[0].mxu0
  %v6558 = vadd.f32 %v6155, %v6557
  %v6559 = vpop.f32.mrb[0].mxu0
  %v6560 = vpop.f32.mrb[0].mxu0
  %v6561 = vadd.f32 %v6156, %v6560
  %v6562 = vpop.f32.mrb[0].mxu0
  %6563 = vmatprep.mubr.bf16.mxu0 %v5836
  %6564 = vmatmul.mubr.bf16.gmra.mrb[0].mxu0 %v5737
  %v6565 = vpop.f32.mrb[0].mxu0
  %v6566 = vadd.f32 %v6157, %v6565
  %v6567 = vpop.f32.mrb[0].mxu0
  %v6568 = vpop.f32.mrb[0].mxu0
  %v6569 = vadd.f32 %v6158, %v6568
  %v6570 = vpop.f32.mrb[0].mxu0
  %6571 = vmatprep.mubr.bf16.mxu0 %v5840
  %6572 = vmatmul.mubr.bf16.gmra.mrb[0].mxu0 %v5740
  %v6573 = vpop.f32.mrb[0].mxu0
  %v6574 = vadd.f32 %v6159, %v6573
  %v6575 = vpop.f32.mrb[0].mxu0
  %v6576 = vpop.f32.mrb[0].mxu0
  %v6577 = vadd.f32 %v6160, %v6576
  %v6578 = vpop.f32.mrb[0].mxu0
  %6579 = vmatprep.mubr.bf16.mxu0 %v5844
  %6580 = vmatmul.mubr.bf16.gmra.mrb[0].mxu0 %v5743
  %v6581 = vpop.f32.mrb[0].mxu0
  %v6582 = vadd.f32 %v6161, %v6581
  %v6583 = vpop.f32.mrb[0].mxu0
  %v6584 = vpop.f32.mrb[0].mxu0
  %v6585 = vadd.f32 %v6162, %v6584
  %v6586 = vpop.f32.mrb[0].mxu0
  %6587 = vmatprep.mubr.bf16.mxu0 %v5848
  %6588 = vmatmul.mubr.bf16.gmra.mrb[0].mxu0 %v5746
  %v6589 = vpop.f32.mrb[0].mxu0
  %v6590 = vadd.f32 %v6163, %v6589
  %v6591 = vpop.f32.mrb[0].mxu0
  %v6592 = vpop.f32.mrb[0].mxu0
  %v6593 = vadd.f32 %v6164, %v6592
  %v6594 = vpop.f32.mrb[0].mxu0
  %6595 = vmatprep.mubr.bf16.mxu0 %v5852
  %6596 = vmatmul.mubr.bf16.gmra.mrb[0].mxu0 %v5749
  %v6597 = vpop.f32.mrb[0].mxu0
  %v6598 = vadd.f32 %v6165, %v6597
  %v6599 = vpop.f32.mrb[0].mxu0
  %v6600 = vpop.f32.mrb[0].mxu0
  %v6601 = vadd.f32 %v6166, %v6600
  %v6602 = vpop.f32.mrb[0].mxu0
  %6603 = vmatprep.mubr.bf16.mxu0 %v5856
  %6604 = vmatmul.mubr.bf16.gmra.mrb[0].mxu0 %v5752
  %v6605 = vpop.f32.mrb[0].mxu0
  %v6606 = vadd.f32 %v6167, %v6605
  %v6607 = vpop.f32.mrb[0].mxu0
  %v6608 = vpop.f32.mrb[0].mxu0
  %v6609 = vadd.f32 %v6168, %v6608
  %v6610 = vpop.f32.mrb[0].mxu0
  %6611 = vmatprep.mubr.bf16.mxu0 %v5860
  %6612 = vmatmul.mubr.bf16.gmra.mrb[0].mxu0 %v5755
  %v6613 = vpop.f32.mrb[0].mxu0
  %v6614 = vadd.f32 %v6169, %v6613
  %v6615 = vpop.f32.mrb[0].mxu0
  %v6616 = vpop.f32.mrb[0].mxu0
  %v6617 = vadd.f32 %v6170, %v6616
  %v6618 = vpop.f32.mrb[0].mxu0
  %6619 = vmatprep.mubr.bf16.mxu0 %v5864
  %6620 = vmatmul.mubr.bf16.gmra.mrb[0].mxu0 %v5758
  %v6621 = vpop.f32.mrb[0].mxu0
  %v6622 = vadd.f32 %v6171, %v6621
  %v6623 = vpop.f32.mrb[0].mxu0
  %v6624 = vpop.f32.mrb[0].mxu0
  %v6625 = vadd.f32 %v6172, %v6624
  %v6626 = vpop.f32.mrb[0].mxu0
  %6627 = vmatprep.mubr.bf16.mxu0 %v5868
  %6628 = vmatmul.mubr.bf16.gmra.mrb[0].mxu0 %v5761
  %v6629 = vpop.f32.mrb[0].mxu0
  %v6630 = vadd.f32 %v6173, %v6629
  %v6631 = vpop.f32.mrb[0].mxu0
  %v6632 = vpop.f32.mrb[0].mxu0
  %v6633 = vadd.f32 %v6174, %v6632
  %v6634 = vpop.f32.mrb[0].mxu0
  %6635 = vmatprep.mubr.bf16.mxu0 %v5872
  %6636 = vmatmul.mubr.bf16.gmra.mrb[0].mxu0 %v5764
  %v6637 = vpop.f32.mrb[0].mxu0
  %v6638 = vadd.f32 %v6175, %v6637
  %v6639 = vpop.f32.mrb[0].mxu0
  %v6640 = vpop.f32.mrb[0].mxu0
  %v6641 = vadd.f32 %v6176, %v6640
  %v6642 = vpop.f32.mrb[0].mxu0
  %6643 = vmatprep.mubr.bf16.mxu0 %v5876
  %6644 = vmatmul.mubr.bf16.gmra.mrb[0].mxu0 %v5767
  %v6645 = vpop.f32.mrb[0].mxu0
  %v6646 = vadd.f32 %v6177, %v6645
  %v6647 = vpop.f32.mrb[0].mxu0
  %v6648 = vpop.f32.mrb[0].mxu0
  %v6649 = vadd.f32 %v6178, %v6648
  %v6650 = vpop.f32.mrb[0].mxu0
  %6651 = vmatprep.mubr.bf16.mxu0 %v5879
  %6652 = vmatmul.mubr.bf16.gmra.mrb[0].mxu0 %v5722
  %v6653 = vpop.f32.mrb[0].mxu0
  %v6654 = vadd.f32 %v6179, %v6653
  %v6655 = vpop.f32.mrb[0].mxu0
  %v6656 = vpop.f32.mrb[0].mxu0
  %v6657 = vadd.f32 %v6180, %v6656
  %v6658 = vpop.f32.mrb[0].mxu0
  %6659 = vmatprep.mubr.bf16.mxu0 %v5883
  %6660 = vmatmul.mubr.bf16.gmra.mrb[0].mxu0 %v5770
  %v6661 = vpop.f32.mrb[0].mxu0
  %v6662 = vadd.f32 %v6181, %v6661
  %v6663 = vpop.f32.mrb[0].mxu0
  %v6664 = vpop.f32.mrb[0].mxu0
  %v6665 = vadd.f32 %v6182, %v6664
  %v6666 = vpop.f32.mrb[0].mxu0
  %6667 = vmatprep.mubr.bf16.mxu0 %v5887
  %6668 = vmatmul.mubr.bf16.gmra.mrb[0].mxu0 %v5773
  %v6669 = vpop.f32.mrb[0].mxu0
  %v6670 = vadd.f32 %v6183, %v6669
  %v6671 = vpop.f32.mrb[0].mxu0
  %v6672 = vpop.f32.mrb[0].mxu0
  %v6673 = vadd.f32 %v6184, %v6672
  %v6674 = vpop.f32.mrb[0].mxu0
  %6675 = vmatprep.mubr.bf16.mxu0 %v5891
  %6676 = vmatmul.mubr.bf16.gmra.mrb[0].mxu0 %v5776
  %v6677 = vpop.f32.mrb[0].mxu0
  %v6678 = vadd.f32 %v6185, %v6677
  %v6679 = vpop.f32.mrb[0].mxu0
  %v6680 = vpop.f32.mrb[0].mxu0
  %v6681 = vadd.f32 %v6186, %v6680
  %v6682 = vpop.f32.mrb[0].mxu0
  %6683 = vmatprep.mubr.bf16.mxu0 %v5895
  %6684 = vmatmul.mubr.bf16.gmra.mrb[0].mxu0 %v5779
  %v6685 = vpop.f32.mrb[0].mxu0
  %v6686 = vadd.f32 %v6187, %v6685
  %v6687 = vpop.f32.mrb[0].mxu0
  %v6688 = vpop.f32.mrb[0].mxu0
  %v6689 = vadd.f32 %v6188, %v6688
  %v6690 = vpop.f32.mrb[0].mxu0
  %6691 = vmatprep.mubr.bf16.mxu0 %v5899
  %6692 = vmatmul.mubr.bf16.gmra.mrb[0].mxu0 %v5782
  %v6693 = vpop.f32.mrb[0].mxu0
  %v6694 = vadd.f32 %v6189, %v6693
  %v6695 = vpop.f32.mrb[0].mxu0
  %v6696 = vpop.f32.mrb[0].mxu0
  %v6697 = vadd.f32 %v6190, %v6696
  %v6698 = vpop.f32.mrb[0].mxu0
  %6699 = vmatprep.mubr.bf16.mxu0 %v5903
  %6700 = vmatmul.mubr.bf16.gmra.mrb[0].mxu0 %v5785
  %v6701 = vpop.f32.mrb[0].mxu0
  %v6702 = vadd.f32 %v6191, %v6701
  %v6703 = vpop.f32.mrb[0].mxu0
  %v6704 = vpop.f32.mrb[0].mxu0
  %v6705 = vadd.f32 %v6192, %v6704
  %v6706 = vpop.f32.mrb[0].mxu0
  %6707 = vmatprep.mubr.bf16.mxu0 %v5907
  %6708 = vmatmul.mubr.bf16.gmra.mrb[0].mxu0 %v5788
  %v6709 = vpop.f32.mrb[0].mxu0
  %v6710 = vadd.f32 %v6193, %v6709
  %v6711 = vpop.f32.mrb[0].mxu0
  %v6712 = vpop.f32.mrb[0].mxu0
  %v6713 = vadd.f32 %v6194, %v6712
  %v6714 = vpop.f32.mrb[0].mxu0
  %6715 = vmatprep.mubr.bf16.mxu0 %v5911
  %6716 = vmatmul.mubr.bf16.gmra.mrb[0].mxu0 %v5791
  %v6717 = vpop.f32.mrb[0].mxu0
  %v6718 = vadd.f32 %v6195, %v6717
  %v6719 = vpop.f32.mrb[0].mxu0
  %v6720 = vpop.f32.mrb[0].mxu0
  %v6721 = vadd.f32 %v6196, %v6720
  %v6722 = vpop.f32.mrb[0].mxu0
  %6723 = vmatprep.mubr.bf16.mxu0 %v5915
  %6724 = vmatmul.mubr.bf16.gmra.mrb[0].mxu0 %v5794
  %v6725 = vpop.f32.mrb[0].mxu0
  %v6726 = vadd.f32 %v6197, %v6725
  %v6727 = vpop.f32.mrb[0].mxu0
  %v6728 = vpop.f32.mrb[0].mxu0
  %v6729 = vadd.f32 %v6198, %v6728
  %v6730 = vpop.f32.mrb[0].mxu0
  %6731 = vmatprep.mubr.bf16.mxu0 %v5919
  %6732 = vmatmul.mubr.bf16.gmra.mrb[0].mxu0 %v5797
  %v6733 = vpop.f32.mrb[0].mxu0
  %v6734 = vadd.f32 %v6199, %v6733
  %v6735 = vpop.f32.mrb[0].mxu0
  %v6736 = vpop.f32.mrb[0].mxu0
  %v6737 = vadd.f32 %v6200, %v6736
  %v6738 = vpop.f32.mrb[0].mxu0
  %6739 = vmatprep.mubr.bf16.mxu0 %v5923
  %6740 = vmatmul.mubr.bf16.gmra.mrb[0].mxu0 %v5800
  %v6741 = vpop.f32.mrb[0].mxu0
  %v6742 = vadd.f32 %v6201, %v6741
  %v6743 = vpop.f32.mrb[0].mxu0
  %v6744 = vpop.f32.mrb[0].mxu0
  %v6745 = vadd.f32 %v6202, %v6744
  %v6746 = vpop.f32.mrb[0].mxu0
  %6747 = vmatprep.mubr.bf16.mxu0 %v5927
  %6748 = vmatmul.mubr.bf16.gmra.mrb[0].mxu0 %v5803
  %v6749 = vpop.f32.mrb[0].mxu0
  %v6750 = vadd.f32 %v6203, %v6749
  %v6751 = vpop.f32.mrb[0].mxu0
  %v6752 = vpop.f32.mrb[0].mxu0
  %v6753 = vadd.f32 %v6204, %v6752
  %v6754 = vpop.f32.mrb[0].mxu0
  %6755 = vmatprep.mubr.bf16.mxu0 %v5931
  %6756 = vmatmul.mubr.bf16.gmra.mrb[0].mxu0 %v5806
  %v6757 = vpop.f32.mrb[0].mxu0
  %v6758 = vadd.f32 %v6205, %v6757
  %v6759 = vpop.f32.mrb[0].mxu0
  %v6760 = vpop.f32.mrb[0].mxu0
  %v6761 = vadd.f32 %v6206, %v6760
  %v6762 = vpop.f32.mrb[0].mxu0
  %6763 = vmatprep.mubr.bf16.mxu0 %v5935
  %6764 = vmatmul.mubr.bf16.gmra.mrb[0].mxu0 %v5809
  %v6765 = vpop.f32.mrb[0].mxu0
  %v6766 = vadd.f32 %v6207, %v6765
  %v6767 = vpop.f32.mrb[0].mxu0
  %v6768 = vpop.f32.mrb[0].mxu0
  %v6769 = vadd.f32 %v6208, %v6768
  %v6770 = vpop.f32.mrb[0].mxu0
  %6771 = vmatprep.mubr.bf16.mxu0 %v5939
  %6772 = vmatmul.mubr.bf16.gmra.mrb[0].mxu0 %v5812
  %v6773 = vpop.f32.mrb[0].mxu0
  %v6774 = vadd.f32 %v6209, %v6773
  %v6775 = vpop.f32.mrb[0].mxu0
  %v6776 = vpop.f32.mrb[0].mxu0
  %v6777 = vadd.f32 %v6210, %v6776
  %v6778 = vpop.f32.mrb[0].mxu0
  %6779 = vdwg.mxu0
  %6780 = vmatprep.subr.bf16.mxu0 0
  %6781 = vmatpush1.bf16.msra.mxu0 %v6371
  %6782 = vmatprep.subr.bf16.mxu0 0
  %6783 = vmatpush1.bf16.msra.mxu0 %v6372
  %6784 = vmatprep.subr.bf16.mxu0 0
  %6785 = vmatpush1.bf16.msra.mxu0 %v6373
  %6786 = vmatprep.subr.bf16.mxu0 0
  %6787 = vmatpush1.bf16.msra.mxu0 %v6374
  %6788 = vmatprep.subr.bf16.mxu0 0
  %6789 = vmatpush1.bf16.msra.mxu0 %v6375
  %6790 = vmatprep.subr.bf16.mxu0 0
  %6791 = vmatpush1.bf16.msra.mxu0 %v6376
  %6792 = vmatprep.subr.bf16.mxu0 0
  %6793 = vmatpush1.bf16.msra.mxu0 %v6377
  %6794 = vmatprep.subr.bf16.mxu0 0
  %6795 = vmatpush1.bf16.msra.mxu0 %v6378
  %6796 = vmatprep.subr.bf16.mxu0 0
  %6797 = vmatpush1.bf16.msra.mxu0 %v6379
  %6798 = vmatprep.subr.bf16.mxu0 0
  %6799 = vmatpush1.bf16.msra.mxu0 %v6380
  %6800 = vmatprep.subr.bf16.mxu0 0
  %6801 = vmatpush1.bf16.msra.mxu0 %v6381
  %6802 = vmatprep.subr.bf16.mxu0 0
  %6803 = vmatpush1.bf16.msra.mxu0 %v6382
  %6804 = vmatprep.subr.bf16.mxu0 0
  %6805 = vmatpush1.bf16.msra.mxu0 %v6383
  %6806 = vmatprep.subr.bf16.mxu0 0
  %6807 = vmatpush1.bf16.msra.mxu0 %v6384
  %6808 = vmatprep.subr.bf16.mxu0 0
  %6809 = vmatpush1.bf16.msra.mxu0 %v6385
  %6810 = vmatprep.subr.bf16.mxu0 0
  %6811 = vmatpush1.bf16.msra.mxu0 %v6386
  %6812 = vmatprep.mubr.bf16.mxu0 %v5728
  %6813 = vmatmul.mubr.bf16.gmra.mrb[0].mxu0 %v5943
  %v6814 = vpop.f32.mrb[0].mxu0
  %v6815 = vadd.f32 %v6526, %v6814
  %v6816 = vpop.f32.mrb[0].mxu0
  %v6817 = vpop.f32.mrb[0].mxu0
  %v6818 = vadd.f32 %v6529, %v6817
  %v6819 = vpop.f32.mrb[0].mxu0
  %6820 = vmatprep.mubr.bf16.mxu0 %v5731
  %6821 = vmatmul.mubr.bf16.gmra.mrb[0].mxu0 %v5947
  %v6822 = vpop.f32.mrb[0].mxu0
  %v6823 = vadd.f32 %v6534, %v6822
  %v6824 = vpop.f32.mrb[0].mxu0
  %v6825 = vpop.f32.mrb[0].mxu0
  %v6826 = vadd.f32 %v6537, %v6825
  %v6827 = vpop.f32.mrb[0].mxu0
  %6828 = vmatprep.mubr.bf16.mxu0 %v5734
  %6829 = vmatmul.mubr.bf16.gmra.mrb[0].mxu0 %v5951
  %v6830 = vpop.f32.mrb[0].mxu0
  %v6831 = vadd.f32 %v6542, %v6830
  %v6832 = vpop.f32.mrb[0].mxu0
  %v6833 = vpop.f32.mrb[0].mxu0
  %v6834 = vadd.f32 %v6545, %v6833
  %v6835 = vpop.f32.mrb[0].mxu0
  %6836 = vmatprep.mubr.bf16.mxu0 %v5737
  %6837 = vmatmul.mubr.bf16.gmra.mrb[0].mxu0 %v5955
  %v6838 = vpop.f32.mrb[0].mxu0
  %v6839 = vadd.f32 %v6550, %v6838
  %v6840 = vpop.f32.mrb[0].mxu0
  %v6841 = vpop.f32.mrb[0].mxu0
  %v6842 = vadd.f32 %v6553, %v6841
  %v6843 = vpop.f32.mrb[0].mxu0
  %6844 = vmatprep.mubr.bf16.mxu0 %v5740
  %6845 = vmatmul.mubr.bf16.gmra.mrb[0].mxu0 %v5959
  %v6846 = vpop.f32.mrb[0].mxu0
  %v6847 = vadd.f32 %v6558, %v6846
  %v6848 = vpop.f32.mrb[0].mxu0
  %v6849 = vpop.f32.mrb[0].mxu0
  %v6850 = vadd.f32 %v6561, %v6849
  %v6851 = vpop.f32.mrb[0].mxu0
  %6852 = vmatprep.mubr.bf16.mxu0 %v5743
  %6853 = vmatmul.mubr.bf16.gmra.mrb[0].mxu0 %v5963
  %v6854 = vpop.f32.mrb[0].mxu0
  %v6855 = vadd.f32 %v6566, %v6854
  %v6856 = vpop.f32.mrb[0].mxu0
  %v6857 = vpop.f32.mrb[0].mxu0
  %v6858 = vadd.f32 %v6569, %v6857
  %v6859 = vpop.f32.mrb[0].mxu0
  %6860 = vmatprep.mubr.bf16.mxu0 %v5746
  %6861 = vmatmul.mubr.bf16.gmra.mrb[0].mxu0 %v5967
  %v6862 = vpop.f32.mrb[0].mxu0
  %v6863 = vadd.f32 %v6574, %v6862
  %v6864 = vpop.f32.mrb[0].mxu0
  %v6865 = vpop.f32.mrb[0].mxu0
  %v6866 = vadd.f32 %v6577, %v6865
  %v6867 = vpop.f32.mrb[0].mxu0
  %6868 = vmatprep.mubr.bf16.mxu0 %v5749
  %6869 = vmatmul.mubr.bf16.gmra.mrb[0].mxu0 %v5971
  %v6870 = vpop.f32.mrb[0].mxu0
  %v6871 = vadd.f32 %v6582, %v6870
  %v6872 = vpop.f32.mrb[0].mxu0
  %v6873 = vpop.f32.mrb[0].mxu0
  %v6874 = vadd.f32 %v6585, %v6873
  %v6875 = vpop.f32.mrb[0].mxu0
  %6876 = vmatprep.mubr.bf16.mxu0 %v5752
  %6877 = vmatmul.mubr.bf16.gmra.mrb[0].mxu0 %v5975
  %v6878 = vpop.f32.mrb[0].mxu0
  %v6879 = vadd.f32 %v6590, %v6878
  %v6880 = vpop.f32.mrb[0].mxu0
  %v6881 = vpop.f32.mrb[0].mxu0
  %v6882 = vadd.f32 %v6593, %v6881
  %v6883 = vpop.f32.mrb[0].mxu0
  %6884 = vmatprep.mubr.bf16.mxu0 %v5755
  %6885 = vmatmul.mubr.bf16.gmra.mrb[0].mxu0 %v5979
  %v6886 = vpop.f32.mrb[0].mxu0
  %v6887 = vadd.f32 %v6598, %v6886
  %v6888 = vpop.f32.mrb[0].mxu0
  %v6889 = vpop.f32.mrb[0].mxu0
  %v6890 = vadd.f32 %v6601, %v6889
  %v6891 = vpop.f32.mrb[0].mxu0
  %6892 = vmatprep.mubr.bf16.mxu0 %v5758
  %6893 = vmatmul.mubr.bf16.gmra.mrb[0].mxu0 %v5983
  %v6894 = vpop.f32.mrb[0].mxu0
  %v6895 = vadd.f32 %v6606, %v6894
  %v6896 = vpop.f32.mrb[0].mxu0
  %v6897 = vpop.f32.mrb[0].mxu0
  %v6898 = vadd.f32 %v6609, %v6897
  %v6899 = vpop.f32.mrb[0].mxu0
  %6900 = vmatprep.mubr.bf16.mxu0 %v5761
  %6901 = vmatmul.mubr.bf16.gmra.mrb[0].mxu0 %v5987
  %v6902 = vpop.f32.mrb[0].mxu0
  %v6903 = vadd.f32 %v6614, %v6902
  %v6904 = vpop.f32.mrb[0].mxu0
  %v6905 = vpop.f32.mrb[0].mxu0
  %v6906 = vadd.f32 %v6617, %v6905
  %v6907 = vpop.f32.mrb[0].mxu0
  %6908 = vmatprep.mubr.bf16.mxu0 %v5764
  %6909 = vmatmul.mubr.bf16.gmra.mrb[0].mxu0 %v5991
  %v6910 = vpop.f32.mrb[0].mxu0
  %v6911 = vadd.f32 %v6622, %v6910
  %v6912 = vpop.f32.mrb[0].mxu0
  %v6913 = vpop.f32.mrb[0].mxu0
  %v6914 = vadd.f32 %v6625, %v6913
  %v6915 = vpop.f32.mrb[0].mxu0
  %6916 = vmatprep.mubr.bf16.mxu0 %v5767
  %6917 = vmatmul.mubr.bf16.gmra.mrb[0].mxu0 %v5995
  %v6918 = vpop.f32.mrb[0].mxu0
  %v6919 = vadd.f32 %v6630, %v6918
  %v6920 = vpop.f32.mrb[0].mxu0
  %v6921 = vpop.f32.mrb[0].mxu0
  %v6922 = vadd.f32 %v6633, %v6921
  %v6923 = vpop.f32.mrb[0].mxu0
  %6924 = vmatprep.mubr.bf16.mxu0 %v6070
  %6925 = vmatmul.mubr.bf16.gmra.mrb[0].mxu0 %v5999
  %v6926 = vpop.f32.mrb[0].mxu0
  %v6927 = vadd.f32 %v6638, %v6926
  %v6928 = vpop.f32.mrb[0].mxu0
  %v6929 = vpop.f32.mrb[0].mxu0
  %v6930 = vadd.f32 %v6641, %v6929
  %v6931 = vpop.f32.mrb[0].mxu0
  %6932 = vmatprep.mubr.bf16.mxu0 %v5722
  %6933 = vmatmul.mubr.bf16.gmra.mrb[0].mxu0 %v6003
  %v6934 = vpop.f32.mrb[0].mxu0
  %v6935 = vadd.f32 %v6646, %v6934
  %v6936 = vpop.f32.mrb[0].mxu0
  %v6937 = vpop.f32.mrb[0].mxu0
  %v6938 = vadd.f32 %v6649, %v6937
  %v6939 = vpop.f32.mrb[0].mxu0
  %6940 = vmatprep.mubr.bf16.mxu0 %v5773
  %6941 = vmatmul.mubr.bf16.gmra.mrb[0].mxu0 %v6007
  %v6942 = vpop.f32.mrb[0].mxu0
  %v6943 = vadd.f32 %v6654, %v6942
  %v6944 = vpop.f32.mrb[0].mxu0
  %v6945 = vpop.f32.mrb[0].mxu0
  %v6946 = vadd.f32 %v6657, %v6945
  %v6947 = vpop.f32.mrb[0].mxu0
  %6948 = vmatprep.mubr.bf16.mxu0 %v5776
  %6949 = vmatmul.mubr.bf16.gmra.mrb[0].mxu0 %v6011
  %v6950 = vpop.f32.mrb[0].mxu0
  %v6951 = vadd.f32 %v6662, %v6950
  %v6952 = vpop.f32.mrb[0].mxu0
  %v6953 = vpop.f32.mrb[0].mxu0
  %v6954 = vadd.f32 %v6665, %v6953
  %v6955 = vpop.f32.mrb[0].mxu0
  %6956 = vmatprep.mubr.bf16.mxu0 %v5779
  %6957 = vmatmul.mubr.bf16.gmra.mrb[0].mxu0 %v6015
  %v6958 = vpop.f32.mrb[0].mxu0
  %v6959 = vadd.f32 %v6670, %v6958
  %v6960 = vpop.f32.mrb[0].mxu0
  %v6961 = vpop.f32.mrb[0].mxu0
  %v6962 = vadd.f32 %v6673, %v6961
  %v6963 = vpop.f32.mrb[0].mxu0
  %6964 = vmatprep.mubr.bf16.mxu0 %v5782
  %6965 = vmatmul.mubr.bf16.gmra.mrb[0].mxu0 %v6019
  %v6966 = vpop.f32.mrb[0].mxu0
  %v6967 = vadd.f32 %v6678, %v6966
  %v6968 = vpop.f32.mrb[0].mxu0
  %v6969 = vpop.f32.mrb[0].mxu0
  %v6970 = vadd.f32 %v6681, %v6969
  %v6971 = vpop.f32.mrb[0].mxu0
  %6972 = vmatprep.mubr.bf16.mxu0 %v5785
  %6973 = vmatmul.mubr.bf16.gmra.mrb[0].mxu0 %v6023
  %v6974 = vpop.f32.mrb[0].mxu0
  %v6975 = vadd.f32 %v6686, %v6974
  %v6976 = vpop.f32.mrb[0].mxu0
  %v6977 = vpop.f32.mrb[0].mxu0
  %v6978 = vadd.f32 %v6689, %v6977
  %v6979 = vpop.f32.mrb[0].mxu0
  %6980 = vmatprep.mubr.bf16.mxu0 %v5788
  %6981 = vmatmul.mubr.bf16.gmra.mrb[0].mxu0 %v6027
  %v6982 = vpop.f32.mrb[0].mxu0
  %v6983 = vadd.f32 %v6694, %v6982
  %v6984 = vpop.f32.mrb[0].mxu0
  %v6985 = vpop.f32.mrb[0].mxu0
  %v6986 = vadd.f32 %v6697, %v6985
  %v6987 = vpop.f32.mrb[0].mxu0
  %6988 = vmatprep.mubr.bf16.mxu0 %v5791
  %6989 = vmatmul.mubr.bf16.gmra.mrb[0].mxu0 %v6031
  %v6990 = vpop.f32.mrb[0].mxu0
  %v6991 = vadd.f32 %v6702, %v6990
  %v6992 = vpop.f32.mrb[0].mxu0
  %v6993 = vpop.f32.mrb[0].mxu0
  %v6994 = vadd.f32 %v6705, %v6993
  %v6995 = vpop.f32.mrb[0].mxu0
  %6996 = vmatprep.mubr.bf16.mxu0 %v5794
  %6997 = vmatmul.mubr.bf16.gmra.mrb[0].mxu0 %v6035
  %v6998 = vpop.f32.mrb[0].mxu0
  %v6999 = vadd.f32 %v6710, %v6998
  %v7000 = vpop.f32.mrb[0].mxu0
  %v7001 = vpop.f32.mrb[0].mxu0
  %v7002 = vadd.f32 %v6713, %v7001
  %v7003 = vpop.f32.mrb[0].mxu0
  %7004 = vmatprep.mubr.bf16.mxu0 %v5797
  %7005 = vmatmul.mubr.bf16.gmra.mrb[0].mxu0 %v6039
  %v7006 = vpop.f32.mrb[0].mxu0
  %v7007 = vadd.f32 %v6718, %v7006
  %v7008 = vpop.f32.mrb[0].mxu0
  %v7009 = vpop.f32.mrb[0].mxu0
  %v7010 = vadd.f32 %v6721, %v7009
  %v7011 = vpop.f32.mrb[0].mxu0
  %7012 = vmatprep.mubr.bf16.mxu0 %v5800
  %7013 = vmatmul.mubr.bf16.gmra.mrb[0].mxu0 %v6043
  %v7014 = vpop.f32.mrb[0].mxu0
  %v7015 = vadd.f32 %v6726, %v7014
  %v7016 = vpop.f32.mrb[0].mxu0
  %v7017 = vpop.f32.mrb[0].mxu0
  %v7018 = vadd.f32 %v6729, %v7017
  %v7019 = vpop.f32.mrb[0].mxu0
  %7020 = vmatprep.mubr.bf16.mxu0 %v5803
  %7021 = vmatmul.mubr.bf16.gmra.mrb[0].mxu0 %v6047
  %v7022 = vpop.f32.mrb[0].mxu0
  %v7023 = vadd.f32 %v6734, %v7022
  %v7024 = vpop.f32.mrb[0].mxu0
  %v7025 = vpop.f32.mrb[0].mxu0
  %v7026 = vadd.f32 %v6737, %v7025
  %v7027 = vpop.f32.mrb[0].mxu0
  %7028 = vmatprep.mubr.bf16.mxu0 %v5806
  %7029 = vmatmul.mubr.bf16.gmra.mrb[0].mxu0 %v6051
  %v7030 = vpop.f32.mrb[0].mxu0
  %v7031 = vadd.f32 %v6742, %v7030
  %v7032 = vpop.f32.mrb[0].mxu0
  %v7033 = vpop.f32.mrb[0].mxu0
  %v7034 = vadd.f32 %v6745, %v7033
  %v7035 = vpop.f32.mrb[0].mxu0
  %7036 = vmatprep.mubr.bf16.mxu0 %v5809
  %7037 = vmatmul.mubr.bf16.gmra.mrb[0].mxu0 %v6055
  %v7038 = vpop.f32.mrb[0].mxu0
  %v7039 = vadd.f32 %v6750, %v7038
  %v7040 = vpop.f32.mrb[0].mxu0
  %v7041 = vpop.f32.mrb[0].mxu0
  %v7042 = vadd.f32 %v6753, %v7041
  %v7043 = vpop.f32.mrb[0].mxu0
  %7044 = vmatprep.mubr.bf16.mxu0 %v5812
  %7045 = vmatmul.mubr.bf16.gmra.mrb[0].mxu0 %v6059
  %v7046 = vpop.f32.mrb[0].mxu0
  %v7047 = vadd.f32 %v6758, %v7046
  %v7048 = vpop.f32.mrb[0].mxu0
  %v7049 = vpop.f32.mrb[0].mxu0
  %v7050 = vadd.f32 %v6761, %v7049
  %v7051 = vpop.f32.mrb[0].mxu0
  %7052 = vmatprep.mubr.bf16.mxu0 %v6073
  %7053 = vmatmul.mubr.bf16.gmra.mrb[0].mxu0 %v6063
  %v7054 = vpop.f32.mrb[0].mxu0
  %v7055 = vadd.f32 %v6766, %v7054
  %v7056 = vpop.f32.mrb[0].mxu0
  %v7057 = vpop.f32.mrb[0].mxu0
  %v7058 = vadd.f32 %v6769, %v7057
  %v7059 = vpop.f32.mrb[0].mxu0
  %7060 = vmatprep.mubr.bf16.mxu0 %v5722
  %7061 = vmatmul.mubr.bf16.gmra.mrb[0].mxu0 %v6067
  %v7062 = vpop.f32.mrb[0].mxu0
  %v7063 = vadd.f32 %v6774, %v7062
  %v7064 = vpop.f32.mrb[0].mxu0
  %v7065 = vpop.f32.mrb[0].mxu0
  %v7066 = vadd.f32 %v6777, %v7065
  %v7067 = vpop.f32.mrb[0].mxu0
  %7068 = vdwg.mxu0
  %7069 = vmatprep.subr.bf16.mxu0 0
  %7070 = vmatpush1.bf16.msra.mxu0 %v6387
  %7071 = vmatprep.subr.bf16.mxu0 0
  %7072 = vmatpush1.bf16.msra.mxu0 %v6388
  %7073 = vmatprep.subr.bf16.mxu0 0
  %7074 = vmatpush1.bf16.msra.mxu0 %v6389
  %7075 = vmatprep.subr.bf16.mxu0 0
  %7076 = vmatpush1.bf16.msra.mxu0 %v6390
  %7077 = vmatprep.subr.bf16.mxu0 0
  %7078 = vmatpush1.bf16.msra.mxu0 0
  %7079 = vmatprep.subr.bf16.mxu0 0
  %7080 = vmatpush1.bf16.msra.mxu0 0
  %7081 = vmatprep.subr.bf16.mxu0 0
  %7082 = vmatpush1.bf16.msra.mxu0 0
  %7083 = vmatprep.subr.bf16.mxu0 0
  %7084 = vmatpush1.bf16.msra.mxu0 0
  %7085 = vmatprep.subr.bf16.mxu0 0
  %7086 = vmatpush1.bf16.msra.mxu0 0
  %7087 = vmatprep.subr.bf16.mxu0 0
  %7088 = vmatpush1.bf16.msra.mxu0 0
  %7089 = vmatprep.subr.bf16.mxu0 0
  %7090 = vmatpush1.bf16.msra.mxu0 0
  %7091 = vmatprep.subr.bf16.mxu0 0
  %7092 = vmatpush1.bf16.msra.mxu0 0
  %7093 = vmatprep.subr.bf16.mxu0 0
  %7094 = vmatpush1.bf16.msra.mxu0 0
  %7095 = vmatprep.subr.bf16.mxu0 0
  %7096 = vmatpush1.bf16.msra.mxu0 0
  %7097 = vmatprep.subr.bf16.mxu0 0
  %7098 = vmatpush1.bf16.msra.mxu0 0
  %7099 = vmatprep.subr.bf16.mxu0 0
  %7100 = vmatpush1.bf16.msra.mxu0 0
  %7101 = vmatprep.mubr.bf16.mxu0 0
  %7102 = vmatmul.mubr.bf16.gmra.mrb[0].mxu0 %v6427
  %v7103 = vpop.f32.mrb[0].mxu0
  %v7104 = vadd.f32 %v6815, %v7103
  %v7105 = vpop.f32.mrb[0].mxu0
  %v7106 = vpop.f32.mrb[0].mxu0
  %v7107 = vadd.f32 %v6818, %v7106
  %v7108 = vpop.f32.mrb[0].mxu0
  %7109 = vmatprep.mubr.bf16.mxu0 0
  %7110 = vmatmul.mubr.bf16.gmra.mrb[0].mxu0 %v6429
  %v7111 = vpop.f32.mrb[0].mxu0
  %v7112 = vadd.f32 %v6823, %v7111
  %v7113 = vpop.f32.mrb[0].mxu0
  %v7114 = vpop.f32.mrb[0].mxu0
  %v7115 = vadd.f32 %v6826, %v7114
  %v7116 = vpop.f32.mrb[0].mxu0
  %7117 = vmatprep.mubr.bf16.mxu0 0
  %7118 = vmatmul.mubr.bf16.gmra.mrb[0].mxu0 %v6431
  %v7119 = vpop.f32.mrb[0].mxu0
  %v7120 = vadd.f32 %v6831, %v7119
  %v7121 = vpop.f32.mrb[0].mxu0
  %v7122 = vpop.f32.mrb[0].mxu0
  %v7123 = vadd.f32 %v6834, %v7122
  %v7124 = vpop.f32.mrb[0].mxu0
  %7125 = vmatprep.mubr.bf16.mxu0 0
  %7126 = vmatmul.mubr.bf16.gmra.mrb[0].mxu0 %v6433
  %v7127 = vpop.f32.mrb[0].mxu0
  %v7128 = vadd.f32 %v6839, %v7127
  %v7129 = vpop.f32.mrb[0].mxu0
  %v7130 = vpop.f32.mrb[0].mxu0
  %v7131 = vadd.f32 %v6842, %v7130
  %v7132 = vpop.f32.mrb[0].mxu0
  %7133 = vmatprep.mubr.bf16.mxu0 0
  %7134 = vmatmul.mubr.bf16.gmra.mrb[0].mxu0 %v6435
  %v7135 = vpop.f32.mrb[0].mxu0
  %v7136 = vadd.f32 %v6847, %v7135
  %v7137 = vpop.f32.mrb[0].mxu0
  %v7138 = vpop.f32.mrb[0].mxu0
  %v7139 = vadd.f32 %v6850, %v7138
  %v7140 = vpop.f32.mrb[0].mxu0
  %7141 = vmatprep.mubr.bf16.mxu0 0
  %7142 = vmatmul.mubr.bf16.gmra.mrb[0].mxu0 %v6437
  %v7143 = vpop.f32.mrb[0].mxu0
  %v7144 = vadd.f32 %v6855, %v7143
  %v7145 = vpop.f32.mrb[0].mxu0
  %v7146 = vpop.f32.mrb[0].mxu0
  %v7147 = vadd.f32 %v6858, %v7146
  %v7148 = vpop.f32.mrb[0].mxu0
  %7149 = vmatprep.mubr.bf16.mxu0 0
  %7150 = vmatmul.mubr.bf16.gmra.mrb[0].mxu0 %v6439
  %v7151 = vpop.f32.mrb[0].mxu0
  %v7152 = vadd.f32 %v6863, %v7151
  %v7153 = vpop.f32.mrb[0].mxu0
  %v7154 = vpop.f32.mrb[0].mxu0
  %v7155 = vadd.f32 %v6866, %v7154
  %v7156 = vpop.f32.mrb[0].mxu0
  %7157 = vmatprep.mubr.bf16.mxu0 0
  %7158 = vmatmul.mubr.bf16.gmra.mrb[0].mxu0 %v6441
  %v7159 = vpop.f32.mrb[0].mxu0
  %v7160 = vadd.f32 %v6871, %v7159
  %v7161 = vpop.f32.mrb[0].mxu0
  %v7162 = vpop.f32.mrb[0].mxu0
  %v7163 = vadd.f32 %v6874, %v7162
  %v7164 = vpop.f32.mrb[0].mxu0
  %7165 = vmatprep.mubr.bf16.mxu0 0
  %7166 = vmatmul.mubr.bf16.gmra.mrb[0].mxu0 %v6443
  %v7167 = vpop.f32.mrb[0].mxu0
  %v7168 = vadd.f32 %v6879, %v7167
  %v7169 = vpop.f32.mrb[0].mxu0
  %v7170 = vpop.f32.mrb[0].mxu0
  %v7171 = vadd.f32 %v6882, %v7170
  %v7172 = vpop.f32.mrb[0].mxu0
  %7173 = vmatprep.mubr.bf16.mxu0 0
  %7174 = vmatmul.mubr.bf16.gmra.mrb[0].mxu0 %v6445
  %v7175 = vpop.f32.mrb[0].mxu0
  %v7176 = vadd.f32 %v6887, %v7175
  %v7177 = vpop.f32.mrb[0].mxu0
  %v7178 = vpop.f32.mrb[0].mxu0
  %v7179 = vadd.f32 %v6890, %v7178
  %v7180 = vpop.f32.mrb[0].mxu0
  %7181 = vmatprep.mubr.bf16.mxu0 0
  %7182 = vmatmul.mubr.bf16.gmra.mrb[0].mxu0 %v6447
  %v7183 = vpop.f32.mrb[0].mxu0
  %v7184 = vadd.f32 %v6895, %v7183
  %v7185 = vpop.f32.mrb[0].mxu0
  %v7186 = vpop.f32.mrb[0].mxu0
  %v7187 = vadd.f32 %v6898, %v7186
  %v7188 = vpop.f32.mrb[0].mxu0
  %7189 = vmatprep.mubr.bf16.mxu0 0
  %7190 = vmatmul.mubr.bf16.gmra.mrb[0].mxu0 %v6449
  %v7191 = vpop.f32.mrb[0].mxu0
  %v7192 = vadd.f32 %v6903, %v7191
  %v7193 = vpop.f32.mrb[0].mxu0
  %v7194 = vpop.f32.mrb[0].mxu0
  %v7195 = vadd.f32 %v6906, %v7194
  %v7196 = vpop.f32.mrb[0].mxu0
  %7197 = vmatprep.mubr.bf16.mxu0 0
  %7198 = vmatmul.mubr.bf16.gmra.mrb[0].mxu0 %v6451
  %v7199 = vpop.f32.mrb[0].mxu0
  %v7200 = vadd.f32 %v6911, %v7199
  %v7201 = vpop.f32.mrb[0].mxu0
  %v7202 = vpop.f32.mrb[0].mxu0
  %v7203 = vadd.f32 %v6914, %v7202
  %v7204 = vpop.f32.mrb[0].mxu0
  %7205 = vmatprep.mubr.bf16.mxu0 0
  %7206 = vmatmul.mubr.bf16.gmra.mrb[0].mxu0 %v6453
  %v7207 = vpop.f32.mrb[0].mxu0
  %v7208 = vadd.f32 %v6919, %v7207
  %v7209 = vpop.f32.mrb[0].mxu0
  %v7210 = vpop.f32.mrb[0].mxu0
  %v7211 = vadd.f32 %v6922, %v7210
  %v7212 = vpop.f32.mrb[0].mxu0
  %7213 = vmatprep.mubr.bf16.mxu0 0
  %7214 = vmatmul.mubr.bf16.gmra.mrb[0].mxu0 %v6456
  %v7215 = vpop.f32.mrb[0].mxu0
  %v7216 = vadd.f32 %v6927, %v7215
  %v7217 = vpop.f32.mrb[0].mxu0
  %v7218 = vpop.f32.mrb[0].mxu0
  %v7219 = vadd.f32 %v6930, %v7218
  %v7220 = vpop.f32.mrb[0].mxu0
  %7221 = vmatprep.mubr.bf16.mxu0 0
  %7222 = vmatmul.mubr.bf16.gmra.mrb[0].mxu0 %v6458
  %v7223 = vpop.f32.mrb[0].mxu0
  %v7224 = vadd.f32 %v6935, %v7223
  %v7225 = vpop.f32.mrb[0].mxu0
  %v7226 = vpop.f32.mrb[0].mxu0
  %v7227 = vadd.f32 %v6938, %v7226
  %v7228 = vpop.f32.mrb[0].mxu0
  %7229 = vmatprep.mubr.bf16.mxu0 0
  %7230 = vmatmul.mubr.bf16.gmra.mrb[0].mxu0 %v6460
  %v7231 = vpop.f32.mrb[0].mxu0
  %v7232 = vadd.f32 %v6943, %v7231
  %v7233 = vpop.f32.mrb[0].mxu0
  %v7234 = vpop.f32.mrb[0].mxu0
  %v7235 = vadd.f32 %v6946, %v7234
  %v7236 = vpop.f32.mrb[0].mxu0
  %7237 = vmatprep.mubr.bf16.mxu0 0
  %7238 = vmatmul.mubr.bf16.gmra.mrb[0].mxu0 %v6462
  %v7239 = vpop.f32.mrb[0].mxu0
  %v7240 = vadd.f32 %v6951, %v7239
  %v7241 = vpop.f32.mrb[0].mxu0
  %v7242 = vpop.f32.mrb[0].mxu0
  %v7243 = vadd.f32 %v6954, %v7242
  %v7244 = vpop.f32.mrb[0].mxu0
  %7245 = vmatprep.mubr.bf16.mxu0 0
  %7246 = vmatmul.mubr.bf16.gmra.mrb[0].mxu0 %v6464
  %v7247 = vpop.f32.mrb[0].mxu0
  %v7248 = vadd.f32 %v6959, %v7247
  %v7249 = vpop.f32.mrb[0].mxu0
  %v7250 = vpop.f32.mrb[0].mxu0
  %v7251 = vadd.f32 %v6962, %v7250
  %v7252 = vpop.f32.mrb[0].mxu0
  %7253 = vmatprep.mubr.bf16.mxu0 0
  %7254 = vmatmul.mubr.bf16.gmra.mrb[0].mxu0 %v6466
  %v7255 = vpop.f32.mrb[0].mxu0
  %v7256 = vadd.f32 %v6967, %v7255
  %v7257 = vpop.f32.mrb[0].mxu0
  %v7258 = vpop.f32.mrb[0].mxu0
  %v7259 = vadd.f32 %v6970, %v7258
  %v7260 = vpop.f32.mrb[0].mxu0
  %7261 = vmatprep.mubr.bf16.mxu0 0
  %7262 = vmatmul.mubr.bf16.gmra.mrb[0].mxu0 %v6468
  %v7263 = vpop.f32.mrb[0].mxu0
  %v7264 = vadd.f32 %v6975, %v7263
  %v7265 = vpop.f32.mrb[0].mxu0
  %v7266 = vpop.f32.mrb[0].mxu0
  %v7267 = vadd.f32 %v6978, %v7266
  %v7268 = vpop.f32.mrb[0].mxu0
  %7269 = vmatprep.mubr.bf16.mxu0 0
  %7270 = vmatmul.mubr.bf16.gmra.mrb[0].mxu0 %v6470
  %v7271 = vpop.f32.mrb[0].mxu0
  %v7272 = vadd.f32 %v6983, %v7271
  %v7273 = vpop.f32.mrb[0].mxu0
  %v7274 = vpop.f32.mrb[0].mxu0
  %v7275 = vadd.f32 %v6986, %v7274
  %v7276 = vpop.f32.mrb[0].mxu0
  %7277 = vmatprep.mubr.bf16.mxu0 0
  %7278 = vmatmul.mubr.bf16.gmra.mrb[0].mxu0 %v6472
  %v7279 = vpop.f32.mrb[0].mxu0
  %v7280 = vadd.f32 %v6991, %v7279
  %v7281 = vpop.f32.mrb[0].mxu0
  %v7282 = vpop.f32.mrb[0].mxu0
  %v7283 = vadd.f32 %v6994, %v7282
  %v7284 = vpop.f32.mrb[0].mxu0
  %7285 = vmatprep.mubr.bf16.mxu0 0
  %7286 = vmatmul.mubr.bf16.gmra.mrb[0].mxu0 %v6474
  %v7287 = vpop.f32.mrb[0].mxu0
  %v7288 = vadd.f32 %v6999, %v7287
  %v7289 = vpop.f32.mrb[0].mxu0
  %v7290 = vpop.f32.mrb[0].mxu0
  %v7291 = vadd.f32 %v7002, %v7290
  %v7292 = vpop.f32.mrb[0].mxu0
  %7293 = vmatprep.mubr.bf16.mxu0 0
  %7294 = vmatmul.mubr.bf16.gmra.mrb[0].mxu0 %v6476
  %v7295 = vpop.f32.mrb[0].mxu0
  %v7296 = vadd.f32 %v7007, %v7295
  %v7297 = vpop.f32.mrb[0].mxu0
  %v7298 = vpop.f32.mrb[0].mxu0
  %v7299 = vadd.f32 %v7010, %v7298
  %v7300 = vpop.f32.mrb[0].mxu0
  %7301 = vmatprep.mubr.bf16.mxu0 0
  %7302 = vmatmul.mubr.bf16.gmra.mrb[0].mxu0 %v6478
  %v7303 = vpop.f32.mrb[0].mxu0
  %v7304 = vadd.f32 %v7015, %v7303
  %v7305 = vpop.f32.mrb[0].mxu0
  %v7306 = vpop.f32.mrb[0].mxu0
  %v7307 = vadd.f32 %v7018, %v7306
  %v7308 = vpop.f32.mrb[0].mxu0
  %7309 = vmatprep.mubr.bf16.mxu0 0
  %7310 = vmatmul.mubr.bf16.gmra.mrb[0].mxu0 %v6480
  %v7311 = vpop.f32.mrb[0].mxu0
  %v7312 = vadd.f32 %v7023, %v7311
  %v7313 = vpop.f32.mrb[0].mxu0
  %v7314 = vpop.f32.mrb[0].mxu0
  %v7315 = vadd.f32 %v7026, %v7314
  %v7316 = vpop.f32.mrb[0].mxu0
  %7317 = vmatprep.mubr.bf16.mxu0 0
  %7318 = vmatmul.mubr.bf16.gmra.mrb[0].mxu0 %v6482
  %v7319 = vpop.f32.mrb[0].mxu0
  %v7320 = vadd.f32 %v7031, %v7319
  %v7321 = vpop.f32.mrb[0].mxu0
  %v7322 = vpop.f32.mrb[0].mxu0
  %v7323 = vadd.f32 %v7034, %v7322
  %v7324 = vpop.f32.mrb[0].mxu0
  %7325 = vmatprep.mubr.bf16.mxu0 0
  %7326 = vmatmul.mubr.bf16.gmra.mrb[0].mxu0 %v6484
  %v7327 = vpop.f32.mrb[0].mxu0
  %v7328 = vadd.f32 %v7039, %v7327
  %v7329 = vpop.f32.mrb[0].mxu0
  %v7330 = vpop.f32.mrb[0].mxu0
  %v7331 = vadd.f32 %v7042, %v7330
  %v7332 = vpop.f32.mrb[0].mxu0
  %7333 = vmatprep.mubr.bf16.mxu0 0
  %7334 = vmatmul.mubr.bf16.gmra.mrb[0].mxu0 %v6486
  %v7335 = vpop.f32.mrb[0].mxu0
  %v7336 = vadd.f32 %v7047, %v7335
  %v7337 = vpop.f32.mrb[0].mxu0
  %v7338 = vpop.f32.mrb[0].mxu0
  %v7339 = vadd.f32 %v7050, %v7338
  %v7340 = vpop.f32.mrb[0].mxu0
  %7341 = vmatprep.mubr.bf16.mxu0 0
  %7342 = vmatmul.mubr.bf16.gmra.mrb[0].mxu0 %v6489
  %v7343 = vpop.f32.mrb[0].mxu0
  %v7344 = vadd.f32 %v7055, %v7343
  %v7345 = vpop.f32.mrb[0].mxu0
  %v7346 = vpop.f32.mrb[0].mxu0
  %v7347 = vadd.f32 %v7058, %v7346
  %v7348 = vpop.f32.mrb[0].mxu0
  %7349 = vmatprep.mubr.bf16.mxu0 0
  %7350 = vmatmul.mubr.bf16.gmra.mrb[0].mxu0 %v6458
  %v7351 = vpop.f32.mrb[0].mxu0
  %v7352 = vadd.f32 %v7063, %v7351
  %v7353 = vpop.f32.mrb[0].mxu0
  %v7354 = vpop.f32.mrb[0].mxu0
  %v7355 = vadd.f32 %v7066, %v7354
  %v7356 = vpop.f32.mrb[0].mxu0
  %7357 = vdwg.mxu0
  %v7358 = vmax.f32 %v7104, 0.0
  %v7359 = vmax.f32 %v7107, 0.0
  %v7360 = vmax.f32 %v7112, 0.0
  %v7361 = vmax.f32 %v7115, 0.0
  %v7362 = vmax.f32 %v7120, 0.0
  %v7363 = vmax.f32 %v7123, 0.0
  %v7364 = vmax.f32 %v7128, 0.0
  %v7365 = vmax.f32 %v7131, 0.0
  %v7366 = vmax.f32 %v7136, 0.0
  %v7367 = vmax.f32 %v7139, 0.0
  %v7368 = vmax.f32 %v7144, 0.0
  %v7369 = vmax.f32 %v7147, 0.0
  %v7370 = vmax.f32 %v7152, 0.0
  %v7371 = vmax.f32 %v7155, 0.0
  %v7372 = vmax.f32 %v7160, 0.0
  %v7373 = vmax.f32 %v7163, 0.0
  %v7374 = vmax.f32 %v7168, 0.0
  %v7375 = vmax.f32 %v7171, 0.0
  %v7376 = vmax.f32 %v7176, 0.0
  %v7377 = vmax.f32 %v7179, 0.0
  %v7378 = vmax.f32 %v7184, 0.0
  %v7379 = vmax.f32 %v7187, 0.0
  %v7380 = vmax.f32 %v7192, 0.0
  %v7381 = vmax.f32 %v7195, 0.0
  %v7382 = vmax.f32 %v7200, 0.0
  %v7383 = vmax.f32 %v7203, 0.0
  %v7384 = vmax.f32 %v7208, 0.0
  %v7385 = vmax.f32 %v7211, 0.0
  %v7386 = vmax.f32 %v7216, 0.0
  %v7387 = vmax.f32 %v7219, 0.0
  %v7388 = vmax.f32 %v7224, 0.0
  %v7389 = vmax.f32 %v7227, 0.0
  %v7390 = vmax.f32 %v7232, 0.0
  %v7391 = vmax.f32 %v7235, 0.0
  %v7392 = vmax.f32 %v7240, 0.0
  %v7393 = vmax.f32 %v7243, 0.0
  %v7394 = vmax.f32 %v7248, 0.0
  %v7395 = vmax.f32 %v7251, 0.0
  %v7396 = vmax.f32 %v7256, 0.0
  %v7397 = vmax.f32 %v7259, 0.0
  %v7398 = vmax.f32 %v7264, 0.0
  %v7399 = vmax.f32 %v7267, 0.0
  %v7400 = vmax.f32 %v7272, 0.0
  %v7401 = vmax.f32 %v7275, 0.0
  %v7402 = vmax.f32 %v7280, 0.0
  %v7403 = vmax.f32 %v7283, 0.0
  %v7404 = vmax.f32 %v7288, 0.0
  %v7405 = vmax.f32 %v7291, 0.0
  %v7406 = vmax.f32 %v7296, 0.0
  %v7407 = vmax.f32 %v7299, 0.0
  %v7408 = vmax.f32 %v7304, 0.0
  %v7409 = vmax.f32 %v7307, 0.0
  %v7410 = vmax.f32 %v7312, 0.0
  %v7411 = vmax.f32 %v7315, 0.0
  %v7412 = vmax.f32 %v7320, 0.0
  %v7413 = vmax.f32 %v7323, 0.0
  %v7414 = vmax.f32 %v7328, 0.0
  %v7415 = vmax.f32 %v7331, 0.0
  %v7416 = vmax.f32 %v7336, 0.0
  %v7417 = vmax.f32 %v7339, 0.0
  %v7418 = vmax.f32 %v7344, 0.0
  %v7419 = vmax.f32 %v7347, 0.0
  %v7420 = vmax.f32 %v7352, 0.0
  %v7421 = vmax.f32 %v7355, 0.0
  %v7422 = vpack.c.bf16 %v7359, %v7358
  %v7423 = vpack.c.bf16 %v7361, %v7360
  %v7424 = vpack.c.bf16 %v7363, %v7362
  %v7425 = vpack.c.bf16 %v7365, %v7364
  %v7426 = vpack.c.bf16 %v7367, %v7366
  %v7427 = vpack.c.bf16 %v7369, %v7368
  %v7428 = vpack.c.bf16 %v7371, %v7370
  %v7429 = vpack.c.bf16 %v7373, %v7372
  %v7430 = vpack.c.bf16 %v7375, %v7374
  %v7431 = vpack.c.bf16 %v7377, %v7376
  %v7432 = vpack.c.bf16 %v7379, %v7378
  %v7433 = vpack.c.bf16 %v7381, %v7380
  %v7434 = vpack.c.bf16 %v7383, %v7382
  %v7435 = vpack.c.bf16 %v7385, %v7384
  %v7436 = vpack.c.bf16 %v7387, %v7386
  %v7437 = vpack.c.bf16 %v7389, %v7388
  %v7438 = vpack.c.bf16 %v7391, %v7390
  %v7439 = vpack.c.bf16 %v7393, %v7392
  %v7440 = vpack.c.bf16 %v7395, %v7394
  %v7441 = vpack.c.bf16 %v7397, %v7396
  %v7442 = vpack.c.bf16 %v7399, %v7398
  %v7443 = vpack.c.bf16 %v7401, %v7400
  %v7444 = vpack.c.bf16 %v7403, %v7402
  %v7445 = vpack.c.bf16 %v7405, %v7404
  %v7446 = vpack.c.bf16 %v7407, %v7406
  %v7447 = vpack.c.bf16 %v7409, %v7408
  %v7448 = vpack.c.bf16 %v7411, %v7410
  %v7449 = vpack.c.bf16 %v7413, %v7412
  %v7450 = vpack.c.bf16 %v7415, %v7414
  %v7451 = vpack.c.bf16 %v7417, %v7416
  %v7452 = vpack.c.bf16 %v7419, %v7418
  %v7453 = vpack.c.bf16 %v7421, %v7420
  %v7454 = vld [vmem:[%s10] sm:$0xf]
  %v7455 = vld [vmem:[%s10 + $0x4] sm:$0xf]
  %v7456 = vld [vmem:[%s10 + $0x8] sm:$0xf]
  %v7457 = vld [vmem:[%s10 + $0xc] sm:$0xf]
  %v7462 = vunpack.c.l.b16 %v7454
  %v7463 = vunpack.c.l.b16 %v7455
  %v7464 = vunpack.c.l.b16 %v7456
  %v7465 = vunpack.c.l.b16 %v7457
  %v7466 = vpack.c.b16 %v7463, %v7462
  %v7467 = vpack.c.b16 %v7465, %v7464
  %vm7470 = vcmask 261120
  %v7472 = vsel %vm7470, %v7422, 0
  %v7475 = vsel %vm7470, %v7423, 0
  %v7478 = vsel %vm7470, %v7424, 0
  %v7481 = vsel %vm7470, %v7425, 0
  %v7484 = vsel %vm7470, %v7426, 0
  %v7487 = vsel %vm7470, %v7427, 0
  %v7490 = vsel %vm7470, %v7428, 0
  %v7493 = vsel %vm7470, %v7429, 0
  %v7496 = vsel %vm7470, %v7430, 0
  %v7499 = vsel %vm7470, %v7431, 0
  %v7502 = vsel %vm7470, %v7432, 0
  %v7505 = vsel %vm7470, %v7433, 0
  %v7508 = vsel %vm7470, %v7434, 0
  %v7511 = vsel %vm7470, %v7435, 0
  %v7514 = vsel %vm7470, %v7436, 0
  %v7517 = vsel %vm7470, %v7437, 0
  %v7520 = vsel %vm7470, %v7438, 0
  %v7523 = vsel %vm7470, %v7439, 0
  %v7526 = vsel %vm7470, %v7440, 0
  %v7529 = vsel %vm7470, %v7441, 0
  %v7532 = vsel %vm7470, %v7442, 0
  %v7535 = vsel %vm7470, %v7443, 0
  %v7538 = vsel %vm7470, %v7444, 0
  %v7541 = vsel %vm7470, %v7445, 0
  %v7544 = vsel %vm7470, %v7446, 0
  %v7547 = vsel %vm7470, %v7447, 0
  %v7550 = vsel %vm7470, %v7448, 0
  %v7553 = vsel %vm7470, %v7449, 0
  %v7556 = vsel %vm7470, %v7450, 0
  %v7559 = vsel %vm7470, %v7451, 0
  %v7562 = vsel %vm7470, %v7452, 0
  %v7565 = vsel %vm7470, %v7453, 0
  %7567 = vmatprep.subr.bf16.mxu0 0
  %7568 = vmatpush1.bf16.msra.mxu0 %v7466
  %7569 = vmatprep.subr.bf16.mxu0 0
  %7570 = vmatpush1.bf16.msra.mxu0 %v7467
  %7571 = vmatprep.subr.bf16.mxu0 0
  %7572 = vmatpush1.bf16.msra.mxu0 0
  %7573 = vmatprep.subr.bf16.mxu0 0
  %7574 = vmatpush1.bf16.msra.mxu0 0
  %7575 = vmatprep.subr.bf16.mxu0 0
  %7576 = vmatpush1.bf16.msra.mxu0 0
  %7577 = vmatprep.subr.bf16.mxu0 0
  %7578 = vmatpush1.bf16.msra.mxu0 0
  %7579 = vmatprep.subr.bf16.mxu0 0
  %7580 = vmatpush1.bf16.msra.mxu0 0
  %7581 = vmatprep.subr.bf16.mxu0 0
  %7582 = vmatpush1.bf16.msra.mxu0 0
  %7583 = vmatprep.subr.bf16.mxu0 0
  %7584 = vmatpush1.bf16.msra.mxu0 0
  %7585 = vmatprep.subr.bf16.mxu0 0
  %7586 = vmatpush1.bf16.msra.mxu0 0
  %7587 = vmatprep.subr.bf16.mxu0 0
  %7588 = vmatpush1.bf16.msra.mxu0 0
  %7589 = vmatprep.subr.bf16.mxu0 0
  %7590 = vmatpush1.bf16.msra.mxu0 0
  %7591 = vmatprep.subr.bf16.mxu0 0
  %7592 = vmatpush1.bf16.msra.mxu0 0
  %7593 = vmatprep.subr.bf16.mxu0 0
  %7594 = vmatpush1.bf16.msra.mxu0 0
  %7595 = vmatprep.subr.bf16.mxu0 0
  %7596 = vmatpush1.bf16.msra.mxu0 0
  %7597 = vmatprep.subr.bf16.mxu0 0
  %7598 = vmatpush1.bf16.msra.mxu0 0
  %7599 = vmatprep.mubr.bf16.mxu0 0
  %7600 = vmatmul.mubr.bf16.gmra.mrb[0].mxu0 %v7472
  %v7601 = vpop.f32.mrb[0].mxu0
  %v7602 = vadd.f32 0.0, %v7601
  %v7603 = vpop.f32.mrb[0].mxu0
  %v7604 = vpop.f32.mrb[0].mxu0
  %v7605 = vadd.f32 0.0, %v7604
  %v7606 = vpop.f32.mrb[0].mxu0
  %7607 = vmatprep.mubr.bf16.mxu0 0
  %7608 = vmatmul.mubr.bf16.gmra.mrb[0].mxu0 %v7475
  %v7609 = vpop.f32.mrb[0].mxu0
  %v7610 = vadd.f32 0.0, %v7609
  %v7611 = vpop.f32.mrb[0].mxu0
  %v7612 = vpop.f32.mrb[0].mxu0
  %v7613 = vadd.f32 0.0, %v7612
  %v7614 = vpop.f32.mrb[0].mxu0
  %7615 = vmatprep.mubr.bf16.mxu0 0
  %7616 = vmatmul.mubr.bf16.gmra.mrb[0].mxu0 %v7478
  %v7617 = vpop.f32.mrb[0].mxu0
  %v7618 = vadd.f32 0.0, %v7617
  %v7619 = vpop.f32.mrb[0].mxu0
  %v7620 = vpop.f32.mrb[0].mxu0
  %v7621 = vadd.f32 0.0, %v7620
  %v7622 = vpop.f32.mrb[0].mxu0
  %7623 = vmatprep.mubr.bf16.mxu0 0
  %7624 = vmatmul.mubr.bf16.gmra.mrb[0].mxu0 %v7481
  %v7625 = vpop.f32.mrb[0].mxu0
  %v7626 = vadd.f32 0.0, %v7625
  %v7627 = vpop.f32.mrb[0].mxu0
  %v7628 = vpop.f32.mrb[0].mxu0
  %v7629 = vadd.f32 0.0, %v7628
  %v7630 = vpop.f32.mrb[0].mxu0
  %7631 = vmatprep.mubr.bf16.mxu0 0
  %7632 = vmatmul.mubr.bf16.gmra.mrb[0].mxu0 %v7484
  %v7633 = vpop.f32.mrb[0].mxu0
  %v7634 = vadd.f32 0.0, %v7633
  %v7635 = vpop.f32.mrb[0].mxu0
  %v7636 = vpop.f32.mrb[0].mxu0
  %v7637 = vadd.f32 0.0, %v7636
  %v7638 = vpop.f32.mrb[0].mxu0
  %7639 = vmatprep.mubr.bf16.mxu0 0
  %7640 = vmatmul.mubr.bf16.gmra.mrb[0].mxu0 %v7487
  %v7641 = vpop.f32.mrb[0].mxu0
  %v7642 = vadd.f32 0.0, %v7641
  %v7643 = vpop.f32.mrb[0].mxu0
  %v7644 = vpop.f32.mrb[0].mxu0
  %v7645 = vadd.f32 0.0, %v7644
  %v7646 = vpop.f32.mrb[0].mxu0
  %7647 = vmatprep.mubr.bf16.mxu0 0
  %7648 = vmatmul.mubr.bf16.gmra.mrb[0].mxu0 %v7490
  %v7649 = vpop.f32.mrb[0].mxu0
  %v7650 = vadd.f32 0.0, %v7649
  %v7651 = vpop.f32.mrb[0].mxu0
  %v7652 = vpop.f32.mrb[0].mxu0
  %v7653 = vadd.f32 0.0, %v7652
  %v7654 = vpop.f32.mrb[0].mxu0
  %7655 = vmatprep.mubr.bf16.mxu0 0
  %7656 = vmatmul.mubr.bf16.gmra.mrb[0].mxu0 %v7493
  %v7657 = vpop.f32.mrb[0].mxu0
  %v7658 = vadd.f32 0.0, %v7657
  %v7659 = vpop.f32.mrb[0].mxu0
  %v7660 = vpop.f32.mrb[0].mxu0
  %v7661 = vadd.f32 0.0, %v7660
  %v7662 = vpop.f32.mrb[0].mxu0
  %7663 = vmatprep.mubr.bf16.mxu0 0
  %7664 = vmatmul.mubr.bf16.gmra.mrb[0].mxu0 %v7496
  %v7665 = vpop.f32.mrb[0].mxu0
  %v7666 = vadd.f32 0.0, %v7665
  %v7667 = vpop.f32.mrb[0].mxu0
  %v7668 = vpop.f32.mrb[0].mxu0
  %v7669 = vadd.f32 0.0, %v7668
  %v7670 = vpop.f32.mrb[0].mxu0
  %7671 = vmatprep.mubr.bf16.mxu0 0
  %7672 = vmatmul.mubr.bf16.gmra.mrb[0].mxu0 %v7499
  %v7673 = vpop.f32.mrb[0].mxu0
  %v7674 = vadd.f32 0.0, %v7673
  %v7675 = vpop.f32.mrb[0].mxu0
  %v7676 = vpop.f32.mrb[0].mxu0
  %v7677 = vadd.f32 0.0, %v7676
  %v7678 = vpop.f32.mrb[0].mxu0
  %7679 = vmatprep.mubr.bf16.mxu0 0
  %7680 = vmatmul.mubr.bf16.gmra.mrb[0].mxu0 %v7502
  %v7681 = vpop.f32.mrb[0].mxu0
  %v7682 = vadd.f32 0.0, %v7681
  %v7683 = vpop.f32.mrb[0].mxu0
  %v7684 = vpop.f32.mrb[0].mxu0
  %v7685 = vadd.f32 0.0, %v7684
  %v7686 = vpop.f32.mrb[0].mxu0
  %7687 = vmatprep.mubr.bf16.mxu0 0
  %7688 = vmatmul.mubr.bf16.gmra.mrb[0].mxu0 %v7505
  %v7689 = vpop.f32.mrb[0].mxu0
  %v7690 = vadd.f32 0.0, %v7689
  %v7691 = vpop.f32.mrb[0].mxu0
  %v7692 = vpop.f32.mrb[0].mxu0
  %v7693 = vadd.f32 0.0, %v7692
  %v7694 = vpop.f32.mrb[0].mxu0
  %7695 = vmatprep.mubr.bf16.mxu0 0
  %7696 = vmatmul.mubr.bf16.gmra.mrb[0].mxu0 %v7508
  %v7697 = vpop.f32.mrb[0].mxu0
  %v7698 = vadd.f32 0.0, %v7697
  %v7699 = vpop.f32.mrb[0].mxu0
  %v7700 = vpop.f32.mrb[0].mxu0
  %v7701 = vadd.f32 0.0, %v7700
  %v7702 = vpop.f32.mrb[0].mxu0
  %7703 = vmatprep.mubr.bf16.mxu0 0
  %7704 = vmatmul.mubr.bf16.gmra.mrb[0].mxu0 %v7511
  %v7705 = vpop.f32.mrb[0].mxu0
  %v7706 = vadd.f32 0.0, %v7705
  %v7707 = vpop.f32.mrb[0].mxu0
  %v7708 = vpop.f32.mrb[0].mxu0
  %v7709 = vadd.f32 0.0, %v7708
  %v7710 = vpop.f32.mrb[0].mxu0
  %7711 = vmatprep.mubr.bf16.mxu0 0
  %7712 = vmatmul.mubr.bf16.gmra.mrb[0].mxu0 %v7514
  %v7713 = vpop.f32.mrb[0].mxu0
  %v7714 = vadd.f32 0.0, %v7713
  %v7715 = vpop.f32.mrb[0].mxu0
  %v7716 = vpop.f32.mrb[0].mxu0
  %v7717 = vadd.f32 0.0, %v7716
  %v7718 = vpop.f32.mrb[0].mxu0
  %7719 = vmatprep.mubr.bf16.mxu0 0
  %7720 = vmatmul.mubr.bf16.gmra.mrb[0].mxu0 %v7517
  %v7721 = vpop.f32.mrb[0].mxu0
  %v7722 = vadd.f32 0.0, %v7721
  %v7723 = vpop.f32.mrb[0].mxu0
  %v7724 = vpop.f32.mrb[0].mxu0
  %v7725 = vadd.f32 0.0, %v7724
  %v7726 = vpop.f32.mrb[0].mxu0
  %7727 = vmatprep.mubr.bf16.mxu0 0
  %7728 = vmatmul.mubr.bf16.gmra.mrb[0].mxu0 %v7520
  %v7729 = vpop.f32.mrb[0].mxu0
  %v7730 = vadd.f32 0.0, %v7729
  %v7731 = vpop.f32.mrb[0].mxu0
  %v7732 = vpop.f32.mrb[0].mxu0
  %v7733 = vadd.f32 0.0, %v7732
  %v7734 = vpop.f32.mrb[0].mxu0
  %7735 = vmatprep.mubr.bf16.mxu0 0
  %7736 = vmatmul.mubr.bf16.gmra.mrb[0].mxu0 %v7523
  %v7737 = vpop.f32.mrb[0].mxu0
  %v7738 = vadd.f32 0.0, %v7737
  %v7739 = vpop.f32.mrb[0].mxu0
  %v7740 = vpop.f32.mrb[0].mxu0
  %v7741 = vadd.f32 0.0, %v7740
  %v7742 = vpop.f32.mrb[0].mxu0
  %7743 = vmatprep.mubr.bf16.mxu0 0
  %7744 = vmatmul.mubr.bf16.gmra.mrb[0].mxu0 %v7526
  %v7745 = vpop.f32.mrb[0].mxu0
  %v7746 = vadd.f32 0.0, %v7745
  %v7747 = vpop.f32.mrb[0].mxu0
  %v7748 = vpop.f32.mrb[0].mxu0
  %v7749 = vadd.f32 0.0, %v7748
  %v7750 = vpop.f32.mrb[0].mxu0
  %7751 = vmatprep.mubr.bf16.mxu0 0
  %7752 = vmatmul.mubr.bf16.gmra.mrb[0].mxu0 %v7529
  %v7753 = vpop.f32.mrb[0].mxu0
  %v7754 = vadd.f32 0.0, %v7753
  %v7755 = vpop.f32.mrb[0].mxu0
  %v7756 = vpop.f32.mrb[0].mxu0
  %v7757 = vadd.f32 0.0, %v7756
  %v7758 = vpop.f32.mrb[0].mxu0
  %7759 = vmatprep.mubr.bf16.mxu0 0
  %7760 = vmatmul.mubr.bf16.gmra.mrb[0].mxu0 %v7532
  %v7761 = vpop.f32.mrb[0].mxu0
  %v7762 = vadd.f32 0.0, %v7761
  %v7763 = vpop.f32.mrb[0].mxu0
  %v7764 = vpop.f32.mrb[0].mxu0
  %v7765 = vadd.f32 0.0, %v7764
  %v7766 = vpop.f32.mrb[0].mxu0
  %7767 = vmatprep.mubr.bf16.mxu0 0
  %7768 = vmatmul.mubr.bf16.gmra.mrb[0].mxu0 %v7535
  %v7769 = vpop.f32.mrb[0].mxu0
  %v7770 = vadd.f32 0.0, %v7769
  %v7771 = vpop.f32.mrb[0].mxu0
  %v7772 = vpop.f32.mrb[0].mxu0
  %v7773 = vadd.f32 0.0, %v7772
  %v7774 = vpop.f32.mrb[0].mxu0
  %7775 = vmatprep.mubr.bf16.mxu0 0
  %7776 = vmatmul.mubr.bf16.gmra.mrb[0].mxu0 %v7538
  %v7777 = vpop.f32.mrb[0].mxu0
  %v7778 = vadd.f32 0.0, %v7777
  %v7779 = vpop.f32.mrb[0].mxu0
  %v7780 = vpop.f32.mrb[0].mxu0
  %v7781 = vadd.f32 0.0, %v7780
  %v7782 = vpop.f32.mrb[0].mxu0
  %7783 = vmatprep.mubr.bf16.mxu0 0
  %7784 = vmatmul.mubr.bf16.gmra.mrb[0].mxu0 %v7541
  %v7785 = vpop.f32.mrb[0].mxu0
  %v7786 = vadd.f32 0.0, %v7785
  %v7787 = vpop.f32.mrb[0].mxu0
  %v7788 = vpop.f32.mrb[0].mxu0
  %v7789 = vadd.f32 0.0, %v7788
  %v7790 = vpop.f32.mrb[0].mxu0
  %7791 = vmatprep.mubr.bf16.mxu0 0
  %7792 = vmatmul.mubr.bf16.gmra.mrb[0].mxu0 %v7544
  %v7793 = vpop.f32.mrb[0].mxu0
  %v7794 = vadd.f32 0.0, %v7793
  %v7795 = vpop.f32.mrb[0].mxu0
  %v7796 = vpop.f32.mrb[0].mxu0
  %v7797 = vadd.f32 0.0, %v7796
  %v7798 = vpop.f32.mrb[0].mxu0
  %7799 = vmatprep.mubr.bf16.mxu0 0
  %7800 = vmatmul.mubr.bf16.gmra.mrb[0].mxu0 %v7547
  %v7801 = vpop.f32.mrb[0].mxu0
  %v7802 = vadd.f32 0.0, %v7801
  %v7803 = vpop.f32.mrb[0].mxu0
  %v7804 = vpop.f32.mrb[0].mxu0
  %v7805 = vadd.f32 0.0, %v7804
  %v7806 = vpop.f32.mrb[0].mxu0
  %7807 = vmatprep.mubr.bf16.mxu0 0
  %7808 = vmatmul.mubr.bf16.gmra.mrb[0].mxu0 %v7550
  %v7809 = vpop.f32.mrb[0].mxu0
  %v7810 = vadd.f32 0.0, %v7809
  %v7811 = vpop.f32.mrb[0].mxu0
  %v7812 = vpop.f32.mrb[0].mxu0
  %v7813 = vadd.f32 0.0, %v7812
  %v7814 = vpop.f32.mrb[0].mxu0
  %7815 = vmatprep.mubr.bf16.mxu0 0
  %7816 = vmatmul.mubr.bf16.gmra.mrb[0].mxu0 %v7553
  %v7817 = vpop.f32.mrb[0].mxu0
  %v7818 = vadd.f32 0.0, %v7817
  %v7819 = vpop.f32.mrb[0].mxu0
  %v7820 = vpop.f32.mrb[0].mxu0
  %v7821 = vadd.f32 0.0, %v7820
  %v7822 = vpop.f32.mrb[0].mxu0
  %7823 = vmatprep.mubr.bf16.mxu0 0
  %7824 = vmatmul.mubr.bf16.gmra.mrb[0].mxu0 %v7556
  %v7825 = vpop.f32.mrb[0].mxu0
  %v7826 = vadd.f32 0.0, %v7825
  %v7827 = vpop.f32.mrb[0].mxu0
  %v7828 = vpop.f32.mrb[0].mxu0
  %v7829 = vadd.f32 0.0, %v7828
  %v7830 = vpop.f32.mrb[0].mxu0
  %7831 = vmatprep.mubr.bf16.mxu0 0
  %7832 = vmatmul.mubr.bf16.gmra.mrb[0].mxu0 %v7559
  %v7833 = vpop.f32.mrb[0].mxu0
  %v7834 = vadd.f32 0.0, %v7833
  %v7835 = vpop.f32.mrb[0].mxu0
  %v7836 = vpop.f32.mrb[0].mxu0
  %v7837 = vadd.f32 0.0, %v7836
  %v7838 = vpop.f32.mrb[0].mxu0
  %7839 = vmatprep.mubr.bf16.mxu0 0
  %7840 = vmatmul.mubr.bf16.gmra.mrb[0].mxu0 %v7562
  %v7841 = vpop.f32.mrb[0].mxu0
  %v7842 = vadd.f32 0.0, %v7841
  %v7843 = vpop.f32.mrb[0].mxu0
  %v7844 = vpop.f32.mrb[0].mxu0
  %v7845 = vadd.f32 0.0, %v7844
  %v7846 = vpop.f32.mrb[0].mxu0
  %7847 = vmatprep.mubr.bf16.mxu0 0
  %7848 = vmatmul.mubr.bf16.gmra.mrb[0].mxu0 %v7565
  %v7849 = vpop.f32.mrb[0].mxu0
  %v7850 = vadd.f32 0.0, %v7849
  %v7851 = vpop.f32.mrb[0].mxu0
  %v7852 = vpop.f32.mrb[0].mxu0
  %v7853 = vadd.f32 0.0, %v7852
  %v7854 = vpop.f32.mrb[0].mxu0
  %7855 = vdwg.mxu0
  %7856 = vxpose.xlu0.b32.start [1/16] %v7602, 128
  %7857 = vxpose.xlu0.b32.cont [2/16] %v7605, 128
  %7858 = vxpose.xlu0.b32.cont [3/16] %v7610, 128
  %7859 = vxpose.xlu0.b32.cont [4/16] %v7613, 128
  %7860 = vxpose.xlu0.b32.cont [5/16] %v7618, 128
  %7861 = vxpose.xlu0.b32.cont [6/16] %v7621, 128
  %7862 = vxpose.xlu0.b32.cont [7/16] %v7626, 128
  %7863 = vxpose.xlu0.b32.cont [8/16] %v7629, 128
  %7864 = vxpose.xlu0.b32.cont [9/16] %v7634, 128
  %7865 = vxpose.xlu0.b32.cont [10/16] %v7637, 128
  %7866 = vxpose.xlu0.b32.cont [11/16] %v7642, 128
  %7867 = vxpose.xlu0.b32.cont [12/16] %v7645, 128
  %7868 = vxpose.xlu0.b32.cont [13/16] %v7650, 128
  %7869 = vxpose.xlu0.b32.cont [14/16] %v7653, 128
  %7870 = vxpose.xlu0.b32.cont [15/16] %v7658, 128
  %7871 = vxpose.xlu0.b32.end [16/16] %v7661, 128
  %v7872 = vpop.trf.xlu0
  %v7873 = vpop.trf.xlu0
  %v7874 = vpop.trf.xlu0
  %v7875 = vpop.trf.xlu0
  %v7876 = vpop.trf.xlu0
  %v7877 = vpop.trf.xlu0
  %v7878 = vpop.trf.xlu0
  %v7879 = vpop.trf.xlu0
  %v7880 = vpop.trf.xlu0
  %v7881 = vpop.trf.xlu0
  %v7882 = vpop.trf.xlu0
  %v7883 = vpop.trf.xlu0
  %v7884 = vpop.trf.xlu0
  %v7885 = vpop.trf.xlu0
  %v7886 = vpop.trf.xlu0
  %v7887 = vpop.trf.xlu0
  %7888 = vxpose.xlu0.b32.start [1/16] %v7666, 128
  %7889 = vxpose.xlu0.b32.cont [2/16] %v7669, 128
  %7890 = vxpose.xlu0.b32.cont [3/16] %v7674, 128
  %7891 = vxpose.xlu0.b32.cont [4/16] %v7677, 128
  %7892 = vxpose.xlu0.b32.cont [5/16] %v7682, 128
  %7893 = vxpose.xlu0.b32.cont [6/16] %v7685, 128
  %7894 = vxpose.xlu0.b32.cont [7/16] %v7690, 128
  %7895 = vxpose.xlu0.b32.cont [8/16] %v7693, 128
  %7896 = vxpose.xlu0.b32.cont [9/16] %v7698, 128
  %7897 = vxpose.xlu0.b32.cont [10/16] %v7701, 128
  %7898 = vxpose.xlu0.b32.cont [11/16] %v7706, 128
  %7899 = vxpose.xlu0.b32.cont [12/16] %v7709, 128
  %7900 = vxpose.xlu0.b32.cont [13/16] %v7714, 128
  %7901 = vxpose.xlu0.b32.cont [14/16] %v7717, 128
  %7902 = vxpose.xlu0.b32.cont [15/16] %v7722, 128
  %7903 = vxpose.xlu0.b32.end [16/16] %v7725, 128
  %v7904 = vpop.trf.xlu0
  %v7905 = vpop.trf.xlu0
  %v7906 = vpop.trf.xlu0
  %v7907 = vpop.trf.xlu0
  %v7908 = vpop.trf.xlu0
  %v7909 = vpop.trf.xlu0
  %v7910 = vpop.trf.xlu0
  %v7911 = vpop.trf.xlu0
  %v7912 = vpop.trf.xlu0
  %v7913 = vpop.trf.xlu0
  %v7914 = vpop.trf.xlu0
  %v7915 = vpop.trf.xlu0
  %v7916 = vpop.trf.xlu0
  %v7917 = vpop.trf.xlu0
  %v7918 = vpop.trf.xlu0
  %v7919 = vpop.trf.xlu0
  %7920 = vxpose.xlu0.b32.start [1/16] %v7730, 128
  %7921 = vxpose.xlu0.b32.cont [2/16] %v7733, 128
  %7922 = vxpose.xlu0.b32.cont [3/16] %v7738, 128
  %7923 = vxpose.xlu0.b32.cont [4/16] %v7741, 128
  %7924 = vxpose.xlu0.b32.cont [5/16] %v7746, 128
  %7925 = vxpose.xlu0.b32.cont [6/16] %v7749, 128
  %7926 = vxpose.xlu0.b32.cont [7/16] %v7754, 128
  %7927 = vxpose.xlu0.b32.cont [8/16] %v7757, 128
  %7928 = vxpose.xlu0.b32.cont [9/16] %v7762, 128
  %7929 = vxpose.xlu0.b32.cont [10/16] %v7765, 128
  %7930 = vxpose.xlu0.b32.cont [11/16] %v7770, 128
  %7931 = vxpose.xlu0.b32.cont [12/16] %v7773, 128
  %7932 = vxpose.xlu0.b32.cont [13/16] %v7778, 128
  %7933 = vxpose.xlu0.b32.cont [14/16] %v7781, 128
  %7934 = vxpose.xlu0.b32.cont [15/16] %v7786, 128
  %7935 = vxpose.xlu0.b32.end [16/16] %v7789, 128
  %v7936 = vpop.trf.xlu0
  %v7937 = vpop.trf.xlu0
  %v7938 = vpop.trf.xlu0
  %v7939 = vpop.trf.xlu0
  %v7940 = vpop.trf.xlu0
  %v7941 = vpop.trf.xlu0
  %v7942 = vpop.trf.xlu0
  %v7943 = vpop.trf.xlu0
  %v7944 = vpop.trf.xlu0
  %v7945 = vpop.trf.xlu0
  %v7946 = vpop.trf.xlu0
  %v7947 = vpop.trf.xlu0
  %v7948 = vpop.trf.xlu0
  %v7949 = vpop.trf.xlu0
  %v7950 = vpop.trf.xlu0
  %v7951 = vpop.trf.xlu0
  %7952 = vxpose.xlu0.b32.start [1/16] %v7794, 128
  %7953 = vxpose.xlu0.b32.cont [2/16] %v7797, 128
  %7954 = vxpose.xlu0.b32.cont [3/16] %v7802, 128
  %7955 = vxpose.xlu0.b32.cont [4/16] %v7805, 128
  %7956 = vxpose.xlu0.b32.cont [5/16] %v7810, 128
  %7957 = vxpose.xlu0.b32.cont [6/16] %v7813, 128
  %7958 = vxpose.xlu0.b32.cont [7/16] %v7818, 128
  %7959 = vxpose.xlu0.b32.cont [8/16] %v7821, 128
  %7960 = vxpose.xlu0.b32.cont [9/16] %v7826, 128
  %7961 = vxpose.xlu0.b32.cont [10/16] %v7829, 128
  %7962 = vxpose.xlu0.b32.cont [11/16] %v7834, 128
  %7963 = vxpose.xlu0.b32.cont [12/16] %v7837, 128
  %7964 = vxpose.xlu0.b32.cont [13/16] %v7842, 128
  %7965 = vxpose.xlu0.b32.cont [14/16] %v7845, 128
  %7966 = vxpose.xlu0.b32.cont [15/16] %v7850, 128
  %7967 = vxpose.xlu0.b32.end [16/16] %v7853, 128
  %v7968 = vpop.trf.xlu0
  %v7969 = vpop.trf.xlu0
  %v7970 = vpop.trf.xlu0
  %v7971 = vpop.trf.xlu0
  %v7972 = vpop.trf.xlu0
  %v7973 = vpop.trf.xlu0
  %v7974 = vpop.trf.xlu0
  %v7975 = vpop.trf.xlu0
  %v7976 = vpop.trf.xlu0
  %v7977 = vpop.trf.xlu0
  %v7978 = vpop.trf.xlu0
  %v7979 = vpop.trf.xlu0
  %v7980 = vpop.trf.xlu0
  %v7981 = vpop.trf.xlu0
  %v7982 = vpop.trf.xlu0
  %v7983 = vpop.trf.xlu0
  %vm7984 = vcmask 1040384
  %v7985 = vsel %vm7984, %v7872, -inf
  %v7986 = vsel %vm7984, %v7904, -inf
  %v7987 = vmax.f32 %v7985, %v7986
  %7988 = vmax.xlane.f32.xlu0 %v7987
  %v7989 = vpop.xlane.xlu0 %7988
  %v7990 = vsub.f32 %v7872, %v7989
  %v7991 = vsub.f32 %v7904, %v7989
  %v7992 = vmul.f32 %v7990, 1.442695
  %v7993 = vpow.pop %v7992
  %v7994 = vmul.f32 %v7991, 1.442695
  %v7995 = vpow.pop %v7994
  %v7996 = vsel %vm7984, %v7993, 0.0
  %v7997 = vsel %vm7984, %v7995, 0.0
  %v7998 = vadd.f32 %v7996, %v7997
  %7999 = vadd.xlane.f32.xlu0 %v7998
  %v8000 = vpop.xlane.xlu0 %7999
  %v8001 = vrcp.pop %v8000
  %v8002 = vmul.f32 %v7993, %v8001
  %v8003 = vmul.f32 %v7995, %v8001
  %v8006 = vcombine.low %v8002, %v8003
  %v8008 = vunpack.c.l.s4 1966171168
  %v8009 = vunpack.c.0.s8 %v8008
  %v8010 = vlaneseq
  %v8011 = vshrl.u32 %v8010, 7
  %v8012 = vsub.s32 %v8009, %v8011
  %v8013 = vrot.slane %v8006, %v8012
  %v8015 = vunpack.c.l.s4 1966171168
  %v8016 = vunpack.c.0.s8 %v8015
  %v8017 = vlaneseq
  %v8018 = vshrl.u32 %v8017, 7
  %v8019 = vsub.s32 %v8016, %v8018
  %v8020 = vrot.slane %v8013, %v8019
  %v8022 = vlaneseq
  %vm8023 = vcmp.ge.s32.totalorder %v8022, 0
  %vm8024 = vcmp.lt.s32.totalorder %v8022, 256
  %vm8025 = vmand %vm8023, %vm8024
  %8026 = vst.msk [vmem:[%s15] sm:$0x3] %vm8025, %v8020
  %v8027 = vsel %vm7984, %v7936, -inf
  %v8028 = vsel %vm7984, %v7968, -inf
  %v8029 = vmax.f32 %v8027, %v8028
  %8030 = vmax.xlane.f32.xlu0 %v8029
  %v8031 = vpop.xlane.xlu0 %8030
  %v8032 = vsub.f32 %v7936, %v8031
  %v8033 = vsub.f32 %v7968, %v8031
  %v8034 = vmul.f32 %v8032, 1.442695
  %v8035 = vpow.pop %v8034
  %v8036 = vmul.f32 %v8033, 1.442695
  %v8037 = vpow.pop %v8036
  %v8038 = vsel %vm7984, %v8035, 0.0
  %v8039 = vsel %vm7984, %v8037, 0.0
  %v8040 = vadd.f32 %v8038, %v8039
  %8041 = vadd.xlane.f32.xlu0 %v8040
  %v8042 = vpop.xlane.xlu0 %8041
  %v8043 = vrcp.pop %v8042
  %v8044 = vmul.f32 %v8035, %v8043
  %v8045 = vmul.f32 %v8037, %v8043
  %v8048 = vcombine.low %v8044, %v8045
  %v8050 = vunpack.c.l.s4 1966171168
  %v8051 = vunpack.c.0.s8 %v8050
  %v8052 = vlaneseq
  %v8053 = vshrl.u32 %v8052, 7
  %v8054 = vsub.s32 %v8051, %v8053
  %v8055 = vrot.slane %v8048, %v8054
  %v8057 = vunpack.c.l.s4 1966171168
  %v8058 = vunpack.c.0.s8 %v8057
  %v8059 = vlaneseq
  %v8060 = vshrl.u32 %v8059, 7
  %v8061 = vsub.s32 %v8058, %v8060
  %v8062 = vrot.slane %v8055, %v8061
  %s8064 = scalar_lea.vmem %s15, 2
  %8065 = vst.msk [vmem:[%s8064] sm:$0x3] %vm8025, %v8062
  %v8066 = vld [vmem:[%s4] sm:$0x1]
  %v8067 = vld [vmem:[%s4 + $0x1] sm:$0x1]
  %v8070 = vlaneseq
  %v8071 = vshrl.u32 %v8070, 7
  %v8072 = vsub.s32 0, %v8071
  %v8073 = vrot.slane %v8066, %v8072
  %v8074 = vlaneseq
  %v8075 = vshrl.u32 %v8074, 7
  %v8076 = vsub.s32 0, %v8075
  %v8077 = vrot.slane %v8067, %v8076
  %v8080 = vadd.f32 %v4104, %v8073
  %v8081 = vadd.f32 %v4108, %v8073
  %v8082 = vadd.f32 %v4114, %v8073
  %v8083 = vadd.f32 %v4118, %v8073
  %v8084 = vadd.f32 %v4124, %v8073
  %v8085 = vadd.f32 %v4128, %v8073
  %v8086 = vadd.f32 %v4134, %v8073
  %v8087 = vadd.f32 %v4138, %v8073
  %v8088 = vadd.f32 %v4144, %v8073
  %v8089 = vadd.f32 %v4148, %v8073
  %v8090 = vadd.f32 %v4154, %v8073
  %v8091 = vadd.f32 %v4158, %v8073
  %v8092 = vadd.f32 %v4164, %v8073
  %v8093 = vadd.f32 %v4168, %v8073
  %v8094 = vadd.f32 %v4174, %v8073
  %v8095 = vadd.f32 %v4178, %v8073
  %v8096 = vadd.f32 %v4184, %v8073
  %v8097 = vadd.f32 %v4188, %v8073
  %v8098 = vadd.f32 %v4194, %v8073
  %v8099 = vadd.f32 %v4198, %v8073
  %v8100 = vadd.f32 %v4204, %v8073
  %v8101 = vadd.f32 %v4208, %v8073
  %v8102 = vadd.f32 %v4214, %v8073
  %v8103 = vadd.f32 %v4218, %v8073
  %v8104 = vadd.f32 %v4224, %v8073
  %v8105 = vadd.f32 %v4228, %v8073
  %v8106 = vadd.f32 %v4234, %v8073
  %v8107 = vadd.f32 %v4238, %v8073
  %v8108 = vadd.f32 %v4260, %v8077
  %v8109 = vadd.f32 %v4264, %v8077
  %v8110 = vadd.f32 %v4270, %v8077
  %v8111 = vadd.f32 %v4274, %v8077
  %v8112 = vadd.f32 %v4280, %v8077
  %v8113 = vadd.f32 %v4284, %v8077
  %v8114 = vadd.f32 %v4290, %v8077
  %v8115 = vadd.f32 %v4294, %v8077
  %v8116 = vadd.f32 %v4300, %v8077
  %v8117 = vadd.f32 %v4304, %v8077
  %v8118 = vadd.f32 %v4310, %v8077
  %v8119 = vadd.f32 %v4314, %v8077
  %v8120 = vadd.f32 %v4320, %v8077
  %v8121 = vadd.f32 %v4324, %v8077
  %v8122 = vadd.f32 %v4330, %v8077
  %v8123 = vadd.f32 %v4334, %v8077
  %v8124 = vadd.f32 %v4340, %v8077
  %v8125 = vadd.f32 %v4344, %v8077
  %v8126 = vadd.f32 %v4350, %v8077
  %v8127 = vadd.f32 %v4354, %v8077
  %v8128 = vadd.f32 %v4360, %v8077
  %v8129 = vadd.f32 %v4364, %v8077
  %v8130 = vadd.f32 %v4370, %v8077
  %v8131 = vadd.f32 %v4374, %v8077
  %v8132 = vadd.f32 %v4380, %v8077
  %v8133 = vadd.f32 %v4384, %v8077
  %v8134 = vadd.f32 %v4390, %v8077
  %v8135 = vadd.f32 %v4394, %v8077
  %v8136 = vmax.f32 %v8080, 0.0
  %v8137 = vmax.f32 %v8081, 0.0
  %v8138 = vmax.f32 %v8082, 0.0
  %v8139 = vmax.f32 %v8083, 0.0
  %v8140 = vmax.f32 %v8084, 0.0
  %v8141 = vmax.f32 %v8085, 0.0
  %v8142 = vmax.f32 %v8086, 0.0
  %v8143 = vmax.f32 %v8087, 0.0
  %v8144 = vmax.f32 %v8088, 0.0
  %v8145 = vmax.f32 %v8089, 0.0
  %v8146 = vmax.f32 %v8090, 0.0
  %v8147 = vmax.f32 %v8091, 0.0
  %v8148 = vmax.f32 %v8092, 0.0
  %v8149 = vmax.f32 %v8093, 0.0
  %v8150 = vmax.f32 %v8094, 0.0
  %v8151 = vmax.f32 %v8095, 0.0
  %v8152 = vmax.f32 %v8096, 0.0
  %v8153 = vmax.f32 %v8097, 0.0
  %v8154 = vmax.f32 %v8098, 0.0
  %v8155 = vmax.f32 %v8099, 0.0
  %v8156 = vmax.f32 %v8100, 0.0
  %v8157 = vmax.f32 %v8101, 0.0
  %v8158 = vmax.f32 %v8102, 0.0
  %v8159 = vmax.f32 %v8103, 0.0
  %v8160 = vmax.f32 %v8104, 0.0
  %v8161 = vmax.f32 %v8105, 0.0
  %v8162 = vmax.f32 %v8106, 0.0
  %v8163 = vmax.f32 %v8107, 0.0
  %v8164 = vmax.f32 %v8108, 0.0
  %v8165 = vmax.f32 %v8109, 0.0
  %v8166 = vmax.f32 %v8110, 0.0
  %v8167 = vmax.f32 %v8111, 0.0
  %v8168 = vmax.f32 %v8112, 0.0
  %v8169 = vmax.f32 %v8113, 0.0
  %v8170 = vmax.f32 %v8114, 0.0
  %v8171 = vmax.f32 %v8115, 0.0
  %v8172 = vmax.f32 %v8116, 0.0
  %v8173 = vmax.f32 %v8117, 0.0
  %v8174 = vmax.f32 %v8118, 0.0
  %v8175 = vmax.f32 %v8119, 0.0
  %v8176 = vmax.f32 %v8120, 0.0
  %v8177 = vmax.f32 %v8121, 0.0
  %v8178 = vmax.f32 %v8122, 0.0
  %v8179 = vmax.f32 %v8123, 0.0
  %v8180 = vmax.f32 %v8124, 0.0
  %v8181 = vmax.f32 %v8125, 0.0
  %v8182 = vmax.f32 %v8126, 0.0
  %v8183 = vmax.f32 %v8127, 0.0
  %v8184 = vmax.f32 %v8128, 0.0
  %v8185 = vmax.f32 %v8129, 0.0
  %v8186 = vmax.f32 %v8130, 0.0
  %v8187 = vmax.f32 %v8131, 0.0
  %v8188 = vmax.f32 %v8132, 0.0
  %v8189 = vmax.f32 %v8133, 0.0
  %v8190 = vmax.f32 %v8134, 0.0
  %v8191 = vmax.f32 %v8135, 0.0
  %v8192 = vmax.f32 %v8136, %v8138
  %v8193 = vmax.f32 %v8137, %v8139
  %v8194 = vmax.f32 %v8140, %v8142
  %v8195 = vmax.f32 %v8141, %v8143
  %v8196 = vmax.f32 %v8144, %v8146
  %v8197 = vmax.f32 %v8145, %v8147
  %v8198 = vmax.f32 %v8148, %v8150
  %v8199 = vmax.f32 %v8149, %v8151
  %v8200 = vmax.f32 %v8152, %v8154
  %v8201 = vmax.f32 %v8153, %v8155
  %v8202 = vmax.f32 %v8156, %v8158
  %v8203 = vmax.f32 %v8157, %v8159
  %v8204 = vmax.f32 %v8160, %v8162
  %v8205 = vmax.f32 %v8161, %v8163
  %v8206 = vmax.f32 %v8164, %v8166
  %v8207 = vmax.f32 %v8165, %v8167
  %v8208 = vmax.f32 %v8168, %v8170
  %v8209 = vmax.f32 %v8169, %v8171
  %v8210 = vmax.f32 %v8172, %v8174
  %v8211 = vmax.f32 %v8173, %v8175
  %v8212 = vmax.f32 %v8176, %v8178
  %v8213 = vmax.f32 %v8177, %v8179
  %v8214 = vmax.f32 %v8180, %v8182
  %v8215 = vmax.f32 %v8181, %v8183
  %v8216 = vmax.f32 %v8184, %v8186
  %v8217 = vmax.f32 %v8185, %v8187
  %v8218 = vmax.f32 %v8188, %v8190
  %v8219 = vmax.f32 %v8189, %v8191
  %v8248 = vcombine.high %v8192, %v8192
  %v8250 = vunpack.c.l.s4 1983009808
  %v8251 = vunpack.c.0.s8 %v8250
  %v8252 = vlaneseq
  %v8253 = vshrl.u32 %v8252, 7
  %v8254 = vsub.s32 %v8251, %v8253
  %v8255 = vrot.slane %v8192, %v8254
  %v8257 = vunpack.c.l.s4 1983009808
  %v8258 = vunpack.c.0.s8 %v8257
  %v8259 = vlaneseq
  %v8260 = vshrl.u32 %v8259, 7
  %v8261 = vsub.s32 %v8258, %v8260
  %v8262 = vrot.slane %v8248, %v8261
  %v8263 = vcombine.high %v8255, %v8255
  %v8264 = vcombine.high %v8262, %v8262
  %v8265 = vcombine.high %v8193, %v8193
  %v8267 = vunpack.c.l.s4 1983009808
  %v8268 = vunpack.c.0.s8 %v8267
  %v8269 = vlaneseq
  %v8270 = vshrl.u32 %v8269, 7
  %v8271 = vsub.s32 %v8268, %v8270
  %v8272 = vrot.slane %v8193, %v8271
  %v8274 = vunpack.c.l.s4 1983009808
  %v8275 = vunpack.c.0.s8 %v8274
  %v8276 = vlaneseq
  %v8277 = vshrl.u32 %v8276, 7
  %v8278 = vsub.s32 %v8275, %v8277
  %v8279 = vrot.slane %v8265, %v8278
  %v8280 = vcombine.high %v8272, %v8272
  %v8281 = vcombine.high %v8279, %v8279
  %v8282 = vcombine.high %v8194, %v8194
  %v8284 = vunpack.c.l.s4 1983009808
  %v8285 = vunpack.c.0.s8 %v8284
  %v8286 = vlaneseq
  %v8287 = vshrl.u32 %v8286, 7
  %v8288 = vsub.s32 %v8285, %v8287
  %v8289 = vrot.slane %v8194, %v8288
  %v8291 = vunpack.c.l.s4 1983009808
  %v8292 = vunpack.c.0.s8 %v8291
  %v8293 = vlaneseq
  %v8294 = vshrl.u32 %v8293, 7
  %v8295 = vsub.s32 %v8292, %v8294
  %v8296 = vrot.slane %v8282, %v8295
  %v8297 = vcombine.high %v8289, %v8289
  %v8298 = vcombine.high %v8296, %v8296
  %v8299 = vcombine.high %v8195, %v8195
  %v8301 = vunpack.c.l.s4 1983009808
  %v8302 = vunpack.c.0.s8 %v8301
  %v8303 = vlaneseq
  %v8304 = vshrl.u32 %v8303, 7
  %v8305 = vsub.s32 %v8302, %v8304
  %v8306 = vrot.slane %v8195, %v8305
  %v8308 = vunpack.c.l.s4 1983009808
  %v8309 = vunpack.c.0.s8 %v8308
  %v8310 = vlaneseq
  %v8311 = vshrl.u32 %v8310, 7
  %v8312 = vsub.s32 %v8309, %v8311
  %v8313 = vrot.slane %v8299, %v8312
  %v8314 = vcombine.high %v8306, %v8306
  %v8315 = vcombine.high %v8313, %v8313
  %v8316 = vcombine.high %v8196, %v8196
  %v8318 = vunpack.c.l.s4 1983009808
  %v8319 = vunpack.c.0.s8 %v8318
  %v8320 = vlaneseq
  %v8321 = vshrl.u32 %v8320, 7
  %v8322 = vsub.s32 %v8319, %v8321
  %v8323 = vrot.slane %v8196, %v8322
  %v8325 = vunpack.c.l.s4 1983009808
  %v8326 = vunpack.c.0.s8 %v8325
  %v8327 = vlaneseq
  %v8328 = vshrl.u32 %v8327, 7
  %v8329 = vsub.s32 %v8326, %v8328
  %v8330 = vrot.slane %v8316, %v8329
  %v8331 = vcombine.high %v8323, %v8323
  %v8332 = vcombine.high %v8330, %v8330
  %v8333 = vcombine.high %v8197, %v8197
  %v8335 = vunpack.c.l.s4 1983009808
  %v8336 = vunpack.c.0.s8 %v8335
  %v8337 = vlaneseq
  %v8338 = vshrl.u32 %v8337, 7
  %v8339 = vsub.s32 %v8336, %v8338
  %v8340 = vrot.slane %v8197, %v8339
  %v8342 = vunpack.c.l.s4 1983009808
  %v8343 = vunpack.c.0.s8 %v8342
  %v8344 = vlaneseq
  %v8345 = vshrl.u32 %v8344, 7
  %v8346 = vsub.s32 %v8343, %v8345
  %v8347 = vrot.slane %v8333, %v8346
  %v8348 = vcombine.high %v8340, %v8340
  %v8349 = vcombine.high %v8347, %v8347
  %v8350 = vcombine.high %v8198, %v8198
  %v8352 = vunpack.c.l.s4 1983009808
  %v8353 = vunpack.c.0.s8 %v8352
  %v8354 = vlaneseq
  %v8355 = vshrl.u32 %v8354, 7
  %v8356 = vsub.s32 %v8353, %v8355
  %v8357 = vrot.slane %v8198, %v8356
  %v8359 = vunpack.c.l.s4 1983009808
  %v8360 = vunpack.c.0.s8 %v8359
  %v8361 = vlaneseq
  %v8362 = vshrl.u32 %v8361, 7
  %v8363 = vsub.s32 %v8360, %v8362
  %v8364 = vrot.slane %v8350, %v8363
  %v8365 = vcombine.high %v8357, %v8357
  %v8366 = vcombine.high %v8364, %v8364
  %v8367 = vcombine.high %v8199, %v8199
  %v8369 = vunpack.c.l.s4 1983009808
  %v8370 = vunpack.c.0.s8 %v8369
  %v8371 = vlaneseq
  %v8372 = vshrl.u32 %v8371, 7
  %v8373 = vsub.s32 %v8370, %v8372
  %v8374 = vrot.slane %v8199, %v8373
  %v8376 = vunpack.c.l.s4 1983009808
  %v8377 = vunpack.c.0.s8 %v8376
  %v8378 = vlaneseq
  %v8379 = vshrl.u32 %v8378, 7
  %v8380 = vsub.s32 %v8377, %v8379
  %v8381 = vrot.slane %v8367, %v8380
  %v8382 = vcombine.high %v8374, %v8374
  %v8383 = vcombine.high %v8381, %v8381
  %v8384 = vcombine.high %v8200, %v8200
  %v8386 = vunpack.c.l.s4 1983009808
  %v8387 = vunpack.c.0.s8 %v8386
  %v8388 = vlaneseq
  %v8389 = vshrl.u32 %v8388, 7
  %v8390 = vsub.s32 %v8387, %v8389
  %v8391 = vrot.slane %v8200, %v8390
  %v8393 = vunpack.c.l.s4 1983009808
  %v8394 = vunpack.c.0.s8 %v8393
  %v8395 = vlaneseq
  %v8396 = vshrl.u32 %v8395, 7
  %v8397 = vsub.s32 %v8394, %v8396
  %v8398 = vrot.slane %v8384, %v8397
  %v8399 = vcombine.high %v8391, %v8391
  %v8400 = vcombine.high %v8398, %v8398
  %v8401 = vcombine.high %v8201, %v8201
  %v8403 = vunpack.c.l.s4 1983009808
  %v8404 = vunpack.c.0.s8 %v8403
  %v8405 = vlaneseq
  %v8406 = vshrl.u32 %v8405, 7
  %v8407 = vsub.s32 %v8404, %v8406
  %v8408 = vrot.slane %v8201, %v8407
  %v8410 = vunpack.c.l.s4 1983009808
  %v8411 = vunpack.c.0.s8 %v8410
  %v8412 = vlaneseq
  %v8413 = vshrl.u32 %v8412, 7
  %v8414 = vsub.s32 %v8411, %v8413
  %v8415 = vrot.slane %v8401, %v8414
  %v8416 = vcombine.high %v8408, %v8408
  %v8417 = vcombine.high %v8415, %v8415
  %v8418 = vcombine.high %v8202, %v8202
  %v8420 = vunpack.c.l.s4 1983009808
  %v8421 = vunpack.c.0.s8 %v8420
  %v8422 = vlaneseq
  %v8423 = vshrl.u32 %v8422, 7
  %v8424 = vsub.s32 %v8421, %v8423
  %v8425 = vrot.slane %v8202, %v8424
  %v8427 = vunpack.c.l.s4 1983009808
  %v8428 = vunpack.c.0.s8 %v8427
  %v8429 = vlaneseq
  %v8430 = vshrl.u32 %v8429, 7
  %v8431 = vsub.s32 %v8428, %v8430
  %v8432 = vrot.slane %v8418, %v8431
  %v8433 = vcombine.high %v8425, %v8425
  %v8434 = vcombine.high %v8432, %v8432
  %v8435 = vcombine.high %v8203, %v8203
  %v8437 = vunpack.c.l.s4 1983009808
  %v8438 = vunpack.c.0.s8 %v8437
  %v8439 = vlaneseq
  %v8440 = vshrl.u32 %v8439, 7
  %v8441 = vsub.s32 %v8438, %v8440
  %v8442 = vrot.slane %v8203, %v8441
  %v8444 = vunpack.c.l.s4 1983009808
  %v8445 = vunpack.c.0.s8 %v8444
  %v8446 = vlaneseq
  %v8447 = vshrl.u32 %v8446, 7
  %v8448 = vsub.s32 %v8445, %v8447
  %v8449 = vrot.slane %v8435, %v8448
  %v8450 = vcombine.high %v8442, %v8442
  %v8451 = vcombine.high %v8449, %v8449
  %v8452 = vcombine.high %v8204, %v8204
  %v8454 = vunpack.c.l.s4 1983009808
  %v8455 = vunpack.c.0.s8 %v8454
  %v8456 = vlaneseq
  %v8457 = vshrl.u32 %v8456, 7
  %v8458 = vsub.s32 %v8455, %v8457
  %v8459 = vrot.slane %v8204, %v8458
  %v8461 = vunpack.c.l.s4 1983009808
  %v8462 = vunpack.c.0.s8 %v8461
  %v8463 = vlaneseq
  %v8464 = vshrl.u32 %v8463, 7
  %v8465 = vsub.s32 %v8462, %v8464
  %v8466 = vrot.slane %v8452, %v8465
  %v8467 = vcombine.high %v8459, %v8459
  %v8468 = vcombine.high %v8466, %v8466
  %v8469 = vcombine.high %v8205, %v8205
  %v8471 = vunpack.c.l.s4 1983009808
  %v8472 = vunpack.c.0.s8 %v8471
  %v8473 = vlaneseq
  %v8474 = vshrl.u32 %v8473, 7
  %v8475 = vsub.s32 %v8472, %v8474
  %v8476 = vrot.slane %v8205, %v8475
  %v8478 = vunpack.c.l.s4 1983009808
  %v8479 = vunpack.c.0.s8 %v8478
  %v8480 = vlaneseq
  %v8481 = vshrl.u32 %v8480, 7
  %v8482 = vsub.s32 %v8479, %v8481
  %v8483 = vrot.slane %v8469, %v8482
  %v8484 = vcombine.high %v8476, %v8476
  %v8485 = vcombine.high %v8483, %v8483
  %v8486 = vcombine.high %v8206, %v8206
  %v8488 = vunpack.c.l.s4 1983009808
  %v8489 = vunpack.c.0.s8 %v8488
  %v8490 = vlaneseq
  %v8491 = vshrl.u32 %v8490, 7
  %v8492 = vsub.s32 %v8489, %v8491
  %v8493 = vrot.slane %v8206, %v8492
  %v8495 = vunpack.c.l.s4 1983009808
  %v8496 = vunpack.c.0.s8 %v8495
  %v8497 = vlaneseq
  %v8498 = vshrl.u32 %v8497, 7
  %v8499 = vsub.s32 %v8496, %v8498
  %v8500 = vrot.slane %v8486, %v8499
  %v8501 = vcombine.high %v8493, %v8493
  %v8502 = vcombine.high %v8500, %v8500
  %v8503 = vcombine.high %v8207, %v8207
  %v8505 = vunpack.c.l.s4 1983009808
  %v8506 = vunpack.c.0.s8 %v8505
  %v8507 = vlaneseq
  %v8508 = vshrl.u32 %v8507, 7
  %v8509 = vsub.s32 %v8506, %v8508
  %v8510 = vrot.slane %v8207, %v8509
  %v8512 = vunpack.c.l.s4 1983009808
  %v8513 = vunpack.c.0.s8 %v8512
  %v8514 = vlaneseq
  %v8515 = vshrl.u32 %v8514, 7
  %v8516 = vsub.s32 %v8513, %v8515
  %v8517 = vrot.slane %v8503, %v8516
  %v8518 = vcombine.high %v8510, %v8510
  %v8519 = vcombine.high %v8517, %v8517
  %v8520 = vcombine.high %v8208, %v8208
  %v8522 = vunpack.c.l.s4 1983009808
  %v8523 = vunpack.c.0.s8 %v8522
  %v8524 = vlaneseq
  %v8525 = vshrl.u32 %v8524, 7
  %v8526 = vsub.s32 %v8523, %v8525
  %v8527 = vrot.slane %v8208, %v8526
  %v8529 = vunpack.c.l.s4 1983009808
  %v8530 = vunpack.c.0.s8 %v8529
  %v8531 = vlaneseq
  %v8532 = vshrl.u32 %v8531, 7
  %v8533 = vsub.s32 %v8530, %v8532
  %v8534 = vrot.slane %v8520, %v8533
  %v8535 = vcombine.high %v8527, %v8527
  %v8536 = vcombine.high %v8534, %v8534
  %v8537 = vcombine.high %v8209, %v8209
  %v8539 = vunpack.c.l.s4 1983009808
  %v8540 = vunpack.c.0.s8 %v8539
  %v8541 = vlaneseq
  %v8542 = vshrl.u32 %v8541, 7
  %v8543 = vsub.s32 %v8540, %v8542
  %v8544 = vrot.slane %v8209, %v8543
  %v8546 = vunpack.c.l.s4 1983009808
  %v8547 = vunpack.c.0.s8 %v8546
  %v8548 = vlaneseq
  %v8549 = vshrl.u32 %v8548, 7
  %v8550 = vsub.s32 %v8547, %v8549
  %v8551 = vrot.slane %v8537, %v8550
  %v8552 = vcombine.high %v8544, %v8544
  %v8553 = vcombine.high %v8551, %v8551
  %v8554 = vcombine.high %v8210, %v8210
  %v8556 = vunpack.c.l.s4 1983009808
  %v8557 = vunpack.c.0.s8 %v8556
  %v8558 = vlaneseq
  %v8559 = vshrl.u32 %v8558, 7
  %v8560 = vsub.s32 %v8557, %v8559
  %v8561 = vrot.slane %v8210, %v8560
  %v8563 = vunpack.c.l.s4 1983009808
  %v8564 = vunpack.c.0.s8 %v8563
  %v8565 = vlaneseq
  %v8566 = vshrl.u32 %v8565, 7
  %v8567 = vsub.s32 %v8564, %v8566
  %v8568 = vrot.slane %v8554, %v8567
  %v8569 = vcombine.high %v8561, %v8561
  %v8570 = vcombine.high %v8568, %v8568
  %v8571 = vcombine.high %v8211, %v8211
  %v8573 = vunpack.c.l.s4 1983009808
  %v8574 = vunpack.c.0.s8 %v8573
  %v8575 = vlaneseq
  %v8576 = vshrl.u32 %v8575, 7
  %v8577 = vsub.s32 %v8574, %v8576
  %v8578 = vrot.slane %v8211, %v8577
  %v8580 = vunpack.c.l.s4 1983009808
  %v8581 = vunpack.c.0.s8 %v8580
  %v8582 = vlaneseq
  %v8583 = vshrl.u32 %v8582, 7
  %v8584 = vsub.s32 %v8581, %v8583
  %v8585 = vrot.slane %v8571, %v8584
  %v8586 = vcombine.high %v8578, %v8578
  %v8587 = vcombine.high %v8585, %v8585
  %v8588 = vcombine.high %v8212, %v8212
  %v8590 = vunpack.c.l.s4 1983009808
  %v8591 = vunpack.c.0.s8 %v8590
  %v8592 = vlaneseq
  %v8593 = vshrl.u32 %v8592, 7
  %v8594 = vsub.s32 %v8591, %v8593
  %v8595 = vrot.slane %v8212, %v8594
  %v8597 = vunpack.c.l.s4 1983009808
  %v8598 = vunpack.c.0.s8 %v8597
  %v8599 = vlaneseq
  %v8600 = vshrl.u32 %v8599, 7
  %v8601 = vsub.s32 %v8598, %v8600
  %v8602 = vrot.slane %v8588, %v8601
  %v8603 = vcombine.high %v8595, %v8595
  %v8604 = vcombine.high %v8602, %v8602
  %v8605 = vcombine.high %v8213, %v8213
  %v8607 = vunpack.c.l.s4 1983009808
  %v8608 = vunpack.c.0.s8 %v8607
  %v8609 = vlaneseq
  %v8610 = vshrl.u32 %v8609, 7
  %v8611 = vsub.s32 %v8608, %v8610
  %v8612 = vrot.slane %v8213, %v8611
  %v8614 = vunpack.c.l.s4 1983009808
  %v8615 = vunpack.c.0.s8 %v8614
  %v8616 = vlaneseq
  %v8617 = vshrl.u32 %v8616, 7
  %v8618 = vsub.s32 %v8615, %v8617
  %v8619 = vrot.slane %v8605, %v8618
  %v8620 = vcombine.high %v8612, %v8612
  %v8621 = vcombine.high %v8619, %v8619
  %v8622 = vcombine.high %v8214, %v8214
  %v8624 = vunpack.c.l.s4 1983009808
  %v8625 = vunpack.c.0.s8 %v8624
  %v8626 = vlaneseq
  %v8627 = vshrl.u32 %v8626, 7
  %v8628 = vsub.s32 %v8625, %v8627
  %v8629 = vrot.slane %v8214, %v8628
  %v8631 = vunpack.c.l.s4 1983009808
  %v8632 = vunpack.c.0.s8 %v8631
  %v8633 = vlaneseq
  %v8634 = vshrl.u32 %v8633, 7
  %v8635 = vsub.s32 %v8632, %v8634
  %v8636 = vrot.slane %v8622, %v8635
  %v8637 = vcombine.high %v8629, %v8629
  %v8638 = vcombine.high %v8636, %v8636
  %v8639 = vcombine.high %v8215, %v8215
  %v8641 = vunpack.c.l.s4 1983009808
  %v8642 = vunpack.c.0.s8 %v8641
  %v8643 = vlaneseq
  %v8644 = vshrl.u32 %v8643, 7
  %v8645 = vsub.s32 %v8642, %v8644
  %v8646 = vrot.slane %v8215, %v8645
  %v8648 = vunpack.c.l.s4 1983009808
  %v8649 = vunpack.c.0.s8 %v8648
  %v8650 = vlaneseq
  %v8651 = vshrl.u32 %v8650, 7
  %v8652 = vsub.s32 %v8649, %v8651
  %v8653 = vrot.slane %v8639, %v8652
  %v8654 = vcombine.high %v8646, %v8646
  %v8655 = vcombine.high %v8653, %v8653
  %v8656 = vcombine.high %v8216, %v8216
  %v8658 = vunpack.c.l.s4 1983009808
  %v8659 = vunpack.c.0.s8 %v8658
  %v8660 = vlaneseq
  %v8661 = vshrl.u32 %v8660, 7
  %v8662 = vsub.s32 %v8659, %v8661
  %v8663 = vrot.slane %v8216, %v8662
  %v8665 = vunpack.c.l.s4 1983009808
  %v8666 = vunpack.c.0.s8 %v8665
  %v8667 = vlaneseq
  %v8668 = vshrl.u32 %v8667, 7
  %v8669 = vsub.s32 %v8666, %v8668
  %v8670 = vrot.slane %v8656, %v8669
  %v8671 = vcombine.high %v8663, %v8663
  %v8672 = vcombine.high %v8670, %v8670
  %v8673 = vcombine.high %v8217, %v8217
  %v8675 = vunpack.c.l.s4 1983009808
  %v8676 = vunpack.c.0.s8 %v8675
  %v8677 = vlaneseq
  %v8678 = vshrl.u32 %v8677, 7
  %v8679 = vsub.s32 %v8676, %v8678
  %v8680 = vrot.slane %v8217, %v8679
  %v8682 = vunpack.c.l.s4 1983009808
  %v8683 = vunpack.c.0.s8 %v8682
  %v8684 = vlaneseq
  %v8685 = vshrl.u32 %v8684, 7
  %v8686 = vsub.s32 %v8683, %v8685
  %v8687 = vrot.slane %v8673, %v8686
  %v8688 = vcombine.high %v8680, %v8680
  %v8689 = vcombine.high %v8687, %v8687
  %v8690 = vcombine.high %v8218, %v8218
  %v8692 = vunpack.c.l.s4 1983009808
  %v8693 = vunpack.c.0.s8 %v8692
  %v8694 = vlaneseq
  %v8695 = vshrl.u32 %v8694, 7
  %v8696 = vsub.s32 %v8693, %v8695
  %v8697 = vrot.slane %v8218, %v8696
  %v8699 = vunpack.c.l.s4 1983009808
  %v8700 = vunpack.c.0.s8 %v8699
  %v8701 = vlaneseq
  %v8702 = vshrl.u32 %v8701, 7
  %v8703 = vsub.s32 %v8700, %v8702
  %v8704 = vrot.slane %v8690, %v8703
  %v8705 = vcombine.high %v8697, %v8697
  %v8706 = vcombine.high %v8704, %v8704
  %v8707 = vcombine.high %v8219, %v8219
  %v8709 = vunpack.c.l.s4 1983009808
  %v8710 = vunpack.c.0.s8 %v8709
  %v8711 = vlaneseq
  %v8712 = vshrl.u32 %v8711, 7
  %v8713 = vsub.s32 %v8710, %v8712
  %v8714 = vrot.slane %v8219, %v8713
  %v8716 = vunpack.c.l.s4 1983009808
  %v8717 = vunpack.c.0.s8 %v8716
  %v8718 = vlaneseq
  %v8719 = vshrl.u32 %v8718, 7
  %v8720 = vsub.s32 %v8717, %v8719
  %v8721 = vrot.slane %v8707, %v8720
  %v8722 = vcombine.high %v8714, %v8714
  %v8723 = vcombine.high %v8721, %v8721
  %vm8724 = vcmask 1042434
  %vm8725 = vmor %vm7984, %vm8724
  %vm8726 = vcmask 1044484
  %vm8727 = vmor %vm8725, %vm8726
  %vm8728 = vcmask 1046534
  %vm8729 = vmor %vm8727, %vm8728
  %v8730 = vrot.slane %v8255, 7
  %v8731 = vrot.slane %v8730, 2
  %v8732 = vrot.slane %v8263, 7
  %v8733 = vsel %vm8729, %v8731, %v8732
  %v8734 = vrot.slane %v8732, 2
  %v8735 = vrot.slane %v8262, 7
  %v8736 = vsel %vm8729, %v8734, %v8735
  %v8737 = vrot.slane %v8735, 2
  %v8738 = vrot.slane %v8264, 7
  %v8739 = vsel %vm8729, %v8737, %v8738
  %v8740 = vrot.slane %v8738, 2
  %v8741 = vrot.slane %v8272, 7
  %v8742 = vsel %vm8729, %v8740, %v8741
  %v8743 = vrot.slane %v8741, 2
  %v8744 = vrot.slane %v8280, 7
  %v8745 = vsel %vm8729, %v8743, %v8744
  %v8746 = vrot.slane %v8744, 2
  %v8747 = vrot.slane %v8279, 7
  %v8748 = vsel %vm8729, %v8746, %v8747
  %v8749 = vrot.slane %v8747, 2
  %v8750 = vrot.slane %v8281, 7
  %v8751 = vsel %vm8729, %v8749, %v8750
  %v8752 = vrot.slane %v8289, 7
  %v8753 = vrot.slane %v8752, 2
  %v8754 = vrot.slane %v8297, 7
  %v8755 = vsel %vm8729, %v8753, %v8754
  %v8756 = vrot.slane %v8754, 2
  %v8757 = vrot.slane %v8296, 7
  %v8758 = vsel %vm8729, %v8756, %v8757
  %v8759 = vrot.slane %v8757, 2
  %v8760 = vrot.slane %v8298, 7
  %v8761 = vsel %vm8729, %v8759, %v8760
  %v8762 = vrot.slane %v8760, 2
  %v8763 = vrot.slane %v8306, 7
  %v8764 = vsel %vm8729, %v8762, %v8763
  %v8765 = vrot.slane %v8763, 2
  %v8766 = vrot.slane %v8314, 7
  %v8767 = vsel %vm8729, %v8765, %v8766
  %v8768 = vrot.slane %v8766, 2
  %v8769 = vrot.slane %v8313, 7
  %v8770 = vsel %vm8729, %v8768, %v8769
  %v8771 = vrot.slane %v8769, 2
  %v8772 = vrot.slane %v8315, 7
  %v8773 = vsel %vm8729, %v8771, %v8772
  %v8774 = vrot.slane %v8323, 7
  %v8775 = vrot.slane %v8774, 2
  %v8776 = vrot.slane %v8331, 7
  %v8777 = vsel %vm8729, %v8775, %v8776
  %v8778 = vrot.slane %v8776, 2
  %v8779 = vrot.slane %v8330, 7
  %v8780 = vsel %vm8729, %v8778, %v8779
  %v8781 = vrot.slane %v8779, 2
  %v8782 = vrot.slane %v8332, 7
  %v8783 = vsel %vm8729, %v8781, %v8782
  %v8784 = vrot.slane %v8782, 2
  %v8785 = vrot.slane %v8340, 7
  %v8786 = vsel %vm8729, %v8784, %v8785
  %v8787 = vrot.slane %v8785, 2
  %v8788 = vrot.slane %v8348, 7
  %v8789 = vsel %vm8729, %v8787, %v8788
  %v8790 = vrot.slane %v8788, 2
  %v8791 = vrot.slane %v8347, 7
  %v8792 = vsel %vm8729, %v8790, %v8791
  %v8793 = vrot.slane %v8791, 2
  %v8794 = vrot.slane %v8349, 7
  %v8795 = vsel %vm8729, %v8793, %v8794
  %v8796 = vrot.slane %v8357, 7
  %v8797 = vrot.slane %v8796, 2
  %v8798 = vrot.slane %v8365, 7
  %v8799 = vsel %vm8729, %v8797, %v8798
  %v8800 = vrot.slane %v8798, 2
  %v8801 = vrot.slane %v8364, 7
  %v8802 = vsel %vm8729, %v8800, %v8801
  %v8803 = vrot.slane %v8801, 2
  %v8804 = vrot.slane %v8366, 7
  %v8805 = vsel %vm8729, %v8803, %v8804
  %v8806 = vrot.slane %v8804, 2
  %v8807 = vrot.slane %v8374, 7
  %v8808 = vsel %vm8729, %v8806, %v8807
  %v8809 = vrot.slane %v8807, 2
  %v8810 = vrot.slane %v8382, 7
  %v8811 = vsel %vm8729, %v8809, %v8810
  %v8812 = vrot.slane %v8810, 2
  %v8813 = vrot.slane %v8381, 7
  %v8814 = vsel %vm8729, %v8812, %v8813
  %v8815 = vrot.slane %v8813, 2
  %v8816 = vrot.slane %v8383, 7
  %v8817 = vsel %vm8729, %v8815, %v8816
  %v8818 = vrot.slane %v8391, 7
  %v8819 = vrot.slane %v8818, 2
  %v8820 = vrot.slane %v8399, 7
  %v8821 = vsel %vm8729, %v8819, %v8820
  %v8822 = vrot.slane %v8820, 2
  %v8823 = vrot.slane %v8398, 7
  %v8824 = vsel %vm8729, %v8822, %v8823
  %v8825 = vrot.slane %v8823, 2
  %v8826 = vrot.slane %v8400, 7
  %v8827 = vsel %vm8729, %v8825, %v8826
  %v8828 = vrot.slane %v8826, 2
  %v8829 = vrot.slane %v8408, 7
  %v8830 = vsel %vm8729, %v8828, %v8829
  %v8831 = vrot.slane %v8829, 2
  %v8832 = vrot.slane %v8416, 7
  %v8833 = vsel %vm8729, %v8831, %v8832
  %v8834 = vrot.slane %v8832, 2
  %v8835 = vrot.slane %v8415, 7
  %v8836 = vsel %vm8729, %v8834, %v8835
  %v8837 = vrot.slane %v8835, 2
  %v8838 = vrot.slane %v8417, 7
  %v8839 = vsel %vm8729, %v8837, %v8838
  %v8840 = vrot.slane %v8425, 7
  %v8841 = vrot.slane %v8840, 2
  %v8842 = vrot.slane %v8433, 7
  %v8843 = vsel %vm8729, %v8841, %v8842
  %v8844 = vrot.slane %v8842, 2
  %v8845 = vrot.slane %v8432, 7
  %v8846 = vsel %vm8729, %v8844, %v8845
  %v8847 = vrot.slane %v8845, 2
  %v8848 = vrot.slane %v8434, 7
  %v8849 = vsel %vm8729, %v8847, %v8848
  %v8850 = vrot.slane %v8848, 2
  %v8851 = vrot.slane %v8442, 7
  %v8852 = vsel %vm8729, %v8850, %v8851
  %v8853 = vrot.slane %v8851, 2
  %v8854 = vrot.slane %v8450, 7
  %v8855 = vsel %vm8729, %v8853, %v8854
  %v8856 = vrot.slane %v8854, 2
  %v8857 = vrot.slane %v8449, 7
  %v8858 = vsel %vm8729, %v8856, %v8857
  %v8859 = vrot.slane %v8857, 2
  %v8860 = vrot.slane %v8451, 7
  %v8861 = vsel %vm8729, %v8859, %v8860
  %v8862 = vrot.slane %v8459, 7
  %v8863 = vrot.slane %v8862, 2
  %v8864 = vrot.slane %v8467, 7
  %v8865 = vsel %vm8729, %v8863, %v8864
  %v8866 = vrot.slane %v8864, 2
  %v8867 = vrot.slane %v8466, 7
  %v8868 = vsel %vm8729, %v8866, %v8867
  %v8869 = vrot.slane %v8867, 2
  %v8870 = vrot.slane %v8468, 7
  %v8871 = vsel %vm8729, %v8869, %v8870
  %v8872 = vrot.slane %v8870, 2
  %v8873 = vrot.slane %v8476, 7
  %v8874 = vsel %vm8729, %v8872, %v8873
  %v8875 = vrot.slane %v8873, 2
  %v8876 = vrot.slane %v8484, 7
  %v8877 = vsel %vm8729, %v8875, %v8876
  %v8878 = vrot.slane %v8876, 2
  %v8879 = vrot.slane %v8483, 7
  %v8880 = vsel %vm8729, %v8878, %v8879
  %v8881 = vrot.slane %v8879, 2
  %v8882 = vrot.slane %v8485, 7
  %v8883 = vsel %vm8729, %v8881, %v8882
  %v8884 = vrot.slane %v8493, 7
  %v8885 = vrot.slane %v8884, 2
  %v8886 = vrot.slane %v8501, 7
  %v8887 = vsel %vm8729, %v8885, %v8886
  %v8888 = vrot.slane %v8886, 2
  %v8889 = vrot.slane %v8500, 7
  %v8890 = vsel %vm8729, %v8888, %v8889
  %v8891 = vrot.slane %v8889, 2
  %v8892 = vrot.slane %v8502, 7
  %v8893 = vsel %vm8729, %v8891, %v8892
  %v8894 = vrot.slane %v8892, 2
  %v8895 = vrot.slane %v8510, 7
  %v8896 = vsel %vm8729, %v8894, %v8895
  %v8897 = vrot.slane %v8895, 2
  %v8898 = vrot.slane %v8518, 7
  %v8899 = vsel %vm8729, %v8897, %v8898
  %v8900 = vrot.slane %v8898, 2
  %v8901 = vrot.slane %v8517, 7
  %v8902 = vsel %vm8729, %v8900, %v8901
  %v8903 = vrot.slane %v8901, 2
  %v8904 = vrot.slane %v8519, 7
  %v8905 = vsel %vm8729, %v8903, %v8904
  %v8906 = vrot.slane %v8527, 7
  %v8907 = vrot.slane %v8906, 2
  %v8908 = vrot.slane %v8535, 7
  %v8909 = vsel %vm8729, %v8907, %v8908
  %v8910 = vrot.slane %v8908, 2
  %v8911 = vrot.slane %v8534, 7
  %v8912 = vsel %vm8729, %v8910, %v8911
  %v8913 = vrot.slane %v8911, 2
  %v8914 = vrot.slane %v8536, 7
  %v8915 = vsel %vm8729, %v8913, %v8914
  %v8916 = vrot.slane %v8914, 2
  %v8917 = vrot.slane %v8544, 7
  %v8918 = vsel %vm8729, %v8916, %v8917
  %v8919 = vrot.slane %v8917, 2
  %v8920 = vrot.slane %v8552, 7
  %v8921 = vsel %vm8729, %v8919, %v8920
  %v8922 = vrot.slane %v8920, 2
  %v8923 = vrot.slane %v8551, 7
  %v8924 = vsel %vm8729, %v8922, %v8923
  %v8925 = vrot.slane %v8923, 2
  %v8926 = vrot.slane %v8553, 7
  %v8927 = vsel %vm8729, %v8925, %v8926
  %v8928 = vrot.slane %v8561, 7
  %v8929 = vrot.slane %v8928, 2
  %v8930 = vrot.slane %v8569, 7
  %v8931 = vsel %vm8729, %v8929, %v8930
  %v8932 = vrot.slane %v8930, 2
  %v8933 = vrot.slane %v8568, 7
  %v8934 = vsel %vm8729, %v8932, %v8933
  %v8935 = vrot.slane %v8933, 2
  %v8936 = vrot.slane %v8570, 7
  %v8937 = vsel %vm8729, %v8935, %v8936
  %v8938 = vrot.slane %v8936, 2
  %v8939 = vrot.slane %v8578, 7
  %v8940 = vsel %vm8729, %v8938, %v8939
  %v8941 = vrot.slane %v8939, 2
  %v8942 = vrot.slane %v8586, 7
  %v8943 = vsel %vm8729, %v8941, %v8942
  %v8944 = vrot.slane %v8942, 2
  %v8945 = vrot.slane %v8585, 7
  %v8946 = vsel %vm8729, %v8944, %v8945
  %v8947 = vrot.slane %v8945, 2
  %v8948 = vrot.slane %v8587, 7
  %v8949 = vsel %vm8729, %v8947, %v8948
  %v8950 = vrot.slane %v8595, 7
  %v8951 = vrot.slane %v8950, 2
  %v8952 = vrot.slane %v8603, 7
  %v8953 = vsel %vm8729, %v8951, %v8952
  %v8954 = vrot.slane %v8952, 2
  %v8955 = vrot.slane %v8602, 7
  %v8956 = vsel %vm8729, %v8954, %v8955
  %v8957 = vrot.slane %v8955, 2
  %v8958 = vrot.slane %v8604, 7
  %v8959 = vsel %vm8729, %v8957, %v8958
  %v8960 = vrot.slane %v8958, 2
  %v8961 = vrot.slane %v8612, 7
  %v8962 = vsel %vm8729, %v8960, %v8961
  %v8963 = vrot.slane %v8961, 2
  %v8964 = vrot.slane %v8620, 7
  %v8965 = vsel %vm8729, %v8963, %v8964
  %v8966 = vrot.slane %v8964, 2
  %v8967 = vrot.slane %v8619, 7
  %v8968 = vsel %vm8729, %v8966, %v8967
  %v8969 = vrot.slane %v8967, 2
  %v8970 = vrot.slane %v8621, 7
  %v8971 = vsel %vm8729, %v8969, %v8970
  %v8972 = vrot.slane %v8629, 7
  %v8973 = vrot.slane %v8972, 2
  %v8974 = vrot.slane %v8637, 7
  %v8975 = vsel %vm8729, %v8973, %v8974
  %v8976 = vrot.slane %v8974, 2
  %v8977 = vrot.slane %v8636, 7
  %v8978 = vsel %vm8729, %v8976, %v8977
  %v8979 = vrot.slane %v8977, 2
  %v8980 = vrot.slane %v8638, 7
  %v8981 = vsel %vm8729, %v8979, %v8980
  %v8982 = vrot.slane %v8980, 2
  %v8983 = vrot.slane %v8646, 7
  %v8984 = vsel %vm8729, %v8982, %v8983
  %v8985 = vrot.slane %v8983, 2
  %v8986 = vrot.slane %v8654, 7
  %v8987 = vsel %vm8729, %v8985, %v8986
  %v8988 = vrot.slane %v8986, 2
  %v8989 = vrot.slane %v8653, 7
  %v8990 = vsel %vm8729, %v8988, %v8989
  %v8991 = vrot.slane %v8989, 2
  %v8992 = vrot.slane %v8655, 7
  %v8993 = vsel %vm8729, %v8991, %v8992
  %v8994 = vrot.slane %v8663, 7
  %v8995 = vrot.slane %v8994, 2
  %v8996 = vrot.slane %v8671, 7
  %v8997 = vsel %vm8729, %v8995, %v8996
  %v8998 = vrot.slane %v8996, 2
  %v8999 = vrot.slane %v8670, 7
  %v9000 = vsel %vm8729, %v8998, %v8999
  %v9001 = vrot.slane %v8999, 2
  %v9002 = vrot.slane %v8672, 7
  %v9003 = vsel %vm8729, %v9001, %v9002
  %v9004 = vrot.slane %v9002, 2
  %v9005 = vrot.slane %v8680, 7
  %v9006 = vsel %vm8729, %v9004, %v9005
  %v9007 = vrot.slane %v9005, 2
  %v9008 = vrot.slane %v8688, 7
  %v9009 = vsel %vm8729, %v9007, %v9008
  %v9010 = vrot.slane %v9008, 2
  %v9011 = vrot.slane %v8687, 7
  %v9012 = vsel %vm8729, %v9010, %v9011
  %v9013 = vrot.slane %v9011, 2
  %v9014 = vrot.slane %v8689, 7
  %v9015 = vsel %vm8729, %v9013, %v9014
  %v9016 = vrot.slane %v8697, 7
  %v9017 = vrot.slane %v9016, 2
  %v9018 = vrot.slane %v8705, 7
  %v9019 = vsel %vm8729, %v9017, %v9018
  %v9020 = vrot.slane %v9018, 2
  %v9021 = vrot.slane %v8704, 7
  %v9022 = vsel %vm8729, %v9020, %v9021
  %v9023 = vrot.slane %v9021, 2
  %v9024 = vrot.slane %v8706, 7
  %v9025 = vsel %vm8729, %v9023, %v9024
  %v9026 = vrot.slane %v9024, 2
  %v9027 = vrot.slane %v8714, 7
  %v9028 = vsel %vm8729, %v9026, %v9027
  %v9029 = vrot.slane %v9027, 2
  %v9030 = vrot.slane %v8722, 7
  %v9031 = vsel %vm8729, %v9029, %v9030
  %v9032 = vrot.slane %v9030, 2
  %v9033 = vrot.slane %v8721, 7
  %v9034 = vsel %vm8729, %v9032, %v9033
  %v9035 = vrot.slane %v9033, 2
  %v9036 = vrot.slane %v8723, 7
  %v9037 = vsel %vm8729, %v9035, %v9036
  %v9136 = vrot.slane %v8733, 7
  %v9137 = vrot.slane %v9136, 2
  %v9138 = vrot.slane %v8736, 7
  %v9139 = vrot.slane %v9138, 2
  %v9140 = vrot.slane %v8739, 7
  %v9141 = vrot.slane %v9140, 2
  %v9142 = vrot.slane %v8742, 7
  %v9143 = vrot.slane %v9142, 2
  %v9144 = vrot.slane %v8745, 7
  %v9145 = vrot.slane %v9144, 2
  %v9146 = vrot.slane %v8748, 7
  %v9147 = vrot.slane %v9146, 2
  %v9148 = vrot.slane %v8751, 7
  %v9149 = vrot.slane %v9148, 2
  %v9150 = vrot.slane %v8755, 7
  %v9151 = vrot.slane %v9150, 2
  %v9152 = vrot.slane %v8758, 7
  %v9153 = vrot.slane %v9152, 2
  %v9154 = vrot.slane %v8761, 7
  %v9155 = vrot.slane %v9154, 2
  %v9156 = vrot.slane %v8764, 7
  %v9157 = vrot.slane %v9156, 2
  %v9158 = vrot.slane %v8767, 7
  %v9159 = vrot.slane %v9158, 2
  %v9160 = vrot.slane %v8770, 7
  %v9161 = vrot.slane %v9160, 2
  %v9162 = vrot.slane %v8773, 7
  %v9163 = vrot.slane %v9162, 2
  %v9164 = vrot.slane %v8777, 7
  %v9165 = vrot.slane %v9164, 2
  %v9166 = vrot.slane %v8780, 7
  %v9167 = vrot.slane %v9166, 2
  %v9168 = vrot.slane %v8783, 7
  %v9169 = vrot.slane %v9168, 2
  %v9170 = vrot.slane %v8786, 7
  %v9171 = vrot.slane %v9170, 2
  %v9172 = vrot.slane %v8789, 7
  %v9173 = vrot.slane %v9172, 2
  %v9174 = vrot.slane %v8792, 7
  %v9175 = vrot.slane %v9174, 2
  %v9176 = vrot.slane %v8795, 7
  %v9177 = vrot.slane %v9176, 2
  %v9178 = vrot.slane %v8799, 7
  %v9179 = vrot.slane %v9178, 2
  %v9180 = vrot.slane %v8802, 7
  %v9181 = vrot.slane %v9180, 2
  %v9182 = vrot.slane %v8805, 7
  %v9183 = vrot.slane %v9182, 2
  %v9184 = vrot.slane %v8808, 7
  %v9185 = vrot.slane %v9184, 2
  %v9186 = vrot.slane %v8811, 7
  %v9187 = vrot.slane %v9186, 2
  %v9188 = vrot.slane %v8814, 7
  %v9189 = vrot.slane %v9188, 2
  %v9190 = vrot.slane %v8817, 7
  %v9191 = vrot.slane %v9190, 2
  %v9192 = vrot.slane %v8821, 7
  %v9193 = vrot.slane %v9192, 2
  %v9194 = vrot.slane %v8824, 7
  %v9195 = vrot.slane %v9194, 2
  %v9196 = vrot.slane %v8827, 7
  %v9197 = vrot.slane %v9196, 2
  %v9198 = vrot.slane %v8830, 7
  %v9199 = vrot.slane %v9198, 2
  %v9200 = vrot.slane %v8833, 7
  %v9201 = vrot.slane %v9200, 2
  %v9202 = vrot.slane %v8836, 7
  %v9203 = vrot.slane %v9202, 2
  %v9204 = vrot.slane %v8839, 7
  %v9205 = vrot.slane %v9204, 2
  %v9206 = vrot.slane %v8843, 7
  %v9207 = vrot.slane %v9206, 2
  %v9208 = vrot.slane %v8846, 7
  %v9209 = vrot.slane %v9208, 2
  %v9210 = vrot.slane %v8849, 7
  %v9211 = vrot.slane %v9210, 2
  %v9212 = vrot.slane %v8852, 7
  %v9213 = vrot.slane %v9212, 2
  %v9214 = vrot.slane %v8855, 7
  %v9215 = vrot.slane %v9214, 2
  %v9216 = vrot.slane %v8858, 7
  %v9217 = vrot.slane %v9216, 2
  %v9218 = vrot.slane %v8861, 7
  %v9219 = vrot.slane %v9218, 2
  %v9220 = vrot.slane %v8865, 7
  %v9221 = vrot.slane %v9220, 2
  %v9222 = vrot.slane %v8868, 7
  %v9223 = vrot.slane %v9222, 2
  %v9224 = vrot.slane %v8871, 7
  %v9225 = vrot.slane %v9224, 2
  %v9226 = vrot.slane %v8874, 7
  %v9227 = vrot.slane %v9226, 2
  %v9228 = vrot.slane %v8877, 7
  %v9229 = vrot.slane %v9228, 2
  %v9230 = vrot.slane %v8880, 7
  %v9231 = vrot.slane %v9230, 2
  %v9232 = vrot.slane %v8883, 7
  %v9233 = vrot.slane %v9232, 2
  %v9234 = vrot.slane %v8887, 7
  %v9235 = vrot.slane %v9234, 2
  %v9236 = vrot.slane %v8890, 7
  %v9237 = vrot.slane %v9236, 2
  %v9238 = vrot.slane %v8893, 7
  %v9239 = vrot.slane %v9238, 2
  %v9240 = vrot.slane %v8896, 7
  %v9241 = vrot.slane %v9240, 2
  %v9242 = vrot.slane %v8899, 7
  %v9243 = vrot.slane %v9242, 2
  %v9244 = vrot.slane %v8902, 7
  %v9245 = vrot.slane %v9244, 2
  %v9246 = vrot.slane %v8905, 7
  %v9247 = vrot.slane %v9246, 2
  %v9248 = vrot.slane %v8909, 7
  %v9249 = vrot.slane %v9248, 2
  %v9250 = vrot.slane %v8912, 7
  %v9251 = vrot.slane %v9250, 2
  %v9252 = vrot.slane %v8915, 7
  %v9253 = vrot.slane %v9252, 2
  %v9254 = vrot.slane %v8918, 7
  %v9255 = vrot.slane %v9254, 2
  %v9256 = vrot.slane %v8921, 7
  %v9257 = vrot.slane %v9256, 2
  %v9258 = vrot.slane %v8924, 7
  %v9259 = vrot.slane %v9258, 2
  %v9260 = vrot.slane %v8927, 7
  %v9261 = vrot.slane %v9260, 2
  %v9262 = vrot.slane %v8931, 7
  %v9263 = vrot.slane %v9262, 2
  %v9264 = vrot.slane %v8934, 7
  %v9265 = vrot.slane %v9264, 2
  %v9266 = vrot.slane %v8937, 7
  %v9267 = vrot.slane %v9266, 2
  %v9268 = vrot.slane %v8940, 7
  %v9269 = vrot.slane %v9268, 2
  %v9270 = vrot.slane %v8943, 7
  %v9271 = vrot.slane %v9270, 2
  %v9272 = vrot.slane %v8946, 7
  %v9273 = vrot.slane %v9272, 2
  %v9274 = vrot.slane %v8949, 7
  %v9275 = vrot.slane %v9274, 2
  %v9276 = vrot.slane %v8953, 7
  %v9277 = vrot.slane %v9276, 2
  %v9278 = vrot.slane %v8956, 7
  %v9279 = vrot.slane %v9278, 2
  %v9280 = vrot.slane %v8959, 7
  %v9281 = vrot.slane %v9280, 2
  %v9282 = vrot.slane %v8962, 7
  %v9283 = vrot.slane %v9282, 2
  %v9284 = vrot.slane %v8965, 7
  %v9285 = vrot.slane %v9284, 2
  %v9286 = vrot.slane %v8968, 7
  %v9287 = vrot.slane %v9286, 2
  %v9288 = vrot.slane %v8971, 7
  %v9289 = vrot.slane %v9288, 2
  %v9290 = vrot.slane %v8975, 7
  %v9291 = vrot.slane %v9290, 2
  %v9292 = vrot.slane %v8978, 7
  %v9293 = vrot.slane %v9292, 2
  %v9294 = vrot.slane %v8981, 7
  %v9295 = vrot.slane %v9294, 2
  %v9296 = vrot.slane %v8984, 7
  %v9297 = vrot.slane %v9296, 2
  %v9298 = vrot.slane %v8987, 7
  %v9299 = vrot.slane %v9298, 2
  %v9300 = vrot.slane %v8990, 7
  %v9301 = vrot.slane %v9300, 2
  %v9302 = vrot.slane %v8993, 7
  %v9303 = vrot.slane %v9302, 2
  %v9304 = vrot.slane %v8997, 7
  %v9305 = vrot.slane %v9304, 2
  %v9306 = vrot.slane %v9000, 7
  %v9307 = vrot.slane %v9306, 2
  %v9308 = vrot.slane %v9003, 7
  %v9309 = vrot.slane %v9308, 2
  %v9310 = vrot.slane %v9006, 7
  %v9311 = vrot.slane %v9310, 2
  %v9312 = vrot.slane %v9009, 7
  %v9313 = vrot.slane %v9312, 2
  %v9314 = vrot.slane %v9012, 7
  %v9315 = vrot.slane %v9314, 2
  %v9316 = vrot.slane %v9015, 7
  %v9317 = vrot.slane %v9316, 2
  %v9318 = vrot.slane %v9019, 7
  %v9319 = vrot.slane %v9318, 2
  %v9320 = vrot.slane %v9022, 7
  %v9321 = vrot.slane %v9320, 2
  %v9322 = vrot.slane %v9025, 7
  %v9323 = vrot.slane %v9322, 2
  %v9324 = vrot.slane %v9028, 7
  %v9325 = vrot.slane %v9324, 2
  %v9326 = vrot.slane %v9031, 7
  %v9327 = vrot.slane %v9326, 2
  %v9328 = vrot.slane %v9034, 7
  %v9329 = vrot.slane %v9328, 2
  %v9330 = vrot.slane %v9037, 7
  %v9331 = vrot.slane %v9330, 2
  %v9430 = vmax.f32 %v8733, %v9137
  %v9431 = vmax.f32 %v8736, %v9139
  %v9432 = vmax.f32 %v8739, %v9141
  %v9433 = vmax.f32 %v8742, %v9143
  %v9434 = vmax.f32 %v8745, %v9145
  %v9435 = vmax.f32 %v8748, %v9147
  %v9436 = vmax.f32 %v8751, %v9149
  %v9437 = vmax.f32 %v8755, %v9151
  %v9438 = vmax.f32 %v8758, %v9153
  %v9439 = vmax.f32 %v8761, %v9155
  %v9440 = vmax.f32 %v8764, %v9157
  %v9441 = vmax.f32 %v8767, %v9159
  %v9442 = vmax.f32 %v8770, %v9161
  %v9443 = vmax.f32 %v8773, %v9163
  %v9444 = vmax.f32 %v8777, %v9165
  %v9445 = vmax.f32 %v8780, %v9167
  %v9446 = vmax.f32 %v8783, %v9169
  %v9447 = vmax.f32 %v8786, %v9171
  %v9448 = vmax.f32 %v8789, %v9173
  %v9449 = vmax.f32 %v8792, %v9175
  %v9450 = vmax.f32 %v8795, %v9177
  %v9451 = vmax.f32 %v8799, %v9179
  %v9452 = vmax.f32 %v8802, %v9181
  %v9453 = vmax.f32 %v8805, %v9183
  %v9454 = vmax.f32 %v8808, %v9185
  %v9455 = vmax.f32 %v8811, %v9187
  %v9456 = vmax.f32 %v8814, %v9189
  %v9457 = vmax.f32 %v8817, %v9191
  %v9458 = vmax.f32 %v8821, %v9193
  %v9459 = vmax.f32 %v8824, %v9195
  %v9460 = vmax.f32 %v8827, %v9197
  %v9461 = vmax.f32 %v8830, %v9199
  %v9462 = vmax.f32 %v8833, %v9201
  %v9463 = vmax.f32 %v8836, %v9203
  %v9464 = vmax.f32 %v8839, %v9205
  %v9465 = vmax.f32 %v8843, %v9207
  %v9466 = vmax.f32 %v8846, %v9209
  %v9467 = vmax.f32 %v8849, %v9211
  %v9468 = vmax.f32 %v8852, %v9213
  %v9469 = vmax.f32 %v8855, %v9215
  %v9470 = vmax.f32 %v8858, %v9217
  %v9471 = vmax.f32 %v8861, %v9219
  %v9472 = vmax.f32 %v8865, %v9221
  %v9473 = vmax.f32 %v8868, %v9223
  %v9474 = vmax.f32 %v8871, %v9225
  %v9475 = vmax.f32 %v8874, %v9227
  %v9476 = vmax.f32 %v8877, %v9229
  %v9477 = vmax.f32 %v8880, %v9231
  %v9478 = vmax.f32 %v8883, %v9233
  %v9479 = vmax.f32 %v8887, %v9235
  %v9480 = vmax.f32 %v8890, %v9237
  %v9481 = vmax.f32 %v8893, %v9239
  %v9482 = vmax.f32 %v8896, %v9241
  %v9483 = vmax.f32 %v8899, %v9243
  %v9484 = vmax.f32 %v8902, %v9245
  %v9485 = vmax.f32 %v8905, %v9247
  %v9486 = vmax.f32 %v8909, %v9249
  %v9487 = vmax.f32 %v8912, %v9251
  %v9488 = vmax.f32 %v8915, %v9253
  %v9489 = vmax.f32 %v8918, %v9255
  %v9490 = vmax.f32 %v8921, %v9257
  %v9491 = vmax.f32 %v8924, %v9259
  %v9492 = vmax.f32 %v8927, %v9261
  %v9493 = vmax.f32 %v8931, %v9263
  %v9494 = vmax.f32 %v8934, %v9265
  %v9495 = vmax.f32 %v8937, %v9267
  %v9496 = vmax.f32 %v8940, %v9269
  %v9497 = vmax.f32 %v8943, %v9271
  %v9498 = vmax.f32 %v8946, %v9273
  %v9499 = vmax.f32 %v8949, %v9275
  %v9500 = vmax.f32 %v8953, %v9277
  %v9501 = vmax.f32 %v8956, %v9279
  %v9502 = vmax.f32 %v8959, %v9281
  %v9503 = vmax.f32 %v8962, %v9283
  %v9504 = vmax.f32 %v8965, %v9285
  %v9505 = vmax.f32 %v8968, %v9287
  %v9506 = vmax.f32 %v8971, %v9289
  %v9507 = vmax.f32 %v8975, %v9291
  %v9508 = vmax.f32 %v8978, %v9293
  %v9509 = vmax.f32 %v8981, %v9295
  %v9510 = vmax.f32 %v8984, %v9297
  %v9511 = vmax.f32 %v8987, %v9299
  %v9512 = vmax.f32 %v8990, %v9301
  %v9513 = vmax.f32 %v8993, %v9303
  %v9514 = vmax.f32 %v8997, %v9305
  %v9515 = vmax.f32 %v9000, %v9307
  %v9516 = vmax.f32 %v9003, %v9309
  %v9517 = vmax.f32 %v9006, %v9311
  %v9518 = vmax.f32 %v9009, %v9313
  %v9519 = vmax.f32 %v9012, %v9315
  %v9520 = vmax.f32 %v9015, %v9317
  %v9521 = vmax.f32 %v9019, %v9319
  %v9522 = vmax.f32 %v9022, %v9321
  %v9523 = vmax.f32 %v9025, %v9323
  %v9524 = vmax.f32 %v9028, %v9325
  %v9525 = vmax.f32 %v9031, %v9327
  %v9526 = vmax.f32 %v9034, %v9329
  %v9527 = vmax.f32 %v9037, %v9331
  %v9528 = vpack.c.bf16 %v9430, %v9430
  %v9529 = vpack.c.bf16 %v9431, %v9431
  %v9530 = vpack.c.bf16 %v9432, %v9432
  %v9531 = vpack.c.bf16 %v9433, %v9433
  %v9532 = vpack.c.bf16 %v9434, %v9434
  %v9533 = vpack.c.bf16 %v9435, %v9435
  %v9534 = vpack.c.bf16 %v9436, %v9436
  %v9535 = vpack.c.bf16 %v9437, %v9437
  %v9536 = vpack.c.bf16 %v9438, %v9438
  %v9537 = vpack.c.bf16 %v9439, %v9439
  %v9538 = vpack.c.bf16 %v9440, %v9440
  %v9539 = vpack.c.bf16 %v9441, %v9441
  %v9540 = vpack.c.bf16 %v9442, %v9442
  %v9541 = vpack.c.bf16 %v9443, %v9443
  %v9542 = vpack.c.bf16 %v9444, %v9444
  %v9543 = vpack.c.bf16 %v9445, %v9445
  %v9544 = vpack.c.bf16 %v9446, %v9446
  %v9545 = vpack.c.bf16 %v9447, %v9447
  %v9546 = vpack.c.bf16 %v9448, %v9448
  %v9547 = vpack.c.bf16 %v9449, %v9449
  %v9548 = vpack.c.bf16 %v9450, %v9450
  %v9549 = vpack.c.bf16 %v9451, %v9451
  %v9550 = vpack.c.bf16 %v9452, %v9452
  %v9551 = vpack.c.bf16 %v9453, %v9453
  %v9552 = vpack.c.bf16 %v9454, %v9454
  %v9553 = vpack.c.bf16 %v9455, %v9455
  %v9554 = vpack.c.bf16 %v9456, %v9456
  %v9555 = vpack.c.bf16 %v9457, %v9457
  %v9556 = vpack.c.bf16 %v9458, %v9458
  %v9557 = vpack.c.bf16 %v9459, %v9459
  %v9558 = vpack.c.bf16 %v9460, %v9460
  %v9559 = vpack.c.bf16 %v9461, %v9461
  %v9560 = vpack.c.bf16 %v9462, %v9462
  %v9561 = vpack.c.bf16 %v9463, %v9463
  %v9562 = vpack.c.bf16 %v9464, %v9464
  %v9563 = vpack.c.bf16 %v9465, %v9465
  %v9564 = vpack.c.bf16 %v9466, %v9466
  %v9565 = vpack.c.bf16 %v9467, %v9467
  %v9566 = vpack.c.bf16 %v9468, %v9468
  %v9567 = vpack.c.bf16 %v9469, %v9469
  %v9568 = vpack.c.bf16 %v9470, %v9470
  %v9569 = vpack.c.bf16 %v9471, %v9471
  %v9570 = vpack.c.bf16 %v9472, %v9472
  %v9571 = vpack.c.bf16 %v9473, %v9473
  %v9572 = vpack.c.bf16 %v9474, %v9474
  %v9573 = vpack.c.bf16 %v9475, %v9475
  %v9574 = vpack.c.bf16 %v9476, %v9476
  %v9575 = vpack.c.bf16 %v9477, %v9477
  %v9576 = vpack.c.bf16 %v9478, %v9478
  %v9577 = vpack.c.bf16 %v9479, %v9479
  %v9578 = vpack.c.bf16 %v9480, %v9480
  %v9579 = vpack.c.bf16 %v9481, %v9481
  %v9580 = vpack.c.bf16 %v9482, %v9482
  %v9581 = vpack.c.bf16 %v9483, %v9483
  %v9582 = vpack.c.bf16 %v9484, %v9484
  %v9583 = vpack.c.bf16 %v9485, %v9485
  %v9584 = vpack.c.bf16 %v9486, %v9486
  %v9585 = vpack.c.bf16 %v9487, %v9487
  %v9586 = vpack.c.bf16 %v9488, %v9488
  %v9587 = vpack.c.bf16 %v9489, %v9489
  %v9588 = vpack.c.bf16 %v9490, %v9490
  %v9589 = vpack.c.bf16 %v9491, %v9491
  %v9590 = vpack.c.bf16 %v9492, %v9492
  %v9591 = vpack.c.bf16 %v9493, %v9493
  %v9592 = vpack.c.bf16 %v9494, %v9494
  %v9593 = vpack.c.bf16 %v9495, %v9495
  %v9594 = vpack.c.bf16 %v9496, %v9496
  %v9595 = vpack.c.bf16 %v9497, %v9497
  %v9596 = vpack.c.bf16 %v9498, %v9498
  %v9597 = vpack.c.bf16 %v9499, %v9499
  %v9598 = vpack.c.bf16 %v9500, %v9500
  %v9599 = vpack.c.bf16 %v9501, %v9501
  %v9600 = vpack.c.bf16 %v9502, %v9502
  %v9601 = vpack.c.bf16 %v9503, %v9503
  %v9602 = vpack.c.bf16 %v9504, %v9504
  %v9603 = vpack.c.bf16 %v9505, %v9505
  %v9604 = vpack.c.bf16 %v9506, %v9506
  %v9605 = vpack.c.bf16 %v9507, %v9507
  %v9606 = vpack.c.bf16 %v9508, %v9508
  %v9607 = vpack.c.bf16 %v9509, %v9509
  %v9608 = vpack.c.bf16 %v9510, %v9510
  %v9609 = vpack.c.bf16 %v9511, %v9511
  %v9610 = vpack.c.bf16 %v9512, %v9512
  %v9611 = vpack.c.bf16 %v9513, %v9513
  %v9612 = vpack.c.bf16 %v9514, %v9514
  %v9613 = vpack.c.bf16 %v9515, %v9515
  %v9614 = vpack.c.bf16 %v9516, %v9516
  %v9615 = vpack.c.bf16 %v9517, %v9517
  %v9616 = vpack.c.bf16 %v9518, %v9518
  %v9617 = vpack.c.bf16 %v9519, %v9519
  %v9618 = vpack.c.bf16 %v9520, %v9520
  %v9619 = vpack.c.bf16 %v9521, %v9521
  %v9620 = vpack.c.bf16 %v9522, %v9522
  %v9621 = vpack.c.bf16 %v9523, %v9523
  %v9622 = vpack.c.bf16 %v9524, %v9524
  %v9623 = vpack.c.bf16 %v9525, %v9525
  %v9624 = vpack.c.bf16 %v9526, %v9526
  %v9625 = vpack.c.bf16 %v9527, %v9527
  %v9676 = vunpack.c.l.b16 %v9528
  %v9677 = vunpack.c.l.b16 %v9529
  %v9678 = vunpack.c.l.b16 %v9530
  %v9679 = vunpack.c.l.b16 %v9531
  %v9680 = vunpack.c.l.b16 %v9532
  %v9681 = vunpack.c.l.b16 %v9535
  %v9682 = vunpack.c.l.b16 %v9536
  %v9683 = vunpack.c.l.b16 %v9537
  %v9684 = vunpack.c.l.b16 %v9538
  %v9685 = vunpack.c.l.b16 %v9539
  %v9686 = vunpack.c.l.b16 %v9542
  %v9687 = vunpack.c.l.b16 %v9543
  %v9688 = vunpack.c.l.b16 %v9544
  %v9689 = vunpack.c.l.b16 %v9545
  %v9690 = vunpack.c.l.b16 %v9546
  %v9691 = vunpack.c.l.b16 %v9549
  %v9692 = vunpack.c.l.b16 %v9550
  %v9693 = vunpack.c.l.b16 %v9551
  %v9694 = vunpack.c.l.b16 %v9552
  %v9695 = vunpack.c.l.b16 %v9553
  %v9696 = vunpack.c.l.b16 %v9556
  %v9697 = vunpack.c.l.b16 %v9557
  %v9698 = vunpack.c.l.b16 %v9558
  %v9699 = vunpack.c.l.b16 %v9559
  %v9700 = vunpack.c.l.b16 %v9560
  %v9701 = vunpack.c.l.b16 %v9577
  %v9702 = vunpack.c.l.b16 %v9578
  %v9703 = vunpack.c.l.b16 %v9579
  %v9704 = vunpack.c.l.b16 %v9580
  %v9705 = vunpack.c.l.b16 %v9581
  %v9706 = vunpack.c.l.b16 %v9584
  %v9707 = vunpack.c.l.b16 %v9585
  %v9708 = vunpack.c.l.b16 %v9586
  %v9709 = vunpack.c.l.b16 %v9587
  %v9710 = vunpack.c.l.b16 %v9588
  %v9711 = vunpack.c.l.b16 %v9591
  %v9712 = vunpack.c.l.b16 %v9592
  %v9713 = vunpack.c.l.b16 %v9593
  %v9714 = vunpack.c.l.b16 %v9594
  %v9715 = vunpack.c.l.b16 %v9595
  %v9716 = vunpack.c.l.b16 %v9598
  %v9717 = vunpack.c.l.b16 %v9599
  %v9718 = vunpack.c.l.b16 %v9600
  %v9719 = vunpack.c.l.b16 %v9601
  %v9720 = vunpack.c.l.b16 %v9602
  %v9721 = vunpack.c.l.b16 %v9605
  %v9722 = vunpack.c.l.b16 %v9606
  %v9723 = vunpack.c.l.b16 %v9607
  %v9724 = vunpack.c.l.b16 %v9608
  %v9725 = vunpack.c.l.b16 %v9609
  %v9726 = vrot.slane %v9677, 7
  %vm9727 = vcmask 1041409
  %v9728 = vsel %vm9727, %v9726, %v9676
  %v9729 = vrot.slane %v9678, 6
  %v9730 = vsel %vm8724, %v9729, %v9728
  %v9731 = vrot.slane %v9679, 5
  %vm9732 = vcmask 1043459
  %v9733 = vsel %vm9732, %v9731, %v9730
  %v9734 = vrot.slane %v9680, 4
  %v9735 = vsel %vm8726, %v9734, %v9733
  %v9736 = vrot.slane %v9681, 3
  %vm9737 = vcmask 1045509
  %v9738 = vsel %vm9737, %v9736, %v9735
  %v9739 = vrot.slane %v9682, 2
  %v9740 = vsel %vm8728, %v9739, %v9738
  %v9741 = vrot.slane %v9683, 1
  %vm9742 = vcmask 1047559
  %v9743 = vsel %vm9742, %v9741, %v9740
  %v9744 = vrot.slane %v9685, 7
  %v9745 = vsel %vm9727, %v9744, %v9684
  %v9746 = vrot.slane %v9686, 6
  %v9747 = vsel %vm8724, %v9746, %v9745
  %v9748 = vrot.slane %v9687, 5
  %v9749 = vsel %vm9732, %v9748, %v9747
  %v9750 = vrot.slane %v9688, 4
  %v9751 = vsel %vm8726, %v9750, %v9749
  %v9752 = vrot.slane %v9689, 3
  %v9753 = vsel %vm9737, %v9752, %v9751
  %v9754 = vrot.slane %v9690, 2
  %v9755 = vsel %vm8728, %v9754, %v9753
  %v9756 = vrot.slane %v9691, 1
  %v9757 = vsel %vm9742, %v9756, %v9755
  %v9758 = vrot.slane %v9693, 7
  %v9759 = vsel %vm9727, %v9758, %v9692
  %v9760 = vrot.slane %v9694, 6
  %v9761 = vsel %vm8724, %v9760, %v9759
  %v9762 = vrot.slane %v9695, 5
  %v9763 = vsel %vm9732, %v9762, %v9761
  %v9764 = vrot.slane %v9696, 4
  %v9765 = vsel %vm8726, %v9764, %v9763
  %v9766 = vrot.slane %v9697, 3
  %v9767 = vsel %vm9737, %v9766, %v9765
  %v9768 = vrot.slane %v9698, 2
  %v9769 = vsel %vm8728, %v9768, %v9767
  %v9770 = vrot.slane %v9699, 1
  %v9771 = vsel %vm9742, %v9770, %v9769
  %v9772 = vrot.slane %v9701, 7
  %v9773 = vsel %vm9727, %v9772, %v9700
  %v9774 = vrot.slane %v9702, 6
  %v9775 = vsel %vm8724, %v9774, %v9773
  %v9776 = vrot.slane %v9703, 5
  %v9777 = vsel %vm9732, %v9776, %v9775
  %v9778 = vrot.slane %v9704, 4
  %v9779 = vsel %vm8726, %v9778, %v9777
  %v9780 = vrot.slane %v9705, 3
  %v9781 = vsel %vm9737, %v9780, %v9779
  %v9782 = vrot.slane %v9706, 2
  %v9783 = vsel %vm8728, %v9782, %v9781
  %v9784 = vrot.slane %v9707, 1
  %v9785 = vsel %vm9742, %v9784, %v9783
  %v9786 = vrot.slane %v9709, 7
  %v9787 = vsel %vm9727, %v9786, %v9708
  %v9788 = vrot.slane %v9710, 6
  %v9789 = vsel %vm8724, %v9788, %v9787
  %v9790 = vrot.slane %v9711, 5
  %v9791 = vsel %vm9732, %v9790, %v9789
  %v9792 = vrot.slane %v9712, 4
  %v9793 = vsel %vm8726, %v9792, %v9791
  %v9794 = vrot.slane %v9713, 3
  %v9795 = vsel %vm9737, %v9794, %v9793
  %v9796 = vrot.slane %v9714, 2
  %v9797 = vsel %vm8728, %v9796, %v9795
  %v9798 = vrot.slane %v9715, 1
  %v9799 = vsel %vm9742, %v9798, %v9797
  %v9800 = vrot.slane %v9717, 7
  %v9801 = vsel %vm9727, %v9800, %v9716
  %v9802 = vrot.slane %v9718, 6
  %v9803 = vsel %vm8724, %v9802, %v9801
  %v9804 = vrot.slane %v9719, 5
  %v9805 = vsel %vm9732, %v9804, %v9803
  %v9806 = vrot.slane %v9720, 4
  %v9807 = vsel %vm8726, %v9806, %v9805
  %v9808 = vrot.slane %v9721, 3
  %v9809 = vsel %vm9737, %v9808, %v9807
  %v9810 = vrot.slane %v9722, 2
  %v9811 = vsel %vm8728, %v9810, %v9809
  %v9812 = vrot.slane %v9723, 1
  %v9813 = vsel %vm9742, %v9812, %v9811
  %v9814 = vrot.slane %v9725, 7
  %v9815 = vsel %vm9727, %v9814, %v9724
  %v9816 = vpack.c.b16 %v9757, %v9743
  %v9817 = vpack.c.b16 %v9785, %v9771
  %v9818 = vpack.c.b16 %v9813, %v9799
  %v9819 = vpack.c.b16 %v9815, %v9815
  %v9834 = vunpack.c.l.b16 %v9533
  %v9835 = vunpack.c.l.b16 %v9540
  %v9836 = vunpack.c.l.b16 %v9547
  %v9837 = vunpack.c.l.b16 %v9554
  %v9838 = vunpack.c.l.b16 %v9561
  %v9839 = vunpack.c.l.b16 %v9582
  %v9840 = vunpack.c.l.b16 %v9589
  %v9841 = vunpack.c.l.b16 %v9596
  %v9842 = vunpack.c.l.b16 %v9603
  %v9843 = vunpack.c.l.b16 %v9610
  %v9844 = vrot.slane %v9678, 7
  %v9845 = vsel %vm9727, %v9844, %v9677
  %v9846 = vrot.slane %v9679, 6
  %v9847 = vsel %vm8724, %v9846, %v9845
  %v9848 = vrot.slane %v9680, 5
  %v9849 = vsel %vm9732, %v9848, %v9847
  %v9850 = vrot.slane %v9834, 4
  %v9851 = vsel %vm8726, %v9850, %v9849
  %v9852 = vrot.slane %v9682, 3
  %v9853 = vsel %vm9737, %v9852, %v9851
  %v9854 = vrot.slane %v9683, 2
  %v9855 = vsel %vm8728, %v9854, %v9853
  %v9856 = vrot.slane %v9684, 1
  %v9857 = vsel %vm9742, %v9856, %v9855
  %v9858 = vrot.slane %v9835, 7
  %v9859 = vsel %vm9727, %v9858, %v9685
  %v9860 = vrot.slane %v9687, 6
  %v9861 = vsel %vm8724, %v9860, %v9859
  %v9862 = vrot.slane %v9688, 5
  %v9863 = vsel %vm9732, %v9862, %v9861
  %v9864 = vrot.slane %v9689, 4
  %v9865 = vsel %vm8726, %v9864, %v9863
  %v9866 = vrot.slane %v9690, 3
  %v9867 = vsel %vm9737, %v9866, %v9865
  %v9868 = vrot.slane %v9836, 2
  %v9869 = vsel %vm8728, %v9868, %v9867
  %v9870 = vrot.slane %v9692, 1
  %v9871 = vsel %vm9742, %v9870, %v9869
  %v9872 = vrot.slane %v9694, 7
  %v9873 = vsel %vm9727, %v9872, %v9693
  %v9874 = vrot.slane %v9695, 6
  %v9875 = vsel %vm8724, %v9874, %v9873
  %v9876 = vrot.slane %v9837, 5
  %v9877 = vsel %vm9732, %v9876, %v9875
  %v9878 = vrot.slane %v9697, 4
  %v9879 = vsel %vm8726, %v9878, %v9877
  %v9880 = vrot.slane %v9698, 3
  %v9881 = vsel %vm9737, %v9880, %v9879
  %v9882 = vrot.slane %v9699, 2
  %v9883 = vsel %vm8728, %v9882, %v9881
  %v9884 = vrot.slane %v9700, 1
  %v9885 = vsel %vm9742, %v9884, %v9883
  %v9886 = vrot.slane %v9702, 7
  %v9887 = vsel %vm9727, %v9886, %v9838
  %v9888 = vrot.slane %v9703, 6
  %v9889 = vsel %vm8724, %v9888, %v9887
  %v9890 = vrot.slane %v9704, 5
  %v9891 = vsel %vm9732, %v9890, %v9889
  %v9892 = vrot.slane %v9705, 4
  %v9893 = vsel %vm8726, %v9892, %v9891
  %v9894 = vrot.slane %v9839, 3
  %v9895 = vsel %vm9737, %v9894, %v9893
  %v9896 = vrot.slane %v9707, 2
  %v9897 = vsel %vm8728, %v9896, %v9895
  %v9898 = vrot.slane %v9708, 1
  %v9899 = vsel %vm9742, %v9898, %v9897
  %v9900 = vrot.slane %v9710, 7
  %v9901 = vsel %vm9727, %v9900, %v9709
  %v9902 = vrot.slane %v9840, 6
  %v9903 = vsel %vm8724, %v9902, %v9901
  %v9904 = vrot.slane %v9712, 5
  %v9905 = vsel %vm9732, %v9904, %v9903
  %v9906 = vrot.slane %v9713, 4
  %v9907 = vsel %vm8726, %v9906, %v9905
  %v9908 = vrot.slane %v9714, 3
  %v9909 = vsel %vm9737, %v9908, %v9907
  %v9910 = vrot.slane %v9715, 2
  %v9911 = vsel %vm8728, %v9910, %v9909
  %v9912 = vrot.slane %v9841, 1
  %v9913 = vsel %vm9742, %v9912, %v9911
  %v9914 = vrot.slane %v9718, 7
  %v9915 = vsel %vm9727, %v9914, %v9717
  %v9916 = vrot.slane %v9719, 6
  %v9917 = vsel %vm8724, %v9916, %v9915
  %v9918 = vrot.slane %v9720, 5
  %v9919 = vsel %vm9732, %v9918, %v9917
  %v9920 = vrot.slane %v9842, 4
  %v9921 = vsel %vm8726, %v9920, %v9919
  %v9922 = vrot.slane %v9722, 3
  %v9923 = vsel %vm9737, %v9922, %v9921
  %v9924 = vrot.slane %v9723, 2
  %v9925 = vsel %vm8728, %v9924, %v9923
  %v9926 = vrot.slane %v9724, 1
  %v9927 = vsel %vm9742, %v9926, %v9925
  %v9928 = vrot.slane %v9843, 7
  %v9929 = vsel %vm9727, %v9928, %v9725
  %v9930 = vpack.c.b16 %v9871, %v9857
  %v9931 = vpack.c.b16 %v9899, %v9885
  %v9932 = vpack.c.b16 %v9927, %v9913
  %v9933 = vpack.c.b16 %v9929, %v9929
  %v9948 = vunpack.c.l.b16 %v9534
  %v9949 = vunpack.c.l.b16 %v9541
  %v9950 = vunpack.c.l.b16 %v9548
  %v9951 = vunpack.c.l.b16 %v9555
  %v9952 = vunpack.c.l.b16 %v9562
  %v9953 = vunpack.c.l.b16 %v9583
  %v9954 = vunpack.c.l.b16 %v9590
  %v9955 = vunpack.c.l.b16 %v9597
  %v9956 = vunpack.c.l.b16 %v9604
  %v9957 = vunpack.c.l.b16 %v9611
  %v9958 = vrot.slane %v9679, 7
  %v9959 = vsel %vm9727, %v9958, %v9678
  %v9960 = vrot.slane %v9680, 6
  %v9961 = vsel %vm8724, %v9960, %v9959
  %v9962 = vrot.slane %v9834, 5
  %v9963 = vsel %vm9732, %v9962, %v9961
  %v9964 = vrot.slane %v9948, 4
  %v9965 = vsel %vm8726, %v9964, %v9963
  %v9966 = vrot.slane %v9683, 3
  %v9967 = vsel %vm9737, %v9966, %v9965
  %v9968 = vrot.slane %v9684, 2
  %v9969 = vsel %vm8728, %v9968, %v9967
  %v9970 = vrot.slane %v9685, 1
  %v9971 = vsel %vm9742, %v9970, %v9969
  %v9972 = vrot.slane %v9949, 7
  %v9973 = vsel %vm9727, %v9972, %v9835
  %v9974 = vrot.slane %v9688, 6
  %v9975 = vsel %vm8724, %v9974, %v9973
  %v9976 = vrot.slane %v9689, 5
  %v9977 = vsel %vm9732, %v9976, %v9975
  %v9978 = vrot.slane %v9690, 4
  %v9979 = vsel %vm8726, %v9978, %v9977
  %v9980 = vrot.slane %v9836, 3
  %v9981 = vsel %vm9737, %v9980, %v9979
  %v9982 = vrot.slane %v9950, 2
  %v9983 = vsel %vm8728, %v9982, %v9981
  %v9984 = vrot.slane %v9693, 1
  %v9985 = vsel %vm9742, %v9984, %v9983
  %v9986 = vrot.slane %v9695, 7
  %v9987 = vsel %vm9727, %v9986, %v9694
  %v9988 = vrot.slane %v9837, 6
  %v9989 = vsel %vm8724, %v9988, %v9987
  %v9990 = vrot.slane %v9951, 5
  %v9991 = vsel %vm9732, %v9990, %v9989
  %v9992 = vrot.slane %v9698, 4
  %v9993 = vsel %vm8726, %v9992, %v9991
  %v9994 = vrot.slane %v9699, 3
  %v9995 = vsel %vm9737, %v9994, %v9993
  %v9996 = vrot.slane %v9700, 2
  %v9997 = vsel %vm8728, %v9996, %v9995
  %v9998 = vrot.slane %v9838, 1
  %v9999 = vsel %vm9742, %v9998, %v9997
  %v10000 = vrot.slane %v9703, 7
  %v10001 = vsel %vm9727, %v10000, %v9952
  %v10002 = vrot.slane %v9704, 6
  %v10003 = vsel %vm8724, %v10002, %v10001
  %v10004 = vrot.slane %v9705, 5
  %v10005 = vsel %vm9732, %v10004, %v10003
  %v10006 = vrot.slane %v9839, 4
  %v10007 = vsel %vm8726, %v10006, %v10005
  %v10008 = vrot.slane %v9953, 3
  %v10009 = vsel %vm9737, %v10008, %v10007
  %v10010 = vrot.slane %v9708, 2
  %v10011 = vsel %vm8728, %v10010, %v10009
  %v10012 = vrot.slane %v9709, 1
  %v10013 = vsel %vm9742, %v10012, %v10011
  %v10014 = vrot.slane %v9840, 7
  %v10015 = vsel %vm9727, %v10014, %v9710
  %v10016 = vrot.slane %v9954, 6
  %v10017 = vsel %vm8724, %v10016, %v10015
  %v10018 = vrot.slane %v9713, 5
  %v10019 = vsel %vm9732, %v10018, %v10017
  %v10020 = vrot.slane %v9714, 4
  %v10021 = vsel %vm8726, %v10020, %v10019
  %v10022 = vrot.slane %v9715, 3
  %v10023 = vsel %vm9737, %v10022, %v10021
  %v10024 = vrot.slane %v9841, 2
  %v10025 = vsel %vm8728, %v10024, %v10023
  %v10026 = vrot.slane %v9955, 1
  %v10027 = vsel %vm9742, %v10026, %v10025
  %v10028 = vrot.slane %v9719, 7
  %v10029 = vsel %vm9727, %v10028, %v9718
  %v10030 = vrot.slane %v9720, 6
  %v10031 = vsel %vm8724, %v10030, %v10029
  %v10032 = vrot.slane %v9842, 5
  %v10033 = vsel %vm9732, %v10032, %v10031
  %v10034 = vrot.slane %v9956, 4
  %v10035 = vsel %vm8726, %v10034, %v10033
  %v10036 = vrot.slane %v9723, 3
  %v10037 = vsel %vm9737, %v10036, %v10035
  %v10038 = vrot.slane %v9724, 2
  %v10039 = vsel %vm8728, %v10038, %v10037
  %v10040 = vrot.slane %v9725, 1
  %v10041 = vsel %vm9742, %v10040, %v10039
  %v10042 = vrot.slane %v9957, 7
  %v10043 = vsel %vm9727, %v10042, %v9843
  %v10044 = vpack.c.b16 %v9985, %v9971
  %v10045 = vpack.c.b16 %v10013, %v9999
  %v10046 = vpack.c.b16 %v10041, %v10027
  %v10047 = vpack.c.b16 %v10043, %v10043
  %v10062 = vunpack.c.l.b16 %v9563
  %v10063 = vunpack.c.l.b16 %v9564
  %v10064 = vunpack.c.l.b16 %v9565
  %v10065 = vunpack.c.l.b16 %v9566
  %v10066 = vunpack.c.l.b16 %v9567
  %v10067 = vunpack.c.l.b16 %v9612
  %v10068 = vunpack.c.l.b16 %v9613
  %v10069 = vunpack.c.l.b16 %v9614
  %v10070 = vunpack.c.l.b16 %v9615
  %v10071 = vunpack.c.l.b16 %v9616
  %v10072 = vrot.slane %v9682, 7
  %v10073 = vsel %vm9727, %v10072, %v9681
  %v10074 = vrot.slane %v9683, 6
  %v10075 = vsel %vm8724, %v10074, %v10073
  %v10076 = vrot.slane %v9684, 5
  %v10077 = vsel %vm9732, %v10076, %v10075
  %v10078 = vrot.slane %v9685, 4
  %v10079 = vsel %vm8726, %v10078, %v10077
  %v10080 = vrot.slane %v9686, 3
  %v10081 = vsel %vm9737, %v10080, %v10079
  %v10082 = vrot.slane %v9687, 2
  %v10083 = vsel %vm8728, %v10082, %v10081
  %v10084 = vrot.slane %v9688, 1
  %v10085 = vsel %vm9742, %v10084, %v10083
  %v10086 = vrot.slane %v9690, 7
  %v10087 = vsel %vm9727, %v10086, %v9689
  %v10088 = vrot.slane %v9691, 6
  %v10089 = vsel %vm8724, %v10088, %v10087
  %v10090 = vrot.slane %v9692, 5
  %v10091 = vsel %vm9732, %v10090, %v10089
  %v10092 = vrot.slane %v9693, 4
  %v10093 = vsel %vm8726, %v10092, %v10091
  %v10094 = vrot.slane %v9694, 3
  %v10095 = vsel %vm9737, %v10094, %v10093
  %v10096 = vrot.slane %v9695, 2
  %v10097 = vsel %vm8728, %v10096, %v10095
  %v10098 = vrot.slane %v9696, 1
  %v10099 = vsel %vm9742, %v10098, %v10097
  %v10100 = vrot.slane %v9698, 7
  %v10101 = vsel %vm9727, %v10100, %v9697
  %v10102 = vrot.slane %v9699, 6
  %v10103 = vsel %vm8724, %v10102, %v10101
  %v10104 = vrot.slane %v9700, 5
  %v10105 = vsel %vm9732, %v10104, %v10103
  %v10106 = vrot.slane %v10062, 4
  %v10107 = vsel %vm8726, %v10106, %v10105
  %v10108 = vrot.slane %v10063, 3
  %v10109 = vsel %vm9737, %v10108, %v10107
  %v10110 = vrot.slane %v10064, 2
  %v10111 = vsel %vm8728, %v10110, %v10109
  %v10112 = vrot.slane %v10065, 1
  %v10113 = vsel %vm9742, %v10112, %v10111
  %v10114 = vrot.slane %v9706, 7
  %v10115 = vsel %vm9727, %v10114, %v10066
  %v10116 = vrot.slane %v9707, 6
  %v10117 = vsel %vm8724, %v10116, %v10115
  %v10118 = vrot.slane %v9708, 5
  %v10119 = vsel %vm9732, %v10118, %v10117
  %v10120 = vrot.slane %v9709, 4
  %v10121 = vsel %vm8726, %v10120, %v10119
  %v10122 = vrot.slane %v9710, 3
  %v10123 = vsel %vm9737, %v10122, %v10121
  %v10124 = vrot.slane %v9711, 2
  %v10125 = vsel %vm8728, %v10124, %v10123
  %v10126 = vrot.slane %v9712, 1
  %v10127 = vsel %vm9742, %v10126, %v10125
  %v10128 = vrot.slane %v9714, 7
  %v10129 = vsel %vm9727, %v10128, %v9713
  %v10130 = vrot.slane %v9715, 6
  %v10131 = vsel %vm8724, %v10130, %v10129
  %v10132 = vrot.slane %v9716, 5
  %v10133 = vsel %vm9732, %v10132, %v10131
  %v10134 = vrot.slane %v9717, 4
  %v10135 = vsel %vm8726, %v10134, %v10133
  %v10136 = vrot.slane %v9718, 3
  %v10137 = vsel %vm9737, %v10136, %v10135
  %v10138 = vrot.slane %v9719, 2
  %v10139 = vsel %vm8728, %v10138, %v10137
  %v10140 = vrot.slane %v9720, 1
  %v10141 = vsel %vm9742, %v10140, %v10139
  %v10142 = vrot.slane %v9722, 7
  %v10143 = vsel %vm9727, %v10142, %v9721
  %v10144 = vrot.slane %v9723, 6
  %v10145 = vsel %vm8724, %v10144, %v10143
  %v10146 = vrot.slane %v9724, 5
  %v10147 = vsel %vm9732, %v10146, %v10145
  %v10148 = vrot.slane %v9725, 4
  %v10149 = vsel %vm8726, %v10148, %v10147
  %v10150 = vrot.slane %v10067, 3
  %v10151 = vsel %vm9737, %v10150, %v10149
  %v10152 = vrot.slane %v10068, 2
  %v10153 = vsel %vm8728, %v10152, %v10151
  %v10154 = vrot.slane %v10069, 1
  %v10155 = vsel %vm9742, %v10154, %v10153
  %v10156 = vrot.slane %v10071, 7
  %v10157 = vsel %vm9727, %v10156, %v10070
  %v10158 = vpack.c.b16 %v10099, %v10085
  %v10159 = vpack.c.b16 %v10127, %v10113
  %v10160 = vpack.c.b16 %v10155, %v10141
  %v10161 = vpack.c.b16 %v10157, %v10157
  %v10168 = vunpack.c.l.b16 %v9568
  %v10169 = vunpack.c.l.b16 %v9617
  %v10170 = vrot.slane %v9683, 7
  %v10171 = vsel %vm9727, %v10170, %v9682
  %v10172 = vrot.slane %v9684, 6
  %v10173 = vsel %vm8724, %v10172, %v10171
  %v10174 = vrot.slane %v9685, 5
  %v10175 = vsel %vm9732, %v10174, %v10173
  %v10176 = vrot.slane %v9835, 4
  %v10177 = vsel %vm8726, %v10176, %v10175
  %v10178 = vrot.slane %v9687, 3
  %v10179 = vsel %vm9737, %v10178, %v10177
  %v10180 = vrot.slane %v9688, 2
  %v10181 = vsel %vm8728, %v10180, %v10179
  %v10182 = vrot.slane %v9689, 1
  %v10183 = vsel %vm9742, %v10182, %v10181
  %v10184 = vrot.slane %v9836, 7
  %v10185 = vsel %vm9727, %v10184, %v9690
  %v10186 = vrot.slane %v9692, 6
  %v10187 = vsel %vm8724, %v10186, %v10185
  %v10188 = vrot.slane %v9693, 5
  %v10189 = vsel %vm9732, %v10188, %v10187
  %v10190 = vrot.slane %v9694, 4
  %v10191 = vsel %vm8726, %v10190, %v10189
  %v10192 = vrot.slane %v9695, 3
  %v10193 = vsel %vm9737, %v10192, %v10191
  %v10194 = vrot.slane %v9837, 2
  %v10195 = vsel %vm8728, %v10194, %v10193
  %v10196 = vrot.slane %v9697, 1
  %v10197 = vsel %vm9742, %v10196, %v10195
  %v10198 = vrot.slane %v9699, 7
  %v10199 = vsel %vm9727, %v10198, %v9698
  %v10200 = vrot.slane %v9700, 6
  %v10201 = vsel %vm8724, %v10200, %v10199
  %v10202 = vrot.slane %v9838, 5
  %v10203 = vsel %vm9732, %v10202, %v10201
  %v10204 = vrot.slane %v10063, 4
  %v10205 = vsel %vm8726, %v10204, %v10203
  %v10206 = vrot.slane %v10064, 3
  %v10207 = vsel %vm9737, %v10206, %v10205
  %v10208 = vrot.slane %v10065, 2
  %v10209 = vsel %vm8728, %v10208, %v10207
  %v10210 = vrot.slane %v10066, 1
  %v10211 = vsel %vm9742, %v10210, %v10209
  %v10212 = vrot.slane %v9707, 7
  %v10213 = vsel %vm9727, %v10212, %v10168
  %v10214 = vrot.slane %v9708, 6
  %v10215 = vsel %vm8724, %v10214, %v10213
  %v10216 = vrot.slane %v9709, 5
  %v10217 = vsel %vm9732, %v10216, %v10215
  %v10218 = vrot.slane %v9710, 4
  %v10219 = vsel %vm8726, %v10218, %v10217
  %v10220 = vrot.slane %v9840, 3
  %v10221 = vsel %vm9737, %v10220, %v10219
  %v10222 = vrot.slane %v9712, 2
  %v10223 = vsel %vm8728, %v10222, %v10221
  %v10224 = vrot.slane %v9713, 1
  %v10225 = vsel %vm9742, %v10224, %v10223
  %v10226 = vrot.slane %v9715, 7
  %v10227 = vsel %vm9727, %v10226, %v9714
  %v10228 = vrot.slane %v9841, 6
  %v10229 = vsel %vm8724, %v10228, %v10227
  %v10230 = vrot.slane %v9717, 5
  %v10231 = vsel %vm9732, %v10230, %v10229
  %v10232 = vrot.slane %v9718, 4
  %v10233 = vsel %vm8726, %v10232, %v10231
  %v10234 = vrot.slane %v9719, 3
  %v10235 = vsel %vm9737, %v10234, %v10233
  %v10236 = vrot.slane %v9720, 2
  %v10237 = vsel %vm8728, %v10236, %v10235
  %v10238 = vrot.slane %v9842, 1
  %v10239 = vsel %vm9742, %v10238, %v10237
  %v10240 = vrot.slane %v9723, 7
  %v10241 = vsel %vm9727, %v10240, %v9722
  %v10242 = vrot.slane %v9724, 6
  %v10243 = vsel %vm8724, %v10242, %v10241
  %v10244 = vrot.slane %v9725, 5
  %v10245 = vsel %vm9732, %v10244, %v10243
  %v10246 = vrot.slane %v9843, 4
  %v10247 = vsel %vm8726, %v10246, %v10245
  %v10248 = vrot.slane %v10068, 3
  %v10249 = vsel %vm9737, %v10248, %v10247
  %v10250 = vrot.slane %v10069, 2
  %v10251 = vsel %vm8728, %v10250, %v10249
  %v10252 = vrot.slane %v10070, 1
  %v10253 = vsel %vm9742, %v10252, %v10251
  %v10254 = vrot.slane %v10169, 7
  %v10255 = vsel %vm9727, %v10254, %v10071
  %v10256 = vpack.c.b16 %v10197, %v10183
  %v10257 = vpack.c.b16 %v10225, %v10211
  %v10258 = vpack.c.b16 %v10253, %v10239
  %v10259 = vpack.c.b16 %v10255, %v10255
  %v10266 = vunpack.c.l.b16 %v9569
  %v10267 = vunpack.c.l.b16 %v9618
  %v10268 = vrot.slane %v9684, 7
  %v10269 = vsel %vm9727, %v10268, %v9683
  %v10270 = vrot.slane %v9685, 6
  %v10271 = vsel %vm8724, %v10270, %v10269
  %v10272 = vrot.slane %v9835, 5
  %v10273 = vsel %vm9732, %v10272, %v10271
  %v10274 = vrot.slane %v9949, 4
  %v10275 = vsel %vm8726, %v10274, %v10273
  %v10276 = vrot.slane %v9688, 3
  %v10277 = vsel %vm9737, %v10276, %v10275
  %v10278 = vrot.slane %v9689, 2
  %v10279 = vsel %vm8728, %v10278, %v10277
  %v10280 = vrot.slane %v9690, 1
  %v10281 = vsel %vm9742, %v10280, %v10279
  %v10282 = vrot.slane %v9950, 7
  %v10283 = vsel %vm9727, %v10282, %v9836
  %v10284 = vrot.slane %v9693, 6
  %v10285 = vsel %vm8724, %v10284, %v10283
  %v10286 = vrot.slane %v9694, 5
  %v10287 = vsel %vm9732, %v10286, %v10285
  %v10288 = vrot.slane %v9695, 4
  %v10289 = vsel %vm8726, %v10288, %v10287
  %v10290 = vrot.slane %v9837, 3
  %v10291 = vsel %vm9737, %v10290, %v10289
  %v10292 = vrot.slane %v9951, 2
  %v10293 = vsel %vm8728, %v10292, %v10291
  %v10294 = vrot.slane %v9698, 1
  %v10295 = vsel %vm9742, %v10294, %v10293
  %v10296 = vrot.slane %v9700, 7
  %v10297 = vsel %vm9727, %v10296, %v9699
  %v10298 = vrot.slane %v9838, 6
  %v10299 = vsel %vm8724, %v10298, %v10297
  %v10300 = vrot.slane %v9952, 5
  %v10301 = vsel %vm9732, %v10300, %v10299
  %v10302 = vrot.slane %v10064, 4
  %v10303 = vsel %vm8726, %v10302, %v10301
  %v10304 = vrot.slane %v10065, 3
  %v10305 = vsel %vm9737, %v10304, %v10303
  %v10306 = vrot.slane %v10066, 2
  %v10307 = vsel %vm8728, %v10306, %v10305
  %v10308 = vrot.slane %v10168, 1
  %v10309 = vsel %vm9742, %v10308, %v10307
  %v10310 = vrot.slane %v9708, 7
  %v10311 = vsel %vm9727, %v10310, %v10266
  %v10312 = vrot.slane %v9709, 6
  %v10313 = vsel %vm8724, %v10312, %v10311
  %v10314 = vrot.slane %v9710, 5
  %v10315 = vsel %vm9732, %v10314, %v10313
  %v10316 = vrot.slane %v9840, 4
  %v10317 = vsel %vm8726, %v10316, %v10315
  %v10318 = vrot.slane %v9954, 3
  %v10319 = vsel %vm9737, %v10318, %v10317
  %v10320 = vrot.slane %v9713, 2
  %v10321 = vsel %vm8728, %v10320, %v10319
  %v10322 = vrot.slane %v9714, 1
  %v10323 = vsel %vm9742, %v10322, %v10321
  %v10324 = vrot.slane %v9841, 7
  %v10325 = vsel %vm9727, %v10324, %v9715
  %v10326 = vrot.slane %v9955, 6
  %v10327 = vsel %vm8724, %v10326, %v10325
  %v10328 = vrot.slane %v9718, 5
  %v10329 = vsel %vm9732, %v10328, %v10327
  %v10330 = vrot.slane %v9719, 4
  %v10331 = vsel %vm8726, %v10330, %v10329
  %v10332 = vrot.slane %v9720, 3
  %v10333 = vsel %vm9737, %v10332, %v10331
  %v10334 = vrot.slane %v9842, 2
  %v10335 = vsel %vm8728, %v10334, %v10333
  %v10336 = vrot.slane %v9956, 1
  %v10337 = vsel %vm9742, %v10336, %v10335
  %v10338 = vrot.slane %v9724, 7
  %v10339 = vsel %vm9727, %v10338, %v9723
  %v10340 = vrot.slane %v9725, 6
  %v10341 = vsel %vm8724, %v10340, %v10339
  %v10342 = vrot.slane %v9843, 5
  %v10343 = vsel %vm9732, %v10342, %v10341
  %v10344 = vrot.slane %v9957, 4
  %v10345 = vsel %vm8726, %v10344, %v10343
  %v10346 = vrot.slane %v10069, 3
  %v10347 = vsel %vm9737, %v10346, %v10345
  %v10348 = vrot.slane %v10070, 2
  %v10349 = vsel %vm8728, %v10348, %v10347
  %v10350 = vrot.slane %v10071, 1
  %v10351 = vsel %vm9742, %v10350, %v10349
  %v10352 = vrot.slane %v10267, 7
  %v10353 = vsel %vm9727, %v10352, %v10169
  %v10354 = vpack.c.b16 %v10295, %v10281
  %v10355 = vpack.c.b16 %v10323, %v10309
  %v10356 = vpack.c.b16 %v10351, %v10337
  %v10357 = vpack.c.b16 %v10353, %v10353
  %v10372 = vunpack.c.l.b16 %v9570
  %v10373 = vunpack.c.l.b16 %v9571
  %v10374 = vunpack.c.l.b16 %v9572
  %v10375 = vunpack.c.l.b16 %v9573
  %v10376 = vunpack.c.l.b16 %v9574
  %v10377 = vunpack.c.l.b16 %v9619
  %v10378 = vunpack.c.l.b16 %v9620
  %v10379 = vunpack.c.l.b16 %v9621
  %v10380 = vunpack.c.l.b16 %v9622
  %v10381 = vunpack.c.l.b16 %v9623
  %v10382 = vrot.slane %v9687, 7
  %v10383 = vsel %vm9727, %v10382, %v9686
  %v10384 = vsel %vm8724, %v9974, %v10383
  %v10385 = vsel %vm9732, %v9976, %v10384
  %v10386 = vsel %vm8726, %v9978, %v10385
  %v10387 = vrot.slane %v9691, 3
  %v10388 = vsel %vm9737, %v10387, %v10386
  %v10389 = vrot.slane %v9692, 2
  %v10390 = vsel %vm8728, %v10389, %v10388
  %v10391 = vsel %vm9742, %v9984, %v10390
  %v10392 = vrot.slane %v9696, 6
  %v10393 = vsel %vm8724, %v10392, %v9987
  %v10394 = vrot.slane %v9697, 5
  %v10395 = vsel %vm9732, %v10394, %v10393
  %v10396 = vsel %vm8726, %v9992, %v10395
  %v10397 = vsel %vm9737, %v9994, %v10396
  %v10398 = vsel %vm8728, %v9996, %v10397
  %v10399 = vrot.slane %v10062, 1
  %v10400 = vsel %vm9742, %v10399, %v10398
  %v10401 = vrot.slane %v10064, 7
  %v10402 = vsel %vm9727, %v10401, %v10063
  %v10403 = vrot.slane %v10065, 6
  %v10404 = vsel %vm8724, %v10403, %v10402
  %v10405 = vrot.slane %v10066, 5
  %v10406 = vsel %vm9732, %v10405, %v10404
  %v10407 = vrot.slane %v10372, 4
  %v10408 = vsel %vm8726, %v10407, %v10406
  %v10409 = vrot.slane %v10373, 3
  %v10410 = vsel %vm9737, %v10409, %v10408
  %v10411 = vrot.slane %v10374, 2
  %v10412 = vsel %vm8728, %v10411, %v10410
  %v10413 = vrot.slane %v10375, 1
  %v10414 = vsel %vm9742, %v10413, %v10412
  %v10415 = vrot.slane %v9711, 7
  %v10416 = vsel %vm9727, %v10415, %v10376
  %v10417 = vrot.slane %v9712, 6
  %v10418 = vsel %vm8724, %v10417, %v10416
  %v10419 = vsel %vm9732, %v10018, %v10418
  %v10420 = vsel %vm8726, %v10020, %v10419
  %v10421 = vsel %vm9737, %v10022, %v10420
  %v10422 = vrot.slane %v9716, 2
  %v10423 = vsel %vm8728, %v10422, %v10421
  %v10424 = vrot.slane %v9717, 1
  %v10425 = vsel %vm9742, %v10424, %v10423
  %v10426 = vrot.slane %v9721, 5
  %v10427 = vsel %vm9732, %v10426, %v10031
  %v10428 = vrot.slane %v9722, 4
  %v10429 = vsel %vm8726, %v10428, %v10427
  %v10430 = vsel %vm9737, %v10036, %v10429
  %v10431 = vsel %vm8728, %v10038, %v10430
  %v10432 = vsel %vm9742, %v10040, %v10431
  %v10433 = vrot.slane %v10068, 7
  %v10434 = vsel %vm9727, %v10433, %v10067
  %v10435 = vrot.slane %v10069, 6
  %v10436 = vsel %vm8724, %v10435, %v10434
  %v10437 = vrot.slane %v10070, 5
  %v10438 = vsel %vm9732, %v10437, %v10436
  %v10439 = vrot.slane %v10071, 4
  %v10440 = vsel %vm8726, %v10439, %v10438
  %v10441 = vrot.slane %v10377, 3
  %v10442 = vsel %vm9737, %v10441, %v10440
  %v10443 = vrot.slane %v10378, 2
  %v10444 = vsel %vm8728, %v10443, %v10442
  %v10445 = vrot.slane %v10379, 1
  %v10446 = vsel %vm9742, %v10445, %v10444
  %v10447 = vrot.slane %v10381, 7
  %v10448 = vsel %vm9727, %v10447, %v10380
  %v10449 = vpack.c.b16 %v10400, %v10391
  %v10450 = vpack.c.b16 %v10425, %v10414
  %v10451 = vpack.c.b16 %v10446, %v10432
  %v10452 = vpack.c.b16 %v10448, %v10448
  %v10459 = vunpack.c.l.b16 %v9575
  %v10460 = vunpack.c.l.b16 %v9624
  %v10461 = vrot.slane %v9688, 7
  %v10462 = vsel %vm9727, %v10461, %v9687
  %v10463 = vrot.slane %v9689, 6
  %v10464 = vsel %vm8724, %v10463, %v10462
  %v10465 = vrot.slane %v9690, 5
  %v10466 = vsel %vm9732, %v10465, %v10464
  %v10467 = vrot.slane %v9836, 4
  %v10468 = vsel %vm8726, %v10467, %v10466
  %v10469 = vrot.slane %v9692, 3
  %v10470 = vsel %vm9737, %v10469, %v10468
  %v10471 = vrot.slane %v9693, 2
  %v10472 = vsel %vm8728, %v10471, %v10470
  %v10473 = vrot.slane %v9694, 1
  %v10474 = vsel %vm9742, %v10473, %v10472
  %v10475 = vrot.slane %v9837, 7
  %v10476 = vsel %vm9727, %v10475, %v9695
  %v10477 = vrot.slane %v9697, 6
  %v10478 = vsel %vm8724, %v10477, %v10476
  %v10479 = vrot.slane %v9698, 5
  %v10480 = vsel %vm9732, %v10479, %v10478
  %v10481 = vrot.slane %v9699, 4
  %v10482 = vsel %vm8726, %v10481, %v10480
  %v10483 = vrot.slane %v9700, 3
  %v10484 = vsel %vm9737, %v10483, %v10482
  %v10485 = vrot.slane %v9838, 2
  %v10486 = vsel %vm8728, %v10485, %v10484
  %v10487 = vrot.slane %v10063, 1
  %v10488 = vsel %vm9742, %v10487, %v10486
  %v10489 = vrot.slane %v10065, 7
  %v10490 = vsel %vm9727, %v10489, %v10064
  %v10491 = vrot.slane %v10066, 6
  %v10492 = vsel %vm8724, %v10491, %v10490
  %v10493 = vrot.slane %v10168, 5
  %v10494 = vsel %vm9732, %v10493, %v10492
  %v10495 = vrot.slane %v10373, 4
  %v10496 = vsel %vm8726, %v10495, %v10494
  %v10497 = vrot.slane %v10374, 3
  %v10498 = vsel %vm9737, %v10497, %v10496
  %v10499 = vrot.slane %v10375, 2
  %v10500 = vsel %vm8728, %v10499, %v10498
  %v10501 = vrot.slane %v10376, 1
  %v10502 = vsel %vm9742, %v10501, %v10500
  %v10503 = vrot.slane %v9712, 7
  %v10504 = vsel %vm9727, %v10503, %v10459
  %v10505 = vrot.slane %v9713, 6
  %v10506 = vsel %vm8724, %v10505, %v10504
  %v10507 = vrot.slane %v9714, 5
  %v10508 = vsel %vm9732, %v10507, %v10506
  %v10509 = vrot.slane %v9715, 4
  %v10510 = vsel %vm8726, %v10509, %v10508
  %v10511 = vrot.slane %v9841, 3
  %v10512 = vsel %vm9737, %v10511, %v10510
  %v10513 = vrot.slane %v9717, 2
  %v10514 = vsel %vm8728, %v10513, %v10512
  %v10515 = vrot.slane %v9718, 1
  %v10516 = vsel %vm9742, %v10515, %v10514
  %v10517 = vrot.slane %v9720, 7
  %v10518 = vsel %vm9727, %v10517, %v9719
  %v10519 = vrot.slane %v9842, 6
  %v10520 = vsel %vm8724, %v10519, %v10518
  %v10521 = vrot.slane %v9722, 5
  %v10522 = vsel %vm9732, %v10521, %v10520
  %v10523 = vrot.slane %v9723, 4
  %v10524 = vsel %vm8726, %v10523, %v10522
  %v10525 = vrot.slane %v9724, 3
  %v10526 = vsel %vm9737, %v10525, %v10524
  %v10527 = vrot.slane %v9725, 2
  %v10528 = vsel %vm8728, %v10527, %v10526
  %v10529 = vrot.slane %v9843, 1
  %v10530 = vsel %vm9742, %v10529, %v10528
  %v10531 = vrot.slane %v10069, 7
  %v10532 = vsel %vm9727, %v10531, %v10068
  %v10533 = vrot.slane %v10070, 6
  %v10534 = vsel %vm8724, %v10533, %v10532
  %v10535 = vrot.slane %v10071, 5
  %v10536 = vsel %vm9732, %v10535, %v10534
  %v10537 = vrot.slane %v10169, 4
  %v10538 = vsel %vm8726, %v10537, %v10536
  %v10539 = vrot.slane %v10378, 3
  %v10540 = vsel %vm9737, %v10539, %v10538
  %v10541 = vrot.slane %v10379, 2
  %v10542 = vsel %vm8728, %v10541, %v10540
  %v10543 = vrot.slane %v10380, 1
  %v10544 = vsel %vm9742, %v10543, %v10542
  %v10545 = vrot.slane %v10460, 7
  %v10546 = vsel %vm9727, %v10545, %v10381
  %v10547 = vpack.c.b16 %v10488, %v10474
  %v10548 = vpack.c.b16 %v10516, %v10502
  %v10549 = vpack.c.b16 %v10544, %v10530
  %v10550 = vpack.c.b16 %v10546, %v10546
  %v10557 = vunpack.c.l.b16 %v9576
  %v10558 = vunpack.c.l.b16 %v9625
  %v10559 = vrot.slane %v9689, 7
  %v10560 = vsel %vm9727, %v10559, %v9688
  %v10561 = vrot.slane %v9690, 6
  %v10562 = vsel %vm8724, %v10561, %v10560
  %v10563 = vrot.slane %v9836, 5
  %v10564 = vsel %vm9732, %v10563, %v10562
  %v10565 = vrot.slane %v9950, 4
  %v10566 = vsel %vm8726, %v10565, %v10564
  %v10567 = vrot.slane %v9693, 3
  %v10568 = vsel %vm9737, %v10567, %v10566
  %v10569 = vrot.slane %v9694, 2
  %v10570 = vsel %vm8728, %v10569, %v10568
  %v10571 = vrot.slane %v9695, 1
  %v10572 = vsel %vm9742, %v10571, %v10570
  %v10573 = vrot.slane %v9951, 7
  %v10574 = vsel %vm9727, %v10573, %v9837
  %v10575 = vrot.slane %v9698, 6
  %v10576 = vsel %vm8724, %v10575, %v10574
  %v10577 = vrot.slane %v9699, 5
  %v10578 = vsel %vm9732, %v10577, %v10576
  %v10579 = vrot.slane %v9700, 4
  %v10580 = vsel %vm8726, %v10579, %v10578
  %v10581 = vrot.slane %v9838, 3
  %v10582 = vsel %vm9737, %v10581, %v10580
  %v10583 = vrot.slane %v9952, 2
  %v10584 = vsel %vm8728, %v10583, %v10582
  %v10585 = vrot.slane %v10064, 1
  %v10586 = vsel %vm9742, %v10585, %v10584
  %v10587 = vrot.slane %v10066, 7
  %v10588 = vsel %vm9727, %v10587, %v10065
  %v10589 = vrot.slane %v10168, 6
  %v10590 = vsel %vm8724, %v10589, %v10588
  %v10591 = vrot.slane %v10266, 5
  %v10592 = vsel %vm9732, %v10591, %v10590
  %v10593 = vrot.slane %v10374, 4
  %v10594 = vsel %vm8726, %v10593, %v10592
  %v10595 = vrot.slane %v10375, 3
  %v10596 = vsel %vm9737, %v10595, %v10594
  %v10597 = vrot.slane %v10376, 2
  %v10598 = vsel %vm8728, %v10597, %v10596
  %v10599 = vrot.slane %v10459, 1
  %v10600 = vsel %vm9742, %v10599, %v10598
  %v10601 = vrot.slane %v9713, 7
  %v10602 = vsel %vm9727, %v10601, %v10557
  %v10603 = vrot.slane %v9714, 6
  %v10604 = vsel %vm8724, %v10603, %v10602
  %v10605 = vrot.slane %v9715, 5
  %v10606 = vsel %vm9732, %v10605, %v10604
  %v10607 = vrot.slane %v9841, 4
  %v10608 = vsel %vm8726, %v10607, %v10606
  %v10609 = vrot.slane %v9955, 3
  %v10610 = vsel %vm9737, %v10609, %v10608
  %v10611 = vrot.slane %v9718, 2
  %v10612 = vsel %vm8728, %v10611, %v10610
  %v10613 = vrot.slane %v9719, 1
  %v10614 = vsel %vm9742, %v10613, %v10612
  %v10615 = vrot.slane %v9842, 7
  %v10616 = vsel %vm9727, %v10615, %v9720
  %v10617 = vrot.slane %v9956, 6
  %v10618 = vsel %vm8724, %v10617, %v10616
  %v10619 = vrot.slane %v9723, 5
  %v10620 = vsel %vm9732, %v10619, %v10618
  %v10621 = vrot.slane %v9724, 4
  %v10622 = vsel %vm8726, %v10621, %v10620
  %v10623 = vrot.slane %v9725, 3
  %v10624 = vsel %vm9737, %v10623, %v10622
  %v10625 = vrot.slane %v9843, 2
  %v10626 = vsel %vm8728, %v10625, %v10624
  %v10627 = vrot.slane %v9957, 1
  %v10628 = vsel %vm9742, %v10627, %v10626
  %v10629 = vrot.slane %v10070, 7
  %v10630 = vsel %vm9727, %v10629, %v10069
  %v10631 = vrot.slane %v10071, 6
  %v10632 = vsel %vm8724, %v10631, %v10630
  %v10633 = vrot.slane %v10169, 5
  %v10634 = vsel %vm9732, %v10633, %v10632
  %v10635 = vrot.slane %v10267, 4
  %v10636 = vsel %vm8726, %v10635, %v10634
  %v10637 = vrot.slane %v10379, 3
  %v10638 = vsel %vm9737, %v10637, %v10636
  %v10639 = vrot.slane %v10380, 2
  %v10640 = vsel %vm8728, %v10639, %v10638
  %v10641 = vrot.slane %v10381, 1
  %v10642 = vsel %vm9742, %v10641, %v10640
  %v10643 = vrot.slane %v10558, 7
  %v10644 = vsel %vm9727, %v10643, %v10460
  %v10645 = vpack.c.b16 %v10586, %v10572
  %v10646 = vpack.c.b16 %v10614, %v10600
  %v10647 = vpack.c.b16 %v10642, %v10628
  %v10648 = vpack.c.b16 %v10644, %v10644
  %v10653 = vld [vmem:[%s11] sm:$0xff]
  %v10654 = vld [vmem:[%s11 + $0x8] sm:$0xff]
  %v10655 = vld [vmem:[%s11 + $0x10] sm:$0xff]
  %v10656 = vld [vmem:[%s11 + $0x18] sm:$0xff]
  %v10657 = vld [vmem:[%s11 + $0x20] sm:$0xff]
  %v10658 = vld [vmem:[%s11 + $0x28] sm:$0xff]
  %v10659 = vld [vmem:[%s11 + $0x30] sm:$0xff]
  %v10660 = vld [vmem:[%s11 + $0x38] sm:$0xff]
  %v10661 = vld [vmem:[%s11 + $0x40] sm:$0xff]
  %v10662 = vld [vmem:[%s11 + $0x48] sm:$0xff]
  %v10663 = vld [vmem:[%s11 + $0x50] sm:$0xff]
  %v10664 = vld [vmem:[%s11 + $0x58] sm:$0xff]
  %v10665 = vld [vmem:[%s11 + $0x60] sm:$0xff]
  %v10666 = vld [vmem:[%s11 + $0x68] sm:$0xff]
  %v10667 = vld [vmem:[%s11 + $0x70] sm:$0xff]
  %v10668 = vld [vmem:[%s11 + $0x78] sm:$0xff]
  %v10669 = vld [vmem:[%s11 + $0x80] sm:$0xff]
  %v10670 = vld [vmem:[%s11 + $0x88] sm:$0xff]
  %v10671 = vld [vmem:[%s11 + $0x90] sm:$0xff]
  %v10672 = vld [vmem:[%s11 + $0x98] sm:$0xff]
  %v10673 = vld [vmem:[%s11 + $0xa0] sm:$0xff]
  %v10674 = vld [vmem:[%s11 + $0xa8] sm:$0xff]
  %v10675 = vld [vmem:[%s11 + $0xb0] sm:$0xff]
  %v10676 = vld [vmem:[%s11 + $0xb8] sm:$0xff]
  %v10677 = vld [vmem:[%s11 + $0xc0] sm:$0xff]
  %v10678 = vld [vmem:[%s11 + $0xc8] sm:$0xff]
  %v10679 = vld [vmem:[%s11 + $0xd0] sm:$0xff]
  %v10680 = vld [vmem:[%s11 + $0xd8] sm:$0xff]
  %v10681 = vld [vmem:[%s11 + $0xe0] sm:$0xff]
  %v10682 = vld [vmem:[%s11 + $0xe8] sm:$0xff]
  %v10683 = vld [vmem:[%s11 + $0xf0] sm:$0xff]
  %v10684 = vld [vmem:[%s11 + $0xf8] sm:$0xff]
  %v10685 = vld [vmem:[%s11 + $0x100] sm:$0xff]
  %v10686 = vld [vmem:[%s11 + $0x108] sm:$0xff]
  %v10687 = vld [vmem:[%s11 + $0x110] sm:$0xff]
  %v10688 = vld [vmem:[%s11 + $0x118] sm:$0xff]
  %v10689 = vld [vmem:[%s11 + $0x120] sm:$0xff]
  %v10690 = vld [vmem:[%s11 + $0x128] sm:$0xff]
  %v10691 = vld [vmem:[%s11 + $0x130] sm:$0xff]
  %v10692 = vld [vmem:[%s11 + $0x138] sm:$0xff]
  %v10693 = vld [vmem:[%s11 + $0x140] sm:$0xff]
  %v10694 = vld [vmem:[%s11 + $0x148] sm:$0xff]
  %v10695 = vld [vmem:[%s11 + $0x150] sm:$0xff]
  %v10696 = vld [vmem:[%s11 + $0x158] sm:$0xff]
  %v10697 = vld [vmem:[%s11 + $0x160] sm:$0xff]
  %v10698 = vld [vmem:[%s11 + $0x168] sm:$0xff]
  %v10699 = vld [vmem:[%s11 + $0x170] sm:$0xff]
  %v10700 = vld [vmem:[%s11 + $0x178] sm:$0xff]
  %v10701 = vld [vmem:[%s11 + $0x180] sm:$0xff]
  %v10702 = vld [vmem:[%s11 + $0x188] sm:$0xff]
  %v10703 = vld [vmem:[%s11 + $0x190] sm:$0xff]
  %v10704 = vld [vmem:[%s11 + $0x198] sm:$0xff]
  %v10705 = vld [vmem:[%s11 + $0x1a0] sm:$0xff]
  %v10706 = vld [vmem:[%s11 + $0x1a8] sm:$0xff]
  %v10707 = vld [vmem:[%s11 + $0x1b0] sm:$0xff]
  %v10708 = vld [vmem:[%s11 + $0x1b8] sm:$0xff]
  %v10709 = vld [vmem:[%s11 + $0x1c0] sm:$0xff]
  %v10710 = vld [vmem:[%s11 + $0x1c8] sm:$0xff]
  %v10711 = vld [vmem:[%s11 + $0x1d0] sm:$0xff]
  %v10712 = vld [vmem:[%s11 + $0x1d8] sm:$0xff]
  %v10713 = vld [vmem:[%s11 + $0x1e0] sm:$0xff]
  %v10714 = vld [vmem:[%s11 + $0x1e8] sm:$0xff]
  %v10715 = vld [vmem:[%s11 + $0x1f0] sm:$0xff]
  %v10716 = vld [vmem:[%s11 + $0x1f8] sm:$0xff]
  %v10717 = vld [vmem:[%s11 + $0x200] sm:$0xff]
  %v10718 = vld [vmem:[%s11 + $0x208] sm:$0xff]
  %v10719 = vld [vmem:[%s11 + $0x210] sm:$0xff]
  %v10720 = vld [vmem:[%s11 + $0x218] sm:$0xff]
  %v10721 = vld [vmem:[%s11 + $0x220] sm:$0xff]
  %v10722 = vld [vmem:[%s11 + $0x228] sm:$0xff]
  %v10723 = vld [vmem:[%s11 + $0x230] sm:$0xff]
  %v10724 = vld [vmem:[%s11 + $0x238] sm:$0xff]
  %v10725 = vld [vmem:[%s11 + $0x240] sm:$0xff]
  %v10726 = vld [vmem:[%s11 + $0x248] sm:$0xff]
  %v10727 = vld [vmem:[%s11 + $0x250] sm:$0xff]
  %v10728 = vld [vmem:[%s11 + $0x258] sm:$0xff]
  %v10729 = vld [vmem:[%s11 + $0x260] sm:$0xff]
  %v10730 = vld [vmem:[%s11 + $0x268] sm:$0xff]
  %v10731 = vld [vmem:[%s11 + $0x270] sm:$0xff]
  %v10732 = vld [vmem:[%s11 + $0x278] sm:$0xff]
  %v10733 = vld [vmem:[%s11 + $0x280] sm:$0xff]
  %v10734 = vld [vmem:[%s11 + $0x288] sm:$0xff]
  %v10735 = vld [vmem:[%s11 + $0x290] sm:$0xff]
  %v10736 = vld [vmem:[%s11 + $0x298] sm:$0xff]
  %v10737 = vld [vmem:[%s11 + $0x2a0] sm:$0xff]
  %v10738 = vld [vmem:[%s11 + $0x2a8] sm:$0xff]
  %v10739 = vld [vmem:[%s11 + $0x2b0] sm:$0xff]
  %v10740 = vld [vmem:[%s11 + $0x2b8] sm:$0xff]
  %v10741 = vld [vmem:[%s11 + $0x2c0] sm:$0xff]
  %v10742 = vld [vmem:[%s11 + $0x2c8] sm:$0xff]
  %v10743 = vld [vmem:[%s11 + $0x2d0] sm:$0xff]
  %v10744 = vld [vmem:[%s11 + $0x2d8] sm:$0xff]
  %v10745 = vld [vmem:[%s11 + $0x2e0] sm:$0xff]
  %v10746 = vld [vmem:[%s11 + $0x2e8] sm:$0xff]
  %v10747 = vld [vmem:[%s11 + $0x2f0] sm:$0xff]
  %v10748 = vld [vmem:[%s11 + $0x2f8] sm:$0xff]
  %v10749 = vld [vmem:[%s11 + $0x300] sm:$0xff]
  %v10750 = vld [vmem:[%s11 + $0x308] sm:$0xff]
  %v10751 = vld [vmem:[%s11 + $0x310] sm:$0xff]
  %v10752 = vld [vmem:[%s11 + $0x318] sm:$0xff]
  %v10753 = vld [vmem:[%s11 + $0x320] sm:$0xff]
  %v10754 = vld [vmem:[%s11 + $0x328] sm:$0xff]
  %v10755 = vld [vmem:[%s11 + $0x330] sm:$0xff]
  %v10756 = vld [vmem:[%s11 + $0x338] sm:$0xff]
  %v10757 = vld [vmem:[%s11 + $0x340] sm:$0xff]
  %v10758 = vld [vmem:[%s11 + $0x348] sm:$0xff]
  %v10759 = vld [vmem:[%s11 + $0x350] sm:$0xff]
  %v10760 = vld [vmem:[%s11 + $0x358] sm:$0xff]
  %v10761 = vld [vmem:[%s11 + $0x360] sm:$0xff]
  %v10762 = vld [vmem:[%s11 + $0x368] sm:$0xff]
  %v10763 = vld [vmem:[%s11 + $0x370] sm:$0xff]
  %v10764 = vld [vmem:[%s11 + $0x378] sm:$0xff]
  %v10765 = vld [vmem:[%s11 + $0x380] sm:$0xff]
  %v10766 = vld [vmem:[%s11 + $0x388] sm:$0xff]
  %v10767 = vld [vmem:[%s11 + $0x390] sm:$0xff]
  %v10768 = vld [vmem:[%s11 + $0x398] sm:$0xff]
  %v10769 = vld [vmem:[%s11 + $0x3a0] sm:$0xff]
  %v10770 = vld [vmem:[%s11 + $0x3a8] sm:$0xff]
  %v10771 = vld [vmem:[%s11 + $0x3b0] sm:$0xff]
  %v10772 = vld [vmem:[%s11 + $0x3b8] sm:$0xff]
  %v10773 = vld [vmem:[%s11 + $0x3c0] sm:$0xff]
  %v10774 = vld [vmem:[%s11 + $0x3c8] sm:$0xff]
  %v10775 = vld [vmem:[%s11 + $0x3d0] sm:$0xff]
  %v10776 = vld [vmem:[%s11 + $0x3d8] sm:$0xff]
  %v10777 = vld [vmem:[%s11 + $0x3e0] sm:$0xff]
  %v10778 = vld [vmem:[%s11 + $0x3e8] sm:$0xff]
  %v10779 = vld [vmem:[%s11 + $0x3f0] sm:$0xff]
  %v10780 = vld [vmem:[%s11 + $0x3f8] sm:$0xff]
  %v10781 = vld [vmem:[%s11 + $0x400] sm:$0xff]
  %v10782 = vld [vmem:[%s11 + $0x408] sm:$0xff]
  %v10783 = vld [vmem:[%s11 + $0x410] sm:$0xff]
  %v10784 = vld [vmem:[%s11 + $0x418] sm:$0xff]
  %v10785 = vld [vmem:[%s11 + $0x420] sm:$0xff]
  %v10786 = vld [vmem:[%s11 + $0x428] sm:$0xff]
  %v10787 = vld [vmem:[%s11 + $0x430] sm:$0xff]
  %v10788 = vld [vmem:[%s11 + $0x438] sm:$0xff]
  %v10789 = vld [vmem:[%s11 + $0x440] sm:$0xff]
  %v10790 = vld [vmem:[%s11 + $0x448] sm:$0xff]
  %v10791 = vld [vmem:[%s11 + $0x450] sm:$0xff]
  %v10792 = vld [vmem:[%s11 + $0x458] sm:$0xff]
  %v10793 = vld [vmem:[%s11 + $0x460] sm:$0xff]
  %v10794 = vld [vmem:[%s11 + $0x468] sm:$0xff]
  %v10795 = vld [vmem:[%s11 + $0x470] sm:$0xff]
  %v10796 = vld [vmem:[%s11 + $0x478] sm:$0xff]
  %v10941 = vunpack.c.l.b16 %v10653
  %v10942 = vunpack.c.h.b16 %v10653
  %v10943 = vunpack.c.l.b16 %v10654
  %v10944 = vunpack.c.h.b16 %v10654
  %v10945 = vunpack.c.l.b16 %v10655
  %v10946 = vunpack.c.h.b16 %v10655
  %v10947 = vunpack.c.l.b16 %v10656
  %v10948 = vunpack.c.h.b16 %v10656
  %v10949 = vunpack.c.l.b16 %v10657
  %v10950 = vunpack.c.h.b16 %v10657
  %v10951 = vunpack.c.l.b16 %v10658
  %v10952 = vunpack.c.h.b16 %v10658
  %v10953 = vunpack.c.l.b16 %v10659
  %v10954 = vunpack.c.h.b16 %v10659
  %v10955 = vunpack.c.l.b16 %v10660
  %v10956 = vunpack.c.h.b16 %v10660
  %v10957 = vunpack.c.l.b16 %v10661
  %v10958 = vunpack.c.h.b16 %v10661
  %v10959 = vunpack.c.l.b16 %v10662
  %v10960 = vunpack.c.h.b16 %v10662
  %v10961 = vunpack.c.l.b16 %v10663
  %v10962 = vunpack.c.h.b16 %v10663
  %v10963 = vunpack.c.l.b16 %v10664
  %v10964 = vunpack.c.h.b16 %v10664
  %v10965 = vunpack.c.l.b16 %v10665
  %v10966 = vunpack.c.h.b16 %v10665
  %v10967 = vunpack.c.l.b16 %v10666
  %v10968 = vunpack.c.h.b16 %v10666
  %v10969 = vunpack.c.l.b16 %v10667
  %v10970 = vunpack.c.h.b16 %v10667
  %v10971 = vunpack.c.l.b16 %v10668
  %v10972 = vunpack.c.h.b16 %v10668
  %v10973 = vunpack.c.l.b16 %v10669
  %v10974 = vunpack.c.h.b16 %v10669
  %v10975 = vunpack.c.l.b16 %v10670
  %v10976 = vunpack.c.h.b16 %v10670
  %v10977 = vunpack.c.l.b16 %v10671
  %v10978 = vunpack.c.h.b16 %v10671
  %v10979 = vunpack.c.l.b16 %v10672
  %v10980 = vunpack.c.h.b16 %v10672
  %v10981 = vunpack.c.l.b16 %v10673
  %v10982 = vunpack.c.h.b16 %v10673
  %v10983 = vunpack.c.l.b16 %v10674
  %v10984 = vunpack.c.h.b16 %v10674
  %v10985 = vunpack.c.l.b16 %v10675
  %v10986 = vunpack.c.h.b16 %v10675
  %v10987 = vunpack.c.l.b16 %v10676
  %v10988 = vunpack.c.h.b16 %v10676
  %v10989 = vunpack.c.l.b16 %v10677
  %v10990 = vunpack.c.h.b16 %v10677
  %v10991 = vunpack.c.l.b16 %v10678
  %v10992 = vunpack.c.h.b16 %v10678
  %v10993 = vunpack.c.l.b16 %v10679
  %v10994 = vunpack.c.h.b16 %v10679
  %v10995 = vunpack.c.l.b16 %v10680
  %v10996 = vunpack.c.h.b16 %v10680
  %v10997 = vunpack.c.l.b16 %v10681
  %v10998 = vunpack.c.h.b16 %v10681
  %v10999 = vunpack.c.l.b16 %v10682
  %v11000 = vunpack.c.h.b16 %v10682
  %v11001 = vunpack.c.l.b16 %v10683
  %v11002 = vunpack.c.h.b16 %v10683
  %v11003 = vunpack.c.l.b16 %v10684
  %v11004 = vunpack.c.h.b16 %v10684
  %v11005 = vunpack.c.l.b16 %v10685
  %v11006 = vunpack.c.h.b16 %v10685
  %v11007 = vunpack.c.l.b16 %v10686
  %v11008 = vunpack.c.h.b16 %v10686
  %v11009 = vunpack.c.l.b16 %v10687
  %v11010 = vunpack.c.h.b16 %v10687
  %v11011 = vunpack.c.l.b16 %v10688
  %v11012 = vunpack.c.h.b16 %v10688
  %v11013 = vunpack.c.l.b16 %v10689
  %v11014 = vunpack.c.h.b16 %v10689
  %v11015 = vunpack.c.l.b16 %v10690
  %v11016 = vunpack.c.h.b16 %v10690
  %v11017 = vunpack.c.l.b16 %v10691
  %v11018 = vunpack.c.h.b16 %v10691
  %v11019 = vunpack.c.l.b16 %v10692
  %v11020 = vunpack.c.h.b16 %v10692
  %v11021 = vunpack.c.l.b16 %v10693
  %v11022 = vunpack.c.h.b16 %v10693
  %v11023 = vunpack.c.l.b16 %v10694
  %v11024 = vunpack.c.h.b16 %v10694
  %v11025 = vunpack.c.l.b16 %v10695
  %v11026 = vunpack.c.h.b16 %v10695
  %v11027 = vunpack.c.l.b16 %v10696
  %v11028 = vunpack.c.h.b16 %v10696
  %v11029 = vunpack.c.l.b16 %v10697
  %v11030 = vunpack.c.h.b16 %v10697
  %v11031 = vunpack.c.l.b16 %v10698
  %v11032 = vunpack.c.h.b16 %v10698
  %v11033 = vunpack.c.l.b16 %v10699
  %v11034 = vunpack.c.h.b16 %v10699
  %v11035 = vunpack.c.l.b16 %v10700
  %v11036 = vunpack.c.h.b16 %v10700
  %v11037 = vunpack.c.l.b16 %v10701
  %v11038 = vunpack.c.h.b16 %v10701
  %v11039 = vunpack.c.l.b16 %v10702
  %v11040 = vunpack.c.h.b16 %v10702
  %v11041 = vunpack.c.l.b16 %v10703
  %v11042 = vunpack.c.h.b16 %v10703
  %v11043 = vunpack.c.l.b16 %v10704
  %v11044 = vunpack.c.h.b16 %v10704
  %v11045 = vunpack.c.l.b16 %v10705
  %v11046 = vunpack.c.h.b16 %v10705
  %v11047 = vunpack.c.l.b16 %v10706
  %v11048 = vunpack.c.h.b16 %v10706
  %v11049 = vunpack.c.l.b16 %v10707
  %v11050 = vunpack.c.h.b16 %v10707
  %v11051 = vunpack.c.l.b16 %v10708
  %v11052 = vunpack.c.h.b16 %v10708
  %v11053 = vunpack.c.l.b16 %v10709
  %v11054 = vunpack.c.h.b16 %v10709
  %v11055 = vunpack.c.l.b16 %v10710
  %v11056 = vunpack.c.h.b16 %v10710
  %v11057 = vunpack.c.l.b16 %v10711
  %v11058 = vunpack.c.h.b16 %v10711
  %v11059 = vunpack.c.l.b16 %v10712
  %v11060 = vunpack.c.h.b16 %v10712
  %v11061 = vunpack.c.l.b16 %v10713
  %v11062 = vunpack.c.h.b16 %v10713
  %v11063 = vunpack.c.l.b16 %v10714
  %v11064 = vunpack.c.h.b16 %v10714
  %v11065 = vunpack.c.l.b16 %v10715
  %v11066 = vunpack.c.h.b16 %v10715
  %v11067 = vunpack.c.l.b16 %v10716
  %v11068 = vunpack.c.h.b16 %v10716
  %v11069 = vunpack.c.l.b16 %v10717
  %v11070 = vunpack.c.h.b16 %v10717
  %v11071 = vunpack.c.l.b16 %v10718
  %v11072 = vunpack.c.h.b16 %v10718
  %v11073 = vunpack.c.l.b16 %v10719
  %v11074 = vunpack.c.h.b16 %v10719
  %v11075 = vunpack.c.l.b16 %v10720
  %v11076 = vunpack.c.h.b16 %v10720
  %v11077 = vunpack.c.l.b16 %v10721
  %v11078 = vunpack.c.h.b16 %v10721
  %v11079 = vunpack.c.l.b16 %v10722
  %v11080 = vunpack.c.h.b16 %v10722
  %v11081 = vunpack.c.l.b16 %v10723
  %v11082 = vunpack.c.h.b16 %v10723
  %v11083 = vunpack.c.l.b16 %v10724
  %v11084 = vunpack.c.h.b16 %v10724
  %v11085 = vunpack.c.l.b16 %v10725
  %v11086 = vunpack.c.h.b16 %v10725
  %v11087 = vunpack.c.l.b16 %v10726
  %v11088 = vunpack.c.h.b16 %v10726
  %v11089 = vunpack.c.l.b16 %v10727
  %v11090 = vunpack.c.h.b16 %v10727
  %v11091 = vunpack.c.l.b16 %v10728
  %v11092 = vunpack.c.h.b16 %v10728
  %v11093 = vunpack.c.l.b16 %v10729
  %v11094 = vunpack.c.h.b16 %v10729
  %v11095 = vunpack.c.l.b16 %v10730
  %v11096 = vunpack.c.h.b16 %v10730
  %v11097 = vunpack.c.l.b16 %v10731
  %v11098 = vunpack.c.h.b16 %v10731
  %v11099 = vunpack.c.l.b16 %v10732
  %v11100 = vunpack.c.h.b16 %v10732
  %v11101 = vunpack.c.l.b16 %v10733
  %v11102 = vunpack.c.h.b16 %v10733
  %v11103 = vunpack.c.l.b16 %v10734
  %v11104 = vunpack.c.h.b16 %v10734
  %v11105 = vunpack.c.l.b16 %v10735
  %v11106 = vunpack.c.h.b16 %v10735
  %v11107 = vunpack.c.l.b16 %v10736
  %v11108 = vunpack.c.h.b16 %v10736
  %v11109 = vunpack.c.l.b16 %v10737
  %v11110 = vunpack.c.h.b16 %v10737
  %v11111 = vunpack.c.l.b16 %v10738
  %v11112 = vunpack.c.h.b16 %v10738
  %v11113 = vunpack.c.l.b16 %v10739
  %v11114 = vunpack.c.h.b16 %v10739
  %v11115 = vunpack.c.l.b16 %v10740
  %v11116 = vunpack.c.h.b16 %v10740
  %v11117 = vunpack.c.l.b16 %v10741
  %v11118 = vunpack.c.h.b16 %v10741
  %v11119 = vunpack.c.l.b16 %v10742
  %v11120 = vunpack.c.h.b16 %v10742
  %v11121 = vunpack.c.l.b16 %v10743
  %v11122 = vunpack.c.h.b16 %v10743
  %v11123 = vunpack.c.l.b16 %v10744
  %v11124 = vunpack.c.h.b16 %v10744
  %v11125 = vunpack.c.l.b16 %v10745
  %v11126 = vunpack.c.h.b16 %v10745
  %v11127 = vunpack.c.l.b16 %v10746
  %v11128 = vunpack.c.h.b16 %v10746
  %v11129 = vunpack.c.l.b16 %v10747
  %v11130 = vunpack.c.h.b16 %v10747
  %v11131 = vunpack.c.l.b16 %v10748
  %v11132 = vunpack.c.h.b16 %v10748
  %v11133 = vunpack.c.l.b16 %v10749
  %v11134 = vunpack.c.h.b16 %v10749
  %v11135 = vunpack.c.l.b16 %v10750
  %v11136 = vunpack.c.h.b16 %v10750
  %v11137 = vunpack.c.l.b16 %v10751
  %v11138 = vunpack.c.h.b16 %v10751
  %v11139 = vunpack.c.l.b16 %v10752
  %v11140 = vunpack.c.h.b16 %v10752
  %v11141 = vunpack.c.l.b16 %v10753
  %v11142 = vunpack.c.h.b16 %v10753
  %v11143 = vunpack.c.l.b16 %v10754
  %v11144 = vunpack.c.h.b16 %v10754
  %v11145 = vunpack.c.l.b16 %v10755
  %v11146 = vunpack.c.h.b16 %v10755
  %v11147 = vunpack.c.l.b16 %v10756
  %v11148 = vunpack.c.h.b16 %v10756
  %v11149 = vunpack.c.l.b16 %v10757
  %v11150 = vunpack.c.h.b16 %v10757
  %v11151 = vunpack.c.l.b16 %v10758
  %v11152 = vunpack.c.h.b16 %v10758
  %v11153 = vunpack.c.l.b16 %v10759
  %v11154 = vunpack.c.h.b16 %v10759
  %v11155 = vunpack.c.l.b16 %v10760
  %v11156 = vunpack.c.h.b16 %v10760
  %v11157 = vunpack.c.l.b16 %v10761
  %v11158 = vunpack.c.h.b16 %v10761
  %v11159 = vunpack.c.l.b16 %v10762
  %v11160 = vunpack.c.h.b16 %v10762
  %v11161 = vunpack.c.l.b16 %v10763
  %v11162 = vunpack.c.h.b16 %v10763
  %v11163 = vunpack.c.l.b16 %v10764
  %v11164 = vunpack.c.h.b16 %v10764
  %v11165 = vunpack.c.l.b16 %v10765
  %v11166 = vunpack.c.h.b16 %v10765
  %v11167 = vunpack.c.l.b16 %v10766
  %v11168 = vunpack.c.h.b16 %v10766
  %v11169 = vunpack.c.l.b16 %v10767
  %v11170 = vunpack.c.h.b16 %v10767
  %v11171 = vunpack.c.l.b16 %v10768
  %v11172 = vunpack.c.h.b16 %v10768
  %v11173 = vunpack.c.l.b16 %v10769
  %v11174 = vunpack.c.h.b16 %v10769
  %v11175 = vunpack.c.l.b16 %v10770
  %v11176 = vunpack.c.h.b16 %v10770
  %v11177 = vunpack.c.l.b16 %v10771
  %v11178 = vunpack.c.h.b16 %v10771
  %v11179 = vunpack.c.l.b16 %v10772
  %v11180 = vunpack.c.h.b16 %v10772
  %v11181 = vunpack.c.l.b16 %v10773
  %v11182 = vunpack.c.h.b16 %v10773
  %v11183 = vunpack.c.l.b16 %v10774
  %v11184 = vunpack.c.h.b16 %v10774
  %v11185 = vunpack.c.l.b16 %v10775
  %v11186 = vunpack.c.h.b16 %v10775
  %v11187 = vunpack.c.l.b16 %v10776
  %v11188 = vunpack.c.h.b16 %v10776
  %v11189 = vunpack.c.l.b16 %v10777
  %v11190 = vunpack.c.h.b16 %v10777
  %v11191 = vunpack.c.l.b16 %v10778
  %v11192 = vunpack.c.h.b16 %v10778
  %v11193 = vunpack.c.l.b16 %v10779
  %v11194 = vunpack.c.h.b16 %v10779
  %v11195 = vunpack.c.l.b16 %v10780
  %v11196 = vunpack.c.h.b16 %v10780
  %v11197 = vunpack.c.l.b16 %v10781
  %v11198 = vunpack.c.h.b16 %v10781
  %v11199 = vunpack.c.l.b16 %v10782
  %v11200 = vunpack.c.h.b16 %v10782
  %v11201 = vunpack.c.l.b16 %v10783
  %v11202 = vunpack.c.h.b16 %v10783
  %v11203 = vunpack.c.l.b16 %v10784
  %v11204 = vunpack.c.h.b16 %v10784
  %v11205 = vunpack.c.l.b16 %v10785
  %v11206 = vunpack.c.h.b16 %v10785
  %v11207 = vunpack.c.l.b16 %v10786
  %v11208 = vunpack.c.h.b16 %v10786
  %v11209 = vunpack.c.l.b16 %v10787
  %v11210 = vunpack.c.h.b16 %v10787
  %v11211 = vunpack.c.l.b16 %v10788
  %v11212 = vunpack.c.h.b16 %v10788
  %v11213 = vunpack.c.l.b16 %v10789
  %v11214 = vunpack.c.h.b16 %v10789
  %v11215 = vunpack.c.l.b16 %v10790
  %v11216 = vunpack.c.h.b16 %v10790
  %v11217 = vunpack.c.l.b16 %v10791
  %v11218 = vunpack.c.h.b16 %v10791
  %v11219 = vunpack.c.l.b16 %v10792
  %v11220 = vunpack.c.h.b16 %v10792
  %v11221 = vunpack.c.l.b16 %v10793
  %v11222 = vunpack.c.h.b16 %v10793
  %v11223 = vunpack.c.l.b16 %v10794
  %v11224 = vunpack.c.h.b16 %v10794
  %v11225 = vunpack.c.l.b16 %v10795
  %v11226 = vunpack.c.h.b16 %v10795
  %v11227 = vunpack.c.l.b16 %v10796
  %v11228 = vunpack.c.h.b16 %v10796
  %v11229 = vpack.c.b16 %v10943, %v10941
  %v11230 = vpack.c.b16 %v10944, %v10942
  %v11231 = vpack.c.b16 %v10947, %v10945
  %v11232 = vpack.c.b16 %v10948, %v10946
  %v11233 = vpack.c.b16 %v10951, %v10949
  %v11234 = vpack.c.b16 %v10952, %v10950
  %v11235 = vpack.c.b16 %v10955, %v10953
  %v11236 = vpack.c.b16 %v10956, %v10954
  %v11237 = vpack.c.b16 %v10959, %v10957
  %v11238 = vpack.c.b16 %v10960, %v10958
  %v11239 = vpack.c.b16 %v10963, %v10961
  %v11240 = vpack.c.b16 %v10964, %v10962
  %v11241 = vpack.c.b16 %v10967, %v10965
  %v11242 = vpack.c.b16 %v10968, %v10966
  %v11243 = vpack.c.b16 %v10971, %v10969
  %v11244 = vpack.c.b16 %v10972, %v10970
  %v11245 = vpack.c.b16 %v10975, %v10973
  %v11246 = vpack.c.b16 %v10976, %v10974
  %v11247 = vpack.c.b16 %v10979, %v10977
  %v11248 = vpack.c.b16 %v10980, %v10978
  %v11249 = vpack.c.b16 %v10983, %v10981
  %v11250 = vpack.c.b16 %v10984, %v10982
  %v11251 = vpack.c.b16 %v10987, %v10985
  %v11252 = vpack.c.b16 %v10988, %v10986
  %v11253 = vpack.c.b16 %v10991, %v10989
  %v11254 = vpack.c.b16 %v10992, %v10990
  %v11255 = vpack.c.b16 %v10995, %v10993
  %v11256 = vpack.c.b16 %v10996, %v10994
  %v11257 = vpack.c.b16 %v10999, %v10997
  %v11258 = vpack.c.b16 %v11000, %v10998
  %v11259 = vpack.c.b16 %v11003, %v11001
  %v11260 = vpack.c.b16 %v11004, %v11002
  %v11261 = vpack.c.b16 %v11007, %v11005
  %v11262 = vpack.c.b16 %v11008, %v11006
  %v11263 = vpack.c.b16 %v11011, %v11009
  %v11264 = vpack.c.b16 %v11012, %v11010
  %v11265 = vpack.c.b16 %v11015, %v11013
  %v11266 = vpack.c.b16 %v11016, %v11014
  %v11267 = vpack.c.b16 %v11019, %v11017
  %v11268 = vpack.c.b16 %v11020, %v11018
  %v11269 = vpack.c.b16 %v11023, %v11021
  %v11270 = vpack.c.b16 %v11024, %v11022
  %v11271 = vpack.c.b16 %v11027, %v11025
  %v11272 = vpack.c.b16 %v11028, %v11026
  %v11273 = vpack.c.b16 %v11031, %v11029
  %v11274 = vpack.c.b16 %v11032, %v11030
  %v11275 = vpack.c.b16 %v11035, %v11033
  %v11276 = vpack.c.b16 %v11036, %v11034
  %v11277 = vpack.c.b16 %v11039, %v11037
  %v11278 = vpack.c.b16 %v11040, %v11038
  %v11279 = vpack.c.b16 %v11043, %v11041
  %v11280 = vpack.c.b16 %v11044, %v11042
  %v11281 = vpack.c.b16 %v11047, %v11045
  %v11282 = vpack.c.b16 %v11048, %v11046
  %v11283 = vpack.c.b16 %v11051, %v11049
  %v11284 = vpack.c.b16 %v11052, %v11050
  %v11285 = vpack.c.b16 %v11055, %v11053
  %v11286 = vpack.c.b16 %v11056, %v11054
  %v11287 = vpack.c.b16 %v11059, %v11057
  %v11288 = vpack.c.b16 %v11060, %v11058
  %v11289 = vpack.c.b16 %v11063, %v11061
  %v11290 = vpack.c.b16 %v11064, %v11062
  %v11291 = vpack.c.b16 %v11067, %v11065
  %v11292 = vpack.c.b16 %v11068, %v11066
  %v11293 = vpack.c.b16 %v11071, %v11069
  %v11294 = vpack.c.b16 %v11072, %v11070
  %v11295 = vpack.c.b16 %v11075, %v11073
  %v11296 = vpack.c.b16 %v11076, %v11074
  %v11297 = vpack.c.b16 %v11079, %v11077
  %v11298 = vpack.c.b16 %v11080, %v11078
  %v11299 = vpack.c.b16 %v11083, %v11081
  %v11300 = vpack.c.b16 %v11084, %v11082
  %v11301 = vpack.c.b16 %v11087, %v11085
  %v11302 = vpack.c.b16 %v11088, %v11086
  %v11303 = vpack.c.b16 %v11091, %v11089
  %v11304 = vpack.c.b16 %v11092, %v11090
  %v11305 = vpack.c.b16 %v11095, %v11093
  %v11306 = vpack.c.b16 %v11096, %v11094
  %v11307 = vpack.c.b16 %v11099, %v11097
  %v11308 = vpack.c.b16 %v11100, %v11098
  %v11309 = vpack.c.b16 %v11103, %v11101
  %v11310 = vpack.c.b16 %v11104, %v11102
  %v11311 = vpack.c.b16 %v11107, %v11105
  %v11312 = vpack.c.b16 %v11108, %v11106
  %v11313 = vpack.c.b16 %v11111, %v11109
  %v11314 = vpack.c.b16 %v11112, %v11110
  %v11315 = vpack.c.b16 %v11115, %v11113
  %v11316 = vpack.c.b16 %v11116, %v11114
  %v11317 = vpack.c.b16 %v11119, %v11117
  %v11318 = vpack.c.b16 %v11120, %v11118
  %v11319 = vpack.c.b16 %v11123, %v11121
  %v11320 = vpack.c.b16 %v11124, %v11122
  %v11321 = vpack.c.b16 %v11127, %v11125
  %v11322 = vpack.c.b16 %v11128, %v11126
  %v11323 = vpack.c.b16 %v11131, %v11129
  %v11324 = vpack.c.b16 %v11132, %v11130
  %v11325 = vpack.c.b16 %v11135, %v11133
  %v11326 = vpack.c.b16 %v11136, %v11134
  %v11327 = vpack.c.b16 %v11139, %v11137
  %v11328 = vpack.c.b16 %v11140, %v11138
  %v11329 = vpack.c.b16 %v11143, %v11141
  %v11330 = vpack.c.b16 %v11144, %v11142
  %v11331 = vpack.c.b16 %v11147, %v11145
  %v11332 = vpack.c.b16 %v11148, %v11146
  %v11333 = vpack.c.b16 %v11151, %v11149
  %v11334 = vpack.c.b16 %v11152, %v11150
  %v11335 = vpack.c.b16 %v11155, %v11153
  %v11336 = vpack.c.b16 %v11156, %v11154
  %v11337 = vpack.c.b16 %v11159, %v11157
  %v11338 = vpack.c.b16 %v11160, %v11158
  %v11339 = vpack.c.b16 %v11163, %v11161
  %v11340 = vpack.c.b16 %v11164, %v11162
  %v11341 = vpack.c.b16 %v11167, %v11165
  %v11342 = vpack.c.b16 %v11168, %v11166
  %v11343 = vpack.c.b16 %v11171, %v11169
  %v11344 = vpack.c.b16 %v11172, %v11170
  %v11345 = vpack.c.b16 %v11175, %v11173
  %v11346 = vpack.c.b16 %v11176, %v11174
  %v11347 = vpack.c.b16 %v11179, %v11177
  %v11348 = vpack.c.b16 %v11180, %v11178
  %v11349 = vpack.c.b16 %v11183, %v11181
  %v11350 = vpack.c.b16 %v11184, %v11182
  %v11351 = vpack.c.b16 %v11187, %v11185
  %v11352 = vpack.c.b16 %v11188, %v11186
  %v11353 = vpack.c.b16 %v11191, %v11189
  %v11354 = vpack.c.b16 %v11192, %v11190
  %v11355 = vpack.c.b16 %v11195, %v11193
  %v11356 = vpack.c.b16 %v11196, %v11194
  %v11357 = vpack.c.b16 %v11199, %v11197
  %v11358 = vpack.c.b16 %v11200, %v11198
  %v11359 = vpack.c.b16 %v11203, %v11201
  %v11360 = vpack.c.b16 %v11204, %v11202
  %v11361 = vpack.c.b16 %v11207, %v11205
  %v11362 = vpack.c.b16 %v11208, %v11206
  %v11363 = vpack.c.b16 %v11211, %v11209
  %v11364 = vpack.c.b16 %v11212, %v11210
  %v11365 = vpack.c.b16 %v11215, %v11213
  %v11366 = vpack.c.b16 %v11216, %v11214
  %v11367 = vpack.c.b16 %v11219, %v11217
  %v11368 = vpack.c.b16 %v11220, %v11218
  %v11369 = vpack.c.b16 %v11223, %v11221
  %v11370 = vpack.c.b16 %v11224, %v11222
  %v11371 = vpack.c.b16 %v11227, %v11225
  %v11372 = vpack.c.b16 %v11228, %v11226
  %11517 = vmatprep.subr.bf16.mxu0 %v11230
  %11518 = vmatpush1.bf16.msra.mxu0 %v11229
  %11519 = vmatprep.subr.bf16.mxu0 %v11232
  %11520 = vmatpush1.bf16.msra.mxu0 %v11231
  %11521 = vmatprep.subr.bf16.mxu0 %v11234
  %11522 = vmatpush1.bf16.msra.mxu0 %v11233
  %11523 = vmatprep.subr.bf16.mxu0 %v11236
  %11524 = vmatpush1.bf16.msra.mxu0 %v11235
  %11525 = vmatprep.subr.bf16.mxu0 %v11238
  %11526 = vmatpush1.bf16.msra.mxu0 %v11237
  %11527 = vmatprep.subr.bf16.mxu0 %v11240
  %11528 = vmatpush1.bf16.msra.mxu0 %v11239
  %11529 = vmatprep.subr.bf16.mxu0 %v11242
  %11530 = vmatpush1.bf16.msra.mxu0 %v11241
  %11531 = vmatprep.subr.bf16.mxu0 %v11244
  %11532 = vmatpush1.bf16.msra.mxu0 %v11243
  %11533 = vmatprep.subr.bf16.mxu0 %v11246
  %11534 = vmatpush1.bf16.msra.mxu0 %v11245
  %11535 = vmatprep.subr.bf16.mxu0 %v11248
  %11536 = vmatpush1.bf16.msra.mxu0 %v11247
  %11537 = vmatprep.subr.bf16.mxu0 %v11250
  %11538 = vmatpush1.bf16.msra.mxu0 %v11249
  %11539 = vmatprep.subr.bf16.mxu0 %v11252
  %11540 = vmatpush1.bf16.msra.mxu0 %v11251
  %11541 = vmatprep.subr.bf16.mxu0 %v11254
  %11542 = vmatpush1.bf16.msra.mxu0 %v11253
  %11543 = vmatprep.subr.bf16.mxu0 %v11256
  %11544 = vmatpush1.bf16.msra.mxu0 %v11255
  %11545 = vmatprep.subr.bf16.mxu0 %v11258
  %11546 = vmatpush1.bf16.msra.mxu0 %v11257
  %11547 = vmatprep.subr.bf16.mxu0 %v11260
  %11548 = vmatpush1.bf16.msra.mxu0 %v11259
  %11549 = vmatprep.mubr.bf16.mxu0 %v9930
  %11550 = vmatmul.mubr.bf16.gmra.mrb[0].mxu0 %v9816
  %v11551 = vpop.f32.mrb[0].mxu0
  %v11552 = vadd.f32 0.0, %v11551
  %v11553 = vpop.f32.mrb[0].mxu0
  %v11554 = vadd.f32 0.0, %v11553
  %v11555 = vpop.f32.mrb[0].mxu0
  %v11556 = vadd.f32 0.0, %v11555
  %v11557 = vpop.f32.mrb[0].mxu0
  %v11558 = vadd.f32 0.0, %v11557
  %11559 = vmatprep.mubr.bf16.mxu0 %v9931
  %11560 = vmatmul.mubr.bf16.gmra.mrb[0].mxu0 %v9817
  %v11561 = vpop.f32.mrb[0].mxu0
  %v11562 = vadd.f32 0.0, %v11561
  %v11563 = vpop.f32.mrb[0].mxu0
  %v11564 = vadd.f32 0.0, %v11563
  %v11565 = vpop.f32.mrb[0].mxu0
  %v11566 = vadd.f32 0.0, %v11565
  %v11567 = vpop.f32.mrb[0].mxu0
  %v11568 = vadd.f32 0.0, %v11567
  %11569 = vmatprep.mubr.bf16.mxu0 %v9932
  %11570 = vmatmul.mubr.bf16.gmra.mrb[0].mxu0 %v9818
  %v11571 = vpop.f32.mrb[0].mxu0
  %v11572 = vadd.f32 0.0, %v11571
  %v11573 = vpop.f32.mrb[0].mxu0
  %v11574 = vadd.f32 0.0, %v11573
  %v11575 = vpop.f32.mrb[0].mxu0
  %v11576 = vadd.f32 0.0, %v11575
  %v11577 = vpop.f32.mrb[0].mxu0
  %v11578 = vadd.f32 0.0, %v11577
  %11579 = vmatprep.mubr.bf16.mxu0 %v9933
  %11580 = vmatmul.mubr.bf16.gmra.mrb[0].mxu0 %v9819
  %v11581 = vpop.f32.mrb[0].mxu0
  %v11582 = vpop.f32.mrb[0].mxu0
  %v11583 = vpop.f32.mrb[0].mxu0
  %v11584 = vpop.f32.mrb[0].mxu0
  %11585 = vdwg.mxu0
  %11586 = vmatprep.subr.bf16.mxu0 %v11262
  %11587 = vmatpush1.bf16.msra.mxu0 %v11261
  %11588 = vmatprep.subr.bf16.mxu0 %v11264
  %11589 = vmatpush1.bf16.msra.mxu0 %v11263
  %11590 = vmatprep.subr.bf16.mxu0 %v11266
  %11591 = vmatpush1.bf16.msra.mxu0 %v11265
  %11592 = vmatprep.subr.bf16.mxu0 %v11268
  %11593 = vmatpush1.bf16.msra.mxu0 %v11267
  %11594 = vmatprep.subr.bf16.mxu0 %v11270
  %11595 = vmatpush1.bf16.msra.mxu0 %v11269
  %11596 = vmatprep.subr.bf16.mxu0 %v11272
  %11597 = vmatpush1.bf16.msra.mxu0 %v11271
  %11598 = vmatprep.subr.bf16.mxu0 %v11274
  %11599 = vmatpush1.bf16.msra.mxu0 %v11273
  %11600 = vmatprep.subr.bf16.mxu0 %v11276
  %11601 = vmatpush1.bf16.msra.mxu0 %v11275
  %11602 = vmatprep.subr.bf16.mxu0 %v11278
  %11603 = vmatpush1.bf16.msra.mxu0 %v11277
  %11604 = vmatprep.subr.bf16.mxu0 %v11280
  %11605 = vmatpush1.bf16.msra.mxu0 %v11279
  %11606 = vmatprep.subr.bf16.mxu0 %v11282
  %11607 = vmatpush1.bf16.msra.mxu0 %v11281
  %11608 = vmatprep.subr.bf16.mxu0 %v11284
  %11609 = vmatpush1.bf16.msra.mxu0 %v11283
  %11610 = vmatprep.subr.bf16.mxu0 %v11286
  %11611 = vmatpush1.bf16.msra.mxu0 %v11285
  %11612 = vmatprep.subr.bf16.mxu0 %v11288
  %11613 = vmatpush1.bf16.msra.mxu0 %v11287
  %11614 = vmatprep.subr.bf16.mxu0 %v11290
  %11615 = vmatpush1.bf16.msra.mxu0 %v11289
  %11616 = vmatprep.subr.bf16.mxu0 %v11292
  %11617 = vmatpush1.bf16.msra.mxu0 %v11291
  %11618 = vmatprep.mubr.bf16.mxu0 %v10158
  %11619 = vmatmul.mubr.bf16.gmra.mrb[0].mxu0 %v10044
  %v11620 = vpop.f32.mrb[0].mxu0
  %v11621 = vadd.f32 %v11552, %v11620
  %v11622 = vpop.f32.mrb[0].mxu0
  %v11623 = vadd.f32 %v11554, %v11622
  %v11624 = vpop.f32.mrb[0].mxu0
  %v11625 = vadd.f32 %v11556, %v11624
  %v11626 = vpop.f32.mrb[0].mxu0
  %v11627 = vadd.f32 %v11558, %v11626
  %11628 = vmatprep.mubr.bf16.mxu0 %v10159
  %11629 = vmatmul.mubr.bf16.gmra.mrb[0].mxu0 %v10045
  %v11630 = vpop.f32.mrb[0].mxu0
  %v11631 = vadd.f32 %v11562, %v11630
  %v11632 = vpop.f32.mrb[0].mxu0
  %v11633 = vadd.f32 %v11564, %v11632
  %v11634 = vpop.f32.mrb[0].mxu0
  %v11635 = vadd.f32 %v11566, %v11634
  %v11636 = vpop.f32.mrb[0].mxu0
  %v11637 = vadd.f32 %v11568, %v11636
  %11638 = vmatprep.mubr.bf16.mxu0 %v10160
  %11639 = vmatmul.mubr.bf16.gmra.mrb[0].mxu0 %v10046
  %v11640 = vpop.f32.mrb[0].mxu0
  %v11641 = vadd.f32 %v11572, %v11640
  %v11642 = vpop.f32.mrb[0].mxu0
  %v11643 = vadd.f32 %v11574, %v11642
  %v11644 = vpop.f32.mrb[0].mxu0
  %v11645 = vadd.f32 %v11576, %v11644
  %v11646 = vpop.f32.mrb[0].mxu0
  %v11647 = vadd.f32 %v11578, %v11646
  %11648 = vmatprep.mubr.bf16.mxu0 %v10161
  %11649 = vmatmul.mubr.bf16.gmra.mrb[0].mxu0 %v10047
  %v11650 = vpop.f32.mrb[0].mxu0
  %v11651 = vpop.f32.mrb[0].mxu0
  %v11652 = vpop.f32.mrb[0].mxu0
  %v11653 = vpop.f32.mrb[0].mxu0
  %11654 = vdwg.mxu0
  %11655 = vmatprep.subr.bf16.mxu0 %v11294
  %11656 = vmatpush1.bf16.msra.mxu0 %v11293
  %11657 = vmatprep.subr.bf16.mxu0 %v11296
  %11658 = vmatpush1.bf16.msra.mxu0 %v11295
  %11659 = vmatprep.subr.bf16.mxu0 %v11298
  %11660 = vmatpush1.bf16.msra.mxu0 %v11297
  %11661 = vmatprep.subr.bf16.mxu0 %v11300
  %11662 = vmatpush1.bf16.msra.mxu0 %v11299
  %11663 = vmatprep.subr.bf16.mxu0 %v11302
  %11664 = vmatpush1.bf16.msra.mxu0 %v11301
  %11665 = vmatprep.subr.bf16.mxu0 %v11304
  %11666 = vmatpush1.bf16.msra.mxu0 %v11303
  %11667 = vmatprep.subr.bf16.mxu0 %v11306
  %11668 = vmatpush1.bf16.msra.mxu0 %v11305
  %11669 = vmatprep.subr.bf16.mxu0 %v11308
  %11670 = vmatpush1.bf16.msra.mxu0 %v11307
  %11671 = vmatprep.subr.bf16.mxu0 %v11310
  %11672 = vmatpush1.bf16.msra.mxu0 %v11309
  %11673 = vmatprep.subr.bf16.mxu0 %v11312
  %11674 = vmatpush1.bf16.msra.mxu0 %v11311
  %11675 = vmatprep.subr.bf16.mxu0 %v11314
  %11676 = vmatpush1.bf16.msra.mxu0 %v11313
  %11677 = vmatprep.subr.bf16.mxu0 %v11316
  %11678 = vmatpush1.bf16.msra.mxu0 %v11315
  %11679 = vmatprep.subr.bf16.mxu0 %v11318
  %11680 = vmatpush1.bf16.msra.mxu0 %v11317
  %11681 = vmatprep.subr.bf16.mxu0 %v11320
  %11682 = vmatpush1.bf16.msra.mxu0 %v11319
  %11683 = vmatprep.subr.bf16.mxu0 %v11322
  %11684 = vmatpush1.bf16.msra.mxu0 %v11321
  %11685 = vmatprep.subr.bf16.mxu0 %v11324
  %11686 = vmatpush1.bf16.msra.mxu0 %v11323
  %11687 = vmatprep.mubr.bf16.mxu0 %v10354
  %11688 = vmatmul.mubr.bf16.gmra.mrb[0].mxu0 %v10256
  %v11689 = vpop.f32.mrb[0].mxu0
  %v11690 = vadd.f32 %v11621, %v11689
  %v11691 = vpop.f32.mrb[0].mxu0
  %v11692 = vadd.f32 %v11623, %v11691
  %v11693 = vpop.f32.mrb[0].mxu0
  %v11694 = vadd.f32 %v11625, %v11693
  %v11695 = vpop.f32.mrb[0].mxu0
  %v11696 = vadd.f32 %v11627, %v11695
  %11697 = vmatprep.mubr.bf16.mxu0 %v10355
  %11698 = vmatmul.mubr.bf16.gmra.mrb[0].mxu0 %v10257
  %v11699 = vpop.f32.mrb[0].mxu0
  %v11700 = vadd.f32 %v11631, %v11699
  %v11701 = vpop.f32.mrb[0].mxu0
  %v11702 = vadd.f32 %v11633, %v11701
  %v11703 = vpop.f32.mrb[0].mxu0
  %v11704 = vadd.f32 %v11635, %v11703
  %v11705 = vpop.f32.mrb[0].mxu0
  %v11706 = vadd.f32 %v11637, %v11705
  %11707 = vmatprep.mubr.bf16.mxu0 %v10356
  %11708 = vmatmul.mubr.bf16.gmra.mrb[0].mxu0 %v10258
  %v11709 = vpop.f32.mrb[0].mxu0
  %v11710 = vadd.f32 %v11641, %v11709
  %v11711 = vpop.f32.mrb[0].mxu0
  %v11712 = vadd.f32 %v11643, %v11711
  %v11713 = vpop.f32.mrb[0].mxu0
  %v11714 = vadd.f32 %v11645, %v11713
  %v11715 = vpop.f32.mrb[0].mxu0
  %v11716 = vadd.f32 %v11647, %v11715
  %11717 = vmatprep.mubr.bf16.mxu0 %v10357
  %11718 = vmatmul.mubr.bf16.gmra.mrb[0].mxu0 %v10259
  %v11719 = vpop.f32.mrb[0].mxu0
  %v11720 = vpop.f32.mrb[0].mxu0
  %v11721 = vpop.f32.mrb[0].mxu0
  %v11722 = vpop.f32.mrb[0].mxu0
  %11723 = vdwg.mxu0
  %11724 = vmatprep.subr.bf16.mxu0 %v11326
  %11725 = vmatpush1.bf16.msra.mxu0 %v11325
  %11726 = vmatprep.subr.bf16.mxu0 %v11328
  %11727 = vmatpush1.bf16.msra.mxu0 %v11327
  %11728 = vmatprep.subr.bf16.mxu0 %v11330
  %11729 = vmatpush1.bf16.msra.mxu0 %v11329
  %11730 = vmatprep.subr.bf16.mxu0 %v11332
  %11731 = vmatpush1.bf16.msra.mxu0 %v11331
  %11732 = vmatprep.subr.bf16.mxu0 %v11334
  %11733 = vmatpush1.bf16.msra.mxu0 %v11333
  %11734 = vmatprep.subr.bf16.mxu0 %v11336
  %11735 = vmatpush1.bf16.msra.mxu0 %v11335
  %11736 = vmatprep.subr.bf16.mxu0 %v11338
  %11737 = vmatpush1.bf16.msra.mxu0 %v11337
  %11738 = vmatprep.subr.bf16.mxu0 %v11340
  %11739 = vmatpush1.bf16.msra.mxu0 %v11339
  %11740 = vmatprep.subr.bf16.mxu0 %v11342
  %11741 = vmatpush1.bf16.msra.mxu0 %v11341
  %11742 = vmatprep.subr.bf16.mxu0 %v11344
  %11743 = vmatpush1.bf16.msra.mxu0 %v11343
  %11744 = vmatprep.subr.bf16.mxu0 %v11346
  %11745 = vmatpush1.bf16.msra.mxu0 %v11345
  %11746 = vmatprep.subr.bf16.mxu0 %v11348
  %11747 = vmatpush1.bf16.msra.mxu0 %v11347
  %11748 = vmatprep.subr.bf16.mxu0 %v11350
  %11749 = vmatpush1.bf16.msra.mxu0 %v11349
  %11750 = vmatprep.subr.bf16.mxu0 %v11352
  %11751 = vmatpush1.bf16.msra.mxu0 %v11351
  %11752 = vmatprep.subr.bf16.mxu0 %v11354
  %11753 = vmatpush1.bf16.msra.mxu0 %v11353
  %11754 = vmatprep.subr.bf16.mxu0 %v11356
  %11755 = vmatpush1.bf16.msra.mxu0 %v11355
  %11756 = vmatprep.mubr.bf16.mxu0 %v10547
  %11757 = vmatmul.mubr.bf16.gmra.mrb[0].mxu0 %v10449
  %v11758 = vpop.f32.mrb[0].mxu0
  %v11759 = vadd.f32 %v11690, %v11758
  %v11760 = vpop.f32.mrb[0].mxu0
  %v11761 = vadd.f32 %v11692, %v11760
  %v11762 = vpop.f32.mrb[0].mxu0
  %v11763 = vadd.f32 %v11694, %v11762
  %v11764 = vpop.f32.mrb[0].mxu0
  %v11765 = vadd.f32 %v11696, %v11764
  %11766 = vmatprep.mubr.bf16.mxu0 %v10548
  %11767 = vmatmul.mubr.bf16.gmra.mrb[0].mxu0 %v10450
  %v11768 = vpop.f32.mrb[0].mxu0
  %v11769 = vadd.f32 %v11700, %v11768
  %v11770 = vpop.f32.mrb[0].mxu0
  %v11771 = vadd.f32 %v11702, %v11770
  %v11772 = vpop.f32.mrb[0].mxu0
  %v11773 = vadd.f32 %v11704, %v11772
  %v11774 = vpop.f32.mrb[0].mxu0
  %v11775 = vadd.f32 %v11706, %v11774
  %11776 = vmatprep.mubr.bf16.mxu0 %v10549
  %11777 = vmatmul.mubr.bf16.gmra.mrb[0].mxu0 %v10451
  %v11778 = vpop.f32.mrb[0].mxu0
  %v11779 = vadd.f32 %v11710, %v11778
  %v11780 = vpop.f32.mrb[0].mxu0
  %v11781 = vadd.f32 %v11712, %v11780
  %v11782 = vpop.f32.mrb[0].mxu0
  %v11783 = vadd.f32 %v11714, %v11782
  %v11784 = vpop.f32.mrb[0].mxu0
  %v11785 = vadd.f32 %v11716, %v11784
  %11786 = vmatprep.mubr.bf16.mxu0 %v10550
  %11787 = vmatmul.mubr.bf16.gmra.mrb[0].mxu0 %v10452
  %v11788 = vpop.f32.mrb[0].mxu0
  %v11789 = vpop.f32.mrb[0].mxu0
  %v11790 = vpop.f32.mrb[0].mxu0
  %v11791 = vpop.f32.mrb[0].mxu0
  %11792 = vdwg.mxu0
  %11793 = vmatprep.subr.bf16.mxu0 %v11358
  %11794 = vmatpush1.bf16.msra.mxu0 %v11357
  %11795 = vmatprep.subr.bf16.mxu0 %v11360
  %11796 = vmatpush1.bf16.msra.mxu0 %v11359
  %11797 = vmatprep.subr.bf16.mxu0 %v11362
  %11798 = vmatpush1.bf16.msra.mxu0 %v11361
  %11799 = vmatprep.subr.bf16.mxu0 %v11364
  %11800 = vmatpush1.bf16.msra.mxu0 %v11363
  %11801 = vmatprep.subr.bf16.mxu0 %v11366
  %11802 = vmatpush1.bf16.msra.mxu0 %v11365
  %11803 = vmatprep.subr.bf16.mxu0 %v11368
  %11804 = vmatpush1.bf16.msra.mxu0 %v11367
  %11805 = vmatprep.subr.bf16.mxu0 %v11370
  %11806 = vmatpush1.bf16.msra.mxu0 %v11369
  %11807 = vmatprep.subr.bf16.mxu0 %v11372
  %11808 = vmatpush1.bf16.msra.mxu0 %v11371
  %11809 = vmatprep.subr.bf16.mxu0 0
  %11810 = vmatpush1.bf16.msra.mxu0 0
  %11811 = vmatprep.subr.bf16.mxu0 0
  %11812 = vmatpush1.bf16.msra.mxu0 0
  %11813 = vmatprep.subr.bf16.mxu0 0
  %11814 = vmatpush1.bf16.msra.mxu0 0
  %11815 = vmatprep.subr.bf16.mxu0 0
  %11816 = vmatpush1.bf16.msra.mxu0 0
  %11817 = vmatprep.subr.bf16.mxu0 0
  %11818 = vmatpush1.bf16.msra.mxu0 0
  %11819 = vmatprep.subr.bf16.mxu0 0
  %11820 = vmatpush1.bf16.msra.mxu0 0
  %11821 = vmatprep.subr.bf16.mxu0 0
  %11822 = vmatpush1.bf16.msra.mxu0 0
  %11823 = vmatprep.subr.bf16.mxu0 0
  %11824 = vmatpush1.bf16.msra.mxu0 0
  %11825 = vmatprep.mubr.bf16.mxu0 0
  %11826 = vmatmul.mubr.bf16.gmra.mrb[0].mxu0 %v10645
  %v11827 = vpop.f32.mrb[0].mxu0
  %v11828 = vadd.f32 %v11759, %v11827
  %v11829 = vpop.f32.mrb[0].mxu0
  %v11830 = vadd.f32 %v11761, %v11829
  %v11831 = vpop.f32.mrb[0].mxu0
  %v11832 = vadd.f32 %v11763, %v11831
  %v11833 = vpop.f32.mrb[0].mxu0
  %v11834 = vadd.f32 %v11765, %v11833
  %11835 = vmatprep.mubr.bf16.mxu0 0
  %11836 = vmatmul.mubr.bf16.gmra.mrb[0].mxu0 %v10646
  %v11837 = vpop.f32.mrb[0].mxu0
  %v11838 = vadd.f32 %v11769, %v11837
  %v11839 = vpop.f32.mrb[0].mxu0
  %v11840 = vadd.f32 %v11771, %v11839
  %v11841 = vpop.f32.mrb[0].mxu0
  %v11842 = vadd.f32 %v11773, %v11841
  %v11843 = vpop.f32.mrb[0].mxu0
  %v11844 = vadd.f32 %v11775, %v11843
  %11845 = vmatprep.mubr.bf16.mxu0 0
  %11846 = vmatmul.mubr.bf16.gmra.mrb[0].mxu0 %v10647
  %v11847 = vpop.f32.mrb[0].mxu0
  %v11848 = vadd.f32 %v11779, %v11847
  %v11849 = vpop.f32.mrb[0].mxu0
  %v11850 = vadd.f32 %v11781, %v11849
  %v11851 = vpop.f32.mrb[0].mxu0
  %v11852 = vadd.f32 %v11783, %v11851
  %v11853 = vpop.f32.mrb[0].mxu0
  %v11854 = vadd.f32 %v11785, %v11853
  %11855 = vmatprep.mubr.bf16.mxu0 0
  %11856 = vmatmul.mubr.bf16.gmra.mrb[0].mxu0 %v10648
  %v11857 = vpop.f32.mrb[0].mxu0
  %v11858 = vpop.f32.mrb[0].mxu0
  %v11859 = vpop.f32.mrb[0].mxu0
  %v11860 = vpop.f32.mrb[0].mxu0
  %11861 = vdwg.mxu0
  %v11874 = vcombine.low %v11828, %v11830
  %v11875 = vcombine.high %v11828, %v11830
  %v11877 = vunpack.c.l.s4 1966171168
  %v11878 = vunpack.c.0.s8 %v11877
  %v11879 = vlaneseq
  %v11880 = vshrl.u32 %v11879, 7
  %v11881 = vsub.s32 %v11878, %v11880
  %v11882 = vrot.slane %v11874, %v11881
  %v11884 = vunpack.c.l.s4 1966171168
  %v11885 = vunpack.c.0.s8 %v11884
  %v11886 = vlaneseq
  %v11887 = vshrl.u32 %v11886, 7
  %v11888 = vsub.s32 %v11885, %v11887
  %v11889 = vrot.slane %v11875, %v11888
  %v11890 = vcombine.high %v11882, %v11882
  %v11891 = vcombine.high %v11889, %v11889
  %v11893 = vunpack.c.l.s4 1966171168
  %v11894 = vunpack.c.0.s8 %v11893
  %v11895 = vlaneseq
  %v11896 = vshrl.u32 %v11895, 7
  %v11897 = vsub.s32 %v11894, %v11896
  %v11898 = vrot.slane %v11882, %v11897
  %v11900 = vunpack.c.l.s4 1966171168
  %v11901 = vunpack.c.0.s8 %v11900
  %v11902 = vlaneseq
  %v11903 = vshrl.u32 %v11902, 7
  %v11904 = vsub.s32 %v11901, %v11903
  %v11905 = vrot.slane %v11889, %v11904
  %v11907 = vunpack.c.l.s4 1966171168
  %v11908 = vunpack.c.0.s8 %v11907
  %v11909 = vlaneseq
  %v11910 = vshrl.u32 %v11909, 7
  %v11911 = vsub.s32 %v11908, %v11910
  %v11912 = vrot.slane %v11890, %v11911
  %v11914 = vunpack.c.l.s4 1966171168
  %v11915 = vunpack.c.0.s8 %v11914
  %v11916 = vlaneseq
  %v11917 = vshrl.u32 %v11916, 7
  %v11918 = vsub.s32 %v11915, %v11917
  %v11919 = vrot.slane %v11891, %v11918
  %v11920 = vcombine.high %v11898, %v11898
  %v11921 = vcombine.high %v11905, %v11905
  %v11922 = vcombine.high %v11912, %v11912
  %v11923 = vcombine.high %v11919, %v11919
  %v11924 = vcombine.low %v11832, %v11834
  %v11925 = vcombine.high %v11832, %v11834
  %v11927 = vunpack.c.l.s4 1966171168
  %v11928 = vunpack.c.0.s8 %v11927
  %v11929 = vlaneseq
  %v11930 = vshrl.u32 %v11929, 7
  %v11931 = vsub.s32 %v11928, %v11930
  %v11932 = vrot.slane %v11924, %v11931
  %v11934 = vunpack.c.l.s4 1966171168
  %v11935 = vunpack.c.0.s8 %v11934
  %v11936 = vlaneseq
  %v11937 = vshrl.u32 %v11936, 7
  %v11938 = vsub.s32 %v11935, %v11937
  %v11939 = vrot.slane %v11925, %v11938
  %v11940 = vcombine.high %v11932, %v11932
  %v11941 = vcombine.high %v11939, %v11939
  %v11943 = vunpack.c.l.s4 1966171168
  %v11944 = vunpack.c.0.s8 %v11943
  %v11945 = vlaneseq
  %v11946 = vshrl.u32 %v11945, 7
  %v11947 = vsub.s32 %v11944, %v11946
  %v11948 = vrot.slane %v11932, %v11947
  %v11950 = vunpack.c.l.s4 1966171168
  %v11951 = vunpack.c.0.s8 %v11950
  %v11952 = vlaneseq
  %v11953 = vshrl.u32 %v11952, 7
  %v11954 = vsub.s32 %v11951, %v11953
  %v11955 = vrot.slane %v11939, %v11954
  %v11957 = vunpack.c.l.s4 1966171168
  %v11958 = vunpack.c.0.s8 %v11957
  %v11959 = vlaneseq
  %v11960 = vshrl.u32 %v11959, 7
  %v11961 = vsub.s32 %v11958, %v11960
  %v11962 = vrot.slane %v11940, %v11961
  %v11964 = vunpack.c.l.s4 1966171168
  %v11965 = vunpack.c.0.s8 %v11964
  %v11966 = vlaneseq
  %v11967 = vshrl.u32 %v11966, 7
  %v11968 = vsub.s32 %v11965, %v11967
  %v11969 = vrot.slane %v11941, %v11968
  %v11970 = vcombine.high %v11948, %v11948
  %v11971 = vcombine.high %v11962, %v11962
  %v11972 = vcombine.high %v11969, %v11969
  %v11973 = vcombine.low %v11838, %v11840
  %v11975 = vunpack.c.l.s4 1966171168
  %v11976 = vunpack.c.0.s8 %v11975
  %v11977 = vlaneseq
  %v11978 = vshrl.u32 %v11977, 7
  %v11979 = vsub.s32 %v11976, %v11978
  %v11980 = vrot.slane %v11973, %v11979
  %v11981 = vcombine.high %v11980, %v11980
  %v11983 = vunpack.c.l.s4 1966171168
  %v11984 = vunpack.c.0.s8 %v11983
  %v11985 = vlaneseq
  %v11986 = vshrl.u32 %v11985, 7
  %v11987 = vsub.s32 %v11984, %v11986
  %v11988 = vrot.slane %v11980, %v11987
  %v11990 = vunpack.c.l.s4 1966171168
  %v11991 = vunpack.c.0.s8 %v11990
  %v11992 = vlaneseq
  %v11993 = vshrl.u32 %v11992, 7
  %v11994 = vsub.s32 %v11991, %v11993
  %v11995 = vrot.slane %v11981, %v11994
  %v11996 = vcombine.high %v11988, %v11988
  %v11997 = vcombine.low %v11842, %v11844
  %v11998 = vcombine.high %v11842, %v11844
  %v12000 = vunpack.c.l.s4 1966171168
  %v12001 = vunpack.c.0.s8 %v12000
  %v12002 = vlaneseq
  %v12003 = vshrl.u32 %v12002, 7
  %v12004 = vsub.s32 %v12001, %v12003
  %v12005 = vrot.slane %v11997, %v12004
  %v12007 = vunpack.c.l.s4 1966171168
  %v12008 = vunpack.c.0.s8 %v12007
  %v12009 = vlaneseq
  %v12010 = vshrl.u32 %v12009, 7
  %v12011 = vsub.s32 %v12008, %v12010
  %v12012 = vrot.slane %v11998, %v12011
  %v12013 = vcombine.high %v12005, %v12005
  %v12014 = vcombine.high %v12012, %v12012
  %v12016 = vunpack.c.l.s4 1966171168
  %v12017 = vunpack.c.0.s8 %v12016
  %v12018 = vlaneseq
  %v12019 = vshrl.u32 %v12018, 7
  %v12020 = vsub.s32 %v12017, %v12019
  %v12021 = vrot.slane %v12005, %v12020
  %v12023 = vunpack.c.l.s4 1966171168
  %v12024 = vunpack.c.0.s8 %v12023
  %v12025 = vlaneseq
  %v12026 = vshrl.u32 %v12025, 7
  %v12027 = vsub.s32 %v12024, %v12026
  %v12028 = vrot.slane %v12012, %v12027
  %v12030 = vunpack.c.l.s4 1966171168
  %v12031 = vunpack.c.0.s8 %v12030
  %v12032 = vlaneseq
  %v12033 = vshrl.u32 %v12032, 7
  %v12034 = vsub.s32 %v12031, %v12033
  %v12035 = vrot.slane %v12013, %v12034
  %v12037 = vunpack.c.l.s4 1966171168
  %v12038 = vunpack.c.0.s8 %v12037
  %v12039 = vlaneseq
  %v12040 = vshrl.u32 %v12039, 7
  %v12041 = vsub.s32 %v12038, %v12040
  %v12042 = vrot.slane %v12014, %v12041
  %v12043 = vcombine.high %v12021, %v12021
  %v12044 = vcombine.high %v12028, %v12028
  %v12045 = vcombine.high %v12035, %v12035
  %v12046 = vcombine.high %v12042, %v12042
  %v12047 = vcombine.low %v11848, %v11850
  %v12048 = vcombine.high %v11848, %v11850
  %v12050 = vunpack.c.l.s4 1966171168
  %v12051 = vunpack.c.0.s8 %v12050
  %v12052 = vlaneseq
  %v12053 = vshrl.u32 %v12052, 7
  %v12054 = vsub.s32 %v12051, %v12053
  %v12055 = vrot.slane %v12047, %v12054
  %v12057 = vunpack.c.l.s4 1966171168
  %v12058 = vunpack.c.0.s8 %v12057
  %v12059 = vlaneseq
  %v12060 = vshrl.u32 %v12059, 7
  %v12061 = vsub.s32 %v12058, %v12060
  %v12062 = vrot.slane %v12048, %v12061
  %v12063 = vcombine.high %v12055, %v12055
  %v12064 = vcombine.high %v12062, %v12062
  %v12066 = vunpack.c.l.s4 1966171168
  %v12067 = vunpack.c.0.s8 %v12066
  %v12068 = vlaneseq
  %v12069 = vshrl.u32 %v12068, 7
  %v12070 = vsub.s32 %v12067, %v12069
  %v12071 = vrot.slane %v12055, %v12070
  %v12073 = vunpack.c.l.s4 1966171168
  %v12074 = vunpack.c.0.s8 %v12073
  %v12075 = vlaneseq
  %v12076 = vshrl.u32 %v12075, 7
  %v12077 = vsub.s32 %v12074, %v12076
  %v12078 = vrot.slane %v12062, %v12077
  %v12080 = vunpack.c.l.s4 1966171168
  %v12081 = vunpack.c.0.s8 %v12080
  %v12082 = vlaneseq
  %v12083 = vshrl.u32 %v12082, 7
  %v12084 = vsub.s32 %v12081, %v12083
  %v12085 = vrot.slane %v12063, %v12084
  %v12087 = vunpack.c.l.s4 1966171168
  %v12088 = vunpack.c.0.s8 %v12087
  %v12089 = vlaneseq
  %v12090 = vshrl.u32 %v12089, 7
  %v12091 = vsub.s32 %v12088, %v12090
  %v12092 = vrot.slane %v12064, %v12091
  %v12093 = vcombine.high %v12078, %v12078
  %v12094 = vcombine.high %v12085, %v12085
  %v12095 = vcombine.low %v11852, %v11854
  %v12097 = vunpack.c.l.s4 1966171168
  %v12098 = vunpack.c.0.s8 %v12097
  %v12099 = vlaneseq
  %v12100 = vshrl.u32 %v12099, 7
  %v12101 = vsub.s32 %v12098, %v12100
  %v12102 = vrot.slane %v12095, %v12101
  %v12103 = vcombine.high %v12102, %v12102
  %v12105 = vunpack.c.l.s4 1966171168
  %v12106 = vunpack.c.0.s8 %v12105
  %v12107 = vlaneseq
  %v12108 = vshrl.u32 %v12107, 7
  %v12109 = vsub.s32 %v12106, %v12108
  %v12110 = vrot.slane %v12102, %v12109
  %v12112 = vunpack.c.l.s4 1966171168
  %v12113 = vunpack.c.0.s8 %v12112
  %v12114 = vlaneseq
  %v12115 = vshrl.u32 %v12114, 7
  %v12116 = vsub.s32 %v12113, %v12115
  %v12117 = vrot.slane %v12103, %v12116
  %v12118 = vcombine.high %v12110, %v12110
  %v12119 = vcombine.high %v12117, %v12117
  %v12152 = vld [vmem:[%s5] sm:$0x3]
  %v12153 = vld [vmem:[%s5 + $0x2] sm:$0x3]
  %v12156 = vlaneseq
  %v12157 = vshrl.u32 %v12156, 7
  %v12158 = vsub.s32 0, %v12157
  %v12159 = vrot.slane %v12152, %v12158
  %v12160 = vlaneseq
  %v12161 = vshrl.u32 %v12160, 7
  %v12162 = vsub.s32 1, %v12161
  %v12163 = vrot.slane %v12152, %v12162
  %v12164 = vlaneseq
  %v12165 = vshrl.u32 %v12164, 7
  %v12166 = vsub.s32 0, %v12165
  %v12167 = vrot.slane %v12153, %v12166
  %v12168 = vlaneseq
  %v12169 = vshrl.u32 %v12168, 7
  %v12170 = vsub.s32 1, %v12169
  %v12171 = vrot.slane %v12153, %v12170
  %v12172 = vcombine.low %v12159, %v12163
  %v12173 = vcombine.high %v12159, %v12163
  %v12175 = vunpack.c.l.s4 1966171168
  %v12176 = vunpack.c.0.s8 %v12175
  %v12177 = vlaneseq
  %v12178 = vshrl.u32 %v12177, 7
  %v12179 = vsub.s32 %v12176, %v12178
  %v12180 = vrot.slane %v12172, %v12179
  %v12182 = vunpack.c.l.s4 1966171168
  %v12183 = vunpack.c.0.s8 %v12182
  %v12184 = vlaneseq
  %v12185 = vshrl.u32 %v12184, 7
  %v12186 = vsub.s32 %v12183, %v12185
  %v12187 = vrot.slane %v12173, %v12186
  %v12188 = vcombine.high %v12180, %v12180
  %v12189 = vcombine.high %v12187, %v12187
  %v12191 = vunpack.c.l.s4 1966171168
  %v12192 = vunpack.c.0.s8 %v12191
  %v12193 = vlaneseq
  %v12194 = vshrl.u32 %v12193, 7
  %v12195 = vsub.s32 %v12192, %v12194
  %v12196 = vrot.slane %v12180, %v12195
  %v12198 = vunpack.c.l.s4 1966171168
  %v12199 = vunpack.c.0.s8 %v12198
  %v12200 = vlaneseq
  %v12201 = vshrl.u32 %v12200, 7
  %v12202 = vsub.s32 %v12199, %v12201
  %v12203 = vrot.slane %v12187, %v12202
  %v12205 = vunpack.c.l.s4 1966171168
  %v12206 = vunpack.c.0.s8 %v12205
  %v12207 = vlaneseq
  %v12208 = vshrl.u32 %v12207, 7
  %v12209 = vsub.s32 %v12206, %v12208
  %v12210 = vrot.slane %v12188, %v12209
  %v12212 = vunpack.c.l.s4 1966171168
  %v12213 = vunpack.c.0.s8 %v12212
  %v12214 = vlaneseq
  %v12215 = vshrl.u32 %v12214, 7
  %v12216 = vsub.s32 %v12213, %v12215
  %v12217 = vrot.slane %v12189, %v12216
  %v12218 = vcombine.high %v12196, %v12196
  %v12219 = vcombine.high %v12203, %v12203
  %v12220 = vcombine.high %v12210, %v12210
  %v12221 = vcombine.high %v12217, %v12217
  %v12222 = vcombine.low %v12167, %v12171
  %v12223 = vcombine.high %v12167, %v12171
  %v12225 = vunpack.c.l.s4 1966171168
  %v12226 = vunpack.c.0.s8 %v12225
  %v12227 = vlaneseq
  %v12228 = vshrl.u32 %v12227, 7
  %v12229 = vsub.s32 %v12226, %v12228
  %v12230 = vrot.slane %v12222, %v12229
  %v12232 = vunpack.c.l.s4 1966171168
  %v12233 = vunpack.c.0.s8 %v12232
  %v12234 = vlaneseq
  %v12235 = vshrl.u32 %v12234, 7
  %v12236 = vsub.s32 %v12233, %v12235
  %v12237 = vrot.slane %v12223, %v12236
  %v12238 = vcombine.high %v12230, %v12230
  %v12239 = vcombine.high %v12237, %v12237
  %v12241 = vunpack.c.l.s4 1966171168
  %v12242 = vunpack.c.0.s8 %v12241
  %v12243 = vlaneseq
  %v12244 = vshrl.u32 %v12243, 7
  %v12245 = vsub.s32 %v12242, %v12244
  %v12246 = vrot.slane %v12230, %v12245
  %v12248 = vunpack.c.l.s4 1966171168
  %v12249 = vunpack.c.0.s8 %v12248
  %v12250 = vlaneseq
  %v12251 = vshrl.u32 %v12250, 7
  %v12252 = vsub.s32 %v12249, %v12251
  %v12253 = vrot.slane %v12237, %v12252
  %v12255 = vunpack.c.l.s4 1966171168
  %v12256 = vunpack.c.0.s8 %v12255
  %v12257 = vlaneseq
  %v12258 = vshrl.u32 %v12257, 7
  %v12259 = vsub.s32 %v12256, %v12258
  %v12260 = vrot.slane %v12238, %v12259
  %v12262 = vunpack.c.l.s4 1966171168
  %v12263 = vunpack.c.0.s8 %v12262
  %v12264 = vlaneseq
  %v12265 = vshrl.u32 %v12264, 7
  %v12266 = vsub.s32 %v12263, %v12265
  %v12267 = vrot.slane %v12239, %v12266
  %v12268 = vcombine.high %v12246, %v12246
  %v12269 = vcombine.high %v12253, %v12253
  %v12270 = vcombine.high %v12260, %v12260
  %v12271 = vcombine.high %v12267, %v12267
  %v12288 = vadd.f32 %v11898, %v12196
  %v12289 = vadd.f32 %v11912, %v12210
  %v12290 = vadd.f32 %v11920, %v12218
  %v12291 = vadd.f32 %v11922, %v12220
  %v12292 = vadd.f32 %v11919, %v12217
  %v12293 = vadd.f32 %v11921, %v12219
  %v12294 = vadd.f32 %v11923, %v12221
  %v12295 = vadd.f32 %v11948, %v12196
  %v12296 = vadd.f32 %v11970, %v12218
  %v12297 = vadd.f32 %v11971, %v12220
  %v12298 = vadd.f32 %v11955, %v12203
  %v12299 = vadd.f32 %v11969, %v12217
  %v12300 = vadd.f32 %v11972, %v12221
  %v12301 = vadd.f32 %v11988, %v12196
  %v12302 = vadd.f32 %v11995, %v12210
  %v12303 = vadd.f32 %v11996, %v12218
  %v12304 = vadd.f32 %v12035, %v12246
  %v12305 = vadd.f32 %v12043, %v12260
  %v12306 = vadd.f32 %v12045, %v12268
  %v12307 = vadd.f32 %v12028, %v12270
  %v12308 = vadd.f32 %v12044, %v12267
  %v12309 = vadd.f32 %v12046, %v12269
  %v12310 = vadd.f32 %v12071, %v12271
  %v12311 = vadd.f32 %v12085, %v12246
  %v12312 = vadd.f32 %v12094, %v12268
  %v12313 = vadd.f32 %v12078, %v12270
  %v12314 = vadd.f32 %v12092, %v12253
  %v12315 = vadd.f32 %v12093, %v12267
  %v12316 = vadd.f32 %v12110, %v12271
  %v12317 = vadd.f32 %v12117, %v12246
  %v12318 = vadd.f32 %v12118, %v12260
  %v12319 = vadd.f32 %v12119, %v12268
  %v12320 = vmax.f32 %v12288, 0.0
  %v12321 = vmax.f32 %v12289, 0.0
  %v12322 = vmax.f32 %v12290, 0.0
  %v12323 = vmax.f32 %v12291, 0.0
  %v12324 = vmax.f32 %v12292, 0.0
  %v12325 = vmax.f32 %v12293, 0.0
  %v12326 = vmax.f32 %v12294, 0.0
  %v12327 = vmax.f32 %v12295, 0.0
  %v12328 = vmax.f32 %v12296, 0.0
  %v12329 = vmax.f32 %v12297, 0.0
  %v12330 = vmax.f32 %v12298, 0.0
  %v12331 = vmax.f32 %v12299, 0.0
  %v12332 = vmax.f32 %v12300, 0.0
  %v12333 = vmax.f32 %v12301, 0.0
  %v12334 = vmax.f32 %v12302, 0.0
  %v12335 = vmax.f32 %v12303, 0.0
  %v12336 = vmax.f32 %v12304, 0.0
  %v12337 = vmax.f32 %v12305, 0.0
  %v12338 = vmax.f32 %v12306, 0.0
  %v12339 = vmax.f32 %v12307, 0.0
  %v12340 = vmax.f32 %v12308, 0.0
  %v12341 = vmax.f32 %v12309, 0.0
  %v12342 = vmax.f32 %v12310, 0.0
  %v12343 = vmax.f32 %v12311, 0.0
  %v12344 = vmax.f32 %v12312, 0.0
  %v12345 = vmax.f32 %v12313, 0.0
  %v12346 = vmax.f32 %v12314, 0.0
  %v12347 = vmax.f32 %v12315, 0.0
  %v12348 = vmax.f32 %v12316, 0.0
  %v12349 = vmax.f32 %v12317, 0.0
  %v12350 = vmax.f32 %v12318, 0.0
  %v12351 = vmax.f32 %v12319, 0.0
  %v12352 = vmax.f32 %v12320, %v12324
  %v12353 = vmax.f32 %v12321, %v12325
  %v12354 = vmax.f32 %v12322, %v12326
  %v12355 = vmax.f32 %v12323, %v12327
  %v12356 = vmax.f32 %v12328, %v12332
  %v12357 = vmax.f32 %v12329, %v12333
  %v12358 = vmax.f32 %v12330, %v12334
  %v12359 = vmax.f32 %v12331, %v12335
  %v12360 = vmax.f32 %v12336, %v12340
  %v12361 = vmax.f32 %v12337, %v12341
  %v12362 = vmax.f32 %v12338, %v12342
  %v12363 = vmax.f32 %v12339, %v12343
  %v12364 = vmax.f32 %v12344, %v12348
  %v12365 = vmax.f32 %v12345, %v12349
  %v12366 = vmax.f32 %v12346, %v12350
  %v12367 = vmax.f32 %v12347, %v12351
  %v12368 = vmax.f32 %v12352, %v12353
  %v12369 = vmax.f32 %v12354, %v12355
  %v12370 = vmax.f32 %v12356, %v12357
  %v12371 = vmax.f32 %v12358, %v12359
  %v12372 = vmax.f32 %v12360, %v12361
  %v12373 = vmax.f32 %v12362, %v12363
  %v12374 = vmax.f32 %v12364, %v12365
  %v12375 = vmax.f32 %v12366, %v12367
  %v12376 = vadd.f32 %v12368, %v12369
  %v12377 = vadd.f32 %v12372, %v12373
  %v12378 = vadd.f32 %v12376, %v12370
  %v12379 = vadd.f32 %v12377, %v12374
  %v12380 = vadd.f32 %v12378, %v12371
  %v12381 = vadd.f32 %v12379, %v12375
  %v12382 = vmul.f32 %v12380, 0.25
  %v12383 = vmul.f32 %v12381, 0.25
  %v12386 = vlaneseq
  %v12387 = vshrl.u32 %v12386, 7
  %v12388 = vsub.s32 0, %v12387
  %v12389 = vrot.slane %v12382, %v12388
  %v12390 = vlaneseq
  %v12391 = vshrl.u32 %v12390, 7
  %v12392 = vsub.s32 1, %v12391
  %v12393 = vrot.slane %v12382, %v12392
  %v12394 = vlaneseq
  %v12395 = vshrl.u32 %v12394, 7
  %v12396 = vsub.s32 0, %v12395
  %v12397 = vrot.slane %v12383, %v12396
  %v12398 = vlaneseq
  %v12399 = vshrl.u32 %v12398, 7
  %v12400 = vsub.s32 1, %v12399
  %v12401 = vrot.slane %v12383, %v12400
  %v12406 = vpack.c.bf16 %v12389, %v12389
  %v12407 = vpack.c.bf16 %v12393, %v12393
  %v12408 = vpack.c.bf16 %v12397, %v12397
  %v12409 = vpack.c.bf16 %v12401, %v12401
  %v12410 = vld [vmem:[%s12] sm:$0xf]
  %v12411 = vld [vmem:[%s12 + $0x4] sm:$0xf]
  %v12412 = vld [vmem:[%s12 + $0x8] sm:$0xf]
  %v12413 = vld [vmem:[%s12 + $0xc] sm:$0xf]
  %v12414 = vld [vmem:[%s12 + $0x10] sm:$0xf]
  %v12415 = vld [vmem:[%s12 + $0x14] sm:$0xf]
  %v12416 = vld [vmem:[%s12 + $0x18] sm:$0xf]
  %v12417 = vld [vmem:[%s12 + $0x1c] sm:$0xf]
  %v12418 = vld [vmem:[%s12 + $0x20] sm:$0xf]
  %v12419 = vld [vmem:[%s12 + $0x24] sm:$0xf]
  %v12420 = vld [vmem:[%s12 + $0x28] sm:$0xf]
  %v12421 = vld [vmem:[%s12 + $0x2c] sm:$0xf]
  %v12422 = vld [vmem:[%s12 + $0x30] sm:$0xf]
  %v12423 = vld [vmem:[%s12 + $0x34] sm:$0xf]
  %v12424 = vld [vmem:[%s12 + $0x38] sm:$0xf]
  %v12425 = vld [vmem:[%s12 + $0x3c] sm:$0xf]
  %v12426 = vld [vmem:[%s12 + $0x40] sm:$0xf]
  %v12427 = vld [vmem:[%s12 + $0x44] sm:$0xf]
  %v12428 = vld [vmem:[%s12 + $0x48] sm:$0xf]
  %v12429 = vld [vmem:[%s12 + $0x4c] sm:$0xf]
  %v12430 = vld [vmem:[%s12 + $0x50] sm:$0xf]
  %v12431 = vld [vmem:[%s12 + $0x54] sm:$0xf]
  %v12432 = vld [vmem:[%s12 + $0x58] sm:$0xf]
  %v12433 = vld [vmem:[%s12 + $0x5c] sm:$0xf]
  %v12434 = vld [vmem:[%s12 + $0x60] sm:$0xf]
  %v12435 = vld [vmem:[%s12 + $0x64] sm:$0xf]
  %v12436 = vld [vmem:[%s12 + $0x68] sm:$0xf]
  %v12437 = vld [vmem:[%s12 + $0x6c] sm:$0xf]
  %v12438 = vld [vmem:[%s12 + $0x70] sm:$0xf]
  %v12439 = vld [vmem:[%s12 + $0x74] sm:$0xf]
  %v12440 = vld [vmem:[%s12 + $0x78] sm:$0xf]
  %v12441 = vld [vmem:[%s12 + $0x7c] sm:$0xf]
  %v12442 = vld [vmem:[%s6] sm:$0x1]
  %v12443 = vld [vmem:[%s6 + $0x1] sm:$0x1]
  %v12448 = vunpack.c.l.b16 %v12406
  %v12449 = vunpack.c.l.b16 %v12407
  %v12450 = vunpack.c.l.b16 %v12408
  %v12451 = vunpack.c.l.b16 %v12409
  %v12452 = vrot.slane %v12450, 7
  %v12453 = vsel %vm9727, %v12452, %v12448
  %v12454 = vrot.slane %v12451, 7
  %v12455 = vsel %vm9727, %v12454, %v12449
  %v12456 = vpack.c.b16 %v12453, %v12453
  %v12457 = vpack.c.b16 %v12455, %v12455
  %v12492 = vunpack.c.l.b16 %v12410
  %v12493 = vunpack.c.l.b16 %v12411
  %v12494 = vunpack.c.l.b16 %v12412
  %v12495 = vunpack.c.l.b16 %v12413
  %v12496 = vunpack.c.l.b16 %v12414
  %v12497 = vunpack.c.l.b16 %v12415
  %v12498 = vunpack.c.l.b16 %v12416
  %v12499 = vunpack.c.l.b16 %v12417
  %v12500 = vunpack.c.l.b16 %v12418
  %v12501 = vunpack.c.l.b16 %v12419
  %v12502 = vunpack.c.l.b16 %v12420
  %v12503 = vunpack.c.l.b16 %v12421
  %v12504 = vunpack.c.l.b16 %v12422
  %v12505 = vunpack.c.l.b16 %v12423
  %v12506 = vunpack.c.l.b16 %v12424
  %v12507 = vunpack.c.l.b16 %v12425
  %v12508 = vunpack.c.l.b16 %v12426
  %v12509 = vunpack.c.l.b16 %v12427
  %v12510 = vunpack.c.l.b16 %v12428
  %v12511 = vunpack.c.l.b16 %v12429
  %v12512 = vunpack.c.l.b16 %v12430
  %v12513 = vunpack.c.l.b16 %v12431
  %v12514 = vunpack.c.l.b16 %v12432
  %v12515 = vunpack.c.l.b16 %v12433
  %v12516 = vunpack.c.l.b16 %v12434
  %v12517 = vunpack.c.l.b16 %v12435
  %v12518 = vunpack.c.l.b16 %v12436
  %v12519 = vunpack.c.l.b16 %v12437
  %v12520 = vunpack.c.l.b16 %v12438
  %v12521 = vunpack.c.l.b16 %v12439
  %v12522 = vunpack.c.l.b16 %v12440
  %v12523 = vunpack.c.l.b16 %v12441
  %v12524 = vpack.c.b16 %v12493, %v12492
  %v12525 = vpack.c.b16 %v12495, %v12494
  %v12526 = vpack.c.b16 %v12497, %v12496
  %v12527 = vpack.c.b16 %v12499, %v12498
  %v12528 = vpack.c.b16 %v12501, %v12500
  %v12529 = vpack.c.b16 %v12503, %v12502
  %v12530 = vpack.c.b16 %v12505, %v12504
  %v12531 = vpack.c.b16 %v12507, %v12506
  %v12532 = vpack.c.b16 %v12509, %v12508
  %v12533 = vpack.c.b16 %v12511, %v12510
  %v12534 = vpack.c.b16 %v12513, %v12512
  %v12535 = vpack.c.b16 %v12515, %v12514
  %v12536 = vpack.c.b16 %v12517, %v12516
  %v12537 = vpack.c.b16 %v12519, %v12518
  %v12538 = vpack.c.b16 %v12521, %v12520
  %v12539 = vpack.c.b16 %v12523, %v12522
  %v12558 = vcombine.low %v12442, %v12443
  %v12560 = vunpack.c.l.s4 1966171168
  %v12561 = vunpack.c.0.s8 %v12560
  %v12562 = vlaneseq
  %v12563 = vshrl.u32 %v12562, 7
  %v12564 = vsub.s32 %v12561, %v12563
  %v12565 = vrot.slane %v12558, %v12564
  %v12567 = vunpack.c.l.s4 1966171168
  %v12568 = vunpack.c.0.s8 %v12567
  %v12569 = vlaneseq
  %v12570 = vshrl.u32 %v12569, 7
  %v12571 = vsub.s32 %v12568, %v12570
  %v12572 = vrot.slane %v12565, %v12571
  %12574 = vmatprep.subr.bf16.mxu0 0
  %12575 = vmatpush1.bf16.msra.mxu0 %v12524
  %12576 = vmatprep.subr.bf16.mxu0 0
  %12577 = vmatpush1.bf16.msra.mxu0 %v12525
  %12578 = vmatprep.subr.bf16.mxu0 0
  %12579 = vmatpush1.bf16.msra.mxu0 %v12526
  %12580 = vmatprep.subr.bf16.mxu0 0
  %12581 = vmatpush1.bf16.msra.mxu0 %v12527
  %12582 = vmatprep.subr.bf16.mxu0 0
  %12583 = vmatpush1.bf16.msra.mxu0 %v12528
  %12584 = vmatprep.subr.bf16.mxu0 0
  %12585 = vmatpush1.bf16.msra.mxu0 %v12529
  %12586 = vmatprep.subr.bf16.mxu0 0
  %12587 = vmatpush1.bf16.msra.mxu0 %v12530
  %12588 = vmatprep.subr.bf16.mxu0 0
  %12589 = vmatpush1.bf16.msra.mxu0 %v12531
  %12590 = vmatprep.subr.bf16.mxu0 0
  %12591 = vmatpush1.bf16.msra.mxu0 %v12532
  %12592 = vmatprep.subr.bf16.mxu0 0
  %12593 = vmatpush1.bf16.msra.mxu0 %v12533
  %12594 = vmatprep.subr.bf16.mxu0 0
  %12595 = vmatpush1.bf16.msra.mxu0 %v12534
  %12596 = vmatprep.subr.bf16.mxu0 0
  %12597 = vmatpush1.bf16.msra.mxu0 %v12535
  %12598 = vmatprep.subr.bf16.mxu0 0
  %12599 = vmatpush1.bf16.msra.mxu0 %v12536
  %12600 = vmatprep.subr.bf16.mxu0 0
  %12601 = vmatpush1.bf16.msra.mxu0 %v12537
  %12602 = vmatprep.subr.bf16.mxu0 0
  %12603 = vmatpush1.bf16.msra.mxu0 %v12538
  %12604 = vmatprep.subr.bf16.mxu0 0
  %12605 = vmatpush1.bf16.msra.mxu0 %v12539
  %12606 = vmatprep.mubr.bf16.mxu0 %v12457
  %12607 = vmatmul.mubr.bf16.gmra.mrb[0].mxu0 %v12456
  %v12608 = vpop.f32.mrb[0].mxu0
  %v12609 = vadd.f32 %v12572, %v12608
  %v12610 = vpop.f32.mrb[0].mxu0
  %v12611 = vpop.f32.mrb[0].mxu0
  %v12612 = vpop.f32.mrb[0].mxu0
  %12613 = vdwg.mxu0
  %v12614 = vmax.f32 %v12609, 0.0
  %v12615 = vpack.c.bf16 %v12614, %v12614
  %v12616 = vld [vmem:[%s13] sm:$0xf]
  %v12617 = vld [vmem:[%s13 + $0x4] sm:$0xf]
  %v12618 = vld [vmem:[%s13 + $0x8] sm:$0xf]
  %v12619 = vld [vmem:[%s13 + $0xc] sm:$0xf]
  %v12620 = vld [vmem:[%s13 + $0x10] sm:$0xf]
  %v12621 = vld [vmem:[%s13 + $0x14] sm:$0xf]
  %v12622 = vld [vmem:[%s13 + $0x18] sm:$0xf]
  %v12623 = vld [vmem:[%s13 + $0x1c] sm:$0xf]
  %v12624 = vld [vmem:[%s14] sm:$0x1]
  %v12626 = vlaneseq
  %v12627 = vshrl.u32 %v12626, 7
  %v12628 = vsub.s32 0, %v12627
  %v12629 = vrot.slane %v12624, %v12628
  %v12639 = vunpack.c.l.b16 %v12616
  %v12640 = vunpack.c.l.b16 %v12617
  %v12641 = vunpack.c.l.b16 %v12618
  %v12642 = vunpack.c.l.b16 %v12619
  %v12643 = vunpack.c.l.b16 %v12620
  %v12644 = vunpack.c.l.b16 %v12621
  %v12645 = vunpack.c.l.b16 %v12622
  %v12646 = vunpack.c.l.b16 %v12623
  %v12647 = vpack.c.b16 %v12640, %v12639
  %v12648 = vpack.c.b16 %v12642, %v12641
  %v12649 = vpack.c.b16 %v12644, %v12643
  %v12650 = vpack.c.b16 %v12646, %v12645
  %v12656 = vsel %vm5720, %v12615, 0
  %12658 = vmatprep.subr.bf16.mxu0 0
  %12659 = vmatpush1.bf16.msra.mxu0 %v12647
  %12660 = vmatprep.subr.bf16.mxu0 0
  %12661 = vmatpush1.bf16.msra.mxu0 %v12648
  %12662 = vmatprep.subr.bf16.mxu0 0
  %12663 = vmatpush1.bf16.msra.mxu0 %v12649
  %12664 = vmatprep.subr.bf16.mxu0 0
  %12665 = vmatpush1.bf16.msra.mxu0 %v12650
  %12666 = vmatprep.subr.bf16.mxu0 0
  %12667 = vmatpush1.bf16.msra.mxu0 0
  %12668 = vmatprep.subr.bf16.mxu0 0
  %12669 = vmatpush1.bf16.msra.mxu0 0
  %12670 = vmatprep.subr.bf16.mxu0 0
  %12671 = vmatpush1.bf16.msra.mxu0 0
  %12672 = vmatprep.subr.bf16.mxu0 0
  %12673 = vmatpush1.bf16.msra.mxu0 0
  %12674 = vmatprep.subr.bf16.mxu0 0
  %12675 = vmatpush1.bf16.msra.mxu0 0
  %12676 = vmatprep.subr.bf16.mxu0 0
  %12677 = vmatpush1.bf16.msra.mxu0 0
  %12678 = vmatprep.subr.bf16.mxu0 0
  %12679 = vmatpush1.bf16.msra.mxu0 0
  %12680 = vmatprep.subr.bf16.mxu0 0
  %12681 = vmatpush1.bf16.msra.mxu0 0
  %12682 = vmatprep.subr.bf16.mxu0 0
  %12683 = vmatpush1.bf16.msra.mxu0 0
  %12684 = vmatprep.subr.bf16.mxu0 0
  %12685 = vmatpush1.bf16.msra.mxu0 0
  %12686 = vmatprep.subr.bf16.mxu0 0
  %12687 = vmatpush1.bf16.msra.mxu0 0
  %12688 = vmatprep.subr.bf16.mxu0 0
  %12689 = vmatpush1.bf16.msra.mxu0 0
  %12690 = vmatprep.mubr.bf16.mxu0 0
  %12691 = vmatmul.mubr.bf16.gmra.mrb[0].mxu0 %v12656
  %v12692 = vpop.f32.mrb[0].mxu0
  %v12693 = vadd.f32 %v12629, %v12692
  %v12694 = vpop.f32.mrb[0].mxu0
  %v12695 = vpop.f32.mrb[0].mxu0
  %v12696 = vpop.f32.mrb[0].mxu0
  %12697 = vdwg.mxu0
  %v12700 = vunpack.c.l.s4 1966171168
  %v12701 = vunpack.c.0.s8 %v12700
  %v12702 = vlaneseq
  %v12703 = vshrl.u32 %v12702, 7
  %v12704 = vsub.s32 %v12701, %v12703
  %v12705 = vrot.slane %v12693, %v12704
  %v12706 = vcombine.high %v12705, %v12705
  %v12708 = vunpack.c.l.s4 1966171168
  %v12709 = vunpack.c.0.s8 %v12708
  %v12710 = vlaneseq
  %v12711 = vshrl.u32 %v12710, 7
  %v12712 = vsub.s32 %v12709, %v12711
  %v12713 = vrot.slane %v12705, %v12712
  %v12715 = vunpack.c.l.s4 1966171168
  %v12716 = vunpack.c.0.s8 %v12715
  %v12717 = vlaneseq
  %v12718 = vshrl.u32 %v12717, 7
  %v12719 = vsub.s32 %v12716, %v12718
  %v12720 = vrot.slane %v12706, %v12719
  %12723 = vst [vmem:[%s16] sm:$0x1] %v12713
  %12724 = vst [vmem:[%s16 + $0x1] sm:$0x1] %v12720
  // Predicated region
  $region62: #{lhf_policy_cond_small_forward.1} parent=0 // pred_check
    _
  $region63: #{lhf_policy_cond_small_forward.1} parent=0 // pred_check_branch
    %12726 = sbr.rel (0) target = $region65
  $region64: #{lhf_policy_cond_small_forward.1} parent=0 // pred_region
    _
  $region65: #{lhf_policy_cond_small_forward.1} parent=0 // pred_fallthru
    _
  // Predicated region
  $region66: #{lhf_policy_cond_small_forward.1} parent=0 // pred_check
    _
  $region67: #{lhf_policy_cond_small_forward.1} parent=0 // pred_check_branch
    %12728 = sbr.rel (0) target = $region69
  $region68: #{lhf_policy_cond_small_forward.1} parent=0 // pred_region
    _
  $region69: #{lhf_policy_cond_small_forward.1} parent=0 // pred_fallthru
    _
  // Predicated region
  $region70: #{lhf_policy_cond_small_forward.1} parent=0 // pred_check
    _
  $region71: #{lhf_policy_cond_small_forward.1} parent=0 // pred_check_branch
    %12730 = sbr.rel (0) target = $region73
  $region72: #{lhf_policy_cond_small_forward.1} parent=0 // pred_region
    _
  $region73: #{lhf_policy_cond_small_forward.1} parent=0 // pred_fallthru
    _
  // Predicated region
  $region74: #{lhf_policy_cond_small_forward.1} parent=0 // pred_check
    _
  $region75: #{lhf_policy_cond_small_forward.1} parent=0 // pred_check_branch
    %12732 = sbr.rel (0) target = $region77
  $region76: #{lhf_policy_cond_small_forward.1} parent=0 // pred_region
    _
  $region77: #{lhf_policy_cond_small_forward.1} parent=0 // pred_fallthru
    _

</llo_original>
